<compile_context>
chip_gen: v7x
topology: tpu7x:2x2x1
jax: 0.10.0
libtpu: 0.0.40
codegen_flags: <defaults>
</compile_context>

<pallas_src>
import math
from functools import partial

import jax
import jax.numpy as jnp
from jax.experimental import pallas as pl
from jax.experimental.pallas import tpu as pltpu


# ----------------------------- small math helpers ---------------------------

def _gelu_exact(v):
    # F.gelu / nn.GELU default (approximate='none')
    return 0.5 * v * (1.0 + jax.lax.erf(v * (1.0 / math.sqrt(2.0))))


def _softmax_last(s):
    # numerically-stable softmax over the last axis; divide on the EUP slot
    m = jnp.max(s, axis=-1, keepdims=True)
    e = jnp.exp(s - m)
    return e * pl.reciprocal(jnp.sum(e, axis=-1, keepdims=True), approx=True)


def _layernorm(y, g, b, eps):
    mean = jnp.mean(y, axis=-1, keepdims=True)
    yc = y - mean
    var = jnp.mean(yc * yc, axis=-1, keepdims=True)   # biased variance (PyTorch LN)
    return yc * jax.lax.rsqrt(var + eps) * g + b


# -------- kernel 1: attention + residual + LayerNorm1 + PEER#1 similarities --------

def _attn_ln_sim_kernel(x_ref, wqkv_ref, bqkv_ref, wo_ref, bo_ref, g_ref, b_ref,
                        wq_ref, kbd_ref, h_ref, sim_ref, *, num_heads, eps):
    x = x_ref[...]                                               # (S, D)  one batch
    D = x.shape[-1]
    hd = D // num_heads
    scale = 1.0 / math.sqrt(hd)

    # in_proj (QKV) — single MXU matmul for all heads of this batch
    qkv = jnp.dot(x, wqkv_ref[...], preferred_element_type=jnp.float32) + bqkv_ref[...]

    ctx = []
    for h in range(num_heads):                                   # static unroll: all heads in
        q = qkv[:, h * hd:(h + 1) * hd]                          # ONE kernel invocation (no
        k = qkv[:, D + h * hd:D + (h + 1) * hd]                  # per-(b,h) grid-step overhead)
        v = qkv[:, 2 * D + h * hd:2 * D + (h + 1) * hd]
        s = jax.lax.dot_general(q, k, (((1,), (1,)), ((), ())),
                                preferred_element_type=jnp.float32) * scale
        ctx.append(jnp.dot(_softmax_last(s), v, preferred_element_type=jnp.float32))
    ctx = jnp.concatenate(ctx, axis=-1)                          # (S, D)

    attn = jnp.dot(ctx, wo_ref[...], preferred_element_type=jnp.float32) + bo_ref[...]
    # residual + dropout(p=0.1, eval -> identity) + LayerNorm1, fused
    h_out = _layernorm(x + attn, g_ref[...], b_ref[...], eps)
    h_ref[...] = h_out

    # PEER#1 to_queries + product-key similarities fused on the hot LN1 output:
    # two plain 2D MXU matmuls, keys pre-packed block-diagonally (see init).
    q1 = jnp.dot(h_out, wq_ref[...], preferred_element_type=jnp.float32)   # (S, 2*H*dk)
    sim_ref[...] = jnp.dot(q1, kbd_ref[...], preferred_element_type=jnp.float32)


def attention_ln_sim_block(xb, w_qkv, b_qkv, w_out, b_out, ln_g, ln_b, wq1, kbd1,
                           *, num_heads, eps=1e-5):
    # xb: (B, S, D) batch-major so each grid step gets a contiguous (S, D) block
    B, S, D = xb.shape
    QD = wq1.shape[1]
    GK = kbd1.shape[1]
    const2 = lambda b: (0, 0)
    return pl.pallas_call(
        partial(_attn_ln_sim_kernel, num_heads=num_heads, eps=eps),
        out_shape=(jax.ShapeDtypeStruct((B, S, D), jnp.float32),
                   jax.ShapeDtypeStruct((B, S, GK), jnp.float32)),
        grid=(B,),
        in_specs=[
            pl.BlockSpec((None, S, D), lambda b: (b, 0, 0)),     # x, batch dim squeezed
            pl.BlockSpec((D, 3 * D), const2),                    # W_qkv (pre-transposed)
            pl.BlockSpec((1, 3 * D), const2),                    # b_qkv
            pl.BlockSpec((D, D), const2),                        # W_out (pre-transposed)
            pl.BlockSpec((1, D), const2),                        # b_out
            pl.BlockSpec((1, D), const2),                        # ln1 gamma
            pl.BlockSpec((1, D), const2),                        # ln1 beta
            pl.BlockSpec((D, QD), const2),                       # PEER#1 W_q (pre-transposed)
            pl.BlockSpec((QD, GK), const2),                      # PEER#1 block-diag keys
        ],
        out_specs=[pl.BlockSpec((None, S, D), lambda b: (b, 0, 0)),
                   pl.BlockSpec((None, S, GK), lambda b: (b, 0, 0))],
        compiler_params=pltpu.CompilerParams(dimension_semantics=("parallel",)),
    )(xb, w_qkv, b_qkv.reshape(1, 3 * D), w_out, b_out.reshape(1, D),
      ln_g.reshape(1, D), ln_b.reshape(1, D), wq1, kbd1)


# ------------- kernel 3: PEER#2 to_queries + product-key similarity ---------

def _peer_sim_kernel(x_ref, wq_ref, kbd_ref, o_ref):
    # x: (R, D); wq: (D, 2*H*dk); kbd: block-diagonal keys (2*H*dk, 2*H*K)
    q = jnp.dot(x_ref[...], wq_ref[...], preferred_element_type=jnp.float32)
    o_ref[...] = jnp.dot(q, kbd_ref[...], preferred_element_type=jnp.float32)


def peer_sim(x_flat, wq, kbd):
    R, _ = x_flat.shape
    GK = kbd.shape[1]
    return pl.pallas_call(
        _peer_sim_kernel,
        out_shape=jax.ShapeDtypeStruct((R, GK), jnp.float32),
    )(x_flat, wq, kbd)


# ---------------- kernels 2/4: PEER combine (down -> gate -> up) ------------

def _peer_core(x3, wd, sc3, wu, *, heads, topk):
    # x3: (r,1,D)  wd/wu: (r,J,D)  sc3: (r,1,J)   with J = heads*topk
    # down-projection logits on the MXU (batched einsum, no (r,H,K,D) broadcast temp)
    logits = jnp.einsum('rqd,rkd->rqk', x3, wd,
                        preferred_element_type=jnp.float32)      # (r,1,J)
    act = _gelu_exact(logits)
    gates = [_softmax_last(sc3[:, :, h * topk:(h + 1) * topk]) for h in range(heads)]
    weighted = act * jnp.concatenate(gates, axis=-1)             # (r,1,J)
    # up-projection / expert combine on the MXU
    return jnp.einsum('rqk,rkd->rqd', weighted, wu,
                      preferred_element_type=jnp.float32)        # (r,1,D)


def _peer_combine_kernel(x_ref, wd_ref, sc_ref, wu_ref, o_ref, *, heads, topk, apply_gelu):
    out = _peer_core(x_ref[...], wd_ref[...], sc_ref[...], wu_ref[...],
                     heads=heads, topk=topk)
    if apply_gelu:                       # fused inter-PEER F.gelu (peer1 -> peer2)
        out = _gelu_exact(out)
    o_ref[...] = out


def _peer_combine_res_ln_kernel(x_ref, wd_ref, sc_ref, wu_ref, res_ref, g_ref, b_ref,
                                o_ref, *, heads, topk, eps):
    out = _peer_core(x_ref[...], wd_ref[...], sc_ref[...], wu_ref[...],
                     heads=heads, topk=topk)
    # residual + dropout (identity, eval) + LayerNorm2, fused
    o_ref[...] = _layernorm(out + res_ref[...], g_ref[...], b_ref[...], eps)


# Row tile: full problem fits easily here; for realistic sizes pick the largest
# row tile whose double-buffered (wd, wu, x, scores) blocks fit scoped VMEM
# (~24 MiB headroom on v7x's 64 MiB, ~2x larger on v5e/v6e).
_ROW_TILE = 128


def peer_combine(x3, wd, sc3, wu, *, heads, topk, apply_gelu):
    R, _, D = x3.shape
    J = heads * topk
    rt = min(_ROW_TILE, R)
    row = lambda r: (r, 0, 0)
    return pl.pallas_call(
        partial(_peer_combine_kernel, heads=heads, topk=topk, apply_gelu=apply_gelu),
        out_shape=jax.ShapeDtypeStruct((R, 1, D), jnp.float32),
        grid=(pl.cdiv(R, rt),),
        in_specs=[pl.BlockSpec((rt, 1, D), row),
                  pl.BlockSpec((rt, J, D), row),
                  pl.BlockSpec((rt, 1, J), row),
                  pl.BlockSpec((rt, J, D), row)],
        out_specs=pl.BlockSpec((rt, 1, D), row),
        compiler_params=pltpu.CompilerParams(dimension_semantics=("parallel",)),
    )(x3, wd, sc3, wu)


def peer_combine_res_ln(x3, wd, sc3, wu, res3, g, b, *, heads, topk, eps=1e-5):
    R, _, D = x3.shape
    J = heads * topk
    rt = min(_ROW_TILE, R)
    row = lambda r: (r, 0, 0)
    const3 = lambda r: (0, 0, 0)
    return pl.pallas_call(
        partial(_peer_combine_res_ln_kernel, heads=heads, topk=topk, eps=eps),
        out_shape=jax.ShapeDtypeStruct((R, 1, D), jnp.float32),
        grid=(pl.cdiv(R, rt),),
        in_specs=[pl.BlockSpec((rt, 1, D), row),
                  pl.BlockSpec((rt, J, D), row),
                  pl.BlockSpec((rt, 1, J), row),
                  pl.BlockSpec((rt, J, D), row),
                  pl.BlockSpec((rt, 1, D), row),
                  pl.BlockSpec((1, 1, D), const3),
                  pl.BlockSpec((1, 1, D), const3)],
        out_specs=pl.BlockSpec((rt, 1, D), row),
        compiler_params=pltpu.CompilerParams(dimension_semantics=("parallel",)),
    )(x3, wd, sc3, wu, res3, g.reshape(1, 1, D), b.reshape(1, 1, D))


# ------------------------------- PEER glue ----------------------------------

def peer_topk_and_gather(sim_flat, p, *, heads, num_keys, topk):
    # sim_flat: (R, 2*heads*num_keys), group order g = p*heads + h (matches kbd packing).
    R = sim_flat.shape[0]
    J = heads * topk
    sim = sim_flat.reshape(R, 2, heads, num_keys)

    # product-key top-k (JAX glue; no Pallas top_k)
    scores_x, _ = jax.lax.top_k(sim[:, 0], topk)                  # (R, H, topk)
    scores_y, _ = jax.lax.top_k(sim[:, 1], topk)
    all_scores = (scores_x[..., :, None] + scores_y[..., None, :]
                  ).reshape(R, heads, topk * topk)
    scores, pk_indices = jax.lax.top_k(all_scores, topk)          # (R, H, topk)
    # NOTE: the reference also builds `all_indices`/`indices` (true expert ids) but
    # they are unused downstream (embeddings are indexed with pk_indices); omitted.

    # TODO(synk): at realistic num_experts, gather expert rows in-kernel via
    # PrefetchScalarGridSpec / manual DMA instead of materializing (R, J, D) in HBM.
    flat_idx = pk_indices.reshape(R, J)
    wd = jnp.take(p["w_down"], flat_idx, axis=0)                  # (R, J, D)
    wu = jnp.take(p["w_up"], flat_idx, axis=0)                    # (R, J, D)
    return scores.reshape(R, 1, J), wd, wu


# -------------------------- TransformerBlock glue ---------------------------

def transformer_block_forward(x, params, *, num_heads, num_keys, topk):
    S, B, D = x.shape
    p1p, p2p = params["peer1"], params["peer2"]
    # work batch-major internally so attention gets contiguous per-batch blocks
    xb = jnp.transpose(x, (1, 0, 2))                              # (B, S, D)

    # fused: QKV -> attention -> out-proj -> residual -> LayerNorm1 -> PEER#1 sims
    h, sim1 = attention_ln_sim_block(xb, params["w_qkv"], params["b_qkv"],
                                     params["w_out"], params["b_out"],
                                     params["ln1_g"], params["ln1_b"],
                                     p1p["wq"], p1p["kbd"],
                                     num_heads=num_heads)         # (B,S,D), (B,S,2HK)
    R = B * S
    h_flat = h.reshape(R, D)

    # PEER #1: top-k + expert gather (glue), then fused combine + inter-PEER F.gelu
    sc1, wd1, wu1 = peer_topk_and_gather(sim1.reshape(R, -1), p1p,
                                         heads=num_heads, num_keys=num_keys, topk=topk)
    p1_flat = peer_combine(h_flat.reshape(R, 1, D), wd1, sc1, wu1,
                           heads=num_heads, topk=topk, apply_gelu=True).reshape(R, D)

    # PEER #2: to_queries + sims, top-k + gather, then fused combine + residual + LN2
    sim2 = peer_sim(p1_flat, p2p["wq"], p2p["kbd"])               # (R, 2HK)
    sc2, wd2, wu2 = peer_topk_and_gather(sim2, p2p,
                                         heads=num_heads, num_keys=num_keys, topk=topk)
    out3 = peer_combine_res_ln(p1_flat.reshape(R, 1, D), wd2, sc2, wu2,
                               h_flat.reshape(R, 1, D),
                               params["ln2_g"], params["ln2_b"],
                               heads=num_heads, topk=topk)

    return jnp.transpose(out3.reshape(B, S, D), (1, 0, 2))        # back to (S, B, D)


# ------------------------------- init / main --------------------------------

def init_peer_params(key, dim, heads, num_experts, dim_key):
    k1, k2, k3, k4 = jax.random.split(key, 4)
    num_keys = int(round(num_experts ** 0.5))
    # to_queries weight stored pre-transposed: (dim, 2*heads*dim_key) == W^T.
    wq = jax.random.normal(k1, (dim, 2 * heads * dim_key), jnp.float32) * 0.05
    # Product keys: PyTorch param is (heads, num_keys, 2, dim_key).  We pre-pack them
    # block-diagonally so the whole 'p b n h d, h k p d -> p b n h k' einsum runs as a
    # single 128-deep MXU matmul (group g = p*heads + h owns block
    # kbd[g*dk:(g+1)*dk, g*K:(g+1)*K]; off-blocks are exact zeros).
    # TODO(synk): for large num_keys/dim_key keep grouped keys + batched einsum instead.
    keys_g = jax.random.normal(k2, (2 * heads, num_keys, dim_key), jnp.float32)
    kbd = jnp.zeros((2 * heads * dim_key, 2 * heads * num_keys), jnp.float32)
    for g in range(2 * heads):
        kbd = kbd.at[g * dim_key:(g + 1) * dim_key,
                     g * num_keys:(g + 1) * num_keys].set(keys_g[g].T)
    return dict(
        wq=wq,
        kbd=kbd,
        w_down=jax.random.normal(k3, (num_experts, dim), jnp.float32) * 0.05,
        w_up=jax.random.normal(k4, (num_experts, dim), jnp.float32) * 0.05,
    )


def init_params(key, dim, num_heads, num_experts):
    ks = jax.random.split(key, 10)
    dim_key = dim // 2
    return dict(
        # attention projections stored pre-transposed to (in, out) layout
        w_qkv=jax.random.normal(ks[0], (dim, 3 * dim), jnp.float32) * 0.05,
        b_qkv=jax.random.normal(ks[1], (3 * dim,), jnp.float32) * 0.01,
        w_out=jax.random.normal(ks[2], (dim, dim), jnp.float32) * 0.05,
        b_out=jax.random.normal(ks[3], (dim,), jnp.float32) * 0.01,
        ln1_g=1.0 + 0.1 * jax.random.normal(ks[4], (dim,), jnp.float32),
        ln1_b=0.1 * jax.random.normal(ks[5], (dim,), jnp.float32),
        ln2_g=1.0 + 0.1 * jax.random.normal(ks[6], (dim,), jnp.float32),
        ln2_b=0.1 * jax.random.normal(ks[7], (dim,), jnp.float32),
        peer1=init_peer_params(ks[8], dim, num_heads, num_experts, dim_key),
        peer2=init_peer_params(ks[9], dim, num_heads, num_experts, dim_key),
    )


if __name__ == "__main__":
    SEQ, BATCH, DIM = 8, 2, 32
    NUM_HEADS = 4
    NUM_EXPERTS = 16                  # must be a perfect square -> num_keys = 4
    NUM_EXPERTS_PER_HEAD = 4          # == product_key_topk (default)
    NUM_KEYS = int(round(NUM_EXPERTS ** 0.5))

    root = jax.random.PRNGKey(0)
    kx, kp = jax.random.split(root)
    x = jax.random.normal(kx, (SEQ, BATCH, DIM), jnp.float32)
    params = init_params(kp, DIM, NUM_HEADS, NUM_EXPERTS)

    fwd = jax.jit(partial(transformer_block_forward,
                          num_heads=NUM_HEADS, num_keys=NUM_KEYS,
                          topk=NUM_EXPERTS_PER_HEAD))
    out = fwd(x, params)
    jax.block_until_ready(out)
    assert out.shape == (SEQ, BATCH, DIM)
    assert bool(jnp.all(jnp.isfinite(out)))
    print("KERNEL_OK")
</pallas_src>

<mosaic_0001>
module attributes {stable_mosaic.version = 11 : i64} {
  func.func @_attn_ln_sim_kernel(%arg0: i32, %arg1: memref<1x8x32xf32, #tpu.memory_space<vmem>>, %arg2: memref<32x96xf32, #tpu.memory_space<vmem>>, %arg3: memref<1x96xf32, #tpu.memory_space<vmem>>, %arg4: memref<32x32xf32, #tpu.memory_space<vmem>>, %arg5: memref<1x32xf32, #tpu.memory_space<vmem>>, %arg6: memref<1x32xf32, #tpu.memory_space<vmem>>, %arg7: memref<1x32xf32, #tpu.memory_space<vmem>>, %arg8: memref<32x128xf32, #tpu.memory_space<vmem>>, %arg9: memref<128x32xf32, #tpu.memory_space<vmem>>, %arg10: memref<1x8x32xf32, #tpu.memory_space<vmem>>, %arg11: memref<1x8x32xf32, #tpu.memory_space<vmem>>) attributes {dimension_semantics = [#tpu.dimension_semantics<parallel>], iteration_bounds = array<i64: 2>, scalar_prefetch = 0 : i64, scratch_operands = 0 : i64, tpu.core_type = #tpu.core_type<tc>, window_params = [{transform_indices = @transform_0, window_bounds = array<i64: 1, 8, 32>}, {pipeline_mode = #tpu.pipeline_mode<synchronous>, transform_indices = @transform_1, window_bounds = array<i64: 32, 96>}, {pipeline_mode = #tpu.pipeline_mode<synchronous>, transform_indices = @transform_2, window_bounds = array<i64: 1, 96>}, {pipeline_mode = #tpu.pipeline_mode<synchronous>, transform_indices = @transform_3, window_bounds = array<i64: 32, 32>}, {pipeline_mode = #tpu.pipeline_mode<synchronous>, transform_indices = @transform_4, window_bounds = array<i64: 1, 32>}, {pipeline_mode = #tpu.pipeline_mode<synchronous>, transform_indices = @transform_5, window_bounds = array<i64: 1, 32>}, {pipeline_mode = #tpu.pipeline_mode<synchronous>, transform_indices = @transform_6, window_bounds = array<i64: 1, 32>}, {pipeline_mode = #tpu.pipeline_mode<synchronous>, transform_indices = @transform_7, window_bounds = array<i64: 32, 128>}, {pipeline_mode = #tpu.pipeline_mode<synchronous>, transform_indices = @transform_8, window_bounds = array<i64: 128, 32>}, {transform_indices = @transform_9, window_bounds = array<i64: 1, 8, 32>}, {transform_indices = @transform_10, window_bounds = array<i64: 1, 8, 32>}]} {
    %c0 = arith.constant 0 : index
    %c0_0 = arith.constant 0 : index
    %c0_1 = arith.constant 0 : index
    %0 = vector.load %arg1[%c0, %c0_0, %c0_1] : memref<1x8x32xf32, #tpu.memory_space<vmem>>, vector<1x8x32xf32>
    %1 = vector.shape_cast %0 : vector<1x8x32xf32> to vector<8x32xf32>
    %c0_2 = arith.constant 0 : index
    %c0_3 = arith.constant 0 : index
    %2 = vector.load %arg2[%c0_2, %c0_3] : memref<32x96xf32, #tpu.memory_space<vmem>>, vector<32x96xf32>
    %cst = arith.constant dense<0.000000e+00> : vector<8x96xf32>
    %3 = tpu.matmul %1, %2, %cst {dimension_numbers = #tpu.dot_dimension_numbers<[1], [0], [0], [1], [0, 0, 1, 1], [], []>} : vector<8x32xf32>, vector<32x96xf32>, vector<8x96xf32> -> vector<8x96xf32>
    %c0_4 = arith.constant 0 : index
    %c0_5 = arith.constant 0 : index
    %4 = vector.load %arg3[%c0_4, %c0_5] : memref<1x96xf32, #tpu.memory_space<vmem>>, vector<1x96xf32>
    %5 = vector.broadcast %4 : vector<1x96xf32> to vector<8x96xf32>
    %6 = arith.addf %3, %5 : vector<8x96xf32>
    %7 = vector.extract_strided_slice %6 {offsets = [0, 0], sizes = [8, 8], strides = [1, 1]} : vector<8x96xf32> to vector<8x8xf32>
    %8 = vector.extract_strided_slice %6 {offsets = [0, 32], sizes = [8, 8], strides = [1, 1]} : vector<8x96xf32> to vector<8x8xf32>
    %9 = vector.extract_strided_slice %6 {offsets = [0, 64], sizes = [8, 8], strides = [1, 1]} : vector<8x96xf32> to vector<8x8xf32>
    %cst_6 = arith.constant dense<0.000000e+00> : vector<8x8xf32>
    %10 = tpu.matmul %7, %8, %cst_6 {dimension_numbers = #tpu.dot_dimension_numbers<[1], [1], [0], [0], [0, 0, 1, 0], [], []>} : vector<8x8xf32>, vector<8x8xf32>, vector<8x8xf32> -> vector<8x8xf32>
    %cst_7 = arith.constant 0.353553385 : f32
    %11 = vector.broadcast %cst_7 : f32 to vector<8x8xf32>
    %12 = arith.mulf %10, %11 : vector<8x8xf32>
    %cst_8 = arith.constant dense<0xFF800000> : vector<8xf32>
    %13 = vector.multi_reduction <maximumf>, %12, %cst_8 [1] : vector<8x8xf32> to vector<8xf32>
    %14 = vector.shape_cast %13 : vector<8xf32> to vector<8x1xf32>
    %15 = vector.broadcast %14 : vector<8x1xf32> to vector<8x8xf32>
    %16 = arith.subf %12, %15 : vector<8x8xf32>
    %17 = math.exp %16 : vector<8x8xf32>
    %cst_9 = arith.constant dense<0.000000e+00> : vector<8xf32>
    %18 = vector.multi_reduction <add>, %17, %cst_9 [1] : vector<8x8xf32> to vector<8xf32>
    %19 = vector.shape_cast %18 : vector<8xf32> to vector<8x1xf32>
    %20 = tpu.reciprocal %19 {approx = true} : vector<8x1xf32> -> vector<8x1xf32>
    %21 = vector.broadcast %20 : vector<8x1xf32> to vector<8x8xf32>
    %22 = arith.mulf %17, %21 : vector<8x8xf32>
    %cst_10 = arith.constant dense<0.000000e+00> : vector<8x8xf32>
    %23 = tpu.matmul %22, %9, %cst_10 {dimension_numbers = #tpu.dot_dimension_numbers<[1], [0], [0], [1], [0, 0, 1, 1], [], []>} : vector<8x8xf32>, vector<8x8xf32>, vector<8x8xf32> -> vector<8x8xf32>
    %24 = vector.extract_strided_slice %6 {offsets = [0, 8], sizes = [8, 8], strides = [1, 1]} : vector<8x96xf32> to vector<8x8xf32>
    %25 = vector.extract_strided_slice %6 {offsets = [0, 40], sizes = [8, 8], strides = [1, 1]} : vector<8x96xf32> to vector<8x8xf32>
    %26 = vector.extract_strided_slice %6 {offsets = [0, 72], sizes = [8, 8], strides = [1, 1]} : vector<8x96xf32> to vector<8x8xf32>
    %cst_11 = arith.constant dense<0.000000e+00> : vector<8x8xf32>
    %27 = tpu.matmul %24, %25, %cst_11 {dimension_numbers = #tpu.dot_dimension_numbers<[1], [1], [0], [0], [0, 0, 1, 0], [], []>} : vector<8x8xf32>, vector<8x8xf32>, vector<8x8xf32> -> vector<8x8xf32>
    %cst_12 = arith.constant 0.353553385 : f32
    %28 = vector.broadcast %cst_12 : f32 to vector<8x8xf32>
    %29 = arith.mulf %27, %28 : vector<8x8xf32>
    %cst_13 = arith.constant dense<0xFF800000> : vector<8xf32>
    %30 = vector.multi_reduction <maximumf>, %29, %cst_13 [1] : vector<8x8xf32> to vector<8xf32>
    %31 = vector.shape_cast %30 : vector<8xf32> to vector<8x1xf32>
    %32 = vector.broadcast %31 : vector<8x1xf32> to vector<8x8xf32>
    %33 = arith.subf %29, %32 : vector<8x8xf32>
    %34 = math.exp %33 : vector<8x8xf32>
    %cst_14 = arith.constant dense<0.000000e+00> : vector<8xf32>
    %35 = vector.multi_reduction <add>, %34, %cst_14 [1] : vector<8x8xf32> to vector<8xf32>
    %36 = vector.shape_cast %35 : vector<8xf32> to vector<8x1xf32>
    %37 = tpu.reciprocal %36 {approx = true} : vector<8x1xf32> -> vector<8x1xf32>
    %38 = vector.broadcast %37 : vector<8x1xf32> to vector<8x8xf32>
    %39 = arith.mulf %34, %38 : vector<8x8xf32>
    %cst_15 = arith.constant dense<0.000000e+00> : vector<8x8xf32>
    %40 = tpu.matmul %39, %26, %cst_15 {dimension_numbers = #tpu.dot_dimension_numbers<[1], [0], [0], [1], [0, 0, 1, 1], [], []>} : vector<8x8xf32>, vector<8x8xf32>, vector<8x8xf32> -> vector<8x8xf32>
    %41 = vector.extract_strided_slice %6 {offsets = [0, 16], sizes = [8, 8], strides = [1, 1]} : vector<8x96xf32> to vector<8x8xf32>
    %42 = vector.extract_strided_slice %6 {offsets = [0, 48], sizes = [8, 8], strides = [1, 1]} : vector<8x96xf32> to vector<8x8xf32>
    %43 = vector.extract_strided_slice %6 {offsets = [0, 80], sizes = [8, 8], strides = [1, 1]} : vector<8x96xf32> to vector<8x8xf32>
    %cst_16 = arith.constant dense<0.000000e+00> : vector<8x8xf32>
    %44 = tpu.matmul %41, %42, %cst_16 {dimension_numbers = #tpu.dot_dimension_numbers<[1], [1], [0], [0], [0, 0, 1, 0], [], []>} : vector<8x8xf32>, vector<8x8xf32>, vector<8x8xf32> -> vector<8x8xf32>
    %cst_17 = arith.constant 0.353553385 : f32
    %45 = vector.broadcast %cst_17 : f32 to vector<8x8xf32>
    %46 = arith.mulf %44, %45 : vector<8x8xf32>
    %cst_18 = arith.constant dense<0xFF800000> : vector<8xf32>
    %47 = vector.multi_reduction <maximumf>, %46, %cst_18 [1] : vector<8x8xf32> to vector<8xf32>
    %48 = vector.shape_cast %47 : vector<8xf32> to vector<8x1xf32>
    %49 = vector.broadcast %48 : vector<8x1xf32> to vector<8x8xf32>
    %50 = arith.subf %46, %49 : vector<8x8xf32>
    %51 = math.exp %50 : vector<8x8xf32>
    %cst_19 = arith.constant dense<0.000000e+00> : vector<8xf32>
    %52 = vector.multi_reduction <add>, %51, %cst_19 [1] : vector<8x8xf32> to vector<8xf32>
    %53 = vector.shape_cast %52 : vector<8xf32> to vector<8x1xf32>
    %54 = tpu.reciprocal %53 {approx = true} : vector<8x1xf32> -> vector<8x1xf32>
    %55 = vector.broadcast %54 : vector<8x1xf32> to vector<8x8xf32>
    %56 = arith.mulf %51, %55 : vector<8x8xf32>
    %cst_20 = arith.constant dense<0.000000e+00> : vector<8x8xf32>
    %57 = tpu.matmul %56, %43, %cst_20 {dimension_numbers = #tpu.dot_dimension_numbers<[1], [0], [0], [1], [0, 0, 1, 1], [], []>} : vector<8x8xf32>, vector<8x8xf32>, vector<8x8xf32> -> vector<8x8xf32>
    %58 = vector.extract_strided_slice %6 {offsets = [0, 24], sizes = [8, 8], strides = [1, 1]} : vector<8x96xf32> to vector<8x8xf32>
    %59 = vector.extract_strided_slice %6 {offsets = [0, 56], sizes = [8, 8], strides = [1, 1]} : vector<8x96xf32> to vector<8x8xf32>
    %60 = vector.extract_strided_slice %6 {offsets = [0, 88], sizes = [8, 8], strides = [1, 1]} : vector<8x96xf32> to vector<8x8xf32>
    %cst_21 = arith.constant dense<0.000000e+00> : vector<8x8xf32>
    %61 = tpu.matmul %58, %59, %cst_21 {dimension_numbers = #tpu.dot_dimension_numbers<[1], [1], [0], [0], [0, 0, 1, 0], [], []>} : vector<8x8xf32>, vector<8x8xf32>, vector<8x8xf32> -> vector<8x8xf32>
    %cst_22 = arith.constant 0.353553385 : f32
    %62 = vector.broadcast %cst_22 : f32 to vector<8x8xf32>
    %63 = arith.mulf %61, %62 : vector<8x8xf32>
    %cst_23 = arith.constant dense<0xFF800000> : vector<8xf32>
    %64 = vector.multi_reduction <maximumf>, %63, %cst_23 [1] : vector<8x8xf32> to vector<8xf32>
    %65 = vector.shape_cast %64 : vector<8xf32> to vector<8x1xf32>
    %66 = vector.broadcast %65 : vector<8x1xf32> to vector<8x8xf32>
    %67 = arith.subf %63, %66 : vector<8x8xf32>
    %68 = math.exp %67 : vector<8x8xf32>
    %cst_24 = arith.constant dense<0.000000e+00> : vector<8xf32>
    %69 = vector.multi_reduction <add>, %68, %cst_24 [1] : vector<8x8xf32> to vector<8xf32>
    %70 = vector.shape_cast %69 : vector<8xf32> to vector<8x1xf32>
    %71 = tpu.reciprocal %70 {approx = true} : vector<8x1xf32> -> vector<8x1xf32>
    %72 = vector.broadcast %71 : vector<8x1xf32> to vector<8x8xf32>
    %73 = arith.mulf %68, %72 : vector<8x8xf32>
    %cst_25 = arith.constant dense<0.000000e+00> : vector<8x8xf32>
    %74 = tpu.matmul %73, %60, %cst_25 {dimension_numbers = #tpu.dot_dimension_numbers<[1], [0], [0], [1], [0, 0, 1, 1], [], []>} : vector<8x8xf32>, vector<8x8xf32>, vector<8x8xf32> -> vector<8x8xf32>
    %75 = tpu.concatenate %23, %40, %57, %74 in 1 : vector<8x8xf32>, vector<8x8xf32>, vector<8x8xf32>, vector<8x8xf32> -> vector<8x32xf32>
    %c0_26 = arith.constant 0 : index
    %c0_27 = arith.constant 0 : index
    %76 = vector.load %arg4[%c0_26, %c0_27] : memref<32x32xf32, #tpu.memory_space<vmem>>, vector<32x32xf32>
    %cst_28 = arith.constant dense<0.000000e+00> : vector<8x32xf32>
    %77 = tpu.matmul %75, %76, %cst_28 {dimension_numbers = #tpu.dot_dimension_numbers<[1], [0], [0], [1], [0, 0, 1, 1], [], []>} : vector<8x32xf32>, vector<32x32xf32>, vector<8x32xf32> -> vector<8x32xf32>
    %c0_29 = arith.constant 0 : index
    %c0_30 = arith.constant 0 : index
    %78 = vector.load %arg5[%c0_29, %c0_30] : memref<1x32xf32, #tpu.memory_space<vmem>>, vector<1x32xf32>
    %79 = vector.broadcast %78 : vector<1x32xf32> to vector<8x32xf32>
    %80 = arith.addf %77, %79 : vector<8x32xf32>
    %81 = arith.addf %1, %80 : vector<8x32xf32>
    %c0_31 = arith.constant 0 : index
    %c0_32 = arith.constant 0 : index
    %82 = vector.load %arg6[%c0_31, %c0_32] : memref<1x32xf32, #tpu.memory_space<vmem>>, vector<1x32xf32>
    %c0_33 = arith.constant 0 : index
    %c0_34 = arith.constant 0 : index
    %83 = vector.load %arg7[%c0_33, %c0_34] : memref<1x32xf32, #tpu.memory_space<vmem>>, vector<1x32xf32>
    %cst_35 = arith.constant dense<0.000000e+00> : vector<8xf32>
    %84 = vector.multi_reduction <add>, %81, %cst_35 [1] : vector<8x32xf32> to vector<8xf32>
    %85 = vector.shape_cast %84 : vector<8xf32> to vector<8x1xf32>
    %cst_36 = arith.constant 3.200000e+01 : f32
    %86 = vector.broadcast %cst_36 : f32 to vector<8x1xf32>
    %87 = arith.divf %85, %86 : vector<8x1xf32>
    %88 = vector.broadcast %87 : vector<8x1xf32> to vector<8x32xf32>
    %89 = arith.subf %81, %88 : vector<8x32xf32>
    %90 = arith.mulf %89, %89 : vector<8x32xf32>
    %cst_37 = arith.constant dense<0.000000e+00> : vector<8xf32>
    %91 = vector.multi_reduction <add>, %90, %cst_37 [1] : vector<8x32xf32> to vector<8xf32>
    %92 = vector.shape_cast %91 : vector<8xf32> to vector<8x1xf32>
    %cst_38 = arith.constant 3.200000e+01 : f32
    %93 = vector.broadcast %cst_38 : f32 to vector<8x1xf32>
    %94 = arith.divf %92, %93 : vector<8x1xf32>
    %cst_39 = arith.constant 9.99999974E-6 : f32
    %95 = vector.broadcast %cst_39 : f32 to vector<8x1xf32>
    %96 = arith.addf %94, %95 : vector<8x1xf32>
    %97 = math.rsqrt %96 : vector<8x1xf32>
    %98 = vector.broadcast %97 : vector<8x1xf32> to vector<8x32xf32>
    %99 = arith.mulf %89, %98 : vector<8x32xf32>
    %100 = vector.broadcast %82 : vector<1x32xf32> to vector<8x32xf32>
    %101 = arith.mulf %99, %100 : vector<8x32xf32>
    %102 = vector.broadcast %83 : vector<1x32xf32> to vector<8x32xf32>
    %103 = arith.addf %101, %102 : vector<8x32xf32>
    %c0_40 = arith.constant 0 : index
    %c0_41 = arith.constant 0 : index
    %c0_42 = arith.constant 0 : index
    %104 = vector.load %arg10[%c0_40, %c0_41, %c0_42] : memref<1x8x32xf32, #tpu.memory_space<vmem>>, vector<1x8x32xf32>
    %105 = vector.shape_cast %104 : vector<1x8x32xf32> to vector<8x32xf32>
    %106 = vector.shape_cast %103 : vector<8x32xf32> to vector<1x8x32xf32>
    tpu.vector_store %arg10[%c0_40, %c0_41, %c0_42], %106 {strides = array<i32>} : memref<1x8x32xf32, #tpu.memory_space<vmem>>, vector<1x8x32xf32>,
    %c0_43 = arith.constant 0 : index
    %c0_44 = arith.constant 0 : index
    %107 = vector.load %arg8[%c0_43, %c0_44] : memref<32x128xf32, #tpu.memory_space<vmem>>, vector<32x128xf32>
    %cst_45 = arith.constant dense<0.000000e+00> : vector<8x128xf32>
    %108 = tpu.matmul %103, %107, %cst_45 {dimension_numbers = #tpu.dot_dimension_numbers<[1], [0], [0], [1], [0, 0, 1, 1], [], []>} : vector<8x32xf32>, vector<32x128xf32>, vector<8x128xf32> -> vector<8x128xf32>
    %c0_46 = arith.constant 0 : index
    %c0_47 = arith.constant 0 : index
    %109 = vector.load %arg9[%c0_46, %c0_47] : memref<128x32xf32, #tpu.memory_space<vmem>>, vector<128x32xf32>
    %cst_48 = arith.constant dense<0.000000e+00> : vector<8x32xf32>
    %110 = tpu.matmul %108, %109, %cst_48 {dimension_numbers = #tpu.dot_dimension_numbers<[1], [0], [0], [1], [0, 0, 1, 1], [], []>} : vector<8x128xf32>, vector<128x32xf32>, vector<8x32xf32> -> vector<8x32xf32>
    %c0_49 = arith.constant 0 : index
    %c0_50 = arith.constant 0 : index
    %c0_51 = arith.constant 0 : index
    %111 = vector.load %arg11[%c0_49, %c0_50, %c0_51] : memref<1x8x32xf32, #tpu.memory_space<vmem>>, vector<1x8x32xf32>
    %112 = vector.shape_cast %111 : vector<1x8x32xf32> to vector<8x32xf32>
    %113 = vector.shape_cast %110 : vector<8x32xf32> to vector<1x8x32xf32>
    tpu.vector_store %arg11[%c0_49, %c0_50, %c0_51], %113 {strides = array<i32>} : memref<1x8x32xf32, #tpu.memory_space<vmem>>, vector<1x8x32xf32>,
    return
  }
  func.func @transform_0(%arg0: i32) -> (i32, i32, i32) {
    %c0_i32 = arith.constant 0 : i32
    %c0_i32_0 = arith.constant 0 : i32
    %c0_i32_1 = arith.constant 0 : i32
    return %arg0, %c0_i32, %c0_i32_0 : i32, i32, i32
  }
  func.func @transform_1(%arg0: i32) -> (i32, i32) {
    %c0_i32 = arith.constant 0 : i32
    %c0_i32_0 = arith.constant 0 : i32
    %c0_i32_1 = arith.constant 0 : i32
    return %c0_i32, %c0_i32_0 : i32, i32
  }
  func.func @transform_2(%arg0: i32) -> (i32, i32) {
    %c0_i32 = arith.constant 0 : i32
    %c0_i32_0 = arith.constant 0 : i32
    %c0_i32_1 = arith.constant 0 : i32
    return %c0_i32, %c0_i32_0 : i32, i32
  }
  func.func @transform_3(%arg0: i32) -> (i32, i32) {
    %c0_i32 = arith.constant 0 : i32
    %c0_i32_0 = arith.constant 0 : i32
    %c0_i32_1 = arith.constant 0 : i32
    return %c0_i32, %c0_i32_0 : i32, i32
  }
  func.func @transform_4(%arg0: i32) -> (i32, i32) {
    %c0_i32 = arith.constant 0 : i32
    %c0_i32_0 = arith.constant 0 : i32
    %c0_i32_1 = arith.constant 0 : i32
    return %c0_i32, %c0_i32_0 : i32, i32
  }
  func.func @transform_5(%arg0: i32) -> (i32, i32) {
    %c0_i32 = arith.constant 0 : i32
    %c0_i32_0 = arith.constant 0 : i32
    %c0_i32_1 = arith.constant 0 : i32
    return %c0_i32, %c0_i32_0 : i32, i32
  }
  func.func @transform_6(%arg0: i32) -> (i32, i32) {
    %c0_i32 = arith.constant 0 : i32
    %c0_i32_0 = arith.constant 0 : i32
    %c0_i32_1 = arith.constant 0 : i32
    return %c0_i32, %c0_i32_0 : i32, i32
  }
  func.func @transform_7(%arg0: i32) -> (i32, i32) {
    %c0_i32 = arith.constant 0 : i32
    %c0_i32_0 = arith.constant 0 : i32
    %c0_i32_1 = arith.constant 0 : i32
    return %c0_i32, %c0_i32_0 : i32, i32
  }
  func.func @transform_8(%arg0: i32) -> (i32, i32) {
    %c0_i32 = arith.constant 0 : i32
    %c0_i32_0 = arith.constant 0 : i32
    %c0_i32_1 = arith.constant 0 : i32
    return %c0_i32, %c0_i32_0 : i32, i32
  }
  func.func @transform_9(%arg0: i32) -> (i32, i32, i32) {
    %c0_i32 = arith.constant 0 : i32
    %c0_i32_0 = arith.constant 0 : i32
    %c0_i32_1 = arith.constant 0 : i32
    return %arg0, %c0_i32, %c0_i32_0 : i32, i32, i32
  }
  func.func @transform_10(%arg0: i32) -> (i32, i32, i32) {
    %c0_i32 = arith.constant 0 : i32
    %c0_i32_0 = arith.constant 0 : i32
    %c0_i32_1 = arith.constant 0 : i32
    return %arg0, %c0_i32, %c0_i32_0 : i32, i32, i32
  }
}

module attributes {stable_mosaic.version = 11 : i64} {
  func.func @_peer_combine_kernel(%arg0: i32, %arg1: memref<16x1x32xf32, #tpu.memory_space<vmem>>, %arg2: memref<16x16x32xf32, #tpu.memory_space<vmem>>, %arg3: memref<16x1x16xf32, #tpu.memory_space<vmem>>, %arg4: memref<16x16x32xf32, #tpu.memory_space<vmem>>, %arg5: memref<16x1x32xf32, #tpu.memory_space<vmem>>) attributes {dimension_semantics = [#tpu.dimension_semantics<parallel>], iteration_bounds = array<i64: 1>, scalar_prefetch = 0 : i64, scratch_operands = 0 : i64, tpu.core_type = #tpu.core_type<tc>, window_params = [{transform_indices = @transform_0, window_bounds = array<i64: 16, 1, 32>}, {transform_indices = @transform_1, window_bounds = array<i64: 16, 16, 32>}, {transform_indices = @transform_2, window_bounds = array<i64: 16, 1, 16>}, {transform_indices = @transform_3, window_bounds = array<i64: 16, 16, 32>}, {transform_indices = @transform_4, window_bounds = array<i64: 16, 1, 32>}]} {
    %c0 = arith.constant 0 : index
    %c0_0 = arith.constant 0 : index
    %c0_1 = arith.constant 0 : index
    %0 = vector.load %arg1[%c0, %c0_0, %c0_1] : memref<16x1x32xf32, #tpu.memory_space<vmem>>, vector<16x1x32xf32>
    %c0_2 = arith.constant 0 : index
    %c0_3 = arith.constant 0 : index
    %c0_4 = arith.constant 0 : index
    %1 = vector.load %arg2[%c0_2, %c0_3, %c0_4] : memref<16x16x32xf32, #tpu.memory_space<vmem>>, vector<16x16x32xf32>
    %c0_5 = arith.constant 0 : index
    %c0_6 = arith.constant 0 : index
    %c0_7 = arith.constant 0 : index
    %2 = vector.load %arg3[%c0_5, %c0_6, %c0_7] : memref<16x1x16xf32, #tpu.memory_space<vmem>>, vector<16x1x16xf32>
    %c0_8 = arith.constant 0 : index
    %c0_9 = arith.constant 0 : index
    %c0_10 = arith.constant 0 : index
    %3 = vector.load %arg4[%c0_8, %c0_9, %c0_10] : memref<16x16x32xf32, #tpu.memory_space<vmem>>, vector<16x16x32xf32>
    "tpu.trace_start"() <{level = 10 : i32, message = "rqd,rkd->rqk"}> : () -> ()
    %cst = arith.constant dense<0.000000e+00> : vector<16x1x16xf32>
    %4 = tpu.matmul %0, %1, %cst {dimension_numbers = #tpu.dot_dimension_numbers<[2], [2], [1], [1], [0, 0, 0, 1, 1, 1], [0], [0]>} : vector<16x1x32xf32>, vector<16x16x32xf32>, vector<16x1x16xf32> -> vector<16x1x16xf32>
    "tpu.trace_stop"() : () -> ()
    %cst_11 = arith.constant 5.000000e-01 : f32
    %5 = vector.broadcast %cst_11 : f32 to vector<16x1x16xf32>
    %6 = arith.mulf %5, %4 : vector<16x1x16xf32>
    %cst_12 = arith.constant 0.707106769 : f32
    %7 = vector.broadcast %cst_12 : f32 to vector<16x1x16xf32>
    %8 = arith.mulf %4, %7 : vector<16x1x16xf32>
    %9 = math.erf %8 : vector<16x1x16xf32>
    %cst_13 = arith.constant 1.000000e+00 : f32
    %10 = vector.broadcast %cst_13 : f32 to vector<16x1x16xf32>
    %11 = arith.addf %10, %9 : vector<16x1x16xf32>
    %12 = arith.mulf %6, %11 : vector<16x1x16xf32>
    %13 = vector.extract_strided_slice %2 {offsets = [0, 0, 0], sizes = [16, 1, 4], strides = [1, 1, 1]} : vector<16x1x16xf32> to vector<16x1x4xf32>
    %cst_14 = arith.constant dense<0xFF800000> : vector<16x1xf32>
    %14 = vector.multi_reduction <maximumf>, %13, %cst_14 [2] : vector<16x1x4xf32> to vector<16x1xf32>
    %15 = vector.shape_cast %14 : vector<16x1xf32> to vector<16x1x1xf32>
    %16 = vector.broadcast %15 : vector<16x1x1xf32> to vector<16x1x4xf32>
    %17 = arith.subf %13, %16 : vector<16x1x4xf32>
    %18 = math.exp %17 : vector<16x1x4xf32>
    %cst_15 = arith.constant dense<0.000000e+00> : vector<16x1xf32>
    %19 = vector.multi_reduction <add>, %18, %cst_15 [2] : vector<16x1x4xf32> to vector<16x1xf32>
    %20 = vector.shape_cast %19 : vector<16x1xf32> to vector<16x1x1xf32>
    %21 = tpu.reciprocal %20 {approx = true} : vector<16x1x1xf32> -> vector<16x1x1xf32>
    %22 = vector.broadcast %21 : vector<16x1x1xf32> to vector<16x1x4xf32>
    %23 = arith.mulf %18, %22 : vector<16x1x4xf32>
    %24 = vector.extract_strided_slice %2 {offsets = [0, 0, 4], sizes = [16, 1, 4], strides = [1, 1, 1]} : vector<16x1x16xf32> to vector<16x1x4xf32>
    %cst_16 = arith.constant dense<0xFF800000> : vector<16x1xf32>
    %25 = vector.multi_reduction <maximumf>, %24, %cst_16 [2] : vector<16x1x4xf32> to vector<16x1xf32>
    %26 = vector.shape_cast %25 : vector<16x1xf32> to vector<16x1x1xf32>
    %27 = vector.broadcast %26 : vector<16x1x1xf32> to vector<16x1x4xf32>
    %28 = arith.subf %24, %27 : vector<16x1x4xf32>
    %29 = math.exp %28 : vector<16x1x4xf32>
    %cst_17 = arith.constant dense<0.000000e+00> : vector<16x1xf32>
    %30 = vector.multi_reduction <add>, %29, %cst_17 [2] : vector<16x1x4xf32> to vector<16x1xf32>
    %31 = vector.shape_cast %30 : vector<16x1xf32> to vector<16x1x1xf32>
    %32 = tpu.reciprocal %31 {approx = true} : vector<16x1x1xf32> -> vector<16x1x1xf32>
    %33 = vector.broadcast %32 : vector<16x1x1xf32> to vector<16x1x4xf32>
    %34 = arith.mulf %29, %33 : vector<16x1x4xf32>
    %35 = vector.extract_strided_slice %2 {offsets = [0, 0, 8], sizes = [16, 1, 4], strides = [1, 1, 1]} : vector<16x1x16xf32> to vector<16x1x4xf32>
    %cst_18 = arith.constant dense<0xFF800000> : vector<16x1xf32>
    %36 = vector.multi_reduction <maximumf>, %35, %cst_18 [2] : vector<16x1x4xf32> to vector<16x1xf32>
    %37 = vector.shape_cast %36 : vector<16x1xf32> to vector<16x1x1xf32>
    %38 = vector.broadcast %37 : vector<16x1x1xf32> to vector<16x1x4xf32>
    %39 = arith.subf %35, %38 : vector<16x1x4xf32>
    %40 = math.exp %39 : vector<16x1x4xf32>
    %cst_19 = arith.constant dense<0.000000e+00> : vector<16x1xf32>
    %41 = vector.multi_reduction <add>, %40, %cst_19 [2] : vector<16x1x4xf32> to vector<16x1xf32>
    %42 = vector.shape_cast %41 : vector<16x1xf32> to vector<16x1x1xf32>
    %43 = tpu.reciprocal %42 {approx = true} : vector<16x1x1xf32> -> vector<16x1x1xf32>
    %44 = vector.broadcast %43 : vector<16x1x1xf32> to vector<16x1x4xf32>
    %45 = arith.mulf %40, %44 : vector<16x1x4xf32>
    %46 = vector.extract_strided_slice %2 {offsets = [0, 0, 12], sizes = [16, 1, 4], strides = [1, 1, 1]} : vector<16x1x16xf32> to vector<16x1x4xf32>
    %cst_20 = arith.constant dense<0xFF800000> : vector<16x1xf32>
    %47 = vector.multi_reduction <maximumf>, %46, %cst_20 [2] : vector<16x1x4xf32> to vector<16x1xf32>
    %48 = vector.shape_cast %47 : vector<16x1xf32> to vector<16x1x1xf32>
    %49 = vector.broadcast %48 : vector<16x1x1xf32> to vector<16x1x4xf32>
    %50 = arith.subf %46, %49 : vector<16x1x4xf32>
    %51 = math.exp %50 : vector<16x1x4xf32>
    %cst_21 = arith.constant dense<0.000000e+00> : vector<16x1xf32>
    %52 = vector.multi_reduction <add>, %51, %cst_21 [2] : vector<16x1x4xf32> to vector<16x1xf32>
    %53 = vector.shape_cast %52 : vector<16x1xf32> to vector<16x1x1xf32>
    %54 = tpu.reciprocal %53 {approx = true} : vector<16x1x1xf32> -> vector<16x1x1xf32>
    %55 = vector.broadcast %54 : vector<16x1x1xf32> to vector<16x1x4xf32>
    %56 = arith.mulf %51, %55 : vector<16x1x4xf32>
    %57 = tpu.concatenate %23, %34, %45, %56 in 2 : vector<16x1x4xf32>, vector<16x1x4xf32>, vector<16x1x4xf32>, vector<16x1x4xf32> -> vector<16x1x16xf32>
    %58 = arith.mulf %12, %57 : vector<16x1x16xf32>
    "tpu.trace_start"() <{level = 10 : i32, message = "rqk,rkd->rqd"}> : () -> ()
    %cst_22 = arith.constant dense<0.000000e+00> : vector<16x1x32xf32>
    %59 = tpu.matmul %58, %3, %cst_22 {dimension_numbers = #tpu.dot_dimension_numbers<[2], [1], [1], [2], [0, 0, 0, 1, 1, 2], [0], [0]>} : vector<16x1x16xf32>, vector<16x16x32xf32>, vector<16x1x32xf32> -> vector<16x1x32xf32>
    "tpu.trace_stop"() : () -> ()
    %cst_23 = arith.constant 5.000000e-01 : f32
    %60 = vector.broadcast %cst_23 : f32 to vector<16x1x32xf32>
    %61 = arith.mulf %60, %59 : vector<16x1x32xf32>
    %cst_24 = arith.constant 0.707106769 : f32
    %62 = vector.broadcast %cst_24 : f32 to vector<16x1x32xf32>
    %63 = arith.mulf %59, %62 : vector<16x1x32xf32>
    %64 = math.erf %63 : vector<16x1x32xf32>
    %cst_25 = arith.constant 1.000000e+00 : f32
    %65 = vector.broadcast %cst_25 : f32 to vector<16x1x32xf32>
    %66 = arith.addf %65, %64 : vector<16x1x32xf32>
    %67 = arith.mulf %61, %66 : vector<16x1x32xf32>
    %c0_26 = arith.constant 0 : index
    %c0_27 = arith.constant 0 : index
    %c0_28 = arith.constant 0 : index
    %68 = vector.load %arg5[%c0_26, %c0_27, %c0_28] : memref<16x1x32xf32, #tpu.memory_space<vmem>>, vector<16x1x32xf32>
    tpu.vector_store %arg5[%c0_26, %c0_27, %c0_28], %67 {strides = array<i32>} : memref<16x1x32xf32, #tpu.memory_space<vmem>>, vector<16x1x32xf32>,
    return
  }
  func.func @transform_0(%arg0: i32) -> (i32, i32, i32) {
    %c0_i32 = arith.constant 0 : i32
    %c0_i32_0 = arith.constant 0 : i32
    %c0_i32_1 = arith.constant 0 : i32
    return %arg0, %c0_i32, %c0_i32_0 : i32, i32, i32
  }
  func.func @transform_1(%arg0: i32) -> (i32, i32, i32) {
    %c0_i32 = arith.constant 0 : i32
    %c0_i32_0 = arith.constant 0 : i32
    %c0_i32_1 = arith.constant 0 : i32
    return %arg0, %c0_i32, %c0_i32_0 : i32, i32, i32
  }
  func.func @transform_2(%arg0: i32) -> (i32, i32, i32) {
    %c0_i32 = arith.constant 0 : i32
    %c0_i32_0 = arith.constant 0 : i32
    %c0_i32_1 = arith.constant 0 : i32
    return %arg0, %c0_i32, %c0_i32_0 : i32, i32, i32
  }
  func.func @transform_3(%arg0: i32) -> (i32, i32, i32) {
    %c0_i32 = arith.constant 0 : i32
    %c0_i32_0 = arith.constant 0 : i32
    %c0_i32_1 = arith.constant 0 : i32
    return %arg0, %c0_i32, %c0_i32_0 : i32, i32, i32
  }
  func.func @transform_4(%arg0: i32) -> (i32, i32, i32) {
    %c0_i32 = arith.constant 0 : i32
    %c0_i32_0 = arith.constant 0 : i32
    %c0_i32_1 = arith.constant 0 : i32
    return %arg0, %c0_i32, %c0_i32_0 : i32, i32, i32
  }
}

module attributes {stable_mosaic.version = 11 : i64} {
  func.func @_peer_sim_kernel(%arg0: memref<16x32xf32, #tpu.memory_space<vmem>>, %arg1: memref<32x128xf32, #tpu.memory_space<vmem>>, %arg2: memref<128x32xf32, #tpu.memory_space<vmem>>, %arg3: memref<16x32xf32, #tpu.memory_space<vmem>>) attributes {dimension_semantics = [], scalar_prefetch = 0 : i64, scratch_operands = 0 : i64, tpu.core_type = #tpu.core_type<tc>} {
    %c0 = arith.constant 0 : index
    %c0_0 = arith.constant 0 : index
    %0 = vector.load %arg0[%c0, %c0_0] : memref<16x32xf32, #tpu.memory_space<vmem>>, vector<16x32xf32>
    %c0_1 = arith.constant 0 : index
    %c0_2 = arith.constant 0 : index
    %1 = vector.load %arg1[%c0_1, %c0_2] : memref<32x128xf32, #tpu.memory_space<vmem>>, vector<32x128xf32>
    %cst = arith.constant dense<0.000000e+00> : vector<16x128xf32>
    %2 = tpu.matmul %0, %1, %cst {dimension_numbers = #tpu.dot_dimension_numbers<[1], [0], [0], [1], [0, 0, 1, 1], [], []>} : vector<16x32xf32>, vector<32x128xf32>, vector<16x128xf32> -> vector<16x128xf32>
    %c0_3 = arith.constant 0 : index
    %c0_4 = arith.constant 0 : index
    %3 = vector.load %arg2[%c0_3, %c0_4] : memref<128x32xf32, #tpu.memory_space<vmem>>, vector<128x32xf32>
    %cst_5 = arith.constant dense<0.000000e+00> : vector<16x32xf32>
    %4 = tpu.matmul %2, %3, %cst_5 {dimension_numbers = #tpu.dot_dimension_numbers<[1], [0], [0], [1], [0, 0, 1, 1], [], []>} : vector<16x128xf32>, vector<128x32xf32>, vector<16x32xf32> -> vector<16x32xf32>
    %c0_6 = arith.constant 0 : index
    %c0_7 = arith.constant 0 : index
    %5 = vector.load %arg3[%c0_6, %c0_7] : memref<16x32xf32, #tpu.memory_space<vmem>>, vector<16x32xf32>
    tpu.vector_store %arg3[%c0_6, %c0_7], %4 {strides = array<i32>} : memref<16x32xf32, #tpu.memory_space<vmem>>, vector<16x32xf32>,
    return
  }
}

module attributes {stable_mosaic.version = 11 : i64} {
  func.func @_peer_combine_res_ln_kernel(%arg0: i32, %arg1: memref<16x1x32xf32, #tpu.memory_space<vmem>>, %arg2: memref<16x16x32xf32, #tpu.memory_space<vmem>>, %arg3: memref<16x1x16xf32, #tpu.memory_space<vmem>>, %arg4: memref<16x16x32xf32, #tpu.memory_space<vmem>>, %arg5: memref<16x1x32xf32, #tpu.memory_space<vmem>>, %arg6: memref<1x1x32xf32, #tpu.memory_space<vmem>>, %arg7: memref<1x1x32xf32, #tpu.memory_space<vmem>>, %arg8: memref<16x1x32xf32, #tpu.memory_space<vmem>>) attributes {dimension_semantics = [#tpu.dimension_semantics<parallel>], iteration_bounds = array<i64: 1>, scalar_prefetch = 0 : i64, scratch_operands = 0 : i64, tpu.core_type = #tpu.core_type<tc>, window_params = [{transform_indices = @transform_0, window_bounds = array<i64: 16, 1, 32>}, {transform_indices = @transform_1, window_bounds = array<i64: 16, 16, 32>}, {transform_indices = @transform_2, window_bounds = array<i64: 16, 1, 16>}, {transform_indices = @transform_3, window_bounds = array<i64: 16, 16, 32>}, {transform_indices = @transform_4, window_bounds = array<i64: 16, 1, 32>}, {pipeline_mode = #tpu.pipeline_mode<synchronous>, transform_indices = @transform_5, window_bounds = array<i64: 1, 1, 32>}, {pipeline_mode = #tpu.pipeline_mode<synchronous>, transform_indices = @transform_6, window_bounds = array<i64: 1, 1, 32>}, {transform_indices = @transform_7, window_bounds = array<i64: 16, 1, 32>}]} {
    %c0 = arith.constant 0 : index
    %c0_0 = arith.constant 0 : index
    %c0_1 = arith.constant 0 : index
    %0 = vector.load %arg1[%c0, %c0_0, %c0_1] : memref<16x1x32xf32, #tpu.memory_space<vmem>>, vector<16x1x32xf32>
    %c0_2 = arith.constant 0 : index
    %c0_3 = arith.constant 0 : index
    %c0_4 = arith.constant 0 : index
    %1 = vector.load %arg2[%c0_2, %c0_3, %c0_4] : memref<16x16x32xf32, #tpu.memory_space<vmem>>, vector<16x16x32xf32>
    %c0_5 = arith.constant 0 : index
    %c0_6 = arith.constant 0 : index
    %c0_7 = arith.constant 0 : index
    %2 = vector.load %arg3[%c0_5, %c0_6, %c0_7] : memref<16x1x16xf32, #tpu.memory_space<vmem>>, vector<16x1x16xf32>
    %c0_8 = arith.constant 0 : index
    %c0_9 = arith.constant 0 : index
    %c0_10 = arith.constant 0 : index
    %3 = vector.load %arg4[%c0_8, %c0_9, %c0_10] : memref<16x16x32xf32, #tpu.memory_space<vmem>>, vector<16x16x32xf32>
    "tpu.trace_start"() <{level = 10 : i32, message = "rqd,rkd->rqk"}> : () -> ()
    %cst = arith.constant dense<0.000000e+00> : vector<16x1x16xf32>
    %4 = tpu.matmul %0, %1, %cst {dimension_numbers = #tpu.dot_dimension_numbers<[2], [2], [1], [1], [0, 0, 0, 1, 1, 1], [0], [0]>} : vector<16x1x32xf32>, vector<16x16x32xf32>, vector<16x1x16xf32> -> vector<16x1x16xf32>
    "tpu.trace_stop"() : () -> ()
    %cst_11 = arith.constant 5.000000e-01 : f32
    %5 = vector.broadcast %cst_11 : f32 to vector<16x1x16xf32>
    %6 = arith.mulf %5, %4 : vector<16x1x16xf32>
    %cst_12 = arith.constant 0.707106769 : f32
    %7 = vector.broadcast %cst_12 : f32 to vector<16x1x16xf32>
    %8 = arith.mulf %4, %7 : vector<16x1x16xf32>
    %9 = math.erf %8 : vector<16x1x16xf32>
    %cst_13 = arith.constant 1.000000e+00 : f32
    %10 = vector.broadcast %cst_13 : f32 to vector<16x1x16xf32>
    %11 = arith.addf %10, %9 : vector<16x1x16xf32>
    %12 = arith.mulf %6, %11 : vector<16x1x16xf32>
    %13 = vector.extract_strided_slice %2 {offsets = [0, 0, 0], sizes = [16, 1, 4], strides = [1, 1, 1]} : vector<16x1x16xf32> to vector<16x1x4xf32>
    %cst_14 = arith.constant dense<0xFF800000> : vector<16x1xf32>
    %14 = vector.multi_reduction <maximumf>, %13, %cst_14 [2] : vector<16x1x4xf32> to vector<16x1xf32>
    %15 = vector.shape_cast %14 : vector<16x1xf32> to vector<16x1x1xf32>
    %16 = vector.broadcast %15 : vector<16x1x1xf32> to vector<16x1x4xf32>
    %17 = arith.subf %13, %16 : vector<16x1x4xf32>
    %18 = math.exp %17 : vector<16x1x4xf32>
    %cst_15 = arith.constant dense<0.000000e+00> : vector<16x1xf32>
    %19 = vector.multi_reduction <add>, %18, %cst_15 [2] : vector<16x1x4xf32> to vector<16x1xf32>
    %20 = vector.shape_cast %19 : vector<16x1xf32> to vector<16x1x1xf32>
    %21 = tpu.reciprocal %20 {approx = true} : vector<16x1x1xf32> -> vector<16x1x1xf32>
    %22 = vector.broadcast %21 : vector<16x1x1xf32> to vector<16x1x4xf32>
    %23 = arith.mulf %18, %22 : vector<16x1x4xf32>
    %24 = vector.extract_strided_slice %2 {offsets = [0, 0, 4], sizes = [16, 1, 4], strides = [1, 1, 1]} : vector<16x1x16xf32> to vector<16x1x4xf32>
    %cst_16 = arith.constant dense<0xFF800000> : vector<16x1xf32>
    %25 = vector.multi_reduction <maximumf>, %24, %cst_16 [2] : vector<16x1x4xf32> to vector<16x1xf32>
    %26 = vector.shape_cast %25 : vector<16x1xf32> to vector<16x1x1xf32>
    %27 = vector.broadcast %26 : vector<16x1x1xf32> to vector<16x1x4xf32>
    %28 = arith.subf %24, %27 : vector<16x1x4xf32>
    %29 = math.exp %28 : vector<16x1x4xf32>
    %cst_17 = arith.constant dense<0.000000e+00> : vector<16x1xf32>
    %30 = vector.multi_reduction <add>, %29, %cst_17 [2] : vector<16x1x4xf32> to vector<16x1xf32>
    %31 = vector.shape_cast %30 : vector<16x1xf32> to vector<16x1x1xf32>
    %32 = tpu.reciprocal %31 {approx = true} : vector<16x1x1xf32> -> vector<16x1x1xf32>
    %33 = vector.broadcast %32 : vector<16x1x1xf32> to vector<16x1x4xf32>
    %34 = arith.mulf %29, %33 : vector<16x1x4xf32>
    %35 = vector.extract_strided_slice %2 {offsets = [0, 0, 8], sizes = [16, 1, 4], strides = [1, 1, 1]} : vector<16x1x16xf32> to vector<16x1x4xf32>
    %cst_18 = arith.constant dense<0xFF800000> : vector<16x1xf32>
    %36 = vector.multi_reduction <maximumf>, %35, %cst_18 [2] : vector<16x1x4xf32> to vector<16x1xf32>
    %37 = vector.shape_cast %36 : vector<16x1xf32> to vector<16x1x1xf32>
    %38 = vector.broadcast %37 : vector<16x1x1xf32> to vector<16x1x4xf32>
    %39 = arith.subf %35, %38 : vector<16x1x4xf32>
    %40 = math.exp %39 : vector<16x1x4xf32>
    %cst_19 = arith.constant dense<0.000000e+00> : vector<16x1xf32>
    %41 = vector.multi_reduction <add>, %40, %cst_19 [2] : vector<16x1x4xf32> to vector<16x1xf32>
    %42 = vector.shape_cast %41 : vector<16x1xf32> to vector<16x1x1xf32>
    %43 = tpu.reciprocal %42 {approx = true} : vector<16x1x1xf32> -> vector<16x1x1xf32>
    %44 = vector.broadcast %43 : vector<16x1x1xf32> to vector<16x1x4xf32>
    %45 = arith.mulf %40, %44 : vector<16x1x4xf32>
    %46 = vector.extract_strided_slice %2 {offsets = [0, 0, 12], sizes = [16, 1, 4], strides = [1, 1, 1]} : vector<16x1x16xf32> to vector<16x1x4xf32>
    %cst_20 = arith.constant dense<0xFF800000> : vector<16x1xf32>
    %47 = vector.multi_reduction <maximumf>, %46, %cst_20 [2] : vector<16x1x4xf32> to vector<16x1xf32>
    %48 = vector.shape_cast %47 : vector<16x1xf32> to vector<16x1x1xf32>
    %49 = vector.broadcast %48 : vector<16x1x1xf32> to vector<16x1x4xf32>
    %50 = arith.subf %46, %49 : vector<16x1x4xf32>
    %51 = math.exp %50 : vector<16x1x4xf32>
    %cst_21 = arith.constant dense<0.000000e+00> : vector<16x1xf32>
    %52 = vector.multi_reduction <add>, %51, %cst_21 [2] : vector<16x1x4xf32> to vector<16x1xf32>
    %53 = vector.shape_cast %52 : vector<16x1xf32> to vector<16x1x1xf32>
    %54 = tpu.reciprocal %53 {approx = true} : vector<16x1x1xf32> -> vector<16x1x1xf32>
    %55 = vector.broadcast %54 : vector<16x1x1xf32> to vector<16x1x4xf32>
    %56 = arith.mulf %51, %55 : vector<16x1x4xf32>
    %57 = tpu.concatenate %23, %34, %45, %56 in 2 : vector<16x1x4xf32>, vector<16x1x4xf32>, vector<16x1x4xf32>, vector<16x1x4xf32> -> vector<16x1x16xf32>
    %58 = arith.mulf %12, %57 : vector<16x1x16xf32>
    "tpu.trace_start"() <{level = 10 : i32, message = "rqk,rkd->rqd"}> : () -> ()
    %cst_22 = arith.constant dense<0.000000e+00> : vector<16x1x32xf32>
    %59 = tpu.matmul %58, %3, %cst_22 {dimension_numbers = #tpu.dot_dimension_numbers<[2], [1], [1], [2], [0, 0, 0, 1, 1, 2], [0], [0]>} : vector<16x1x16xf32>, vector<16x16x32xf32>, vector<16x1x32xf32> -> vector<16x1x32xf32>
    "tpu.trace_stop"() : () -> ()
    %c0_23 = arith.constant 0 : index
    %c0_24 = arith.constant 0 : index
    %c0_25 = arith.constant 0 : index
    %60 = vector.load %arg5[%c0_23, %c0_24, %c0_25] : memref<16x1x32xf32, #tpu.memory_space<vmem>>, vector<16x1x32xf32>
    %61 = arith.addf %59, %60 : vector<16x1x32xf32>
    %c0_26 = arith.constant 0 : index
    %c0_27 = arith.constant 0 : index
    %c0_28 = arith.constant 0 : index
    %62 = vector.load %arg6[%c0_26, %c0_27, %c0_28] : memref<1x1x32xf32, #tpu.memory_space<vmem>>, vector<1x1x32xf32>
    %c0_29 = arith.constant 0 : index
    %c0_30 = arith.constant 0 : index
    %c0_31 = arith.constant 0 : index
    %63 = vector.load %arg7[%c0_29, %c0_30, %c0_31] : memref<1x1x32xf32, #tpu.memory_space<vmem>>, vector<1x1x32xf32>
    %cst_32 = arith.constant dense<0.000000e+00> : vector<16x1xf32>
    %64 = vector.multi_reduction <add>, %61, %cst_32 [2] : vector<16x1x32xf32> to vector<16x1xf32>
    %65 = vector.shape_cast %64 : vector<16x1xf32> to vector<16x1x1xf32>
    %cst_33 = arith.constant 3.200000e+01 : f32
    %66 = vector.broadcast %cst_33 : f32 to vector<16x1x1xf32>
    %67 = arith.divf %65, %66 : vector<16x1x1xf32>
    %68 = vector.broadcast %67 : vector<16x1x1xf32> to vector<16x1x32xf32>
    %69 = arith.subf %61, %68 : vector<16x1x32xf32>
    %70 = arith.mulf %69, %69 : vector<16x1x32xf32>
    %cst_34 = arith.constant dense<0.000000e+00> : vector<16x1xf32>
    %71 = vector.multi_reduction <add>, %70, %cst_34 [2] : vector<16x1x32xf32> to vector<16x1xf32>
    %72 = vector.shape_cast %71 : vector<16x1xf32> to vector<16x1x1xf32>
    %cst_35 = arith.constant 3.200000e+01 : f32
    %73 = vector.broadcast %cst_35 : f32 to vector<16x1x1xf32>
    %74 = arith.divf %72, %73 : vector<16x1x1xf32>
    %cst_36 = arith.constant 9.99999974E-6 : f32
    %75 = vector.broadcast %cst_36 : f32 to vector<16x1x1xf32>
    %76 = arith.addf %74, %75 : vector<16x1x1xf32>
    %77 = math.rsqrt %76 : vector<16x1x1xf32>
    %78 = vector.broadcast %77 : vector<16x1x1xf32> to vector<16x1x32xf32>
    %79 = arith.mulf %69, %78 : vector<16x1x32xf32>
    %80 = vector.broadcast %62 : vector<1x1x32xf32> to vector<16x1x32xf32>
    %81 = arith.mulf %79, %80 : vector<16x1x32xf32>
    %82 = vector.broadcast %63 : vector<1x1x32xf32> to vector<16x1x32xf32>
    %83 = arith.addf %81, %82 : vector<16x1x32xf32>
    %c0_37 = arith.constant 0 : index
    %c0_38 = arith.constant 0 : index
    %c0_39 = arith.constant 0 : index
    %84 = vector.load %arg8[%c0_37, %c0_38, %c0_39] : memref<16x1x32xf32, #tpu.memory_space<vmem>>, vector<16x1x32xf32>
    tpu.vector_store %arg8[%c0_37, %c0_38, %c0_39], %83 {strides = array<i32>} : memref<16x1x32xf32, #tpu.memory_space<vmem>>, vector<16x1x32xf32>,
    return
  }
  func.func @transform_0(%arg0: i32) -> (i32, i32, i32) {
    %c0_i32 = arith.constant 0 : i32
    %c0_i32_0 = arith.constant 0 : i32
    %c0_i32_1 = arith.constant 0 : i32
    return %arg0, %c0_i32, %c0_i32_0 : i32, i32, i32
  }
  func.func @transform_1(%arg0: i32) -> (i32, i32, i32) {
    %c0_i32 = arith.constant 0 : i32
    %c0_i32_0 = arith.constant 0 : i32
    %c0_i32_1 = arith.constant 0 : i32
    return %arg0, %c0_i32, %c0_i32_0 : i32, i32, i32
  }
  func.func @transform_2(%arg0: i32) -> (i32, i32, i32) {
    %c0_i32 = arith.constant 0 : i32
    %c0_i32_0 = arith.constant 0 : i32
    %c0_i32_1 = arith.constant 0 : i32
    return %arg0, %c0_i32, %c0_i32_0 : i32, i32, i32
  }
  func.func @transform_3(%arg0: i32) -> (i32, i32, i32) {
    %c0_i32 = arith.constant 0 : i32
    %c0_i32_0 = arith.constant 0 : i32
    %c0_i32_1 = arith.constant 0 : i32
    return %arg0, %c0_i32, %c0_i32_0 : i32, i32, i32
  }
  func.func @transform_4(%arg0: i32) -> (i32, i32, i32) {
    %c0_i32 = arith.constant 0 : i32
    %c0_i32_0 = arith.constant 0 : i32
    %c0_i32_1 = arith.constant 0 : i32
    return %arg0, %c0_i32, %c0_i32_0 : i32, i32, i32
  }
  func.func @transform_5(%arg0: i32) -> (i32, i32, i32) {
    %c0_i32 = arith.constant 0 : i32
    %c0_i32_0 = arith.constant 0 : i32
    %c0_i32_1 = arith.constant 0 : i32
    %c0_i32_2 = arith.constant 0 : i32
    return %c0_i32, %c0_i32_0, %c0_i32_1 : i32, i32, i32
  }
  func.func @transform_6(%arg0: i32) -> (i32, i32, i32) {
    %c0_i32 = arith.constant 0 : i32
    %c0_i32_0 = arith.constant 0 : i32
    %c0_i32_1 = arith.constant 0 : i32
    %c0_i32_2 = arith.constant 0 : i32
    return %c0_i32, %c0_i32_0, %c0_i32_1 : i32, i32, i32
  }
  func.func @transform_7(%arg0: i32) -> (i32, i32, i32) {
    %c0_i32 = arith.constant 0 : i32
    %c0_i32_0 = arith.constant 0 : i32
    %c0_i32_1 = arith.constant 0 : i32
    return %arg0, %c0_i32, %c0_i32_0 : i32, i32, i32
  }
}

</mosaic_0001>

<llo_original>
// kernel: transformer_block_forward.4
$region0: #{transformer_block_forward.4}
  #allocation0 [shape = 'u32[]', space=smem, size = 0x4, offset = 0x4, fixed_abs, tag = 'smem constant byte address 0x4 - core index']
  #allocation1 [shape = 'u32[144,128]{1,0:T(1,128)}', space=vmem, size = 0x12000, scoped, tag = 'internal scratch']
  %s0 = inlined_call_operand.vmem [shape: f32[2,8,32], index: 0, kind: input, shape index: {}]
  %s1 = inlined_call_operand.vmem [shape: f32[32,96], index: 1, kind: input, shape index: {}]
  %s2 = inlined_call_operand.vmem [shape: f32[1,96], index: 2, kind: input, shape index: {}]
  %s3 = inlined_call_operand.vmem [shape: f32[32,32], index: 3, kind: input, shape index: {}]
  %s4 = inlined_call_operand.vmem [shape: f32[1,32], index: 4, kind: input, shape index: {}]
  %s5 = inlined_call_operand.vmem [shape: f32[1,32], index: 5, kind: input, shape index: {}]
  %s6 = inlined_call_operand.vmem [shape: f32[1,32], index: 6, kind: input, shape index: {}]
  %s7 = inlined_call_operand.vmem [shape: f32[32,128], index: 7, kind: input, shape index: {}]
  %s8 = inlined_call_operand.vmem [shape: f32[128,32], index: 8, kind: input, shape index: {}]
  %s9 = inlined_call_operand.vmem [shape: f32[2,8,32], index: 9, kind: output, shape index: {0}]
  %s10 = inlined_call_operand.vmem [shape: f32[2,8,32], index: 10, kind: output, shape index: {1}]
  %11 = xla_tuple %s9, %s10
  %s12 = sld [smem:[#allocation0]]
  $region77: #{transformer_block_forward.4} parent=0
    _
  %s14 = ssub.s32 1, %s12
  %s15 = scalar_select 0, %s14, %s12
  loop: start=0, step=1, limit=4
  $region2: #{transformer_block_forward.4} parent=0 // loop_pre_header
    _
  $region3: #{transformer_block_forward.4} parent=0 // loop_header
    %s17 = sphi 0, %s21
    %p18 = scmp.ge.s32.totalorder %s17, 4
    %s27 = sphi 0, %s29
    %s30 = sphi 0, %s27
    %s31 = sphi 0, %s30
    %s47 = sphi 0, %s31
    %s51 = sphi 0, %s51
    %s53 = sphi 0, %s51
    %s54 = sphi 0, %s53
    %s68 = sphi 0, %s54
    %s72 = sphi 0, %s72
    %s74 = sphi 0, %s72
    %s75 = sphi 0, %s74
    %s89 = sphi 0, %s75
    %s93 = sphi 0, %s93
    %s95 = sphi 0, %s93
    %s96 = sphi 0, %s95
    %s110 = sphi 0, %s96
    %s114 = sphi 0, %s114
    %s116 = sphi 0, %s114
    %s117 = sphi 0, %s116
    %s131 = sphi 0, %s117
    %s135 = sphi 0, %s135
    %s137 = sphi 0, %s135
    %s138 = sphi 0, %s137
    %s152 = sphi 0, %s138
    %s156 = sphi 0, %s156
    %s158 = sphi 0, %s156
    %s159 = sphi 0, %s158
    %s173 = sphi 0, %s159
    %s177 = sphi 0, %s177
    %s179 = sphi 0, %s177
    %s180 = sphi 0, %s179
    %s194 = sphi 0, %s180
    %s198 = sphi 0, %s198
    %s200 = sphi 0, %s198
    %s201 = sphi 0, %s200
    %s215 = sphi 0, %s201
    %s221 = sphi 0, %s223
    %s224 = sphi 0, %s221
    %s225 = sphi 0, %s224
    %s241 = sphi 0, %s225
    %s247 = sphi 0, %s249
    %s250 = sphi 0, %s247
    %s251 = sphi 0, %s250
    %s267 = sphi 0, %s251
  $region4: #{transformer_block_forward.4} parent=0 // loop_header_branch
    %20 = sbr.rel (%p18) target = $region8
  $region5: #{transformer_block_forward.4} parent=0 // loop_body
    %s22 = ssub.s32 %s17, 1
    %s23 = ssub.s32 %s17, 2
    %s24 = sadd.s32 %s17, 1
    %s25 = ssub.s32 %s17, %s24
    %p26 = scmp.eq.s32.totalorder %s25, 0
    %s28 = sadd.s32 %s27, 1
    %s29 = scalar_select %p26, %s27, %s28
    %p32 = pneg %p26
    %p33 = scmp.eq.s32.totalorder %s17, 1
    %p34 = por %p32, %p33
    %p35 = scmp.ne.s32.totalorder %s27, %s30
    %p36 = scmp.eq.s32.totalorder %s17, 0
    %p37 = por %p35, %p36
    %p38 = scmp.ne.s32.totalorder %s27, %s30
    %p39 = scmp.eq.s32.totalorder %s22, 1
    %p40 = por %p38, %p39
    %p41 = scmp.ne.s32.totalorder %s30, %s31
    %p42 = scmp.eq.s32.totalorder %s22, 0
    %p43 = por %p41, %p42
    %p44 = scmp.ne.s32.totalorder %s30, %s31
    %p45 = scmp.eq.s32.totalorder %s23, 1
    %p46 = por %p44, %p45
    %p48 = scmp.ne.s32.totalorder %s31, %s47
    %p49 = scmp.eq.s32.totalorder %s23, 0
    %p50 = por %p48, %p49
    %s52 = sadd.s32 %s51, 1
    %p55 = scmp.eq.s32.totalorder %s17, 1
    %p56 = scmp.ne.s32.totalorder %s51, %s53
    %p57 = scmp.eq.s32.totalorder %s17, 0
    %p58 = por %p56, %p57
    %p59 = scmp.ne.s32.totalorder %s51, %s53
    %p60 = scmp.eq.s32.totalorder %s22, 1
    %p61 = por %p59, %p60
    %p62 = scmp.ne.s32.totalorder %s53, %s54
    %p63 = scmp.eq.s32.totalorder %s22, 0
    %p64 = por %p62, %p63
    %p65 = scmp.ne.s32.totalorder %s53, %s54
    %p66 = scmp.eq.s32.totalorder %s23, 1
    %p67 = por %p65, %p66
    %p69 = scmp.ne.s32.totalorder %s54, %s68
    %p70 = scmp.eq.s32.totalorder %s23, 0
    %p71 = por %p69, %p70
    %s73 = sadd.s32 %s72, 1
    %p76 = scmp.eq.s32.totalorder %s17, 1
    %p77 = scmp.ne.s32.totalorder %s72, %s74
    %p78 = scmp.eq.s32.totalorder %s17, 0
    %p79 = por %p77, %p78
    %p80 = scmp.ne.s32.totalorder %s72, %s74
    %p81 = scmp.eq.s32.totalorder %s22, 1
    %p82 = por %p80, %p81
    %p83 = scmp.ne.s32.totalorder %s74, %s75
    %p84 = scmp.eq.s32.totalorder %s22, 0
    %p85 = por %p83, %p84
    %p86 = scmp.ne.s32.totalorder %s74, %s75
    %p87 = scmp.eq.s32.totalorder %s23, 1
    %p88 = por %p86, %p87
    %p90 = scmp.ne.s32.totalorder %s75, %s89
    %p91 = scmp.eq.s32.totalorder %s23, 0
    %p92 = por %p90, %p91
    %s94 = sadd.s32 %s93, 1
    %p97 = scmp.eq.s32.totalorder %s17, 1
    %p98 = scmp.ne.s32.totalorder %s93, %s95
    %p99 = scmp.eq.s32.totalorder %s17, 0
    %p100 = por %p98, %p99
    %p101 = scmp.ne.s32.totalorder %s93, %s95
    %p102 = scmp.eq.s32.totalorder %s22, 1
    %p103 = por %p101, %p102
    %p104 = scmp.ne.s32.totalorder %s95, %s96
    %p105 = scmp.eq.s32.totalorder %s22, 0
    %p106 = por %p104, %p105
    %p107 = scmp.ne.s32.totalorder %s95, %s96
    %p108 = scmp.eq.s32.totalorder %s23, 1
    %p109 = por %p107, %p108
    %p111 = scmp.ne.s32.totalorder %s96, %s110
    %p112 = scmp.eq.s32.totalorder %s23, 0
    %p113 = por %p111, %p112
    %s115 = sadd.s32 %s114, 1
    %p118 = scmp.eq.s32.totalorder %s17, 1
    %p119 = scmp.ne.s32.totalorder %s114, %s116
    %p120 = scmp.eq.s32.totalorder %s17, 0
    %p121 = por %p119, %p120
    %p122 = scmp.ne.s32.totalorder %s114, %s116
    %p123 = scmp.eq.s32.totalorder %s22, 1
    %p124 = por %p122, %p123
    %p125 = scmp.ne.s32.totalorder %s116, %s117
    %p126 = scmp.eq.s32.totalorder %s22, 0
    %p127 = por %p125, %p126
    %p128 = scmp.ne.s32.totalorder %s116, %s117
    %p129 = scmp.eq.s32.totalorder %s23, 1
    %p130 = por %p128, %p129
    %p132 = scmp.ne.s32.totalorder %s117, %s131
    %p133 = scmp.eq.s32.totalorder %s23, 0
    %p134 = por %p132, %p133
    %s136 = sadd.s32 %s135, 1
    %p139 = scmp.eq.s32.totalorder %s17, 1
    %p140 = scmp.ne.s32.totalorder %s135, %s137
    %p141 = scmp.eq.s32.totalorder %s17, 0
    %p142 = por %p140, %p141
    %p143 = scmp.ne.s32.totalorder %s135, %s137
    %p144 = scmp.eq.s32.totalorder %s22, 1
    %p145 = por %p143, %p144
    %p146 = scmp.ne.s32.totalorder %s137, %s138
    %p147 = scmp.eq.s32.totalorder %s22, 0
    %p148 = por %p146, %p147
    %p149 = scmp.ne.s32.totalorder %s137, %s138
    %p150 = scmp.eq.s32.totalorder %s23, 1
    %p151 = por %p149, %p150
    %p153 = scmp.ne.s32.totalorder %s138, %s152
    %p154 = scmp.eq.s32.totalorder %s23, 0
    %p155 = por %p153, %p154
    %s157 = sadd.s32 %s156, 1
    %p160 = scmp.eq.s32.totalorder %s17, 1
    %p161 = scmp.ne.s32.totalorder %s156, %s158
    %p162 = scmp.eq.s32.totalorder %s17, 0
    %p163 = por %p161, %p162
    %p164 = scmp.ne.s32.totalorder %s156, %s158
    %p165 = scmp.eq.s32.totalorder %s22, 1
    %p166 = por %p164, %p165
    %p167 = scmp.ne.s32.totalorder %s158, %s159
    %p168 = scmp.eq.s32.totalorder %s22, 0
    %p169 = por %p167, %p168
    %p170 = scmp.ne.s32.totalorder %s158, %s159
    %p171 = scmp.eq.s32.totalorder %s23, 1
    %p172 = por %p170, %p171
    %p174 = scmp.ne.s32.totalorder %s159, %s173
    %p175 = scmp.eq.s32.totalorder %s23, 0
    %p176 = por %p174, %p175
    %s178 = sadd.s32 %s177, 1
    %p181 = scmp.eq.s32.totalorder %s17, 1
    %p182 = scmp.ne.s32.totalorder %s177, %s179
    %p183 = scmp.eq.s32.totalorder %s17, 0
    %p184 = por %p182, %p183
    %p185 = scmp.ne.s32.totalorder %s177, %s179
    %p186 = scmp.eq.s32.totalorder %s22, 1
    %p187 = por %p185, %p186
    %p188 = scmp.ne.s32.totalorder %s179, %s180
    %p189 = scmp.eq.s32.totalorder %s22, 0
    %p190 = por %p188, %p189
    %p191 = scmp.ne.s32.totalorder %s179, %s180
    %p192 = scmp.eq.s32.totalorder %s23, 1
    %p193 = por %p191, %p192
    %p195 = scmp.ne.s32.totalorder %s180, %s194
    %p196 = scmp.eq.s32.totalorder %s23, 0
    %p197 = por %p195, %p196
    %s199 = sadd.s32 %s198, 1
    %p202 = scmp.eq.s32.totalorder %s17, 1
    %p203 = scmp.ne.s32.totalorder %s198, %s200
    %p204 = scmp.eq.s32.totalorder %s17, 0
    %p205 = por %p203, %p204
    %p206 = scmp.ne.s32.totalorder %s198, %s200
    %p207 = scmp.eq.s32.totalorder %s22, 1
    %p208 = por %p206, %p207
    %p209 = scmp.ne.s32.totalorder %s200, %s201
    %p210 = scmp.eq.s32.totalorder %s22, 0
    %p211 = por %p209, %p210
    %p212 = scmp.ne.s32.totalorder %s200, %s201
    %p213 = scmp.eq.s32.totalorder %s23, 1
    %p214 = por %p212, %p213
    %p216 = scmp.ne.s32.totalorder %s201, %s215
    %p217 = scmp.eq.s32.totalorder %s23, 0
    %p218 = por %p216, %p217
    %s219 = ssub.s32 %s17, %s24
    %p220 = scmp.eq.s32.totalorder %s219, 0
    %s222 = sadd.s32 %s221, 1
    %s223 = scalar_select %p220, %s221, %s222
    %p226 = pneg %p220
    %p227 = scmp.eq.s32.totalorder %s17, 1
    %p228 = por %p226, %p227
    %p229 = scmp.ne.s32.totalorder %s221, %s224
    %p230 = scmp.eq.s32.totalorder %s17, 0
    %p231 = por %p229, %p230
    %p232 = scmp.ne.s32.totalorder %s221, %s224
    %p233 = scmp.eq.s32.totalorder %s22, 1
    %p234 = por %p232, %p233
    %p235 = scmp.ne.s32.totalorder %s224, %s225
    %p236 = scmp.eq.s32.totalorder %s22, 0
    %p237 = por %p235, %p236
    %p238 = scmp.ne.s32.totalorder %s224, %s225
    %p239 = scmp.eq.s32.totalorder %s23, 1
    %p240 = por %p238, %p239
    %p242 = scmp.ne.s32.totalorder %s225, %s241
    %p243 = scmp.eq.s32.totalorder %s23, 0
    %p244 = por %p242, %p243
    %s245 = ssub.s32 %s17, %s24
    %p246 = scmp.eq.s32.totalorder %s245, 0
    %s248 = sadd.s32 %s247, 1
    %s249 = scalar_select %p246, %s247, %s248
    %p252 = pneg %p246
    %p253 = scmp.eq.s32.totalorder %s17, 1
    %p254 = por %p252, %p253
    %p255 = scmp.ne.s32.totalorder %s247, %s250
    %p256 = scmp.eq.s32.totalorder %s17, 0
    %p257 = por %p255, %p256
    %p258 = scmp.ne.s32.totalorder %s247, %s250
    %p259 = scmp.eq.s32.totalorder %s22, 1
    %p260 = por %p258, %p259
    %p261 = scmp.ne.s32.totalorder %s250, %s251
    %p262 = scmp.eq.s32.totalorder %s22, 0
    %p263 = por %p261, %p262
    %p264 = scmp.ne.s32.totalorder %s250, %s251
    %p265 = scmp.eq.s32.totalorder %s23, 1
    %p266 = por %p264, %p265
    %p268 = scmp.ne.s32.totalorder %s251, %s267
    %p269 = scmp.eq.s32.totalorder %s23, 0
    %p270 = por %p268, %p269
    %p271 = scmp.le.s32.totalorder 1, %s17
    %p272 = scmp.lt.s32.totalorder %s17, 3
    %p273 = pnand %p271, %p272
    %p274 = pneg %p273
    // Predicated region
    $region9: #{transformer_block_forward.4} parent=5 // pred_check
      _
    $region10: #{transformer_block_forward.4} parent=5 // pred_check_branch
      %276 = sbr.rel (%p273) target = $region12
    $region11: #{transformer_block_forward.4} parent=5 // pred_region
      %s277 = ssub.s32 %s17, 1
      // Predicated region
      $region13: #{transformer_block_forward.4} parent=11 // pred_check
        %p278 = pneg %p64
      $region14: #{transformer_block_forward.4} parent=11 // pred_check_branch
        %280 = sbr.rel (%p278) target = $region16
      $region15: #{transformer_block_forward.4} parent=11 // pred_region
        _
      $region16: #{transformer_block_forward.4} parent=11 // pred_fallthru
        _
      // Predicated region
      $region17: #{transformer_block_forward.4} parent=11 // pred_check
        %p281 = pneg %p85
      $region18: #{transformer_block_forward.4} parent=11 // pred_check_branch
        %283 = sbr.rel (%p281) target = $region20
      $region19: #{transformer_block_forward.4} parent=11 // pred_region
        _
      $region20: #{transformer_block_forward.4} parent=11 // pred_fallthru
        _
      // Predicated region
      $region21: #{transformer_block_forward.4} parent=11 // pred_check
        %p284 = pneg %p106
      $region22: #{transformer_block_forward.4} parent=11 // pred_check_branch
        %286 = sbr.rel (%p284) target = $region24
      $region23: #{transformer_block_forward.4} parent=11 // pred_region
        _
      $region24: #{transformer_block_forward.4} parent=11 // pred_fallthru
        _
      // Predicated region
      $region25: #{transformer_block_forward.4} parent=11 // pred_check
        %p287 = pneg %p127
      $region26: #{transformer_block_forward.4} parent=11 // pred_check_branch
        %289 = sbr.rel (%p287) target = $region28
      $region27: #{transformer_block_forward.4} parent=11 // pred_region
        _
      $region28: #{transformer_block_forward.4} parent=11 // pred_fallthru
        _
      // Predicated region
      $region29: #{transformer_block_forward.4} parent=11 // pred_check
        %p290 = pneg %p148
      $region30: #{transformer_block_forward.4} parent=11 // pred_check_branch
        %292 = sbr.rel (%p290) target = $region32
      $region31: #{transformer_block_forward.4} parent=11 // pred_region
        _
      $region32: #{transformer_block_forward.4} parent=11 // pred_fallthru
        _
      // Predicated region
      $region33: #{transformer_block_forward.4} parent=11 // pred_check
        %p293 = pneg %p169
      $region34: #{transformer_block_forward.4} parent=11 // pred_check_branch
        %295 = sbr.rel (%p293) target = $region36
      $region35: #{transformer_block_forward.4} parent=11 // pred_region
        _
      $region36: #{transformer_block_forward.4} parent=11 // pred_fallthru
        _
      // Predicated region
      $region37: #{transformer_block_forward.4} parent=11 // pred_check
        %p296 = pneg %p190
      $region38: #{transformer_block_forward.4} parent=11 // pred_check_branch
        %298 = sbr.rel (%p296) target = $region40
      $region39: #{transformer_block_forward.4} parent=11 // pred_region
        _
      $region40: #{transformer_block_forward.4} parent=11 // pred_fallthru
        _
      // Predicated region
      $region41: #{transformer_block_forward.4} parent=11 // pred_check
        %p299 = pneg %p211
      $region42: #{transformer_block_forward.4} parent=11 // pred_check_branch
        %301 = sbr.rel (%p299) target = $region44
      $region43: #{transformer_block_forward.4} parent=11 // pred_region
        _
      $region44: #{transformer_block_forward.4} parent=11 // pred_fallthru
        _
    $region12: #{transformer_block_forward.4} parent=5 // pred_fallthru
      _
    %p302 = scmp.lt.s32.totalorder %s17, 2
    // Predicated region
    $region45: #{transformer_block_forward.4} parent=5 // pred_check
      %p303 = pneg %p302
    $region46: #{transformer_block_forward.4} parent=5 // pred_check_branch
      %305 = sbr.rel (%p303) target = $region48
    $region47: #{transformer_block_forward.4} parent=5 // pred_region
      // Predicated region
      $region49: #{transformer_block_forward.4} parent=47 // pred_check
        %p306 = pneg %p37
      $region50: #{transformer_block_forward.4} parent=47 // pred_check_branch
        %308 = sbr.rel (%p306) target = $region52
      $region51: #{transformer_block_forward.4} parent=47 // pred_region
        %p309 = scmp.lt.s32.totalorder %s17, 1
        %s310 = scalar_select %p309, %s17, 1
        %s311 = smul.addr %s310, 8
        %s312 = scalar_lea.vmem %s0, %s311
      $region52: #{transformer_block_forward.4} parent=47 // pred_fallthru
        _
    $region48: #{transformer_block_forward.4} parent=5 // pred_fallthru
      _
    %p313 = scmp.le.s32.totalorder 1, %s17
    %p314 = scmp.lt.s32.totalorder %s17, 3
    %p315 = pnand %p313, %p314
    %p316 = pneg %p315
    // Predicated region
    $region53: #{transformer_block_forward.4} parent=5 // pred_check
      _
    $region54: #{transformer_block_forward.4} parent=5 // pred_check_branch
      %318 = sbr.rel (%p315) target = $region56
    $region55: #{transformer_block_forward.4} parent=5 // pred_region
      %s319 = ssub.s32 %s17, 1
      %p320 = scmp.lt.s32.totalorder %s22, 1
      %s321 = scalar_select %p320, %s22, 1
      %s322 = smul.addr %s321, 8
      %s323 = scalar_lea.vmem %s0, %s322
      %p324 = pneg %p43
      %p325 = pneg %p40
      %p326 = pneg %p64
      %p327 = pneg %p61
      %p328 = pneg %p85
      %p329 = pneg %p82
      %p330 = pneg %p106
      %p331 = pneg %p103
      %p332 = pneg %p127
      %p333 = pneg %p124
      %p334 = pneg %p148
      %p335 = pneg %p145
      %p336 = pneg %p169
      %p337 = pneg %p166
      %p338 = pneg %p190
      %p339 = pneg %p187
      %p340 = pneg %p211
      %p341 = pneg %p208
      %p342 = pneg %p237
      %p343 = pneg %p234
      %p344 = scmp.lt.s32.totalorder %s22, 1
      %s345 = scalar_select %p344, %s22, 1
      %s346 = smul.addr %s345, 8
      %s347 = scalar_lea.vmem %s9, %s346
      %p348 = pneg %p263
      %p349 = pneg %p260
      %p350 = scmp.lt.s32.totalorder %s22, 1
      %s351 = scalar_select %p350, %s22, 1
      %s352 = smul.addr %s351, 8
      %s353 = scalar_lea.vmem %s10, %s352
      %p354 = scmp.lt.s32.totalorder %s22, 1
      %s355 = scalar_select %p354, %s22, 1
      %s356 = smul.addr %s355, 8
      %s357 = scalar_lea.vmem %s0, %s356
      %p358 = scmp.lt.s32.totalorder %s22, 1
      %s359 = scalar_select %p358, %s22, 1
      %s360 = smul.addr %s359, 8
      %s361 = scalar_lea.vmem %s9, %s360
      %p362 = scmp.lt.s32.totalorder %s22, 1
      %s363 = scalar_select %p362, %s22, 1
      %s364 = smul.addr %s363, 8
      %s365 = scalar_lea.vmem %s10, %s364
      %v366 = vld [vmem:[%s357] sm:$0xff]
      %v367 = vld [vmem:[%s1] sm:$0xff]
      %v368 = vld [vmem:[%s1 + $0x8] sm:$0xff]
      %v369 = vld [vmem:[%s1 + $0x10] sm:$0xff]
      %v370 = vld [vmem:[%s1 + $0x18] sm:$0xff]
      %v371 = vld [vmem:[%s2] sm:$0x1]
      %v373 = vlaneseq
      %v374 = vshrl.u32 %v373, 7
      %v375 = vsub.s32 0, %v374
      %v376 = vrot.slane %v371, %v375
      %vm378 = vcmask 261120
      %v380 = vsel %vm378, %v366, 0
      %382 = vmatprep.subr.mxu0 0.0
      %383 = vmatpush1.msra.mxu0 %v367
      %384 = vmatprep.subr.mxu0 0.0
      %385 = vmatpush1.msra.mxu0 %v368
      %386 = vmatprep.subr.mxu0 0.0
      %387 = vmatpush1.msra.mxu0 %v369
      %388 = vmatprep.subr.mxu0 0.0
      %389 = vmatpush1.msra.mxu0 %v370
      %390 = vmatprep.subr.mxu0 0.0
      %391 = vmatpush1.msra.mxu0 0.0
      %392 = vmatprep.subr.mxu0 0.0
      %393 = vmatpush1.msra.mxu0 0.0
      %394 = vmatprep.subr.mxu0 0.0
      %395 = vmatpush1.msra.mxu0 0.0
      %396 = vmatprep.subr.mxu0 0.0
      %397 = vmatpush1.msra.mxu0 0.0
      %398 = vmatprep.subr.mxu0 0.0
      %399 = vmatpush1.msra.mxu0 0.0
      %400 = vmatprep.subr.mxu0 0.0
      %401 = vmatpush1.msra.mxu0 0.0
      %402 = vmatprep.subr.mxu0 0.0
      %403 = vmatpush1.msra.mxu0 0.0
      %404 = vmatprep.subr.mxu0 0.0
      %405 = vmatpush1.msra.mxu0 0.0
      %406 = vmatprep.subr.mxu0 0.0
      %407 = vmatpush1.msra.mxu0 0.0
      %408 = vmatprep.subr.mxu0 0.0
      %409 = vmatpush1.msra.mxu0 0.0
      %410 = vmatprep.subr.mxu0 0.0
      %411 = vmatpush1.msra.mxu0 0.0
      %412 = vmatprep.subr.mxu0 0.0
      %413 = vmatpush1.msra.mxu0 0.0
      %414 = vmatprep.subr.mxu0 0.0
      %415 = vmatpush1.msra.mxu0 0.0
      %416 = vmatprep.subr.mxu0 0.0
      %417 = vmatpush1.msra.mxu0 0.0
      %418 = vmatprep.subr.mxu0 0.0
      %419 = vmatpush1.msra.mxu0 0.0
      %420 = vmatprep.subr.mxu0 0.0
      %421 = vmatpush1.msra.mxu0 0.0
      %422 = vmatprep.subr.mxu0 0.0
      %423 = vmatpush1.msra.mxu0 0.0
      %424 = vmatprep.subr.mxu0 0.0
      %425 = vmatpush1.msra.mxu0 0.0
      %426 = vmatprep.subr.mxu0 0.0
      %427 = vmatpush1.msra.mxu0 0.0
      %428 = vmatprep.subr.mxu0 0.0
      %429 = vmatpush1.msra.mxu0 0.0
      %430 = vmatprep.subr.mxu0 0.0
      %431 = vmatpush1.msra.mxu0 0.0
      %432 = vmatprep.subr.mxu0 0.0
      %433 = vmatpush1.msra.mxu0 0.0
      %434 = vmatprep.subr.mxu0 0.0
      %435 = vmatpush1.msra.mxu0 0.0
      %436 = vmatprep.subr.mxu0 0.0
      %437 = vmatpush1.msra.mxu0 0.0
      %438 = vmatprep.subr.mxu0 0.0
      %439 = vmatpush1.msra.mxu0 0.0
      %440 = vmatprep.subr.mxu0 0.0
      %441 = vmatpush1.msra.mxu0 0.0
      %442 = vmatprep.subr.mxu0 0.0
      %443 = vmatpush1.msra.mxu0 0.0
      %444 = vmatprep.subr.mxu0 0.0
      %445 = vmatpush1.msra.mxu0 0.0
      %446 = vmatprep.mubr.f32.mxu0 0.0
      %447 = vmatmul.mubr.f32.gmra.mrb[0].mxu0 %v380
      %v448 = vpop.f32.mrb[0].mxu0
      %v449 = vadd.f32 %v376, %v448
      %v450 = vpop.f32.mrb[0].mxu0
      %451 = vdwg.mxu0
      %453 = vrot.lane.b32.xlu0 %v449, 96
      %v454 = vpop.permute.xlu0 %453
      %vm455 = vcmask 64512
      %v456 = vsel %vm455, %v449, 0
      %v458 = vsel %vm455, %v454, 0
      %460 = vmatprep.subr.mxu0 0.0
      %461 = vmatpush1.xpose.msra.mxu0 %v458
      %462 = vmatprep.subr.mxu0 0.0
      %463 = vmatpush1.xpose.msra.mxu0 0.0
      %464 = vmatprep.subr.mxu0 0.0
      %465 = vmatpush1.xpose.msra.mxu0 0.0
      %466 = vmatprep.subr.mxu0 0.0
      %467 = vmatpush1.xpose.msra.mxu0 0.0
      %468 = vmatprep.subr.mxu0 0.0
      %469 = vmatpush1.xpose.msra.mxu0 0.0
      %470 = vmatprep.subr.mxu0 0.0
      %471 = vmatpush1.xpose.msra.mxu0 0.0
      %472 = vmatprep.subr.mxu0 0.0
      %473 = vmatpush1.xpose.msra.mxu0 0.0
      %474 = vmatprep.subr.mxu0 0.0
      %475 = vmatpush1.xpose.msra.mxu0 0.0
      %476 = vmatprep.subr.mxu0 0.0
      %477 = vmatpush1.xpose.msra.mxu0 0.0
      %478 = vmatprep.subr.mxu0 0.0
      %479 = vmatpush1.xpose.msra.mxu0 0.0
      %480 = vmatprep.subr.mxu0 0.0
      %481 = vmatpush1.xpose.msra.mxu0 0.0
      %482 = vmatprep.subr.mxu0 0.0
      %483 = vmatpush1.xpose.msra.mxu0 0.0
      %484 = vmatprep.subr.mxu0 0.0
      %485 = vmatpush1.xpose.msra.mxu0 0.0
      %486 = vmatprep.subr.mxu0 0.0
      %487 = vmatpush1.xpose.msra.mxu0 0.0
      %488 = vmatprep.subr.mxu0 0.0
      %489 = vmatpush1.xpose.msra.mxu0 0.0
      %490 = vmatprep.subr.mxu0 0.0
      %491 = vmatpush1.xpose.msra.mxu0 0.0
      %492 = vmatprep.subr.mxu0 0.0
      %493 = vmatpush1.xpose.msra.mxu0 0.0
      %494 = vmatprep.subr.mxu0 0.0
      %495 = vmatpush1.xpose.msra.mxu0 0.0
      %496 = vmatprep.subr.mxu0 0.0
      %497 = vmatpush1.xpose.msra.mxu0 0.0
      %498 = vmatprep.subr.mxu0 0.0
      %499 = vmatpush1.xpose.msra.mxu0 0.0
      %500 = vmatprep.subr.mxu0 0.0
      %501 = vmatpush1.xpose.msra.mxu0 0.0
      %502 = vmatprep.subr.mxu0 0.0
      %503 = vmatpush1.xpose.msra.mxu0 0.0
      %504 = vmatprep.subr.mxu0 0.0
      %505 = vmatpush1.xpose.msra.mxu0 0.0
      %506 = vmatprep.subr.mxu0 0.0
      %507 = vmatpush1.xpose.msra.mxu0 0.0
      %508 = vmatprep.subr.mxu0 0.0
      %509 = vmatpush1.xpose.msra.mxu0 0.0
      %510 = vmatprep.subr.mxu0 0.0
      %511 = vmatpush1.xpose.msra.mxu0 0.0
      %512 = vmatprep.subr.mxu0 0.0
      %513 = vmatpush1.xpose.msra.mxu0 0.0
      %514 = vmatprep.subr.mxu0 0.0
      %515 = vmatpush1.xpose.msra.mxu0 0.0
      %516 = vmatprep.subr.mxu0 0.0
      %517 = vmatpush1.xpose.msra.mxu0 0.0
      %518 = vmatprep.subr.mxu0 0.0
      %519 = vmatpush1.xpose.msra.mxu0 0.0
      %520 = vmatprep.subr.mxu0 0.0
      %521 = vmatpush1.xpose.msra.mxu0 0.0
      %522 = vmatprep.subr.mxu0 0.0
      %523 = vmatpush1.xpose.msra.mxu0 0.0
      %524 = vmatprep.mubr.f32.mxu0 0.0
      %525 = vmatmul.mubr.f32.gmra.mrb[0].mxu0 %v456
      %v526 = vpop.f32.mrb[0].mxu0
      %v527 = vadd.f32 0.0, %v526
      %v528 = vpop.f32.mrb[0].mxu0
      %529 = vdwg.mxu0
      %v530 = vmul.f32 %v527, 0.35355338
      %v531 = vsel %vm455, %v530, -inf
      %532 = vmax.xlane.f32.xlu0 %v531
      %v533 = vpop.xlane.xlu0 %532
      %v534 = vsub.f32 %v530, %v533
      %v535 = vmul.f32 %v534, 1.442695
      %v536 = vpow.pop %v535
      %v537 = vsel %vm455, %v536, 0.0
      %538 = vadd.xlane.f32.xlu0 %v537
      %v539 = vpop.xlane.xlu0 %538
      %v540 = vrcp.pop %v539
      %v541 = vmul.f32 %v536, %v540
      %542 = vrot.lane.b32.xlu0 %v449, 64
      %v543 = vpop.permute.xlu0 %542
      %v546 = vsel %vm455, %v541, 0
      %548 = vmatprep.subr.mxu0 0.0
      %549 = vmatpush1.msra.mxu0 %v543
      %550 = vmatprep.subr.mxu0 0.0
      %551 = vmatpush1.msra.mxu0 0.0
      %552 = vmatprep.subr.mxu0 0.0
      %553 = vmatpush1.msra.mxu0 0.0
      %554 = vmatprep.subr.mxu0 0.0
      %555 = vmatpush1.msra.mxu0 0.0
      %556 = vmatprep.subr.mxu0 0.0
      %557 = vmatpush1.msra.mxu0 0.0
      %558 = vmatprep.subr.mxu0 0.0
      %559 = vmatpush1.msra.mxu0 0.0
      %560 = vmatprep.subr.mxu0 0.0
      %561 = vmatpush1.msra.mxu0 0.0
      %562 = vmatprep.subr.mxu0 0.0
      %563 = vmatpush1.msra.mxu0 0.0
      %564 = vmatprep.subr.mxu0 0.0
      %565 = vmatpush1.msra.mxu0 0.0
      %566 = vmatprep.subr.mxu0 0.0
      %567 = vmatpush1.msra.mxu0 0.0
      %568 = vmatprep.subr.mxu0 0.0
      %569 = vmatpush1.msra.mxu0 0.0
      %570 = vmatprep.subr.mxu0 0.0
      %571 = vmatpush1.msra.mxu0 0.0
      %572 = vmatprep.subr.mxu0 0.0
      %573 = vmatpush1.msra.mxu0 0.0
      %574 = vmatprep.subr.mxu0 0.0
      %575 = vmatpush1.msra.mxu0 0.0
      %576 = vmatprep.subr.mxu0 0.0
      %577 = vmatpush1.msra.mxu0 0.0
      %578 = vmatprep.subr.mxu0 0.0
      %579 = vmatpush1.msra.mxu0 0.0
      %580 = vmatprep.subr.mxu0 0.0
      %581 = vmatpush1.msra.mxu0 0.0
      %582 = vmatprep.subr.mxu0 0.0
      %583 = vmatpush1.msra.mxu0 0.0
      %584 = vmatprep.subr.mxu0 0.0
      %585 = vmatpush1.msra.mxu0 0.0
      %586 = vmatprep.subr.mxu0 0.0
      %587 = vmatpush1.msra.mxu0 0.0
      %588 = vmatprep.subr.mxu0 0.0
      %589 = vmatpush1.msra.mxu0 0.0
      %590 = vmatprep.subr.mxu0 0.0
      %591 = vmatpush1.msra.mxu0 0.0
      %592 = vmatprep.subr.mxu0 0.0
      %593 = vmatpush1.msra.mxu0 0.0
      %594 = vmatprep.subr.mxu0 0.0
      %595 = vmatpush1.msra.mxu0 0.0
      %596 = vmatprep.subr.mxu0 0.0
      %597 = vmatpush1.msra.mxu0 0.0
      %598 = vmatprep.subr.mxu0 0.0
      %599 = vmatpush1.msra.mxu0 0.0
      %600 = vmatprep.subr.mxu0 0.0
      %601 = vmatpush1.msra.mxu0 0.0
      %602 = vmatprep.subr.mxu0 0.0
      %603 = vmatpush1.msra.mxu0 0.0
      %604 = vmatprep.subr.mxu0 0.0
      %605 = vmatpush1.msra.mxu0 0.0
      %606 = vmatprep.subr.mxu0 0.0
      %607 = vmatpush1.msra.mxu0 0.0
      %608 = vmatprep.subr.mxu0 0.0
      %609 = vmatpush1.msra.mxu0 0.0
      %610 = vmatprep.subr.mxu0 0.0
      %611 = vmatpush1.msra.mxu0 0.0
      %612 = vmatprep.mubr.f32.mxu0 0.0
      %613 = vmatmul.mubr.f32.gmra.mrb[0].mxu0 %v546
      %v614 = vpop.f32.mrb[0].mxu0
      %v615 = vadd.f32 0.0, %v614
      %v616 = vpop.f32.mrb[0].mxu0
      %617 = vdwg.mxu0
      %618 = vrot.lane.b32.xlu0 %v449, 120
      %v619 = vpop.permute.xlu0 %618
      %620 = vrot.lane.b32.xlu0 %v449, 88
      %v621 = vpop.permute.xlu0 %620
      %v622 = vsel %vm455, %v619, 0
      %v624 = vsel %vm455, %v621, 0
      %626 = vmatprep.subr.mxu0 0.0
      %627 = vmatpush1.xpose.msra.mxu0 %v624
      %628 = vmatprep.subr.mxu0 0.0
      %629 = vmatpush1.xpose.msra.mxu0 0.0
      %630 = vmatprep.subr.mxu0 0.0
      %631 = vmatpush1.xpose.msra.mxu0 0.0
      %632 = vmatprep.subr.mxu0 0.0
      %633 = vmatpush1.xpose.msra.mxu0 0.0
      %634 = vmatprep.subr.mxu0 0.0
      %635 = vmatpush1.xpose.msra.mxu0 0.0
      %636 = vmatprep.subr.mxu0 0.0
      %637 = vmatpush1.xpose.msra.mxu0 0.0
      %638 = vmatprep.subr.mxu0 0.0
      %639 = vmatpush1.xpose.msra.mxu0 0.0
      %640 = vmatprep.subr.mxu0 0.0
      %641 = vmatpush1.xpose.msra.mxu0 0.0
      %642 = vmatprep.subr.mxu0 0.0
      %643 = vmatpush1.xpose.msra.mxu0 0.0
      %644 = vmatprep.subr.mxu0 0.0
      %645 = vmatpush1.xpose.msra.mxu0 0.0
      %646 = vmatprep.subr.mxu0 0.0
      %647 = vmatpush1.xpose.msra.mxu0 0.0
      %648 = vmatprep.subr.mxu0 0.0
      %649 = vmatpush1.xpose.msra.mxu0 0.0
      %650 = vmatprep.subr.mxu0 0.0
      %651 = vmatpush1.xpose.msra.mxu0 0.0
      %652 = vmatprep.subr.mxu0 0.0
      %653 = vmatpush1.xpose.msra.mxu0 0.0
      %654 = vmatprep.subr.mxu0 0.0
      %655 = vmatpush1.xpose.msra.mxu0 0.0
      %656 = vmatprep.subr.mxu0 0.0
      %657 = vmatpush1.xpose.msra.mxu0 0.0
      %658 = vmatprep.subr.mxu0 0.0
      %659 = vmatpush1.xpose.msra.mxu0 0.0
      %660 = vmatprep.subr.mxu0 0.0
      %661 = vmatpush1.xpose.msra.mxu0 0.0
      %662 = vmatprep.subr.mxu0 0.0
      %663 = vmatpush1.xpose.msra.mxu0 0.0
      %664 = vmatprep.subr.mxu0 0.0
      %665 = vmatpush1.xpose.msra.mxu0 0.0
      %666 = vmatprep.subr.mxu0 0.0
      %667 = vmatpush1.xpose.msra.mxu0 0.0
      %668 = vmatprep.subr.mxu0 0.0
      %669 = vmatpush1.xpose.msra.mxu0 0.0
      %670 = vmatprep.subr.mxu0 0.0
      %671 = vmatpush1.xpose.msra.mxu0 0.0
      %672 = vmatprep.subr.mxu0 0.0
      %673 = vmatpush1.xpose.msra.mxu0 0.0
      %674 = vmatprep.subr.mxu0 0.0
      %675 = vmatpush1.xpose.msra.mxu0 0.0
      %676 = vmatprep.subr.mxu0 0.0
      %677 = vmatpush1.xpose.msra.mxu0 0.0
      %678 = vmatprep.subr.mxu0 0.0
      %679 = vmatpush1.xpose.msra.mxu0 0.0
      %680 = vmatprep.subr.mxu0 0.0
      %681 = vmatpush1.xpose.msra.mxu0 0.0
      %682 = vmatprep.subr.mxu0 0.0
      %683 = vmatpush1.xpose.msra.mxu0 0.0
      %684 = vmatprep.subr.mxu0 0.0
      %685 = vmatpush1.xpose.msra.mxu0 0.0
      %686 = vmatprep.subr.mxu0 0.0
      %687 = vmatpush1.xpose.msra.mxu0 0.0
      %688 = vmatprep.subr.mxu0 0.0
      %689 = vmatpush1.xpose.msra.mxu0 0.0
      %690 = vmatprep.mubr.f32.mxu0 0.0
      %691 = vmatmul.mubr.f32.gmra.mrb[0].mxu0 %v622
      %v692 = vpop.f32.mrb[0].mxu0
      %v693 = vadd.f32 0.0, %v692
      %v694 = vpop.f32.mrb[0].mxu0
      %695 = vdwg.mxu0
      %v696 = vmul.f32 %v693, 0.35355338
      %v697 = vsel %vm455, %v696, -inf
      %698 = vmax.xlane.f32.xlu0 %v697
      %v699 = vpop.xlane.xlu0 %698
      %v700 = vsub.f32 %v696, %v699
      %v701 = vmul.f32 %v700, 1.442695
      %v702 = vpow.pop %v701
      %v703 = vsel %vm455, %v702, 0.0
      %704 = vadd.xlane.f32.xlu0 %v703
      %v705 = vpop.xlane.xlu0 %704
      %v706 = vrcp.pop %v705
      %v707 = vmul.f32 %v702, %v706
      %708 = vrot.lane.b32.xlu0 %v449, 56
      %v709 = vpop.permute.xlu0 %708
      %v712 = vsel %vm455, %v707, 0
      %714 = vmatprep.subr.mxu0 0.0
      %715 = vmatpush1.msra.mxu0 %v709
      %716 = vmatprep.subr.mxu0 0.0
      %717 = vmatpush1.msra.mxu0 0.0
      %718 = vmatprep.subr.mxu0 0.0
      %719 = vmatpush1.msra.mxu0 0.0
      %720 = vmatprep.subr.mxu0 0.0
      %721 = vmatpush1.msra.mxu0 0.0
      %722 = vmatprep.subr.mxu0 0.0
      %723 = vmatpush1.msra.mxu0 0.0
      %724 = vmatprep.subr.mxu0 0.0
      %725 = vmatpush1.msra.mxu0 0.0
      %726 = vmatprep.subr.mxu0 0.0
      %727 = vmatpush1.msra.mxu0 0.0
      %728 = vmatprep.subr.mxu0 0.0
      %729 = vmatpush1.msra.mxu0 0.0
      %730 = vmatprep.subr.mxu0 0.0
      %731 = vmatpush1.msra.mxu0 0.0
      %732 = vmatprep.subr.mxu0 0.0
      %733 = vmatpush1.msra.mxu0 0.0
      %734 = vmatprep.subr.mxu0 0.0
      %735 = vmatpush1.msra.mxu0 0.0
      %736 = vmatprep.subr.mxu0 0.0
      %737 = vmatpush1.msra.mxu0 0.0
      %738 = vmatprep.subr.mxu0 0.0
      %739 = vmatpush1.msra.mxu0 0.0
      %740 = vmatprep.subr.mxu0 0.0
      %741 = vmatpush1.msra.mxu0 0.0
      %742 = vmatprep.subr.mxu0 0.0
      %743 = vmatpush1.msra.mxu0 0.0
      %744 = vmatprep.subr.mxu0 0.0
      %745 = vmatpush1.msra.mxu0 0.0
      %746 = vmatprep.subr.mxu0 0.0
      %747 = vmatpush1.msra.mxu0 0.0
      %748 = vmatprep.subr.mxu0 0.0
      %749 = vmatpush1.msra.mxu0 0.0
      %750 = vmatprep.subr.mxu0 0.0
      %751 = vmatpush1.msra.mxu0 0.0
      %752 = vmatprep.subr.mxu0 0.0
      %753 = vmatpush1.msra.mxu0 0.0
      %754 = vmatprep.subr.mxu0 0.0
      %755 = vmatpush1.msra.mxu0 0.0
      %756 = vmatprep.subr.mxu0 0.0
      %757 = vmatpush1.msra.mxu0 0.0
      %758 = vmatprep.subr.mxu0 0.0
      %759 = vmatpush1.msra.mxu0 0.0
      %760 = vmatprep.subr.mxu0 0.0
      %761 = vmatpush1.msra.mxu0 0.0
      %762 = vmatprep.subr.mxu0 0.0
      %763 = vmatpush1.msra.mxu0 0.0
      %764 = vmatprep.subr.mxu0 0.0
      %765 = vmatpush1.msra.mxu0 0.0
      %766 = vmatprep.subr.mxu0 0.0
      %767 = vmatpush1.msra.mxu0 0.0
      %768 = vmatprep.subr.mxu0 0.0
      %769 = vmatpush1.msra.mxu0 0.0
      %770 = vmatprep.subr.mxu0 0.0
      %771 = vmatpush1.msra.mxu0 0.0
      %772 = vmatprep.subr.mxu0 0.0
      %773 = vmatpush1.msra.mxu0 0.0
      %774 = vmatprep.subr.mxu0 0.0
      %775 = vmatpush1.msra.mxu0 0.0
      %776 = vmatprep.subr.mxu0 0.0
      %777 = vmatpush1.msra.mxu0 0.0
      %778 = vmatprep.mubr.f32.mxu0 0.0
      %779 = vmatmul.mubr.f32.gmra.mrb[0].mxu0 %v712
      %v780 = vpop.f32.mrb[0].mxu0
      %v781 = vadd.f32 0.0, %v780
      %v782 = vpop.f32.mrb[0].mxu0
      %783 = vdwg.mxu0
      %784 = vrot.lane.b32.xlu0 %v449, 112
      %v785 = vpop.permute.xlu0 %784
      %786 = vrot.lane.b32.xlu0 %v449, 80
      %v787 = vpop.permute.xlu0 %786
      %v788 = vsel %vm455, %v785, 0
      %v790 = vsel %vm455, %v787, 0
      %792 = vmatprep.subr.mxu0 0.0
      %793 = vmatpush1.xpose.msra.mxu0 %v790
      %794 = vmatprep.subr.mxu0 0.0
      %795 = vmatpush1.xpose.msra.mxu0 0.0
      %796 = vmatprep.subr.mxu0 0.0
      %797 = vmatpush1.xpose.msra.mxu0 0.0
      %798 = vmatprep.subr.mxu0 0.0
      %799 = vmatpush1.xpose.msra.mxu0 0.0
      %800 = vmatprep.subr.mxu0 0.0
      %801 = vmatpush1.xpose.msra.mxu0 0.0
      %802 = vmatprep.subr.mxu0 0.0
      %803 = vmatpush1.xpose.msra.mxu0 0.0
      %804 = vmatprep.subr.mxu0 0.0
      %805 = vmatpush1.xpose.msra.mxu0 0.0
      %806 = vmatprep.subr.mxu0 0.0
      %807 = vmatpush1.xpose.msra.mxu0 0.0
      %808 = vmatprep.subr.mxu0 0.0
      %809 = vmatpush1.xpose.msra.mxu0 0.0
      %810 = vmatprep.subr.mxu0 0.0
      %811 = vmatpush1.xpose.msra.mxu0 0.0
      %812 = vmatprep.subr.mxu0 0.0
      %813 = vmatpush1.xpose.msra.mxu0 0.0
      %814 = vmatprep.subr.mxu0 0.0
      %815 = vmatpush1.xpose.msra.mxu0 0.0
      %816 = vmatprep.subr.mxu0 0.0
      %817 = vmatpush1.xpose.msra.mxu0 0.0
      %818 = vmatprep.subr.mxu0 0.0
      %819 = vmatpush1.xpose.msra.mxu0 0.0
      %820 = vmatprep.subr.mxu0 0.0
      %821 = vmatpush1.xpose.msra.mxu0 0.0
      %822 = vmatprep.subr.mxu0 0.0
      %823 = vmatpush1.xpose.msra.mxu0 0.0
      %824 = vmatprep.subr.mxu0 0.0
      %825 = vmatpush1.xpose.msra.mxu0 0.0
      %826 = vmatprep.subr.mxu0 0.0
      %827 = vmatpush1.xpose.msra.mxu0 0.0
      %828 = vmatprep.subr.mxu0 0.0
      %829 = vmatpush1.xpose.msra.mxu0 0.0
      %830 = vmatprep.subr.mxu0 0.0
      %831 = vmatpush1.xpose.msra.mxu0 0.0
      %832 = vmatprep.subr.mxu0 0.0
      %833 = vmatpush1.xpose.msra.mxu0 0.0
      %834 = vmatprep.subr.mxu0 0.0
      %835 = vmatpush1.xpose.msra.mxu0 0.0
      %836 = vmatprep.subr.mxu0 0.0
      %837 = vmatpush1.xpose.msra.mxu0 0.0
      %838 = vmatprep.subr.mxu0 0.0
      %839 = vmatpush1.xpose.msra.mxu0 0.0
      %840 = vmatprep.subr.mxu0 0.0
      %841 = vmatpush1.xpose.msra.mxu0 0.0
      %842 = vmatprep.subr.mxu0 0.0
      %843 = vmatpush1.xpose.msra.mxu0 0.0
      %844 = vmatprep.subr.mxu0 0.0
      %845 = vmatpush1.xpose.msra.mxu0 0.0
      %846 = vmatprep.subr.mxu0 0.0
      %847 = vmatpush1.xpose.msra.mxu0 0.0
      %848 = vmatprep.subr.mxu0 0.0
      %849 = vmatpush1.xpose.msra.mxu0 0.0
      %850 = vmatprep.subr.mxu0 0.0
      %851 = vmatpush1.xpose.msra.mxu0 0.0
      %852 = vmatprep.subr.mxu0 0.0
      %853 = vmatpush1.xpose.msra.mxu0 0.0
      %854 = vmatprep.subr.mxu0 0.0
      %855 = vmatpush1.xpose.msra.mxu0 0.0
      %856 = vmatprep.mubr.f32.mxu0 0.0
      %857 = vmatmul.mubr.f32.gmra.mrb[0].mxu0 %v788
      %v858 = vpop.f32.mrb[0].mxu0
      %v859 = vadd.f32 0.0, %v858
      %v860 = vpop.f32.mrb[0].mxu0
      %861 = vdwg.mxu0
      %v862 = vmul.f32 %v859, 0.35355338
      %v863 = vsel %vm455, %v862, -inf
      %864 = vmax.xlane.f32.xlu0 %v863
      %v865 = vpop.xlane.xlu0 %864
      %v866 = vsub.f32 %v862, %v865
      %v867 = vmul.f32 %v866, 1.442695
      %v868 = vpow.pop %v867
      %v869 = vsel %vm455, %v868, 0.0
      %870 = vadd.xlane.f32.xlu0 %v869
      %v871 = vpop.xlane.xlu0 %870
      %v872 = vrcp.pop %v871
      %v873 = vmul.f32 %v868, %v872
      %874 = vrot.lane.b32.xlu0 %v449, 48
      %v875 = vpop.permute.xlu0 %874
      %v878 = vsel %vm455, %v873, 0
      %880 = vmatprep.subr.mxu0 0.0
      %881 = vmatpush1.msra.mxu0 %v875
      %882 = vmatprep.subr.mxu0 0.0
      %883 = vmatpush1.msra.mxu0 0.0
      %884 = vmatprep.subr.mxu0 0.0
      %885 = vmatpush1.msra.mxu0 0.0
      %886 = vmatprep.subr.mxu0 0.0
      %887 = vmatpush1.msra.mxu0 0.0
      %888 = vmatprep.subr.mxu0 0.0
      %889 = vmatpush1.msra.mxu0 0.0
      %890 = vmatprep.subr.mxu0 0.0
      %891 = vmatpush1.msra.mxu0 0.0
      %892 = vmatprep.subr.mxu0 0.0
      %893 = vmatpush1.msra.mxu0 0.0
      %894 = vmatprep.subr.mxu0 0.0
      %895 = vmatpush1.msra.mxu0 0.0
      %896 = vmatprep.subr.mxu0 0.0
      %897 = vmatpush1.msra.mxu0 0.0
      %898 = vmatprep.subr.mxu0 0.0
      %899 = vmatpush1.msra.mxu0 0.0
      %900 = vmatprep.subr.mxu0 0.0
      %901 = vmatpush1.msra.mxu0 0.0
      %902 = vmatprep.subr.mxu0 0.0
      %903 = vmatpush1.msra.mxu0 0.0
      %904 = vmatprep.subr.mxu0 0.0
      %905 = vmatpush1.msra.mxu0 0.0
      %906 = vmatprep.subr.mxu0 0.0
      %907 = vmatpush1.msra.mxu0 0.0
      %908 = vmatprep.subr.mxu0 0.0
      %909 = vmatpush1.msra.mxu0 0.0
      %910 = vmatprep.subr.mxu0 0.0
      %911 = vmatpush1.msra.mxu0 0.0
      %912 = vmatprep.subr.mxu0 0.0
      %913 = vmatpush1.msra.mxu0 0.0
      %914 = vmatprep.subr.mxu0 0.0
      %915 = vmatpush1.msra.mxu0 0.0
      %916 = vmatprep.subr.mxu0 0.0
      %917 = vmatpush1.msra.mxu0 0.0
      %918 = vmatprep.subr.mxu0 0.0
      %919 = vmatpush1.msra.mxu0 0.0
      %920 = vmatprep.subr.mxu0 0.0
      %921 = vmatpush1.msra.mxu0 0.0
      %922 = vmatprep.subr.mxu0 0.0
      %923 = vmatpush1.msra.mxu0 0.0
      %924 = vmatprep.subr.mxu0 0.0
      %925 = vmatpush1.msra.mxu0 0.0
      %926 = vmatprep.subr.mxu0 0.0
      %927 = vmatpush1.msra.mxu0 0.0
      %928 = vmatprep.subr.mxu0 0.0
      %929 = vmatpush1.msra.mxu0 0.0
      %930 = vmatprep.subr.mxu0 0.0
      %931 = vmatpush1.msra.mxu0 0.0
      %932 = vmatprep.subr.mxu0 0.0
      %933 = vmatpush1.msra.mxu0 0.0
      %934 = vmatprep.subr.mxu0 0.0
      %935 = vmatpush1.msra.mxu0 0.0
      %936 = vmatprep.subr.mxu0 0.0
      %937 = vmatpush1.msra.mxu0 0.0
      %938 = vmatprep.subr.mxu0 0.0
      %939 = vmatpush1.msra.mxu0 0.0
      %940 = vmatprep.subr.mxu0 0.0
      %941 = vmatpush1.msra.mxu0 0.0
      %942 = vmatprep.subr.mxu0 0.0
      %943 = vmatpush1.msra.mxu0 0.0
      %944 = vmatprep.mubr.f32.mxu0 0.0
      %945 = vmatmul.mubr.f32.gmra.mrb[0].mxu0 %v878
      %v946 = vpop.f32.mrb[0].mxu0
      %v947 = vadd.f32 0.0, %v946
      %v948 = vpop.f32.mrb[0].mxu0
      %949 = vdwg.mxu0
      %950 = vrot.lane.b32.xlu0 %v449, 104
      %v951 = vpop.permute.xlu0 %950
      %952 = vrot.lane.b32.xlu0 %v449, 72
      %v953 = vpop.permute.xlu0 %952
      %v954 = vsel %vm455, %v951, 0
      %v956 = vsel %vm455, %v953, 0
      %958 = vmatprep.subr.mxu0 0.0
      %959 = vmatpush1.xpose.msra.mxu0 %v956
      %960 = vmatprep.subr.mxu0 0.0
      %961 = vmatpush1.xpose.msra.mxu0 0.0
      %962 = vmatprep.subr.mxu0 0.0
      %963 = vmatpush1.xpose.msra.mxu0 0.0
      %964 = vmatprep.subr.mxu0 0.0
      %965 = vmatpush1.xpose.msra.mxu0 0.0
      %966 = vmatprep.subr.mxu0 0.0
      %967 = vmatpush1.xpose.msra.mxu0 0.0
      %968 = vmatprep.subr.mxu0 0.0
      %969 = vmatpush1.xpose.msra.mxu0 0.0
      %970 = vmatprep.subr.mxu0 0.0
      %971 = vmatpush1.xpose.msra.mxu0 0.0
      %972 = vmatprep.subr.mxu0 0.0
      %973 = vmatpush1.xpose.msra.mxu0 0.0
      %974 = vmatprep.subr.mxu0 0.0
      %975 = vmatpush1.xpose.msra.mxu0 0.0
      %976 = vmatprep.subr.mxu0 0.0
      %977 = vmatpush1.xpose.msra.mxu0 0.0
      %978 = vmatprep.subr.mxu0 0.0
      %979 = vmatpush1.xpose.msra.mxu0 0.0
      %980 = vmatprep.subr.mxu0 0.0
      %981 = vmatpush1.xpose.msra.mxu0 0.0
      %982 = vmatprep.subr.mxu0 0.0
      %983 = vmatpush1.xpose.msra.mxu0 0.0
      %984 = vmatprep.subr.mxu0 0.0
      %985 = vmatpush1.xpose.msra.mxu0 0.0
      %986 = vmatprep.subr.mxu0 0.0
      %987 = vmatpush1.xpose.msra.mxu0 0.0
      %988 = vmatprep.subr.mxu0 0.0
      %989 = vmatpush1.xpose.msra.mxu0 0.0
      %990 = vmatprep.subr.mxu0 0.0
      %991 = vmatpush1.xpose.msra.mxu0 0.0
      %992 = vmatprep.subr.mxu0 0.0
      %993 = vmatpush1.xpose.msra.mxu0 0.0
      %994 = vmatprep.subr.mxu0 0.0
      %995 = vmatpush1.xpose.msra.mxu0 0.0
      %996 = vmatprep.subr.mxu0 0.0
      %997 = vmatpush1.xpose.msra.mxu0 0.0
      %998 = vmatprep.subr.mxu0 0.0
      %999 = vmatpush1.xpose.msra.mxu0 0.0
      %1000 = vmatprep.subr.mxu0 0.0
      %1001 = vmatpush1.xpose.msra.mxu0 0.0
      %1002 = vmatprep.subr.mxu0 0.0
      %1003 = vmatpush1.xpose.msra.mxu0 0.0
      %1004 = vmatprep.subr.mxu0 0.0
      %1005 = vmatpush1.xpose.msra.mxu0 0.0
      %1006 = vmatprep.subr.mxu0 0.0
      %1007 = vmatpush1.xpose.msra.mxu0 0.0
      %1008 = vmatprep.subr.mxu0 0.0
      %1009 = vmatpush1.xpose.msra.mxu0 0.0
      %1010 = vmatprep.subr.mxu0 0.0
      %1011 = vmatpush1.xpose.msra.mxu0 0.0
      %1012 = vmatprep.subr.mxu0 0.0
      %1013 = vmatpush1.xpose.msra.mxu0 0.0
      %1014 = vmatprep.subr.mxu0 0.0
      %1015 = vmatpush1.xpose.msra.mxu0 0.0
      %1016 = vmatprep.subr.mxu0 0.0
      %1017 = vmatpush1.xpose.msra.mxu0 0.0
      %1018 = vmatprep.subr.mxu0 0.0
      %1019 = vmatpush1.xpose.msra.mxu0 0.0
      %1020 = vmatprep.subr.mxu0 0.0
      %1021 = vmatpush1.xpose.msra.mxu0 0.0
      %1022 = vmatprep.mubr.f32.mxu0 0.0
      %1023 = vmatmul.mubr.f32.gmra.mrb[0].mxu0 %v954
      %v1024 = vpop.f32.mrb[0].mxu0
      %v1025 = vadd.f32 0.0, %v1024
      %v1026 = vpop.f32.mrb[0].mxu0
      %1027 = vdwg.mxu0
      %v1028 = vmul.f32 %v1025, 0.35355338
      %v1029 = vsel %vm455, %v1028, -inf
      %1030 = vmax.xlane.f32.xlu0 %v1029
      %v1031 = vpop.xlane.xlu0 %1030
      %v1032 = vsub.f32 %v1028, %v1031
      %v1033 = vmul.f32 %v1032, 1.442695
      %v1034 = vpow.pop %v1033
      %v1035 = vsel %vm455, %v1034, 0.0
      %1036 = vadd.xlane.f32.xlu0 %v1035
      %v1037 = vpop.xlane.xlu0 %1036
      %v1038 = vrcp.pop %v1037
      %v1039 = vmul.f32 %v1034, %v1038
      %1040 = vrot.lane.b32.xlu0 %v449, 40
      %v1041 = vpop.permute.xlu0 %1040
      %v1044 = vsel %vm455, %v1039, 0
      %1046 = vmatprep.subr.mxu0 0.0
      %1047 = vmatpush1.msra.mxu0 %v1041
      %1048 = vmatprep.subr.mxu0 0.0
      %1049 = vmatpush1.msra.mxu0 0.0
      %1050 = vmatprep.subr.mxu0 0.0
      %1051 = vmatpush1.msra.mxu0 0.0
      %1052 = vmatprep.subr.mxu0 0.0
      %1053 = vmatpush1.msra.mxu0 0.0
      %1054 = vmatprep.subr.mxu0 0.0
      %1055 = vmatpush1.msra.mxu0 0.0
      %1056 = vmatprep.subr.mxu0 0.0
      %1057 = vmatpush1.msra.mxu0 0.0
      %1058 = vmatprep.subr.mxu0 0.0
      %1059 = vmatpush1.msra.mxu0 0.0
      %1060 = vmatprep.subr.mxu0 0.0
      %1061 = vmatpush1.msra.mxu0 0.0
      %1062 = vmatprep.subr.mxu0 0.0
      %1063 = vmatpush1.msra.mxu0 0.0
      %1064 = vmatprep.subr.mxu0 0.0
      %1065 = vmatpush1.msra.mxu0 0.0
      %1066 = vmatprep.subr.mxu0 0.0
      %1067 = vmatpush1.msra.mxu0 0.0
      %1068 = vmatprep.subr.mxu0 0.0
      %1069 = vmatpush1.msra.mxu0 0.0
      %1070 = vmatprep.subr.mxu0 0.0
      %1071 = vmatpush1.msra.mxu0 0.0
      %1072 = vmatprep.subr.mxu0 0.0
      %1073 = vmatpush1.msra.mxu0 0.0
      %1074 = vmatprep.subr.mxu0 0.0
      %1075 = vmatpush1.msra.mxu0 0.0
      %1076 = vmatprep.subr.mxu0 0.0
      %1077 = vmatpush1.msra.mxu0 0.0
      %1078 = vmatprep.subr.mxu0 0.0
      %1079 = vmatpush1.msra.mxu0 0.0
      %1080 = vmatprep.subr.mxu0 0.0
      %1081 = vmatpush1.msra.mxu0 0.0
      %1082 = vmatprep.subr.mxu0 0.0
      %1083 = vmatpush1.msra.mxu0 0.0
      %1084 = vmatprep.subr.mxu0 0.0
      %1085 = vmatpush1.msra.mxu0 0.0
      %1086 = vmatprep.subr.mxu0 0.0
      %1087 = vmatpush1.msra.mxu0 0.0
      %1088 = vmatprep.subr.mxu0 0.0
      %1089 = vmatpush1.msra.mxu0 0.0
      %1090 = vmatprep.subr.mxu0 0.0
      %1091 = vmatpush1.msra.mxu0 0.0
      %1092 = vmatprep.subr.mxu0 0.0
      %1093 = vmatpush1.msra.mxu0 0.0
      %1094 = vmatprep.subr.mxu0 0.0
      %1095 = vmatpush1.msra.mxu0 0.0
      %1096 = vmatprep.subr.mxu0 0.0
      %1097 = vmatpush1.msra.mxu0 0.0
      %1098 = vmatprep.subr.mxu0 0.0
      %1099 = vmatpush1.msra.mxu0 0.0
      %1100 = vmatprep.subr.mxu0 0.0
      %1101 = vmatpush1.msra.mxu0 0.0
      %1102 = vmatprep.subr.mxu0 0.0
      %1103 = vmatpush1.msra.mxu0 0.0
      %1104 = vmatprep.subr.mxu0 0.0
      %1105 = vmatpush1.msra.mxu0 0.0
      %1106 = vmatprep.subr.mxu0 0.0
      %1107 = vmatpush1.msra.mxu0 0.0
      %1108 = vmatprep.subr.mxu0 0.0
      %1109 = vmatpush1.msra.mxu0 0.0
      %1110 = vmatprep.mubr.f32.mxu0 0.0
      %1111 = vmatmul.mubr.f32.gmra.mrb[0].mxu0 %v1044
      %v1112 = vpop.f32.mrb[0].mxu0
      %v1113 = vadd.f32 0.0, %v1112
      %v1114 = vpop.f32.mrb[0].mxu0
      %1115 = vdwg.mxu0
      %1117 = vrot.lane.b32.xlu0 %v781, 8
      %v1118 = vpop.permute.xlu0 %1117
      %1121 = vrot.lane.b32.xlu0 %v947, 16
      %v1122 = vpop.permute.xlu0 %1121
      %1125 = vrot.lane.b32.xlu0 %v1113, 24
      %v1126 = vpop.permute.xlu0 %1125
      %v1128 = vsel %vm455, %v615, %v1118
      %vm1129 = vcmask 130048
      %v1130 = vsel %vm1129, %v1128, %v1122
      %vm1131 = vcmask 195584
      %v1132 = vsel %vm1131, %v1130, %v1126
      %v1133 = vld [vmem:[%s3] sm:$0xff]
      %v1134 = vld [vmem:[%s3 + $0x8] sm:$0xff]
      %v1135 = vld [vmem:[%s3 + $0x10] sm:$0xff]
      %v1136 = vld [vmem:[%s3 + $0x18] sm:$0xff]
      %v1137 = vld [vmem:[%s4] sm:$0x1]
      %v1139 = vlaneseq
      %v1140 = vshrl.u32 %v1139, 7
      %v1141 = vsub.s32 0, %v1140
      %v1142 = vrot.slane %v1137, %v1141
      %v1145 = vsel %vm378, %v1132, 0
      %1147 = vmatprep.subr.mxu0 0.0
      %1148 = vmatpush1.msra.mxu0 %v1133
      %1149 = vmatprep.subr.mxu0 0.0
      %1150 = vmatpush1.msra.mxu0 %v1134
      %1151 = vmatprep.subr.mxu0 0.0
      %1152 = vmatpush1.msra.mxu0 %v1135
      %1153 = vmatprep.subr.mxu0 0.0
      %1154 = vmatpush1.msra.mxu0 %v1136
      %1155 = vmatprep.subr.mxu0 0.0
      %1156 = vmatpush1.msra.mxu0 0.0
      %1157 = vmatprep.subr.mxu0 0.0
      %1158 = vmatpush1.msra.mxu0 0.0
      %1159 = vmatprep.subr.mxu0 0.0
      %1160 = vmatpush1.msra.mxu0 0.0
      %1161 = vmatprep.subr.mxu0 0.0
      %1162 = vmatpush1.msra.mxu0 0.0
      %1163 = vmatprep.subr.mxu0 0.0
      %1164 = vmatpush1.msra.mxu0 0.0
      %1165 = vmatprep.subr.mxu0 0.0
      %1166 = vmatpush1.msra.mxu0 0.0
      %1167 = vmatprep.subr.mxu0 0.0
      %1168 = vmatpush1.msra.mxu0 0.0
      %1169 = vmatprep.subr.mxu0 0.0
      %1170 = vmatpush1.msra.mxu0 0.0
      %1171 = vmatprep.subr.mxu0 0.0
      %1172 = vmatpush1.msra.mxu0 0.0
      %1173 = vmatprep.subr.mxu0 0.0
      %1174 = vmatpush1.msra.mxu0 0.0
      %1175 = vmatprep.subr.mxu0 0.0
      %1176 = vmatpush1.msra.mxu0 0.0
      %1177 = vmatprep.subr.mxu0 0.0
      %1178 = vmatpush1.msra.mxu0 0.0
      %1179 = vmatprep.subr.mxu0 0.0
      %1180 = vmatpush1.msra.mxu0 0.0
      %1181 = vmatprep.subr.mxu0 0.0
      %1182 = vmatpush1.msra.mxu0 0.0
      %1183 = vmatprep.subr.mxu0 0.0
      %1184 = vmatpush1.msra.mxu0 0.0
      %1185 = vmatprep.subr.mxu0 0.0
      %1186 = vmatpush1.msra.mxu0 0.0
      %1187 = vmatprep.subr.mxu0 0.0
      %1188 = vmatpush1.msra.mxu0 0.0
      %1189 = vmatprep.subr.mxu0 0.0
      %1190 = vmatpush1.msra.mxu0 0.0
      %1191 = vmatprep.subr.mxu0 0.0
      %1192 = vmatpush1.msra.mxu0 0.0
      %1193 = vmatprep.subr.mxu0 0.0
      %1194 = vmatpush1.msra.mxu0 0.0
      %1195 = vmatprep.subr.mxu0 0.0
      %1196 = vmatpush1.msra.mxu0 0.0
      %1197 = vmatprep.subr.mxu0 0.0
      %1198 = vmatpush1.msra.mxu0 0.0
      %1199 = vmatprep.subr.mxu0 0.0
      %1200 = vmatpush1.msra.mxu0 0.0
      %1201 = vmatprep.subr.mxu0 0.0
      %1202 = vmatpush1.msra.mxu0 0.0
      %1203 = vmatprep.subr.mxu0 0.0
      %1204 = vmatpush1.msra.mxu0 0.0
      %1205 = vmatprep.subr.mxu0 0.0
      %1206 = vmatpush1.msra.mxu0 0.0
      %1207 = vmatprep.subr.mxu0 0.0
      %1208 = vmatpush1.msra.mxu0 0.0
      %1209 = vmatprep.subr.mxu0 0.0
      %1210 = vmatpush1.msra.mxu0 0.0
      %1211 = vmatprep.mubr.f32.mxu0 0.0
      %1212 = vmatmul.mubr.f32.gmra.mrb[0].mxu0 %v1145
      %v1213 = vpop.f32.mrb[0].mxu0
      %v1214 = vadd.f32 %v1142, %v1213
      %v1215 = vpop.f32.mrb[0].mxu0
      %1216 = vdwg.mxu0
      %v1217 = vadd.f32 %v366, %v1214
      %v1218 = vld [vmem:[%s5] sm:$0x1]
      %v1219 = vld [vmem:[%s6] sm:$0x1]
      %v1220 = vsel %vm378, %v1217, 0.0
      %1221 = vadd.xlane.f32.xlu0 %v1220
      %v1222 = vpop.xlane.xlu0 %1221
      %v1223 = vrcp.pop 32.0
      %v1224 = vmul.f32 %v1222, %v1223
      %v1225 = vsub.f32 %v1217, %v1224
      %v1226 = vmul.f32 %v1225, %v1225
      %v1227 = vsel %vm378, %v1226, 0.0
      %1228 = vadd.xlane.f32.xlu0 %v1227
      %v1229 = vpop.xlane.xlu0 %1228
      %v1230 = vmul.f32 %v1229, %v1223
      %v1231 = vadd.f32 %v1230, 1e-05
      %v1232 = vrsqrt.pop %v1231
      %v1233 = vmul.f32 %v1225, %v1232
      %v1235 = vlaneseq
      %v1236 = vshrl.u32 %v1235, 7
      %v1237 = vsub.s32 0, %v1236
      %v1238 = vrot.slane %v1218, %v1237
      %v1240 = vmul.f32 %v1233, %v1238
      %v1242 = vlaneseq
      %v1243 = vshrl.u32 %v1242, 7
      %v1244 = vsub.s32 0, %v1243
      %v1245 = vrot.slane %v1219, %v1244
      %v1247 = vadd.f32 %v1240, %v1245
      %1248 = vst.msk [vmem:[%s361] sm:$0xff] %vm378, %v1247
      %v1249 = vld [vmem:[%s7] sm:$0xff]
      %v1250 = vld [vmem:[%s7 + $0x8] sm:$0xff]
      %v1251 = vld [vmem:[%s7 + $0x10] sm:$0xff]
      %v1252 = vld [vmem:[%s7 + $0x18] sm:$0xff]
      %v1254 = vsel %vm378, %v1247, 0
      %1256 = vmatprep.subr.mxu0 0.0
      %1257 = vmatpush1.msra.mxu0 %v1249
      %1258 = vmatprep.subr.mxu0 0.0
      %1259 = vmatpush1.msra.mxu0 %v1250
      %1260 = vmatprep.subr.mxu0 0.0
      %1261 = vmatpush1.msra.mxu0 %v1251
      %1262 = vmatprep.subr.mxu0 0.0
      %1263 = vmatpush1.msra.mxu0 %v1252
      %1264 = vmatprep.subr.mxu0 0.0
      %1265 = vmatpush1.msra.mxu0 0.0
      %1266 = vmatprep.subr.mxu0 0.0
      %1267 = vmatpush1.msra.mxu0 0.0
      %1268 = vmatprep.subr.mxu0 0.0
      %1269 = vmatpush1.msra.mxu0 0.0
      %1270 = vmatprep.subr.mxu0 0.0
      %1271 = vmatpush1.msra.mxu0 0.0
      %1272 = vmatprep.subr.mxu0 0.0
      %1273 = vmatpush1.msra.mxu0 0.0
      %1274 = vmatprep.subr.mxu0 0.0
      %1275 = vmatpush1.msra.mxu0 0.0
      %1276 = vmatprep.subr.mxu0 0.0
      %1277 = vmatpush1.msra.mxu0 0.0
      %1278 = vmatprep.subr.mxu0 0.0
      %1279 = vmatpush1.msra.mxu0 0.0
      %1280 = vmatprep.subr.mxu0 0.0
      %1281 = vmatpush1.msra.mxu0 0.0
      %1282 = vmatprep.subr.mxu0 0.0
      %1283 = vmatpush1.msra.mxu0 0.0
      %1284 = vmatprep.subr.mxu0 0.0
      %1285 = vmatpush1.msra.mxu0 0.0
      %1286 = vmatprep.subr.mxu0 0.0
      %1287 = vmatpush1.msra.mxu0 0.0
      %1288 = vmatprep.subr.mxu0 0.0
      %1289 = vmatpush1.msra.mxu0 0.0
      %1290 = vmatprep.subr.mxu0 0.0
      %1291 = vmatpush1.msra.mxu0 0.0
      %1292 = vmatprep.subr.mxu0 0.0
      %1293 = vmatpush1.msra.mxu0 0.0
      %1294 = vmatprep.subr.mxu0 0.0
      %1295 = vmatpush1.msra.mxu0 0.0
      %1296 = vmatprep.subr.mxu0 0.0
      %1297 = vmatpush1.msra.mxu0 0.0
      %1298 = vmatprep.subr.mxu0 0.0
      %1299 = vmatpush1.msra.mxu0 0.0
      %1300 = vmatprep.subr.mxu0 0.0
      %1301 = vmatpush1.msra.mxu0 0.0
      %1302 = vmatprep.subr.mxu0 0.0
      %1303 = vmatpush1.msra.mxu0 0.0
      %1304 = vmatprep.subr.mxu0 0.0
      %1305 = vmatpush1.msra.mxu0 0.0
      %1306 = vmatprep.subr.mxu0 0.0
      %1307 = vmatpush1.msra.mxu0 0.0
      %1308 = vmatprep.subr.mxu0 0.0
      %1309 = vmatpush1.msra.mxu0 0.0
      %1310 = vmatprep.subr.mxu0 0.0
      %1311 = vmatpush1.msra.mxu0 0.0
      %1312 = vmatprep.subr.mxu0 0.0
      %1313 = vmatpush1.msra.mxu0 0.0
      %1314 = vmatprep.subr.mxu0 0.0
      %1315 = vmatpush1.msra.mxu0 0.0
      %1316 = vmatprep.subr.mxu0 0.0
      %1317 = vmatpush1.msra.mxu0 0.0
      %1318 = vmatprep.subr.mxu0 0.0
      %1319 = vmatpush1.msra.mxu0 0.0
      %1320 = vmatprep.mubr.f32.mxu0 0.0
      %1321 = vmatmul.mubr.f32.gmra.mrb[0].mxu0 %v1254
      %v1322 = vpop.f32.mrb[0].mxu0
      %v1323 = vadd.f32 0.0, %v1322
      %v1324 = vpop.f32.mrb[0].mxu0
      %1325 = vdwg.mxu0
      %v1326 = vld [vmem:[%s8] sm:$0xff]
      %v1327 = vld [vmem:[%s8 + $0x8] sm:$0xff]
      %v1328 = vld [vmem:[%s8 + $0x10] sm:$0xff]
      %v1329 = vld [vmem:[%s8 + $0x18] sm:$0xff]
      %v1330 = vld [vmem:[%s8 + $0x20] sm:$0xff]
      %v1331 = vld [vmem:[%s8 + $0x28] sm:$0xff]
      %v1332 = vld [vmem:[%s8 + $0x30] sm:$0xff]
      %v1333 = vld [vmem:[%s8 + $0x38] sm:$0xff]
      %v1334 = vld [vmem:[%s8 + $0x40] sm:$0xff]
      %v1335 = vld [vmem:[%s8 + $0x48] sm:$0xff]
      %v1336 = vld [vmem:[%s8 + $0x50] sm:$0xff]
      %v1337 = vld [vmem:[%s8 + $0x58] sm:$0xff]
      %v1338 = vld [vmem:[%s8 + $0x60] sm:$0xff]
      %v1339 = vld [vmem:[%s8 + $0x68] sm:$0xff]
      %v1340 = vld [vmem:[%s8 + $0x70] sm:$0xff]
      %v1341 = vld [vmem:[%s8 + $0x78] sm:$0xff]
      %1342 = vmatprep.subr.mxu0 0.0
      %1343 = vmatpush1.msra.mxu0 %v1326
      %1344 = vmatprep.subr.mxu0 0.0
      %1345 = vmatpush1.msra.mxu0 %v1327
      %1346 = vmatprep.subr.mxu0 0.0
      %1347 = vmatpush1.msra.mxu0 %v1328
      %1348 = vmatprep.subr.mxu0 0.0
      %1349 = vmatpush1.msra.mxu0 %v1329
      %1350 = vmatprep.subr.mxu0 0.0
      %1351 = vmatpush1.msra.mxu0 %v1330
      %1352 = vmatprep.subr.mxu0 0.0
      %1353 = vmatpush1.msra.mxu0 %v1331
      %1354 = vmatprep.subr.mxu0 0.0
      %1355 = vmatpush1.msra.mxu0 %v1332
      %1356 = vmatprep.subr.mxu0 0.0
      %1357 = vmatpush1.msra.mxu0 %v1333
      %1358 = vmatprep.subr.mxu0 0.0
      %1359 = vmatpush1.msra.mxu0 %v1334
      %1360 = vmatprep.subr.mxu0 0.0
      %1361 = vmatpush1.msra.mxu0 %v1335
      %1362 = vmatprep.subr.mxu0 0.0
      %1363 = vmatpush1.msra.mxu0 %v1336
      %1364 = vmatprep.subr.mxu0 0.0
      %1365 = vmatpush1.msra.mxu0 %v1337
      %1366 = vmatprep.subr.mxu0 0.0
      %1367 = vmatpush1.msra.mxu0 %v1338
      %1368 = vmatprep.subr.mxu0 0.0
      %1369 = vmatpush1.msra.mxu0 %v1339
      %1370 = vmatprep.subr.mxu0 0.0
      %1371 = vmatpush1.msra.mxu0 %v1340
      %1372 = vmatprep.subr.mxu0 0.0
      %1373 = vmatpush1.msra.mxu0 %v1341
      %1374 = vmatprep.subr.mxu0 0.0
      %1375 = vmatpush1.msra.mxu0 0.0
      %1376 = vmatprep.subr.mxu0 0.0
      %1377 = vmatpush1.msra.mxu0 0.0
      %1378 = vmatprep.subr.mxu0 0.0
      %1379 = vmatpush1.msra.mxu0 0.0
      %1380 = vmatprep.subr.mxu0 0.0
      %1381 = vmatpush1.msra.mxu0 0.0
      %1382 = vmatprep.subr.mxu0 0.0
      %1383 = vmatpush1.msra.mxu0 0.0
      %1384 = vmatprep.subr.mxu0 0.0
      %1385 = vmatpush1.msra.mxu0 0.0
      %1386 = vmatprep.subr.mxu0 0.0
      %1387 = vmatpush1.msra.mxu0 0.0
      %1388 = vmatprep.subr.mxu0 0.0
      %1389 = vmatpush1.msra.mxu0 0.0
      %1390 = vmatprep.subr.mxu0 0.0
      %1391 = vmatpush1.msra.mxu0 0.0
      %1392 = vmatprep.subr.mxu0 0.0
      %1393 = vmatpush1.msra.mxu0 0.0
      %1394 = vmatprep.subr.mxu0 0.0
      %1395 = vmatpush1.msra.mxu0 0.0
      %1396 = vmatprep.subr.mxu0 0.0
      %1397 = vmatpush1.msra.mxu0 0.0
      %1398 = vmatprep.subr.mxu0 0.0
      %1399 = vmatpush1.msra.mxu0 0.0
      %1400 = vmatprep.subr.mxu0 0.0
      %1401 = vmatpush1.msra.mxu0 0.0
      %1402 = vmatprep.subr.mxu0 0.0
      %1403 = vmatpush1.msra.mxu0 0.0
      %1404 = vmatprep.subr.mxu0 0.0
      %1405 = vmatpush1.msra.mxu0 0.0
      %1406 = vmatprep.mubr.f32.mxu0 0.0
      %1407 = vmatmul.mubr.f32.gmra.mrb[0].mxu0 %v1323
      %v1408 = vpop.f32.mrb[0].mxu0
      %v1409 = vadd.f32 0.0, %v1408
      %v1410 = vpop.f32.mrb[0].mxu0
      %1411 = vdwg.mxu0
      %1412 = vst.msk [vmem:[%s365] sm:$0xff] %vm378, %v1409
      %p1413 = scmp.lt.s32.totalorder %s22, 1
      %s1414 = scalar_select %p1413, %s22, 1
      %s1415 = smul.addr %s1414, 8
      %s1416 = scalar_lea.vmem %s9, %s1415
      %p1417 = scmp.lt.s32.totalorder %s22, 1
      %s1418 = scalar_select %p1417, %s22, 1
      %s1419 = smul.addr %s1418, 8
      %s1420 = scalar_lea.vmem %s10, %s1419
      // Predicated region
      $region57: #{transformer_block_forward.4} parent=55 // pred_check
        %p1421 = pneg %p234
      $region58: #{transformer_block_forward.4} parent=55 // pred_check_branch
        %1423 = sbr.rel (%p1421) target = $region60
      $region59: #{transformer_block_forward.4} parent=55 // pred_region
        _
      $region60: #{transformer_block_forward.4} parent=55 // pred_fallthru
        _
      // Predicated region
      $region61: #{transformer_block_forward.4} parent=55 // pred_check
        %p1424 = pneg %p260
      $region62: #{transformer_block_forward.4} parent=55 // pred_check_branch
        %1426 = sbr.rel (%p1424) target = $region64
      $region63: #{transformer_block_forward.4} parent=55 // pred_region
        _
      $region64: #{transformer_block_forward.4} parent=55 // pred_fallthru
        _
    $region56: #{transformer_block_forward.4} parent=5 // pred_fallthru
      _
    %p1427 = scmp.le.s32.totalorder 2, %s17
    // Predicated region
    $region65: #{transformer_block_forward.4} parent=5 // pred_check
      %p1428 = pneg %p1427
    $region66: #{transformer_block_forward.4} parent=5 // pred_check_branch
      %1430 = sbr.rel (%p1428) target = $region68
    $region67: #{transformer_block_forward.4} parent=5 // pred_region
      %s1431 = ssub.s32 %s17, 2
      // Predicated region
      $region69: #{transformer_block_forward.4} parent=67 // pred_check
        %p1432 = pneg %p240
      $region70: #{transformer_block_forward.4} parent=67 // pred_check_branch
        %1434 = sbr.rel (%p1432) target = $region72
      $region71: #{transformer_block_forward.4} parent=67 // pred_region
        %p1435 = scmp.lt.s32.totalorder %s23, 1
        %s1436 = scalar_select %p1435, %s23, 1
        %s1437 = smul.addr %s1436, 8
        %s1438 = scalar_lea.vmem %s9, %s1437
      $region72: #{transformer_block_forward.4} parent=67 // pred_fallthru
        _
      // Predicated region
      $region73: #{transformer_block_forward.4} parent=67 // pred_check
        %p1439 = pneg %p266
      $region74: #{transformer_block_forward.4} parent=67 // pred_check_branch
        %1441 = sbr.rel (%p1439) target = $region76
      $region75: #{transformer_block_forward.4} parent=67 // pred_region
        %p1442 = scmp.lt.s32.totalorder %s23, 1
        %s1443 = scalar_select %p1442, %s23, 1
        %s1444 = smul.addr %s1443, 8
        %s1445 = scalar_lea.vmem %s10, %s1444
      $region76: #{transformer_block_forward.4} parent=67 // pred_fallthru
        _
    $region68: #{transformer_block_forward.4} parent=5 // pred_fallthru
      _
  $region6: #{transformer_block_forward.4} parent=0 // loop_footer
    %s21 = sadd.s32 1, %s17
  $region7: #{transformer_block_forward.4} parent=0 // loop_footer_branch
    %16 = sbr.rel target = $region3
  $region8: #{transformer_block_forward.4} parent=0 // loop_exit
    _

// kernel: transformer_block_forward.6
$region0: #{transformer_block_forward.6}
  #allocation0 [shape = 'u32[]', space=smem, size = 0x4, offset = 0x4, fixed_abs, tag = 'smem constant byte address 0x4 - core index']
  #allocation1 [shape = 'u32[144,128]{1,0:T(1,128)}', space=vmem, size = 0x12000, scoped, tag = 'internal scratch']
  %s0 = inlined_call_operand.vmem [shape: f32[16,32], index: 0, kind: input, shape index: {}]
  %s1 = inlined_call_operand.vmem [shape: f32[32,128], index: 1, kind: input, shape index: {}]
  %s2 = inlined_call_operand.vmem [shape: f32[128,32], index: 2, kind: input, shape index: {}]
  %s3 = inlined_call_operand.vmem [shape: f32[16,32], index: 3, kind: output, shape index: {}]
  %s4 = sld [smem:[#allocation0]]
  $region22: #{transformer_block_forward.6} parent=0
    _
  %s6 = ssub.s32 1, %s4
  %s7 = scalar_select 0, %s6, %s4
  // Predicated region
  $region2: #{transformer_block_forward.6} parent=0 // pred_check
    _
  $region3: #{transformer_block_forward.6} parent=0 // pred_check_branch
    %9 = sbr.rel (0) target = $region5
  $region4: #{transformer_block_forward.6} parent=0 // pred_region
    _
  $region5: #{transformer_block_forward.6} parent=0 // pred_fallthru
    _
  // Predicated region
  $region6: #{transformer_block_forward.6} parent=0 // pred_check
    _
  $region7: #{transformer_block_forward.6} parent=0 // pred_check_branch
    %11 = sbr.rel (0) target = $region9
  $region8: #{transformer_block_forward.6} parent=0 // pred_region
    _
  $region9: #{transformer_block_forward.6} parent=0 // pred_fallthru
    _
  // Predicated region
  $region10: #{transformer_block_forward.6} parent=0 // pred_check
    _
  $region11: #{transformer_block_forward.6} parent=0 // pred_check_branch
    %13 = sbr.rel (0) target = $region13
  $region12: #{transformer_block_forward.6} parent=0 // pred_region
    _
  $region13: #{transformer_block_forward.6} parent=0 // pred_fallthru
    _
  %v14 = vld [vmem:[%s0] sm:$0xff]
  %v15 = vld [vmem:[%s0 + $0x8] sm:$0xff]
  %v16 = vld [vmem:[%s1] sm:$0xff]
  %v17 = vld [vmem:[%s1 + $0x8] sm:$0xff]
  %v18 = vld [vmem:[%s1 + $0x10] sm:$0xff]
  %v19 = vld [vmem:[%s1 + $0x18] sm:$0xff]
  %vm20 = vcmask 261120
  %v22 = vsel %vm20, %v14, 0
  %v25 = vsel %vm20, %v15, 0
  %27 = vmatprep.subr.mxu0 0.0
  %28 = vmatpush1.msra.mxu0 %v16
  %29 = vmatprep.subr.mxu0 0.0
  %30 = vmatpush1.msra.mxu0 %v17
  %31 = vmatprep.subr.mxu0 0.0
  %32 = vmatpush1.msra.mxu0 %v18
  %33 = vmatprep.subr.mxu0 0.0
  %34 = vmatpush1.msra.mxu0 %v19
  %35 = vmatprep.subr.mxu0 0.0
  %36 = vmatpush1.msra.mxu0 0.0
  %37 = vmatprep.subr.mxu0 0.0
  %38 = vmatpush1.msra.mxu0 0.0
  %39 = vmatprep.subr.mxu0 0.0
  %40 = vmatpush1.msra.mxu0 0.0
  %41 = vmatprep.subr.mxu0 0.0
  %42 = vmatpush1.msra.mxu0 0.0
  %43 = vmatprep.subr.mxu0 0.0
  %44 = vmatpush1.msra.mxu0 0.0
  %45 = vmatprep.subr.mxu0 0.0
  %46 = vmatpush1.msra.mxu0 0.0
  %47 = vmatprep.subr.mxu0 0.0
  %48 = vmatpush1.msra.mxu0 0.0
  %49 = vmatprep.subr.mxu0 0.0
  %50 = vmatpush1.msra.mxu0 0.0
  %51 = vmatprep.subr.mxu0 0.0
  %52 = vmatpush1.msra.mxu0 0.0
  %53 = vmatprep.subr.mxu0 0.0
  %54 = vmatpush1.msra.mxu0 0.0
  %55 = vmatprep.subr.mxu0 0.0
  %56 = vmatpush1.msra.mxu0 0.0
  %57 = vmatprep.subr.mxu0 0.0
  %58 = vmatpush1.msra.mxu0 0.0
  %59 = vmatprep.subr.mxu0 0.0
  %60 = vmatpush1.msra.mxu0 0.0
  %61 = vmatprep.subr.mxu0 0.0
  %62 = vmatpush1.msra.mxu0 0.0
  %63 = vmatprep.subr.mxu0 0.0
  %64 = vmatpush1.msra.mxu0 0.0
  %65 = vmatprep.subr.mxu0 0.0
  %66 = vmatpush1.msra.mxu0 0.0
  %67 = vmatprep.subr.mxu0 0.0
  %68 = vmatpush1.msra.mxu0 0.0
  %69 = vmatprep.subr.mxu0 0.0
  %70 = vmatpush1.msra.mxu0 0.0
  %71 = vmatprep.subr.mxu0 0.0
  %72 = vmatpush1.msra.mxu0 0.0
  %73 = vmatprep.subr.mxu0 0.0
  %74 = vmatpush1.msra.mxu0 0.0
  %75 = vmatprep.subr.mxu0 0.0
  %76 = vmatpush1.msra.mxu0 0.0
  %77 = vmatprep.subr.mxu0 0.0
  %78 = vmatpush1.msra.mxu0 0.0
  %79 = vmatprep.subr.mxu0 0.0
  %80 = vmatpush1.msra.mxu0 0.0
  %81 = vmatprep.subr.mxu0 0.0
  %82 = vmatpush1.msra.mxu0 0.0
  %83 = vmatprep.subr.mxu0 0.0
  %84 = vmatpush1.msra.mxu0 0.0
  %85 = vmatprep.subr.mxu0 0.0
  %86 = vmatpush1.msra.mxu0 0.0
  %87 = vmatprep.subr.mxu0 0.0
  %88 = vmatpush1.msra.mxu0 0.0
  %89 = vmatprep.subr.mxu0 0.0
  %90 = vmatpush1.msra.mxu0 0.0
  %91 = vmatprep.mubr.f32.mxu0 0.0
  %92 = vmatmul.mubr.f32.gmra.mrb[0].mxu0 %v22
  %v93 = vpop.f32.mrb[0].mxu0
  %v94 = vadd.f32 0.0, %v93
  %v95 = vpop.f32.mrb[0].mxu0
  %96 = vmatprep.mubr.f32.mxu0 0.0
  %97 = vmatmul.mubr.f32.gmra.mrb[0].mxu0 %v25
  %v98 = vpop.f32.mrb[0].mxu0
  %v99 = vadd.f32 0.0, %v98
  %v100 = vpop.f32.mrb[0].mxu0
  %101 = vdwg.mxu0
  %v102 = vld [vmem:[%s2] sm:$0xff]
  %v103 = vld [vmem:[%s2 + $0x8] sm:$0xff]
  %v104 = vld [vmem:[%s2 + $0x10] sm:$0xff]
  %v105 = vld [vmem:[%s2 + $0x18] sm:$0xff]
  %v106 = vld [vmem:[%s2 + $0x20] sm:$0xff]
  %v107 = vld [vmem:[%s2 + $0x28] sm:$0xff]
  %v108 = vld [vmem:[%s2 + $0x30] sm:$0xff]
  %v109 = vld [vmem:[%s2 + $0x38] sm:$0xff]
  %v110 = vld [vmem:[%s2 + $0x40] sm:$0xff]
  %v111 = vld [vmem:[%s2 + $0x48] sm:$0xff]
  %v112 = vld [vmem:[%s2 + $0x50] sm:$0xff]
  %v113 = vld [vmem:[%s2 + $0x58] sm:$0xff]
  %v114 = vld [vmem:[%s2 + $0x60] sm:$0xff]
  %v115 = vld [vmem:[%s2 + $0x68] sm:$0xff]
  %v116 = vld [vmem:[%s2 + $0x70] sm:$0xff]
  %v117 = vld [vmem:[%s2 + $0x78] sm:$0xff]
  %118 = vmatprep.subr.mxu0 0.0
  %119 = vmatpush1.msra.mxu0 %v102
  %120 = vmatprep.subr.mxu0 0.0
  %121 = vmatpush1.msra.mxu0 %v103
  %122 = vmatprep.subr.mxu0 0.0
  %123 = vmatpush1.msra.mxu0 %v104
  %124 = vmatprep.subr.mxu0 0.0
  %125 = vmatpush1.msra.mxu0 %v105
  %126 = vmatprep.subr.mxu0 0.0
  %127 = vmatpush1.msra.mxu0 %v106
  %128 = vmatprep.subr.mxu0 0.0
  %129 = vmatpush1.msra.mxu0 %v107
  %130 = vmatprep.subr.mxu0 0.0
  %131 = vmatpush1.msra.mxu0 %v108
  %132 = vmatprep.subr.mxu0 0.0
  %133 = vmatpush1.msra.mxu0 %v109
  %134 = vmatprep.subr.mxu0 0.0
  %135 = vmatpush1.msra.mxu0 %v110
  %136 = vmatprep.subr.mxu0 0.0
  %137 = vmatpush1.msra.mxu0 %v111
  %138 = vmatprep.subr.mxu0 0.0
  %139 = vmatpush1.msra.mxu0 %v112
  %140 = vmatprep.subr.mxu0 0.0
  %141 = vmatpush1.msra.mxu0 %v113
  %142 = vmatprep.subr.mxu0 0.0
  %143 = vmatpush1.msra.mxu0 %v114
  %144 = vmatprep.subr.mxu0 0.0
  %145 = vmatpush1.msra.mxu0 %v115
  %146 = vmatprep.subr.mxu0 0.0
  %147 = vmatpush1.msra.mxu0 %v116
  %148 = vmatprep.subr.mxu0 0.0
  %149 = vmatpush1.msra.mxu0 %v117
  %150 = vmatprep.subr.mxu0 0.0
  %151 = vmatpush1.msra.mxu0 0.0
  %152 = vmatprep.subr.mxu0 0.0
  %153 = vmatpush1.msra.mxu0 0.0
  %154 = vmatprep.subr.mxu0 0.0
  %155 = vmatpush1.msra.mxu0 0.0
  %156 = vmatprep.subr.mxu0 0.0
  %157 = vmatpush1.msra.mxu0 0.0
  %158 = vmatprep.subr.mxu0 0.0
  %159 = vmatpush1.msra.mxu0 0.0
  %160 = vmatprep.subr.mxu0 0.0
  %161 = vmatpush1.msra.mxu0 0.0
  %162 = vmatprep.subr.mxu0 0.0
  %163 = vmatpush1.msra.mxu0 0.0
  %164 = vmatprep.subr.mxu0 0.0
  %165 = vmatpush1.msra.mxu0 0.0
  %166 = vmatprep.subr.mxu0 0.0
  %167 = vmatpush1.msra.mxu0 0.0
  %168 = vmatprep.subr.mxu0 0.0
  %169 = vmatpush1.msra.mxu0 0.0
  %170 = vmatprep.subr.mxu0 0.0
  %171 = vmatpush1.msra.mxu0 0.0
  %172 = vmatprep.subr.mxu0 0.0
  %173 = vmatpush1.msra.mxu0 0.0
  %174 = vmatprep.subr.mxu0 0.0
  %175 = vmatpush1.msra.mxu0 0.0
  %176 = vmatprep.subr.mxu0 0.0
  %177 = vmatpush1.msra.mxu0 0.0
  %178 = vmatprep.subr.mxu0 0.0
  %179 = vmatpush1.msra.mxu0 0.0
  %180 = vmatprep.subr.mxu0 0.0
  %181 = vmatpush1.msra.mxu0 0.0
  %182 = vmatprep.mubr.f32.mxu0 0.0
  %183 = vmatmul.mubr.f32.gmra.mrb[0].mxu0 %v94
  %v184 = vpop.f32.mrb[0].mxu0
  %v185 = vadd.f32 0.0, %v184
  %v186 = vpop.f32.mrb[0].mxu0
  %187 = vmatprep.mubr.f32.mxu0 0.0
  %188 = vmatmul.mubr.f32.gmra.mrb[0].mxu0 %v99
  %v189 = vpop.f32.mrb[0].mxu0
  %v190 = vadd.f32 0.0, %v189
  %v191 = vpop.f32.mrb[0].mxu0
  %192 = vdwg.mxu0
  %193 = vst.msk [vmem:[%s3] sm:$0xff] %vm20, %v185
  %194 = vst.msk [vmem:[%s3 + $0x8] sm:$0xff] %vm20, %v190
  // Predicated region
  $region14: #{transformer_block_forward.6} parent=0 // pred_check
    _
  $region15: #{transformer_block_forward.6} parent=0 // pred_check_branch
    %196 = sbr.rel (0) target = $region17
  $region16: #{transformer_block_forward.6} parent=0 // pred_region
    _
  $region17: #{transformer_block_forward.6} parent=0 // pred_fallthru
    _
  // Predicated region
  $region18: #{transformer_block_forward.6} parent=0 // pred_check
    _
  $region19: #{transformer_block_forward.6} parent=0 // pred_check_branch
    %198 = sbr.rel (0) target = $region21
  $region20: #{transformer_block_forward.6} parent=0 // pred_region
    _
  $region21: #{transformer_block_forward.6} parent=0 // pred_fallthru
    _

// kernel: transformer_block_forward.5
$region0: #{transformer_block_forward.5}
  #allocation0 [shape = 'u32[]', space=smem, size = 0x4, offset = 0x4, fixed_abs, tag = 'smem constant byte address 0x4 - core index']
  #allocation1 [shape = 'u32[144,128]{1,0:T(1,128)}', space=vmem, size = 0x12000, scoped, tag = 'internal scratch']
  %s0 = inlined_call_operand.vmem [shape: f32[16,1,32], index: 0, kind: input, shape index: {}]
  %s1 = inlined_call_operand.vmem [shape: f32[16,16,32], index: 1, kind: input, shape index: {}]
  %s2 = inlined_call_operand.vmem [shape: f32[16,1,16], index: 2, kind: input, shape index: {}]
  %s3 = inlined_call_operand.vmem [shape: f32[16,16,32], index: 3, kind: input, shape index: {}]
  %s4 = inlined_call_operand.vmem [shape: f32[16,1,32], index: 4, kind: output, shape index: {}]
  %s5 = sld [smem:[#allocation0]]
  $region26: #{transformer_block_forward.5} parent=0
    _
  %s7 = ssub.s32 1, %s5
  %s8 = scalar_select 0, %s7, %s5
  // Predicated region
  $region2: #{transformer_block_forward.5} parent=0 // pred_check
    _
  $region3: #{transformer_block_forward.5} parent=0 // pred_check_branch
    %10 = sbr.rel (0) target = $region5
  $region4: #{transformer_block_forward.5} parent=0 // pred_region
    _
  $region5: #{transformer_block_forward.5} parent=0 // pred_fallthru
    _
  // Predicated region
  $region6: #{transformer_block_forward.5} parent=0 // pred_check
    _
  $region7: #{transformer_block_forward.5} parent=0 // pred_check_branch
    %12 = sbr.rel (0) target = $region9
  $region8: #{transformer_block_forward.5} parent=0 // pred_region
    _
  $region9: #{transformer_block_forward.5} parent=0 // pred_fallthru
    _
  // Predicated region
  $region10: #{transformer_block_forward.5} parent=0 // pred_check
    _
  $region11: #{transformer_block_forward.5} parent=0 // pred_check_branch
    %14 = sbr.rel (0) target = $region13
  $region12: #{transformer_block_forward.5} parent=0 // pred_region
    _
  $region13: #{transformer_block_forward.5} parent=0 // pred_fallthru
    _
  // Predicated region
  $region14: #{transformer_block_forward.5} parent=0 // pred_check
    _
  $region15: #{transformer_block_forward.5} parent=0 // pred_check_branch
    %16 = sbr.rel (0) target = $region17
  $region16: #{transformer_block_forward.5} parent=0 // pred_region
    _
  $region17: #{transformer_block_forward.5} parent=0 // pred_fallthru
    _
  %v17 = vld [vmem:[%s0] sm:$0x1]
  %v18 = vld [vmem:[%s0 + $0x1] sm:$0x1]
  %v19 = vld [vmem:[%s0 + $0x2] sm:$0x1]
  %v20 = vld [vmem:[%s0 + $0x3] sm:$0x1]
  %v21 = vld [vmem:[%s0 + $0x4] sm:$0x1]
  %v22 = vld [vmem:[%s0 + $0x5] sm:$0x1]
  %v23 = vld [vmem:[%s0 + $0x6] sm:$0x1]
  %v24 = vld [vmem:[%s0 + $0x7] sm:$0x1]
  %v25 = vld [vmem:[%s0 + $0x8] sm:$0x1]
  %v26 = vld [vmem:[%s0 + $0x9] sm:$0x1]
  %v27 = vld [vmem:[%s0 + $0xa] sm:$0x1]
  %v28 = vld [vmem:[%s0 + $0xb] sm:$0x1]
  %v29 = vld [vmem:[%s0 + $0xc] sm:$0x1]
  %v30 = vld [vmem:[%s0 + $0xd] sm:$0x1]
  %v31 = vld [vmem:[%s0 + $0xe] sm:$0x1]
  %v32 = vld [vmem:[%s0 + $0xf] sm:$0x1]
  %v33 = vld [vmem:[%s1] sm:$0xff]
  %v34 = vld [vmem:[%s1 + $0x8] sm:$0xff]
  %v35 = vld [vmem:[%s1 + $0x10] sm:$0xff]
  %v36 = vld [vmem:[%s1 + $0x18] sm:$0xff]
  %v37 = vld [vmem:[%s1 + $0x20] sm:$0xff]
  %v38 = vld [vmem:[%s1 + $0x28] sm:$0xff]
  %v39 = vld [vmem:[%s1 + $0x30] sm:$0xff]
  %v40 = vld [vmem:[%s1 + $0x38] sm:$0xff]
  %v41 = vld [vmem:[%s1 + $0x40] sm:$0xff]
  %v42 = vld [vmem:[%s1 + $0x48] sm:$0xff]
  %v43 = vld [vmem:[%s1 + $0x50] sm:$0xff]
  %v44 = vld [vmem:[%s1 + $0x58] sm:$0xff]
  %v45 = vld [vmem:[%s1 + $0x60] sm:$0xff]
  %v46 = vld [vmem:[%s1 + $0x68] sm:$0xff]
  %v47 = vld [vmem:[%s1 + $0x70] sm:$0xff]
  %v48 = vld [vmem:[%s1 + $0x78] sm:$0xff]
  %v49 = vld [vmem:[%s1 + $0x80] sm:$0xff]
  %v50 = vld [vmem:[%s1 + $0x88] sm:$0xff]
  %v51 = vld [vmem:[%s1 + $0x90] sm:$0xff]
  %v52 = vld [vmem:[%s1 + $0x98] sm:$0xff]
  %v53 = vld [vmem:[%s1 + $0xa0] sm:$0xff]
  %v54 = vld [vmem:[%s1 + $0xa8] sm:$0xff]
  %v55 = vld [vmem:[%s1 + $0xb0] sm:$0xff]
  %v56 = vld [vmem:[%s1 + $0xb8] sm:$0xff]
  %v57 = vld [vmem:[%s1 + $0xc0] sm:$0xff]
  %v58 = vld [vmem:[%s1 + $0xc8] sm:$0xff]
  %v59 = vld [vmem:[%s1 + $0xd0] sm:$0xff]
  %v60 = vld [vmem:[%s1 + $0xd8] sm:$0xff]
  %v61 = vld [vmem:[%s1 + $0xe0] sm:$0xff]
  %v62 = vld [vmem:[%s1 + $0xe8] sm:$0xff]
  %v63 = vld [vmem:[%s1 + $0xf0] sm:$0xff]
  %v64 = vld [vmem:[%s1 + $0xf8] sm:$0xff]
  %v65 = vld [vmem:[%s2] sm:$0x1]
  %v66 = vld [vmem:[%s2 + $0x1] sm:$0x1]
  %v67 = vld [vmem:[%s2 + $0x2] sm:$0x1]
  %v68 = vld [vmem:[%s2 + $0x3] sm:$0x1]
  %v69 = vld [vmem:[%s2 + $0x4] sm:$0x1]
  %v70 = vld [vmem:[%s2 + $0x5] sm:$0x1]
  %v71 = vld [vmem:[%s2 + $0x6] sm:$0x1]
  %v72 = vld [vmem:[%s2 + $0x7] sm:$0x1]
  %v73 = vld [vmem:[%s2 + $0x8] sm:$0x1]
  %v74 = vld [vmem:[%s2 + $0x9] sm:$0x1]
  %v75 = vld [vmem:[%s2 + $0xa] sm:$0x1]
  %v76 = vld [vmem:[%s2 + $0xb] sm:$0x1]
  %v77 = vld [vmem:[%s2 + $0xc] sm:$0x1]
  %v78 = vld [vmem:[%s2 + $0xd] sm:$0x1]
  %v79 = vld [vmem:[%s2 + $0xe] sm:$0x1]
  %v80 = vld [vmem:[%s2 + $0xf] sm:$0x1]
  %v81 = vld [vmem:[%s3] sm:$0xff]
  %v82 = vld [vmem:[%s3 + $0x8] sm:$0xff]
  %v83 = vld [vmem:[%s3 + $0x10] sm:$0xff]
  %v84 = vld [vmem:[%s3 + $0x18] sm:$0xff]
  %v85 = vld [vmem:[%s3 + $0x20] sm:$0xff]
  %v86 = vld [vmem:[%s3 + $0x28] sm:$0xff]
  %v87 = vld [vmem:[%s3 + $0x30] sm:$0xff]
  %v88 = vld [vmem:[%s3 + $0x38] sm:$0xff]
  %v89 = vld [vmem:[%s3 + $0x40] sm:$0xff]
  %v90 = vld [vmem:[%s3 + $0x48] sm:$0xff]
  %v91 = vld [vmem:[%s3 + $0x50] sm:$0xff]
  %v92 = vld [vmem:[%s3 + $0x58] sm:$0xff]
  %v93 = vld [vmem:[%s3 + $0x60] sm:$0xff]
  %v94 = vld [vmem:[%s3 + $0x68] sm:$0xff]
  %v95 = vld [vmem:[%s3 + $0x70] sm:$0xff]
  %v96 = vld [vmem:[%s3 + $0x78] sm:$0xff]
  %v97 = vld [vmem:[%s3 + $0x80] sm:$0xff]
  %v98 = vld [vmem:[%s3 + $0x88] sm:$0xff]
  %v99 = vld [vmem:[%s3 + $0x90] sm:$0xff]
  %v100 = vld [vmem:[%s3 + $0x98] sm:$0xff]
  %v101 = vld [vmem:[%s3 + $0xa0] sm:$0xff]
  %v102 = vld [vmem:[%s3 + $0xa8] sm:$0xff]
  %v103 = vld [vmem:[%s3 + $0xb0] sm:$0xff]
  %v104 = vld [vmem:[%s3 + $0xb8] sm:$0xff]
  %v105 = vld [vmem:[%s3 + $0xc0] sm:$0xff]
  %v106 = vld [vmem:[%s3 + $0xc8] sm:$0xff]
  %v107 = vld [vmem:[%s3 + $0xd0] sm:$0xff]
  %v108 = vld [vmem:[%s3 + $0xd8] sm:$0xff]
  %v109 = vld [vmem:[%s3 + $0xe0] sm:$0xff]
  %v110 = vld [vmem:[%s3 + $0xe8] sm:$0xff]
  %v111 = vld [vmem:[%s3 + $0xf0] sm:$0xff]
  %v112 = vld [vmem:[%s3 + $0xf8] sm:$0xff]
  %vm113 = vcmask 261120
  %v115 = vsel %vm113, %v17, 0
  %v118 = vsel %vm113, %v33, 0
  %v121 = vsel %vm113, %v34, 0
  %123 = vmatprep.subr.mxu0 0.0
  %124 = vmatpush1.xpose.msra.mxu0 %v118
  %125 = vmatprep.subr.mxu0 0.0
  %126 = vmatpush1.xpose.msra.mxu0 %v121
  %127 = vmatprep.subr.mxu0 0.0
  %128 = vmatpush1.xpose.msra.mxu0 0.0
  %129 = vmatprep.subr.mxu0 0.0
  %130 = vmatpush1.xpose.msra.mxu0 0.0
  %131 = vmatprep.subr.mxu0 0.0
  %132 = vmatpush1.xpose.msra.mxu0 0.0
  %133 = vmatprep.subr.mxu0 0.0
  %134 = vmatpush1.xpose.msra.mxu0 0.0
  %135 = vmatprep.subr.mxu0 0.0
  %136 = vmatpush1.xpose.msra.mxu0 0.0
  %137 = vmatprep.subr.mxu0 0.0
  %138 = vmatpush1.xpose.msra.mxu0 0.0
  %139 = vmatprep.subr.mxu0 0.0
  %140 = vmatpush1.xpose.msra.mxu0 0.0
  %141 = vmatprep.subr.mxu0 0.0
  %142 = vmatpush1.xpose.msra.mxu0 0.0
  %143 = vmatprep.subr.mxu0 0.0
  %144 = vmatpush1.xpose.msra.mxu0 0.0
  %145 = vmatprep.subr.mxu0 0.0
  %146 = vmatpush1.xpose.msra.mxu0 0.0
  %147 = vmatprep.subr.mxu0 0.0
  %148 = vmatpush1.xpose.msra.mxu0 0.0
  %149 = vmatprep.subr.mxu0 0.0
  %150 = vmatpush1.xpose.msra.mxu0 0.0
  %151 = vmatprep.subr.mxu0 0.0
  %152 = vmatpush1.xpose.msra.mxu0 0.0
  %153 = vmatprep.subr.mxu0 0.0
  %154 = vmatpush1.xpose.msra.mxu0 0.0
  %155 = vmatprep.subr.mxu0 0.0
  %156 = vmatpush1.xpose.msra.mxu0 0.0
  %157 = vmatprep.subr.mxu0 0.0
  %158 = vmatpush1.xpose.msra.mxu0 0.0
  %159 = vmatprep.subr.mxu0 0.0
  %160 = vmatpush1.xpose.msra.mxu0 0.0
  %161 = vmatprep.subr.mxu0 0.0
  %162 = vmatpush1.xpose.msra.mxu0 0.0
  %163 = vmatprep.subr.mxu0 0.0
  %164 = vmatpush1.xpose.msra.mxu0 0.0
  %165 = vmatprep.subr.mxu0 0.0
  %166 = vmatpush1.xpose.msra.mxu0 0.0
  %167 = vmatprep.subr.mxu0 0.0
  %168 = vmatpush1.xpose.msra.mxu0 0.0
  %169 = vmatprep.subr.mxu0 0.0
  %170 = vmatpush1.xpose.msra.mxu0 0.0
  %171 = vmatprep.subr.mxu0 0.0
  %172 = vmatpush1.xpose.msra.mxu0 0.0
  %173 = vmatprep.subr.mxu0 0.0
  %174 = vmatpush1.xpose.msra.mxu0 0.0
  %175 = vmatprep.subr.mxu0 0.0
  %176 = vmatpush1.xpose.msra.mxu0 0.0
  %177 = vmatprep.subr.mxu0 0.0
  %178 = vmatpush1.xpose.msra.mxu0 0.0
  %179 = vmatprep.subr.mxu0 0.0
  %180 = vmatpush1.xpose.msra.mxu0 0.0
  %181 = vmatprep.subr.mxu0 0.0
  %182 = vmatpush1.xpose.msra.mxu0 0.0
  %183 = vmatprep.subr.mxu0 0.0
  %184 = vmatpush1.xpose.msra.mxu0 0.0
  %185 = vmatprep.subr.mxu0 0.0
  %186 = vmatpush1.xpose.msra.mxu0 0.0
  %187 = vmatprep.mubr.f32.mxu0 0.0
  %188 = vmatmul.mubr.f32.gmra.mrb[0].mxu0 %v115
  %v189 = vpop.f32.mrb[0].mxu0
  %v190 = vadd.f32 0.0, %v189
  %v191 = vpop.f32.mrb[0].mxu0
  %192 = vdwg.mxu0
  %v194 = vsel %vm113, %v18, 0
  %v197 = vsel %vm113, %v35, 0
  %v200 = vsel %vm113, %v36, 0
  %202 = vmatprep.subr.mxu0 0.0
  %203 = vmatpush1.xpose.msra.mxu0 %v197
  %204 = vmatprep.subr.mxu0 0.0
  %205 = vmatpush1.xpose.msra.mxu0 %v200
  %206 = vmatprep.subr.mxu0 0.0
  %207 = vmatpush1.xpose.msra.mxu0 0.0
  %208 = vmatprep.subr.mxu0 0.0
  %209 = vmatpush1.xpose.msra.mxu0 0.0
  %210 = vmatprep.subr.mxu0 0.0
  %211 = vmatpush1.xpose.msra.mxu0 0.0
  %212 = vmatprep.subr.mxu0 0.0
  %213 = vmatpush1.xpose.msra.mxu0 0.0
  %214 = vmatprep.subr.mxu0 0.0
  %215 = vmatpush1.xpose.msra.mxu0 0.0
  %216 = vmatprep.subr.mxu0 0.0
  %217 = vmatpush1.xpose.msra.mxu0 0.0
  %218 = vmatprep.subr.mxu0 0.0
  %219 = vmatpush1.xpose.msra.mxu0 0.0
  %220 = vmatprep.subr.mxu0 0.0
  %221 = vmatpush1.xpose.msra.mxu0 0.0
  %222 = vmatprep.subr.mxu0 0.0
  %223 = vmatpush1.xpose.msra.mxu0 0.0
  %224 = vmatprep.subr.mxu0 0.0
  %225 = vmatpush1.xpose.msra.mxu0 0.0
  %226 = vmatprep.subr.mxu0 0.0
  %227 = vmatpush1.xpose.msra.mxu0 0.0
  %228 = vmatprep.subr.mxu0 0.0
  %229 = vmatpush1.xpose.msra.mxu0 0.0
  %230 = vmatprep.subr.mxu0 0.0
  %231 = vmatpush1.xpose.msra.mxu0 0.0
  %232 = vmatprep.subr.mxu0 0.0
  %233 = vmatpush1.xpose.msra.mxu0 0.0
  %234 = vmatprep.subr.mxu0 0.0
  %235 = vmatpush1.xpose.msra.mxu0 0.0
  %236 = vmatprep.subr.mxu0 0.0
  %237 = vmatpush1.xpose.msra.mxu0 0.0
  %238 = vmatprep.subr.mxu0 0.0
  %239 = vmatpush1.xpose.msra.mxu0 0.0
  %240 = vmatprep.subr.mxu0 0.0
  %241 = vmatpush1.xpose.msra.mxu0 0.0
  %242 = vmatprep.subr.mxu0 0.0
  %243 = vmatpush1.xpose.msra.mxu0 0.0
  %244 = vmatprep.subr.mxu0 0.0
  %245 = vmatpush1.xpose.msra.mxu0 0.0
  %246 = vmatprep.subr.mxu0 0.0
  %247 = vmatpush1.xpose.msra.mxu0 0.0
  %248 = vmatprep.subr.mxu0 0.0
  %249 = vmatpush1.xpose.msra.mxu0 0.0
  %250 = vmatprep.subr.mxu0 0.0
  %251 = vmatpush1.xpose.msra.mxu0 0.0
  %252 = vmatprep.subr.mxu0 0.0
  %253 = vmatpush1.xpose.msra.mxu0 0.0
  %254 = vmatprep.subr.mxu0 0.0
  %255 = vmatpush1.xpose.msra.mxu0 0.0
  %256 = vmatprep.subr.mxu0 0.0
  %257 = vmatpush1.xpose.msra.mxu0 0.0
  %258 = vmatprep.subr.mxu0 0.0
  %259 = vmatpush1.xpose.msra.mxu0 0.0
  %260 = vmatprep.subr.mxu0 0.0
  %261 = vmatpush1.xpose.msra.mxu0 0.0
  %262 = vmatprep.subr.mxu0 0.0
  %263 = vmatpush1.xpose.msra.mxu0 0.0
  %264 = vmatprep.subr.mxu0 0.0
  %265 = vmatpush1.xpose.msra.mxu0 0.0
  %266 = vmatprep.mubr.f32.mxu0 0.0
  %267 = vmatmul.mubr.f32.gmra.mrb[0].mxu0 %v194
  %v268 = vpop.f32.mrb[0].mxu0
  %v269 = vadd.f32 0.0, %v268
  %v270 = vpop.f32.mrb[0].mxu0
  %271 = vdwg.mxu0
  %v273 = vsel %vm113, %v19, 0
  %v276 = vsel %vm113, %v37, 0
  %v279 = vsel %vm113, %v38, 0
  %281 = vmatprep.subr.mxu0 0.0
  %282 = vmatpush1.xpose.msra.mxu0 %v276
  %283 = vmatprep.subr.mxu0 0.0
  %284 = vmatpush1.xpose.msra.mxu0 %v279
  %285 = vmatprep.subr.mxu0 0.0
  %286 = vmatpush1.xpose.msra.mxu0 0.0
  %287 = vmatprep.subr.mxu0 0.0
  %288 = vmatpush1.xpose.msra.mxu0 0.0
  %289 = vmatprep.subr.mxu0 0.0
  %290 = vmatpush1.xpose.msra.mxu0 0.0
  %291 = vmatprep.subr.mxu0 0.0
  %292 = vmatpush1.xpose.msra.mxu0 0.0
  %293 = vmatprep.subr.mxu0 0.0
  %294 = vmatpush1.xpose.msra.mxu0 0.0
  %295 = vmatprep.subr.mxu0 0.0
  %296 = vmatpush1.xpose.msra.mxu0 0.0
  %297 = vmatprep.subr.mxu0 0.0
  %298 = vmatpush1.xpose.msra.mxu0 0.0
  %299 = vmatprep.subr.mxu0 0.0
  %300 = vmatpush1.xpose.msra.mxu0 0.0
  %301 = vmatprep.subr.mxu0 0.0
  %302 = vmatpush1.xpose.msra.mxu0 0.0
  %303 = vmatprep.subr.mxu0 0.0
  %304 = vmatpush1.xpose.msra.mxu0 0.0
  %305 = vmatprep.subr.mxu0 0.0
  %306 = vmatpush1.xpose.msra.mxu0 0.0
  %307 = vmatprep.subr.mxu0 0.0
  %308 = vmatpush1.xpose.msra.mxu0 0.0
  %309 = vmatprep.subr.mxu0 0.0
  %310 = vmatpush1.xpose.msra.mxu0 0.0
  %311 = vmatprep.subr.mxu0 0.0
  %312 = vmatpush1.xpose.msra.mxu0 0.0
  %313 = vmatprep.subr.mxu0 0.0
  %314 = vmatpush1.xpose.msra.mxu0 0.0
  %315 = vmatprep.subr.mxu0 0.0
  %316 = vmatpush1.xpose.msra.mxu0 0.0
  %317 = vmatprep.subr.mxu0 0.0
  %318 = vmatpush1.xpose.msra.mxu0 0.0
  %319 = vmatprep.subr.mxu0 0.0
  %320 = vmatpush1.xpose.msra.mxu0 0.0
  %321 = vmatprep.subr.mxu0 0.0
  %322 = vmatpush1.xpose.msra.mxu0 0.0
  %323 = vmatprep.subr.mxu0 0.0
  %324 = vmatpush1.xpose.msra.mxu0 0.0
  %325 = vmatprep.subr.mxu0 0.0
  %326 = vmatpush1.xpose.msra.mxu0 0.0
  %327 = vmatprep.subr.mxu0 0.0
  %328 = vmatpush1.xpose.msra.mxu0 0.0
  %329 = vmatprep.subr.mxu0 0.0
  %330 = vmatpush1.xpose.msra.mxu0 0.0
  %331 = vmatprep.subr.mxu0 0.0
  %332 = vmatpush1.xpose.msra.mxu0 0.0
  %333 = vmatprep.subr.mxu0 0.0
  %334 = vmatpush1.xpose.msra.mxu0 0.0
  %335 = vmatprep.subr.mxu0 0.0
  %336 = vmatpush1.xpose.msra.mxu0 0.0
  %337 = vmatprep.subr.mxu0 0.0
  %338 = vmatpush1.xpose.msra.mxu0 0.0
  %339 = vmatprep.subr.mxu0 0.0
  %340 = vmatpush1.xpose.msra.mxu0 0.0
  %341 = vmatprep.subr.mxu0 0.0
  %342 = vmatpush1.xpose.msra.mxu0 0.0
  %343 = vmatprep.subr.mxu0 0.0
  %344 = vmatpush1.xpose.msra.mxu0 0.0
  %345 = vmatprep.mubr.f32.mxu0 0.0
  %346 = vmatmul.mubr.f32.gmra.mrb[0].mxu0 %v273
  %v347 = vpop.f32.mrb[0].mxu0
  %v348 = vadd.f32 0.0, %v347
  %v349 = vpop.f32.mrb[0].mxu0
  %350 = vdwg.mxu0
  %v352 = vsel %vm113, %v20, 0
  %v355 = vsel %vm113, %v39, 0
  %v358 = vsel %vm113, %v40, 0
  %360 = vmatprep.subr.mxu0 0.0
  %361 = vmatpush1.xpose.msra.mxu0 %v355
  %362 = vmatprep.subr.mxu0 0.0
  %363 = vmatpush1.xpose.msra.mxu0 %v358
  %364 = vmatprep.subr.mxu0 0.0
  %365 = vmatpush1.xpose.msra.mxu0 0.0
  %366 = vmatprep.subr.mxu0 0.0
  %367 = vmatpush1.xpose.msra.mxu0 0.0
  %368 = vmatprep.subr.mxu0 0.0
  %369 = vmatpush1.xpose.msra.mxu0 0.0
  %370 = vmatprep.subr.mxu0 0.0
  %371 = vmatpush1.xpose.msra.mxu0 0.0
  %372 = vmatprep.subr.mxu0 0.0
  %373 = vmatpush1.xpose.msra.mxu0 0.0
  %374 = vmatprep.subr.mxu0 0.0
  %375 = vmatpush1.xpose.msra.mxu0 0.0
  %376 = vmatprep.subr.mxu0 0.0
  %377 = vmatpush1.xpose.msra.mxu0 0.0
  %378 = vmatprep.subr.mxu0 0.0
  %379 = vmatpush1.xpose.msra.mxu0 0.0
  %380 = vmatprep.subr.mxu0 0.0
  %381 = vmatpush1.xpose.msra.mxu0 0.0
  %382 = vmatprep.subr.mxu0 0.0
  %383 = vmatpush1.xpose.msra.mxu0 0.0
  %384 = vmatprep.subr.mxu0 0.0
  %385 = vmatpush1.xpose.msra.mxu0 0.0
  %386 = vmatprep.subr.mxu0 0.0
  %387 = vmatpush1.xpose.msra.mxu0 0.0
  %388 = vmatprep.subr.mxu0 0.0
  %389 = vmatpush1.xpose.msra.mxu0 0.0
  %390 = vmatprep.subr.mxu0 0.0
  %391 = vmatpush1.xpose.msra.mxu0 0.0
  %392 = vmatprep.subr.mxu0 0.0
  %393 = vmatpush1.xpose.msra.mxu0 0.0
  %394 = vmatprep.subr.mxu0 0.0
  %395 = vmatpush1.xpose.msra.mxu0 0.0
  %396 = vmatprep.subr.mxu0 0.0
  %397 = vmatpush1.xpose.msra.mxu0 0.0
  %398 = vmatprep.subr.mxu0 0.0
  %399 = vmatpush1.xpose.msra.mxu0 0.0
  %400 = vmatprep.subr.mxu0 0.0
  %401 = vmatpush1.xpose.msra.mxu0 0.0
  %402 = vmatprep.subr.mxu0 0.0
  %403 = vmatpush1.xpose.msra.mxu0 0.0
  %404 = vmatprep.subr.mxu0 0.0
  %405 = vmatpush1.xpose.msra.mxu0 0.0
  %406 = vmatprep.subr.mxu0 0.0
  %407 = vmatpush1.xpose.msra.mxu0 0.0
  %408 = vmatprep.subr.mxu0 0.0
  %409 = vmatpush1.xpose.msra.mxu0 0.0
  %410 = vmatprep.subr.mxu0 0.0
  %411 = vmatpush1.xpose.msra.mxu0 0.0
  %412 = vmatprep.subr.mxu0 0.0
  %413 = vmatpush1.xpose.msra.mxu0 0.0
  %414 = vmatprep.subr.mxu0 0.0
  %415 = vmatpush1.xpose.msra.mxu0 0.0
  %416 = vmatprep.subr.mxu0 0.0
  %417 = vmatpush1.xpose.msra.mxu0 0.0
  %418 = vmatprep.subr.mxu0 0.0
  %419 = vmatpush1.xpose.msra.mxu0 0.0
  %420 = vmatprep.subr.mxu0 0.0
  %421 = vmatpush1.xpose.msra.mxu0 0.0
  %422 = vmatprep.subr.mxu0 0.0
  %423 = vmatpush1.xpose.msra.mxu0 0.0
  %424 = vmatprep.mubr.f32.mxu0 0.0
  %425 = vmatmul.mubr.f32.gmra.mrb[0].mxu0 %v352
  %v426 = vpop.f32.mrb[0].mxu0
  %v427 = vadd.f32 0.0, %v426
  %v428 = vpop.f32.mrb[0].mxu0
  %429 = vdwg.mxu0
  %v431 = vsel %vm113, %v21, 0
  %v434 = vsel %vm113, %v41, 0
  %v437 = vsel %vm113, %v42, 0
  %439 = vmatprep.subr.mxu0 0.0
  %440 = vmatpush1.xpose.msra.mxu0 %v434
  %441 = vmatprep.subr.mxu0 0.0
  %442 = vmatpush1.xpose.msra.mxu0 %v437
  %443 = vmatprep.subr.mxu0 0.0
  %444 = vmatpush1.xpose.msra.mxu0 0.0
  %445 = vmatprep.subr.mxu0 0.0
  %446 = vmatpush1.xpose.msra.mxu0 0.0
  %447 = vmatprep.subr.mxu0 0.0
  %448 = vmatpush1.xpose.msra.mxu0 0.0
  %449 = vmatprep.subr.mxu0 0.0
  %450 = vmatpush1.xpose.msra.mxu0 0.0
  %451 = vmatprep.subr.mxu0 0.0
  %452 = vmatpush1.xpose.msra.mxu0 0.0
  %453 = vmatprep.subr.mxu0 0.0
  %454 = vmatpush1.xpose.msra.mxu0 0.0
  %455 = vmatprep.subr.mxu0 0.0
  %456 = vmatpush1.xpose.msra.mxu0 0.0
  %457 = vmatprep.subr.mxu0 0.0
  %458 = vmatpush1.xpose.msra.mxu0 0.0
  %459 = vmatprep.subr.mxu0 0.0
  %460 = vmatpush1.xpose.msra.mxu0 0.0
  %461 = vmatprep.subr.mxu0 0.0
  %462 = vmatpush1.xpose.msra.mxu0 0.0
  %463 = vmatprep.subr.mxu0 0.0
  %464 = vmatpush1.xpose.msra.mxu0 0.0
  %465 = vmatprep.subr.mxu0 0.0
  %466 = vmatpush1.xpose.msra.mxu0 0.0
  %467 = vmatprep.subr.mxu0 0.0
  %468 = vmatpush1.xpose.msra.mxu0 0.0
  %469 = vmatprep.subr.mxu0 0.0
  %470 = vmatpush1.xpose.msra.mxu0 0.0
  %471 = vmatprep.subr.mxu0 0.0
  %472 = vmatpush1.xpose.msra.mxu0 0.0
  %473 = vmatprep.subr.mxu0 0.0
  %474 = vmatpush1.xpose.msra.mxu0 0.0
  %475 = vmatprep.subr.mxu0 0.0
  %476 = vmatpush1.xpose.msra.mxu0 0.0
  %477 = vmatprep.subr.mxu0 0.0
  %478 = vmatpush1.xpose.msra.mxu0 0.0
  %479 = vmatprep.subr.mxu0 0.0
  %480 = vmatpush1.xpose.msra.mxu0 0.0
  %481 = vmatprep.subr.mxu0 0.0
  %482 = vmatpush1.xpose.msra.mxu0 0.0
  %483 = vmatprep.subr.mxu0 0.0
  %484 = vmatpush1.xpose.msra.mxu0 0.0
  %485 = vmatprep.subr.mxu0 0.0
  %486 = vmatpush1.xpose.msra.mxu0 0.0
  %487 = vmatprep.subr.mxu0 0.0
  %488 = vmatpush1.xpose.msra.mxu0 0.0
  %489 = vmatprep.subr.mxu0 0.0
  %490 = vmatpush1.xpose.msra.mxu0 0.0
  %491 = vmatprep.subr.mxu0 0.0
  %492 = vmatpush1.xpose.msra.mxu0 0.0
  %493 = vmatprep.subr.mxu0 0.0
  %494 = vmatpush1.xpose.msra.mxu0 0.0
  %495 = vmatprep.subr.mxu0 0.0
  %496 = vmatpush1.xpose.msra.mxu0 0.0
  %497 = vmatprep.subr.mxu0 0.0
  %498 = vmatpush1.xpose.msra.mxu0 0.0
  %499 = vmatprep.subr.mxu0 0.0
  %500 = vmatpush1.xpose.msra.mxu0 0.0
  %501 = vmatprep.subr.mxu0 0.0
  %502 = vmatpush1.xpose.msra.mxu0 0.0
  %503 = vmatprep.mubr.f32.mxu0 0.0
  %504 = vmatmul.mubr.f32.gmra.mrb[0].mxu0 %v431
  %v505 = vpop.f32.mrb[0].mxu0
  %v506 = vadd.f32 0.0, %v505
  %v507 = vpop.f32.mrb[0].mxu0
  %508 = vdwg.mxu0
  %v510 = vsel %vm113, %v22, 0
  %v513 = vsel %vm113, %v43, 0
  %v516 = vsel %vm113, %v44, 0
  %518 = vmatprep.subr.mxu0 0.0
  %519 = vmatpush1.xpose.msra.mxu0 %v513
  %520 = vmatprep.subr.mxu0 0.0
  %521 = vmatpush1.xpose.msra.mxu0 %v516
  %522 = vmatprep.subr.mxu0 0.0
  %523 = vmatpush1.xpose.msra.mxu0 0.0
  %524 = vmatprep.subr.mxu0 0.0
  %525 = vmatpush1.xpose.msra.mxu0 0.0
  %526 = vmatprep.subr.mxu0 0.0
  %527 = vmatpush1.xpose.msra.mxu0 0.0
  %528 = vmatprep.subr.mxu0 0.0
  %529 = vmatpush1.xpose.msra.mxu0 0.0
  %530 = vmatprep.subr.mxu0 0.0
  %531 = vmatpush1.xpose.msra.mxu0 0.0
  %532 = vmatprep.subr.mxu0 0.0
  %533 = vmatpush1.xpose.msra.mxu0 0.0
  %534 = vmatprep.subr.mxu0 0.0
  %535 = vmatpush1.xpose.msra.mxu0 0.0
  %536 = vmatprep.subr.mxu0 0.0
  %537 = vmatpush1.xpose.msra.mxu0 0.0
  %538 = vmatprep.subr.mxu0 0.0
  %539 = vmatpush1.xpose.msra.mxu0 0.0
  %540 = vmatprep.subr.mxu0 0.0
  %541 = vmatpush1.xpose.msra.mxu0 0.0
  %542 = vmatprep.subr.mxu0 0.0
  %543 = vmatpush1.xpose.msra.mxu0 0.0
  %544 = vmatprep.subr.mxu0 0.0
  %545 = vmatpush1.xpose.msra.mxu0 0.0
  %546 = vmatprep.subr.mxu0 0.0
  %547 = vmatpush1.xpose.msra.mxu0 0.0
  %548 = vmatprep.subr.mxu0 0.0
  %549 = vmatpush1.xpose.msra.mxu0 0.0
  %550 = vmatprep.subr.mxu0 0.0
  %551 = vmatpush1.xpose.msra.mxu0 0.0
  %552 = vmatprep.subr.mxu0 0.0
  %553 = vmatpush1.xpose.msra.mxu0 0.0
  %554 = vmatprep.subr.mxu0 0.0
  %555 = vmatpush1.xpose.msra.mxu0 0.0
  %556 = vmatprep.subr.mxu0 0.0
  %557 = vmatpush1.xpose.msra.mxu0 0.0
  %558 = vmatprep.subr.mxu0 0.0
  %559 = vmatpush1.xpose.msra.mxu0 0.0
  %560 = vmatprep.subr.mxu0 0.0
  %561 = vmatpush1.xpose.msra.mxu0 0.0
  %562 = vmatprep.subr.mxu0 0.0
  %563 = vmatpush1.xpose.msra.mxu0 0.0
  %564 = vmatprep.subr.mxu0 0.0
  %565 = vmatpush1.xpose.msra.mxu0 0.0
  %566 = vmatprep.subr.mxu0 0.0
  %567 = vmatpush1.xpose.msra.mxu0 0.0
  %568 = vmatprep.subr.mxu0 0.0
  %569 = vmatpush1.xpose.msra.mxu0 0.0
  %570 = vmatprep.subr.mxu0 0.0
  %571 = vmatpush1.xpose.msra.mxu0 0.0
  %572 = vmatprep.subr.mxu0 0.0
  %573 = vmatpush1.xpose.msra.mxu0 0.0
  %574 = vmatprep.subr.mxu0 0.0
  %575 = vmatpush1.xpose.msra.mxu0 0.0
  %576 = vmatprep.subr.mxu0 0.0
  %577 = vmatpush1.xpose.msra.mxu0 0.0
  %578 = vmatprep.subr.mxu0 0.0
  %579 = vmatpush1.xpose.msra.mxu0 0.0
  %580 = vmatprep.subr.mxu0 0.0
  %581 = vmatpush1.xpose.msra.mxu0 0.0
  %582 = vmatprep.mubr.f32.mxu0 0.0
  %583 = vmatmul.mubr.f32.gmra.mrb[0].mxu0 %v510
  %v584 = vpop.f32.mrb[0].mxu0
  %v585 = vadd.f32 0.0, %v584
  %v586 = vpop.f32.mrb[0].mxu0
  %587 = vdwg.mxu0
  %v589 = vsel %vm113, %v23, 0
  %v592 = vsel %vm113, %v45, 0
  %v595 = vsel %vm113, %v46, 0
  %597 = vmatprep.subr.mxu0 0.0
  %598 = vmatpush1.xpose.msra.mxu0 %v592
  %599 = vmatprep.subr.mxu0 0.0
  %600 = vmatpush1.xpose.msra.mxu0 %v595
  %601 = vmatprep.subr.mxu0 0.0
  %602 = vmatpush1.xpose.msra.mxu0 0.0
  %603 = vmatprep.subr.mxu0 0.0
  %604 = vmatpush1.xpose.msra.mxu0 0.0
  %605 = vmatprep.subr.mxu0 0.0
  %606 = vmatpush1.xpose.msra.mxu0 0.0
  %607 = vmatprep.subr.mxu0 0.0
  %608 = vmatpush1.xpose.msra.mxu0 0.0
  %609 = vmatprep.subr.mxu0 0.0
  %610 = vmatpush1.xpose.msra.mxu0 0.0
  %611 = vmatprep.subr.mxu0 0.0
  %612 = vmatpush1.xpose.msra.mxu0 0.0
  %613 = vmatprep.subr.mxu0 0.0
  %614 = vmatpush1.xpose.msra.mxu0 0.0
  %615 = vmatprep.subr.mxu0 0.0
  %616 = vmatpush1.xpose.msra.mxu0 0.0
  %617 = vmatprep.subr.mxu0 0.0
  %618 = vmatpush1.xpose.msra.mxu0 0.0
  %619 = vmatprep.subr.mxu0 0.0
  %620 = vmatpush1.xpose.msra.mxu0 0.0
  %621 = vmatprep.subr.mxu0 0.0
  %622 = vmatpush1.xpose.msra.mxu0 0.0
  %623 = vmatprep.subr.mxu0 0.0
  %624 = vmatpush1.xpose.msra.mxu0 0.0
  %625 = vmatprep.subr.mxu0 0.0
  %626 = vmatpush1.xpose.msra.mxu0 0.0
  %627 = vmatprep.subr.mxu0 0.0
  %628 = vmatpush1.xpose.msra.mxu0 0.0
  %629 = vmatprep.subr.mxu0 0.0
  %630 = vmatpush1.xpose.msra.mxu0 0.0
  %631 = vmatprep.subr.mxu0 0.0
  %632 = vmatpush1.xpose.msra.mxu0 0.0
  %633 = vmatprep.subr.mxu0 0.0
  %634 = vmatpush1.xpose.msra.mxu0 0.0
  %635 = vmatprep.subr.mxu0 0.0
  %636 = vmatpush1.xpose.msra.mxu0 0.0
  %637 = vmatprep.subr.mxu0 0.0
  %638 = vmatpush1.xpose.msra.mxu0 0.0
  %639 = vmatprep.subr.mxu0 0.0
  %640 = vmatpush1.xpose.msra.mxu0 0.0
  %641 = vmatprep.subr.mxu0 0.0
  %642 = vmatpush1.xpose.msra.mxu0 0.0
  %643 = vmatprep.subr.mxu0 0.0
  %644 = vmatpush1.xpose.msra.mxu0 0.0
  %645 = vmatprep.subr.mxu0 0.0
  %646 = vmatpush1.xpose.msra.mxu0 0.0
  %647 = vmatprep.subr.mxu0 0.0
  %648 = vmatpush1.xpose.msra.mxu0 0.0
  %649 = vmatprep.subr.mxu0 0.0
  %650 = vmatpush1.xpose.msra.mxu0 0.0
  %651 = vmatprep.subr.mxu0 0.0
  %652 = vmatpush1.xpose.msra.mxu0 0.0
  %653 = vmatprep.subr.mxu0 0.0
  %654 = vmatpush1.xpose.msra.mxu0 0.0
  %655 = vmatprep.subr.mxu0 0.0
  %656 = vmatpush1.xpose.msra.mxu0 0.0
  %657 = vmatprep.subr.mxu0 0.0
  %658 = vmatpush1.xpose.msra.mxu0 0.0
  %659 = vmatprep.subr.mxu0 0.0
  %660 = vmatpush1.xpose.msra.mxu0 0.0
  %661 = vmatprep.mubr.f32.mxu0 0.0
  %662 = vmatmul.mubr.f32.gmra.mrb[0].mxu0 %v589
  %v663 = vpop.f32.mrb[0].mxu0
  %v664 = vadd.f32 0.0, %v663
  %v665 = vpop.f32.mrb[0].mxu0
  %666 = vdwg.mxu0
  %v668 = vsel %vm113, %v24, 0
  %v671 = vsel %vm113, %v47, 0
  %v674 = vsel %vm113, %v48, 0
  %676 = vmatprep.subr.mxu0 0.0
  %677 = vmatpush1.xpose.msra.mxu0 %v671
  %678 = vmatprep.subr.mxu0 0.0
  %679 = vmatpush1.xpose.msra.mxu0 %v674
  %680 = vmatprep.subr.mxu0 0.0
  %681 = vmatpush1.xpose.msra.mxu0 0.0
  %682 = vmatprep.subr.mxu0 0.0
  %683 = vmatpush1.xpose.msra.mxu0 0.0
  %684 = vmatprep.subr.mxu0 0.0
  %685 = vmatpush1.xpose.msra.mxu0 0.0
  %686 = vmatprep.subr.mxu0 0.0
  %687 = vmatpush1.xpose.msra.mxu0 0.0
  %688 = vmatprep.subr.mxu0 0.0
  %689 = vmatpush1.xpose.msra.mxu0 0.0
  %690 = vmatprep.subr.mxu0 0.0
  %691 = vmatpush1.xpose.msra.mxu0 0.0
  %692 = vmatprep.subr.mxu0 0.0
  %693 = vmatpush1.xpose.msra.mxu0 0.0
  %694 = vmatprep.subr.mxu0 0.0
  %695 = vmatpush1.xpose.msra.mxu0 0.0
  %696 = vmatprep.subr.mxu0 0.0
  %697 = vmatpush1.xpose.msra.mxu0 0.0
  %698 = vmatprep.subr.mxu0 0.0
  %699 = vmatpush1.xpose.msra.mxu0 0.0
  %700 = vmatprep.subr.mxu0 0.0
  %701 = vmatpush1.xpose.msra.mxu0 0.0
  %702 = vmatprep.subr.mxu0 0.0
  %703 = vmatpush1.xpose.msra.mxu0 0.0
  %704 = vmatprep.subr.mxu0 0.0
  %705 = vmatpush1.xpose.msra.mxu0 0.0
  %706 = vmatprep.subr.mxu0 0.0
  %707 = vmatpush1.xpose.msra.mxu0 0.0
  %708 = vmatprep.subr.mxu0 0.0
  %709 = vmatpush1.xpose.msra.mxu0 0.0
  %710 = vmatprep.subr.mxu0 0.0
  %711 = vmatpush1.xpose.msra.mxu0 0.0
  %712 = vmatprep.subr.mxu0 0.0
  %713 = vmatpush1.xpose.msra.mxu0 0.0
  %714 = vmatprep.subr.mxu0 0.0
  %715 = vmatpush1.xpose.msra.mxu0 0.0
  %716 = vmatprep.subr.mxu0 0.0
  %717 = vmatpush1.xpose.msra.mxu0 0.0
  %718 = vmatprep.subr.mxu0 0.0
  %719 = vmatpush1.xpose.msra.mxu0 0.0
  %720 = vmatprep.subr.mxu0 0.0
  %721 = vmatpush1.xpose.msra.mxu0 0.0
  %722 = vmatprep.subr.mxu0 0.0
  %723 = vmatpush1.xpose.msra.mxu0 0.0
  %724 = vmatprep.subr.mxu0 0.0
  %725 = vmatpush1.xpose.msra.mxu0 0.0
  %726 = vmatprep.subr.mxu0 0.0
  %727 = vmatpush1.xpose.msra.mxu0 0.0
  %728 = vmatprep.subr.mxu0 0.0
  %729 = vmatpush1.xpose.msra.mxu0 0.0
  %730 = vmatprep.subr.mxu0 0.0
  %731 = vmatpush1.xpose.msra.mxu0 0.0
  %732 = vmatprep.subr.mxu0 0.0
  %733 = vmatpush1.xpose.msra.mxu0 0.0
  %734 = vmatprep.subr.mxu0 0.0
  %735 = vmatpush1.xpose.msra.mxu0 0.0
  %736 = vmatprep.subr.mxu0 0.0
  %737 = vmatpush1.xpose.msra.mxu0 0.0
  %738 = vmatprep.subr.mxu0 0.0
  %739 = vmatpush1.xpose.msra.mxu0 0.0
  %740 = vmatprep.mubr.f32.mxu0 0.0
  %741 = vmatmul.mubr.f32.gmra.mrb[0].mxu0 %v668
  %v742 = vpop.f32.mrb[0].mxu0
  %v743 = vadd.f32 0.0, %v742
  %v744 = vpop.f32.mrb[0].mxu0
  %745 = vdwg.mxu0
  %v747 = vsel %vm113, %v25, 0
  %v750 = vsel %vm113, %v49, 0
  %v753 = vsel %vm113, %v50, 0
  %755 = vmatprep.subr.mxu0 0.0
  %756 = vmatpush1.xpose.msra.mxu0 %v750
  %757 = vmatprep.subr.mxu0 0.0
  %758 = vmatpush1.xpose.msra.mxu0 %v753
  %759 = vmatprep.subr.mxu0 0.0
  %760 = vmatpush1.xpose.msra.mxu0 0.0
  %761 = vmatprep.subr.mxu0 0.0
  %762 = vmatpush1.xpose.msra.mxu0 0.0
  %763 = vmatprep.subr.mxu0 0.0
  %764 = vmatpush1.xpose.msra.mxu0 0.0
  %765 = vmatprep.subr.mxu0 0.0
  %766 = vmatpush1.xpose.msra.mxu0 0.0
  %767 = vmatprep.subr.mxu0 0.0
  %768 = vmatpush1.xpose.msra.mxu0 0.0
  %769 = vmatprep.subr.mxu0 0.0
  %770 = vmatpush1.xpose.msra.mxu0 0.0
  %771 = vmatprep.subr.mxu0 0.0
  %772 = vmatpush1.xpose.msra.mxu0 0.0
  %773 = vmatprep.subr.mxu0 0.0
  %774 = vmatpush1.xpose.msra.mxu0 0.0
  %775 = vmatprep.subr.mxu0 0.0
  %776 = vmatpush1.xpose.msra.mxu0 0.0
  %777 = vmatprep.subr.mxu0 0.0
  %778 = vmatpush1.xpose.msra.mxu0 0.0
  %779 = vmatprep.subr.mxu0 0.0
  %780 = vmatpush1.xpose.msra.mxu0 0.0
  %781 = vmatprep.subr.mxu0 0.0
  %782 = vmatpush1.xpose.msra.mxu0 0.0
  %783 = vmatprep.subr.mxu0 0.0
  %784 = vmatpush1.xpose.msra.mxu0 0.0
  %785 = vmatprep.subr.mxu0 0.0
  %786 = vmatpush1.xpose.msra.mxu0 0.0
  %787 = vmatprep.subr.mxu0 0.0
  %788 = vmatpush1.xpose.msra.mxu0 0.0
  %789 = vmatprep.subr.mxu0 0.0
  %790 = vmatpush1.xpose.msra.mxu0 0.0
  %791 = vmatprep.subr.mxu0 0.0
  %792 = vmatpush1.xpose.msra.mxu0 0.0
  %793 = vmatprep.subr.mxu0 0.0
  %794 = vmatpush1.xpose.msra.mxu0 0.0
  %795 = vmatprep.subr.mxu0 0.0
  %796 = vmatpush1.xpose.msra.mxu0 0.0
  %797 = vmatprep.subr.mxu0 0.0
  %798 = vmatpush1.xpose.msra.mxu0 0.0
  %799 = vmatprep.subr.mxu0 0.0
  %800 = vmatpush1.xpose.msra.mxu0 0.0
  %801 = vmatprep.subr.mxu0 0.0
  %802 = vmatpush1.xpose.msra.mxu0 0.0
  %803 = vmatprep.subr.mxu0 0.0
  %804 = vmatpush1.xpose.msra.mxu0 0.0
  %805 = vmatprep.subr.mxu0 0.0
  %806 = vmatpush1.xpose.msra.mxu0 0.0
  %807 = vmatprep.subr.mxu0 0.0
  %808 = vmatpush1.xpose.msra.mxu0 0.0
  %809 = vmatprep.subr.mxu0 0.0
  %810 = vmatpush1.xpose.msra.mxu0 0.0
  %811 = vmatprep.subr.mxu0 0.0
  %812 = vmatpush1.xpose.msra.mxu0 0.0
  %813 = vmatprep.subr.mxu0 0.0
  %814 = vmatpush1.xpose.msra.mxu0 0.0
  %815 = vmatprep.subr.mxu0 0.0
  %816 = vmatpush1.xpose.msra.mxu0 0.0
  %817 = vmatprep.subr.mxu0 0.0
  %818 = vmatpush1.xpose.msra.mxu0 0.0
  %819 = vmatprep.mubr.f32.mxu0 0.0
  %820 = vmatmul.mubr.f32.gmra.mrb[0].mxu0 %v747
  %v821 = vpop.f32.mrb[0].mxu0
  %v822 = vadd.f32 0.0, %v821
  %v823 = vpop.f32.mrb[0].mxu0
  %824 = vdwg.mxu0
  %v826 = vsel %vm113, %v26, 0
  %v829 = vsel %vm113, %v51, 0
  %v832 = vsel %vm113, %v52, 0
  %834 = vmatprep.subr.mxu0 0.0
  %835 = vmatpush1.xpose.msra.mxu0 %v829
  %836 = vmatprep.subr.mxu0 0.0
  %837 = vmatpush1.xpose.msra.mxu0 %v832
  %838 = vmatprep.subr.mxu0 0.0
  %839 = vmatpush1.xpose.msra.mxu0 0.0
  %840 = vmatprep.subr.mxu0 0.0
  %841 = vmatpush1.xpose.msra.mxu0 0.0
  %842 = vmatprep.subr.mxu0 0.0
  %843 = vmatpush1.xpose.msra.mxu0 0.0
  %844 = vmatprep.subr.mxu0 0.0
  %845 = vmatpush1.xpose.msra.mxu0 0.0
  %846 = vmatprep.subr.mxu0 0.0
  %847 = vmatpush1.xpose.msra.mxu0 0.0
  %848 = vmatprep.subr.mxu0 0.0
  %849 = vmatpush1.xpose.msra.mxu0 0.0
  %850 = vmatprep.subr.mxu0 0.0
  %851 = vmatpush1.xpose.msra.mxu0 0.0
  %852 = vmatprep.subr.mxu0 0.0
  %853 = vmatpush1.xpose.msra.mxu0 0.0
  %854 = vmatprep.subr.mxu0 0.0
  %855 = vmatpush1.xpose.msra.mxu0 0.0
  %856 = vmatprep.subr.mxu0 0.0
  %857 = vmatpush1.xpose.msra.mxu0 0.0
  %858 = vmatprep.subr.mxu0 0.0
  %859 = vmatpush1.xpose.msra.mxu0 0.0
  %860 = vmatprep.subr.mxu0 0.0
  %861 = vmatpush1.xpose.msra.mxu0 0.0
  %862 = vmatprep.subr.mxu0 0.0
  %863 = vmatpush1.xpose.msra.mxu0 0.0
  %864 = vmatprep.subr.mxu0 0.0
  %865 = vmatpush1.xpose.msra.mxu0 0.0
  %866 = vmatprep.subr.mxu0 0.0
  %867 = vmatpush1.xpose.msra.mxu0 0.0
  %868 = vmatprep.subr.mxu0 0.0
  %869 = vmatpush1.xpose.msra.mxu0 0.0
  %870 = vmatprep.subr.mxu0 0.0
  %871 = vmatpush1.xpose.msra.mxu0 0.0
  %872 = vmatprep.subr.mxu0 0.0
  %873 = vmatpush1.xpose.msra.mxu0 0.0
  %874 = vmatprep.subr.mxu0 0.0
  %875 = vmatpush1.xpose.msra.mxu0 0.0
  %876 = vmatprep.subr.mxu0 0.0
  %877 = vmatpush1.xpose.msra.mxu0 0.0
  %878 = vmatprep.subr.mxu0 0.0
  %879 = vmatpush1.xpose.msra.mxu0 0.0
  %880 = vmatprep.subr.mxu0 0.0
  %881 = vmatpush1.xpose.msra.mxu0 0.0
  %882 = vmatprep.subr.mxu0 0.0
  %883 = vmatpush1.xpose.msra.mxu0 0.0
  %884 = vmatprep.subr.mxu0 0.0
  %885 = vmatpush1.xpose.msra.mxu0 0.0
  %886 = vmatprep.subr.mxu0 0.0
  %887 = vmatpush1.xpose.msra.mxu0 0.0
  %888 = vmatprep.subr.mxu0 0.0
  %889 = vmatpush1.xpose.msra.mxu0 0.0
  %890 = vmatprep.subr.mxu0 0.0
  %891 = vmatpush1.xpose.msra.mxu0 0.0
  %892 = vmatprep.subr.mxu0 0.0
  %893 = vmatpush1.xpose.msra.mxu0 0.0
  %894 = vmatprep.subr.mxu0 0.0
  %895 = vmatpush1.xpose.msra.mxu0 0.0
  %896 = vmatprep.subr.mxu0 0.0
  %897 = vmatpush1.xpose.msra.mxu0 0.0
  %898 = vmatprep.mubr.f32.mxu0 0.0
  %899 = vmatmul.mubr.f32.gmra.mrb[0].mxu0 %v826
  %v900 = vpop.f32.mrb[0].mxu0
  %v901 = vadd.f32 0.0, %v900
  %v902 = vpop.f32.mrb[0].mxu0
  %903 = vdwg.mxu0
  %v905 = vsel %vm113, %v27, 0
  %v908 = vsel %vm113, %v53, 0
  %v911 = vsel %vm113, %v54, 0
  %913 = vmatprep.subr.mxu0 0.0
  %914 = vmatpush1.xpose.msra.mxu0 %v908
  %915 = vmatprep.subr.mxu0 0.0
  %916 = vmatpush1.xpose.msra.mxu0 %v911
  %917 = vmatprep.subr.mxu0 0.0
  %918 = vmatpush1.xpose.msra.mxu0 0.0
  %919 = vmatprep.subr.mxu0 0.0
  %920 = vmatpush1.xpose.msra.mxu0 0.0
  %921 = vmatprep.subr.mxu0 0.0
  %922 = vmatpush1.xpose.msra.mxu0 0.0
  %923 = vmatprep.subr.mxu0 0.0
  %924 = vmatpush1.xpose.msra.mxu0 0.0
  %925 = vmatprep.subr.mxu0 0.0
  %926 = vmatpush1.xpose.msra.mxu0 0.0
  %927 = vmatprep.subr.mxu0 0.0
  %928 = vmatpush1.xpose.msra.mxu0 0.0
  %929 = vmatprep.subr.mxu0 0.0
  %930 = vmatpush1.xpose.msra.mxu0 0.0
  %931 = vmatprep.subr.mxu0 0.0
  %932 = vmatpush1.xpose.msra.mxu0 0.0
  %933 = vmatprep.subr.mxu0 0.0
  %934 = vmatpush1.xpose.msra.mxu0 0.0
  %935 = vmatprep.subr.mxu0 0.0
  %936 = vmatpush1.xpose.msra.mxu0 0.0
  %937 = vmatprep.subr.mxu0 0.0
  %938 = vmatpush1.xpose.msra.mxu0 0.0
  %939 = vmatprep.subr.mxu0 0.0
  %940 = vmatpush1.xpose.msra.mxu0 0.0
  %941 = vmatprep.subr.mxu0 0.0
  %942 = vmatpush1.xpose.msra.mxu0 0.0
  %943 = vmatprep.subr.mxu0 0.0
  %944 = vmatpush1.xpose.msra.mxu0 0.0
  %945 = vmatprep.subr.mxu0 0.0
  %946 = vmatpush1.xpose.msra.mxu0 0.0
  %947 = vmatprep.subr.mxu0 0.0
  %948 = vmatpush1.xpose.msra.mxu0 0.0
  %949 = vmatprep.subr.mxu0 0.0
  %950 = vmatpush1.xpose.msra.mxu0 0.0
  %951 = vmatprep.subr.mxu0 0.0
  %952 = vmatpush1.xpose.msra.mxu0 0.0
  %953 = vmatprep.subr.mxu0 0.0
  %954 = vmatpush1.xpose.msra.mxu0 0.0
  %955 = vmatprep.subr.mxu0 0.0
  %956 = vmatpush1.xpose.msra.mxu0 0.0
  %957 = vmatprep.subr.mxu0 0.0
  %958 = vmatpush1.xpose.msra.mxu0 0.0
  %959 = vmatprep.subr.mxu0 0.0
  %960 = vmatpush1.xpose.msra.mxu0 0.0
  %961 = vmatprep.subr.mxu0 0.0
  %962 = vmatpush1.xpose.msra.mxu0 0.0
  %963 = vmatprep.subr.mxu0 0.0
  %964 = vmatpush1.xpose.msra.mxu0 0.0
  %965 = vmatprep.subr.mxu0 0.0
  %966 = vmatpush1.xpose.msra.mxu0 0.0
  %967 = vmatprep.subr.mxu0 0.0
  %968 = vmatpush1.xpose.msra.mxu0 0.0
  %969 = vmatprep.subr.mxu0 0.0
  %970 = vmatpush1.xpose.msra.mxu0 0.0
  %971 = vmatprep.subr.mxu0 0.0
  %972 = vmatpush1.xpose.msra.mxu0 0.0
  %973 = vmatprep.subr.mxu0 0.0
  %974 = vmatpush1.xpose.msra.mxu0 0.0
  %975 = vmatprep.subr.mxu0 0.0
  %976 = vmatpush1.xpose.msra.mxu0 0.0
  %977 = vmatprep.mubr.f32.mxu0 0.0
  %978 = vmatmul.mubr.f32.gmra.mrb[0].mxu0 %v905
  %v979 = vpop.f32.mrb[0].mxu0
  %v980 = vadd.f32 0.0, %v979
  %v981 = vpop.f32.mrb[0].mxu0
  %982 = vdwg.mxu0
  %v984 = vsel %vm113, %v28, 0
  %v987 = vsel %vm113, %v55, 0
  %v990 = vsel %vm113, %v56, 0
  %992 = vmatprep.subr.mxu0 0.0
  %993 = vmatpush1.xpose.msra.mxu0 %v987
  %994 = vmatprep.subr.mxu0 0.0
  %995 = vmatpush1.xpose.msra.mxu0 %v990
  %996 = vmatprep.subr.mxu0 0.0
  %997 = vmatpush1.xpose.msra.mxu0 0.0
  %998 = vmatprep.subr.mxu0 0.0
  %999 = vmatpush1.xpose.msra.mxu0 0.0
  %1000 = vmatprep.subr.mxu0 0.0
  %1001 = vmatpush1.xpose.msra.mxu0 0.0
  %1002 = vmatprep.subr.mxu0 0.0
  %1003 = vmatpush1.xpose.msra.mxu0 0.0
  %1004 = vmatprep.subr.mxu0 0.0
  %1005 = vmatpush1.xpose.msra.mxu0 0.0
  %1006 = vmatprep.subr.mxu0 0.0
  %1007 = vmatpush1.xpose.msra.mxu0 0.0
  %1008 = vmatprep.subr.mxu0 0.0
  %1009 = vmatpush1.xpose.msra.mxu0 0.0
  %1010 = vmatprep.subr.mxu0 0.0
  %1011 = vmatpush1.xpose.msra.mxu0 0.0
  %1012 = vmatprep.subr.mxu0 0.0
  %1013 = vmatpush1.xpose.msra.mxu0 0.0
  %1014 = vmatprep.subr.mxu0 0.0
  %1015 = vmatpush1.xpose.msra.mxu0 0.0
  %1016 = vmatprep.subr.mxu0 0.0
  %1017 = vmatpush1.xpose.msra.mxu0 0.0
  %1018 = vmatprep.subr.mxu0 0.0
  %1019 = vmatpush1.xpose.msra.mxu0 0.0
  %1020 = vmatprep.subr.mxu0 0.0
  %1021 = vmatpush1.xpose.msra.mxu0 0.0
  %1022 = vmatprep.subr.mxu0 0.0
  %1023 = vmatpush1.xpose.msra.mxu0 0.0
  %1024 = vmatprep.subr.mxu0 0.0
  %1025 = vmatpush1.xpose.msra.mxu0 0.0
  %1026 = vmatprep.subr.mxu0 0.0
  %1027 = vmatpush1.xpose.msra.mxu0 0.0
  %1028 = vmatprep.subr.mxu0 0.0
  %1029 = vmatpush1.xpose.msra.mxu0 0.0
  %1030 = vmatprep.subr.mxu0 0.0
  %1031 = vmatpush1.xpose.msra.mxu0 0.0
  %1032 = vmatprep.subr.mxu0 0.0
  %1033 = vmatpush1.xpose.msra.mxu0 0.0
  %1034 = vmatprep.subr.mxu0 0.0
  %1035 = vmatpush1.xpose.msra.mxu0 0.0
  %1036 = vmatprep.subr.mxu0 0.0
  %1037 = vmatpush1.xpose.msra.mxu0 0.0
  %1038 = vmatprep.subr.mxu0 0.0
  %1039 = vmatpush1.xpose.msra.mxu0 0.0
  %1040 = vmatprep.subr.mxu0 0.0
  %1041 = vmatpush1.xpose.msra.mxu0 0.0
  %1042 = vmatprep.subr.mxu0 0.0
  %1043 = vmatpush1.xpose.msra.mxu0 0.0
  %1044 = vmatprep.subr.mxu0 0.0
  %1045 = vmatpush1.xpose.msra.mxu0 0.0
  %1046 = vmatprep.subr.mxu0 0.0
  %1047 = vmatpush1.xpose.msra.mxu0 0.0
  %1048 = vmatprep.subr.mxu0 0.0
  %1049 = vmatpush1.xpose.msra.mxu0 0.0
  %1050 = vmatprep.subr.mxu0 0.0
  %1051 = vmatpush1.xpose.msra.mxu0 0.0
  %1052 = vmatprep.subr.mxu0 0.0
  %1053 = vmatpush1.xpose.msra.mxu0 0.0
  %1054 = vmatprep.subr.mxu0 0.0
  %1055 = vmatpush1.xpose.msra.mxu0 0.0
  %1056 = vmatprep.mubr.f32.mxu0 0.0
  %1057 = vmatmul.mubr.f32.gmra.mrb[0].mxu0 %v984
  %v1058 = vpop.f32.mrb[0].mxu0
  %v1059 = vadd.f32 0.0, %v1058
  %v1060 = vpop.f32.mrb[0].mxu0
  %1061 = vdwg.mxu0
  %v1063 = vsel %vm113, %v29, 0
  %v1066 = vsel %vm113, %v57, 0
  %v1069 = vsel %vm113, %v58, 0
  %1071 = vmatprep.subr.mxu0 0.0
  %1072 = vmatpush1.xpose.msra.mxu0 %v1066
  %1073 = vmatprep.subr.mxu0 0.0
  %1074 = vmatpush1.xpose.msra.mxu0 %v1069
  %1075 = vmatprep.subr.mxu0 0.0
  %1076 = vmatpush1.xpose.msra.mxu0 0.0
  %1077 = vmatprep.subr.mxu0 0.0
  %1078 = vmatpush1.xpose.msra.mxu0 0.0
  %1079 = vmatprep.subr.mxu0 0.0
  %1080 = vmatpush1.xpose.msra.mxu0 0.0
  %1081 = vmatprep.subr.mxu0 0.0
  %1082 = vmatpush1.xpose.msra.mxu0 0.0
  %1083 = vmatprep.subr.mxu0 0.0
  %1084 = vmatpush1.xpose.msra.mxu0 0.0
  %1085 = vmatprep.subr.mxu0 0.0
  %1086 = vmatpush1.xpose.msra.mxu0 0.0
  %1087 = vmatprep.subr.mxu0 0.0
  %1088 = vmatpush1.xpose.msra.mxu0 0.0
  %1089 = vmatprep.subr.mxu0 0.0
  %1090 = vmatpush1.xpose.msra.mxu0 0.0
  %1091 = vmatprep.subr.mxu0 0.0
  %1092 = vmatpush1.xpose.msra.mxu0 0.0
  %1093 = vmatprep.subr.mxu0 0.0
  %1094 = vmatpush1.xpose.msra.mxu0 0.0
  %1095 = vmatprep.subr.mxu0 0.0
  %1096 = vmatpush1.xpose.msra.mxu0 0.0
  %1097 = vmatprep.subr.mxu0 0.0
  %1098 = vmatpush1.xpose.msra.mxu0 0.0
  %1099 = vmatprep.subr.mxu0 0.0
  %1100 = vmatpush1.xpose.msra.mxu0 0.0
  %1101 = vmatprep.subr.mxu0 0.0
  %1102 = vmatpush1.xpose.msra.mxu0 0.0
  %1103 = vmatprep.subr.mxu0 0.0
  %1104 = vmatpush1.xpose.msra.mxu0 0.0
  %1105 = vmatprep.subr.mxu0 0.0
  %1106 = vmatpush1.xpose.msra.mxu0 0.0
  %1107 = vmatprep.subr.mxu0 0.0
  %1108 = vmatpush1.xpose.msra.mxu0 0.0
  %1109 = vmatprep.subr.mxu0 0.0
  %1110 = vmatpush1.xpose.msra.mxu0 0.0
  %1111 = vmatprep.subr.mxu0 0.0
  %1112 = vmatpush1.xpose.msra.mxu0 0.0
  %1113 = vmatprep.subr.mxu0 0.0
  %1114 = vmatpush1.xpose.msra.mxu0 0.0
  %1115 = vmatprep.subr.mxu0 0.0
  %1116 = vmatpush1.xpose.msra.mxu0 0.0
  %1117 = vmatprep.subr.mxu0 0.0
  %1118 = vmatpush1.xpose.msra.mxu0 0.0
  %1119 = vmatprep.subr.mxu0 0.0
  %1120 = vmatpush1.xpose.msra.mxu0 0.0
  %1121 = vmatprep.subr.mxu0 0.0
  %1122 = vmatpush1.xpose.msra.mxu0 0.0
  %1123 = vmatprep.subr.mxu0 0.0
  %1124 = vmatpush1.xpose.msra.mxu0 0.0
  %1125 = vmatprep.subr.mxu0 0.0
  %1126 = vmatpush1.xpose.msra.mxu0 0.0
  %1127 = vmatprep.subr.mxu0 0.0
  %1128 = vmatpush1.xpose.msra.mxu0 0.0
  %1129 = vmatprep.subr.mxu0 0.0
  %1130 = vmatpush1.xpose.msra.mxu0 0.0
  %1131 = vmatprep.subr.mxu0 0.0
  %1132 = vmatpush1.xpose.msra.mxu0 0.0
  %1133 = vmatprep.subr.mxu0 0.0
  %1134 = vmatpush1.xpose.msra.mxu0 0.0
  %1135 = vmatprep.mubr.f32.mxu0 0.0
  %1136 = vmatmul.mubr.f32.gmra.mrb[0].mxu0 %v1063
  %v1137 = vpop.f32.mrb[0].mxu0
  %v1138 = vadd.f32 0.0, %v1137
  %v1139 = vpop.f32.mrb[0].mxu0
  %1140 = vdwg.mxu0
  %v1142 = vsel %vm113, %v30, 0
  %v1145 = vsel %vm113, %v59, 0
  %v1148 = vsel %vm113, %v60, 0
  %1150 = vmatprep.subr.mxu0 0.0
  %1151 = vmatpush1.xpose.msra.mxu0 %v1145
  %1152 = vmatprep.subr.mxu0 0.0
  %1153 = vmatpush1.xpose.msra.mxu0 %v1148
  %1154 = vmatprep.subr.mxu0 0.0
  %1155 = vmatpush1.xpose.msra.mxu0 0.0
  %1156 = vmatprep.subr.mxu0 0.0
  %1157 = vmatpush1.xpose.msra.mxu0 0.0
  %1158 = vmatprep.subr.mxu0 0.0
  %1159 = vmatpush1.xpose.msra.mxu0 0.0
  %1160 = vmatprep.subr.mxu0 0.0
  %1161 = vmatpush1.xpose.msra.mxu0 0.0
  %1162 = vmatprep.subr.mxu0 0.0
  %1163 = vmatpush1.xpose.msra.mxu0 0.0
  %1164 = vmatprep.subr.mxu0 0.0
  %1165 = vmatpush1.xpose.msra.mxu0 0.0
  %1166 = vmatprep.subr.mxu0 0.0
  %1167 = vmatpush1.xpose.msra.mxu0 0.0
  %1168 = vmatprep.subr.mxu0 0.0
  %1169 = vmatpush1.xpose.msra.mxu0 0.0
  %1170 = vmatprep.subr.mxu0 0.0
  %1171 = vmatpush1.xpose.msra.mxu0 0.0
  %1172 = vmatprep.subr.mxu0 0.0
  %1173 = vmatpush1.xpose.msra.mxu0 0.0
  %1174 = vmatprep.subr.mxu0 0.0
  %1175 = vmatpush1.xpose.msra.mxu0 0.0
  %1176 = vmatprep.subr.mxu0 0.0
  %1177 = vmatpush1.xpose.msra.mxu0 0.0
  %1178 = vmatprep.subr.mxu0 0.0
  %1179 = vmatpush1.xpose.msra.mxu0 0.0
  %1180 = vmatprep.subr.mxu0 0.0
  %1181 = vmatpush1.xpose.msra.mxu0 0.0
  %1182 = vmatprep.subr.mxu0 0.0
  %1183 = vmatpush1.xpose.msra.mxu0 0.0
  %1184 = vmatprep.subr.mxu0 0.0
  %1185 = vmatpush1.xpose.msra.mxu0 0.0
  %1186 = vmatprep.subr.mxu0 0.0
  %1187 = vmatpush1.xpose.msra.mxu0 0.0
  %1188 = vmatprep.subr.mxu0 0.0
  %1189 = vmatpush1.xpose.msra.mxu0 0.0
  %1190 = vmatprep.subr.mxu0 0.0
  %1191 = vmatpush1.xpose.msra.mxu0 0.0
  %1192 = vmatprep.subr.mxu0 0.0
  %1193 = vmatpush1.xpose.msra.mxu0 0.0
  %1194 = vmatprep.subr.mxu0 0.0
  %1195 = vmatpush1.xpose.msra.mxu0 0.0
  %1196 = vmatprep.subr.mxu0 0.0
  %1197 = vmatpush1.xpose.msra.mxu0 0.0
  %1198 = vmatprep.subr.mxu0 0.0
  %1199 = vmatpush1.xpose.msra.mxu0 0.0
  %1200 = vmatprep.subr.mxu0 0.0
  %1201 = vmatpush1.xpose.msra.mxu0 0.0
  %1202 = vmatprep.subr.mxu0 0.0
  %1203 = vmatpush1.xpose.msra.mxu0 0.0
  %1204 = vmatprep.subr.mxu0 0.0
  %1205 = vmatpush1.xpose.msra.mxu0 0.0
  %1206 = vmatprep.subr.mxu0 0.0
  %1207 = vmatpush1.xpose.msra.mxu0 0.0
  %1208 = vmatprep.subr.mxu0 0.0
  %1209 = vmatpush1.xpose.msra.mxu0 0.0
  %1210 = vmatprep.subr.mxu0 0.0
  %1211 = vmatpush1.xpose.msra.mxu0 0.0
  %1212 = vmatprep.subr.mxu0 0.0
  %1213 = vmatpush1.xpose.msra.mxu0 0.0
  %1214 = vmatprep.mubr.f32.mxu0 0.0
  %1215 = vmatmul.mubr.f32.gmra.mrb[0].mxu0 %v1142
  %v1216 = vpop.f32.mrb[0].mxu0
  %v1217 = vadd.f32 0.0, %v1216
  %v1218 = vpop.f32.mrb[0].mxu0
  %1219 = vdwg.mxu0
  %v1221 = vsel %vm113, %v31, 0
  %v1224 = vsel %vm113, %v61, 0
  %v1227 = vsel %vm113, %v62, 0
  %1229 = vmatprep.subr.mxu0 0.0
  %1230 = vmatpush1.xpose.msra.mxu0 %v1224
  %1231 = vmatprep.subr.mxu0 0.0
  %1232 = vmatpush1.xpose.msra.mxu0 %v1227
  %1233 = vmatprep.subr.mxu0 0.0
  %1234 = vmatpush1.xpose.msra.mxu0 0.0
  %1235 = vmatprep.subr.mxu0 0.0
  %1236 = vmatpush1.xpose.msra.mxu0 0.0
  %1237 = vmatprep.subr.mxu0 0.0
  %1238 = vmatpush1.xpose.msra.mxu0 0.0
  %1239 = vmatprep.subr.mxu0 0.0
  %1240 = vmatpush1.xpose.msra.mxu0 0.0
  %1241 = vmatprep.subr.mxu0 0.0
  %1242 = vmatpush1.xpose.msra.mxu0 0.0
  %1243 = vmatprep.subr.mxu0 0.0
  %1244 = vmatpush1.xpose.msra.mxu0 0.0
  %1245 = vmatprep.subr.mxu0 0.0
  %1246 = vmatpush1.xpose.msra.mxu0 0.0
  %1247 = vmatprep.subr.mxu0 0.0
  %1248 = vmatpush1.xpose.msra.mxu0 0.0
  %1249 = vmatprep.subr.mxu0 0.0
  %1250 = vmatpush1.xpose.msra.mxu0 0.0
  %1251 = vmatprep.subr.mxu0 0.0
  %1252 = vmatpush1.xpose.msra.mxu0 0.0
  %1253 = vmatprep.subr.mxu0 0.0
  %1254 = vmatpush1.xpose.msra.mxu0 0.0
  %1255 = vmatprep.subr.mxu0 0.0
  %1256 = vmatpush1.xpose.msra.mxu0 0.0
  %1257 = vmatprep.subr.mxu0 0.0
  %1258 = vmatpush1.xpose.msra.mxu0 0.0
  %1259 = vmatprep.subr.mxu0 0.0
  %1260 = vmatpush1.xpose.msra.mxu0 0.0
  %1261 = vmatprep.subr.mxu0 0.0
  %1262 = vmatpush1.xpose.msra.mxu0 0.0
  %1263 = vmatprep.subr.mxu0 0.0
  %1264 = vmatpush1.xpose.msra.mxu0 0.0
  %1265 = vmatprep.subr.mxu0 0.0
  %1266 = vmatpush1.xpose.msra.mxu0 0.0
  %1267 = vmatprep.subr.mxu0 0.0
  %1268 = vmatpush1.xpose.msra.mxu0 0.0
  %1269 = vmatprep.subr.mxu0 0.0
  %1270 = vmatpush1.xpose.msra.mxu0 0.0
  %1271 = vmatprep.subr.mxu0 0.0
  %1272 = vmatpush1.xpose.msra.mxu0 0.0
  %1273 = vmatprep.subr.mxu0 0.0
  %1274 = vmatpush1.xpose.msra.mxu0 0.0
  %1275 = vmatprep.subr.mxu0 0.0
  %1276 = vmatpush1.xpose.msra.mxu0 0.0
  %1277 = vmatprep.subr.mxu0 0.0
  %1278 = vmatpush1.xpose.msra.mxu0 0.0
  %1279 = vmatprep.subr.mxu0 0.0
  %1280 = vmatpush1.xpose.msra.mxu0 0.0
  %1281 = vmatprep.subr.mxu0 0.0
  %1282 = vmatpush1.xpose.msra.mxu0 0.0
  %1283 = vmatprep.subr.mxu0 0.0
  %1284 = vmatpush1.xpose.msra.mxu0 0.0
  %1285 = vmatprep.subr.mxu0 0.0
  %1286 = vmatpush1.xpose.msra.mxu0 0.0
  %1287 = vmatprep.subr.mxu0 0.0
  %1288 = vmatpush1.xpose.msra.mxu0 0.0
  %1289 = vmatprep.subr.mxu0 0.0
  %1290 = vmatpush1.xpose.msra.mxu0 0.0
  %1291 = vmatprep.subr.mxu0 0.0
  %1292 = vmatpush1.xpose.msra.mxu0 0.0
  %1293 = vmatprep.mubr.f32.mxu0 0.0
  %1294 = vmatmul.mubr.f32.gmra.mrb[0].mxu0 %v1221
  %v1295 = vpop.f32.mrb[0].mxu0
  %v1296 = vadd.f32 0.0, %v1295
  %v1297 = vpop.f32.mrb[0].mxu0
  %1298 = vdwg.mxu0
  %v1300 = vsel %vm113, %v32, 0
  %v1303 = vsel %vm113, %v63, 0
  %v1306 = vsel %vm113, %v64, 0
  %1308 = vmatprep.subr.mxu0 0.0
  %1309 = vmatpush1.xpose.msra.mxu0 %v1303
  %1310 = vmatprep.subr.mxu0 0.0
  %1311 = vmatpush1.xpose.msra.mxu0 %v1306
  %1312 = vmatprep.subr.mxu0 0.0
  %1313 = vmatpush1.xpose.msra.mxu0 0.0
  %1314 = vmatprep.subr.mxu0 0.0
  %1315 = vmatpush1.xpose.msra.mxu0 0.0
  %1316 = vmatprep.subr.mxu0 0.0
  %1317 = vmatpush1.xpose.msra.mxu0 0.0
  %1318 = vmatprep.subr.mxu0 0.0
  %1319 = vmatpush1.xpose.msra.mxu0 0.0
  %1320 = vmatprep.subr.mxu0 0.0
  %1321 = vmatpush1.xpose.msra.mxu0 0.0
  %1322 = vmatprep.subr.mxu0 0.0
  %1323 = vmatpush1.xpose.msra.mxu0 0.0
  %1324 = vmatprep.subr.mxu0 0.0
  %1325 = vmatpush1.xpose.msra.mxu0 0.0
  %1326 = vmatprep.subr.mxu0 0.0
  %1327 = vmatpush1.xpose.msra.mxu0 0.0
  %1328 = vmatprep.subr.mxu0 0.0
  %1329 = vmatpush1.xpose.msra.mxu0 0.0
  %1330 = vmatprep.subr.mxu0 0.0
  %1331 = vmatpush1.xpose.msra.mxu0 0.0
  %1332 = vmatprep.subr.mxu0 0.0
  %1333 = vmatpush1.xpose.msra.mxu0 0.0
  %1334 = vmatprep.subr.mxu0 0.0
  %1335 = vmatpush1.xpose.msra.mxu0 0.0
  %1336 = vmatprep.subr.mxu0 0.0
  %1337 = vmatpush1.xpose.msra.mxu0 0.0
  %1338 = vmatprep.subr.mxu0 0.0
  %1339 = vmatpush1.xpose.msra.mxu0 0.0
  %1340 = vmatprep.subr.mxu0 0.0
  %1341 = vmatpush1.xpose.msra.mxu0 0.0
  %1342 = vmatprep.subr.mxu0 0.0
  %1343 = vmatpush1.xpose.msra.mxu0 0.0
  %1344 = vmatprep.subr.mxu0 0.0
  %1345 = vmatpush1.xpose.msra.mxu0 0.0
  %1346 = vmatprep.subr.mxu0 0.0
  %1347 = vmatpush1.xpose.msra.mxu0 0.0
  %1348 = vmatprep.subr.mxu0 0.0
  %1349 = vmatpush1.xpose.msra.mxu0 0.0
  %1350 = vmatprep.subr.mxu0 0.0
  %1351 = vmatpush1.xpose.msra.mxu0 0.0
  %1352 = vmatprep.subr.mxu0 0.0
  %1353 = vmatpush1.xpose.msra.mxu0 0.0
  %1354 = vmatprep.subr.mxu0 0.0
  %1355 = vmatpush1.xpose.msra.mxu0 0.0
  %1356 = vmatprep.subr.mxu0 0.0
  %1357 = vmatpush1.xpose.msra.mxu0 0.0
  %1358 = vmatprep.subr.mxu0 0.0
  %1359 = vmatpush1.xpose.msra.mxu0 0.0
  %1360 = vmatprep.subr.mxu0 0.0
  %1361 = vmatpush1.xpose.msra.mxu0 0.0
  %1362 = vmatprep.subr.mxu0 0.0
  %1363 = vmatpush1.xpose.msra.mxu0 0.0
  %1364 = vmatprep.subr.mxu0 0.0
  %1365 = vmatpush1.xpose.msra.mxu0 0.0
  %1366 = vmatprep.subr.mxu0 0.0
  %1367 = vmatpush1.xpose.msra.mxu0 0.0
  %1368 = vmatprep.subr.mxu0 0.0
  %1369 = vmatpush1.xpose.msra.mxu0 0.0
  %1370 = vmatprep.subr.mxu0 0.0
  %1371 = vmatpush1.xpose.msra.mxu0 0.0
  %1372 = vmatprep.mubr.f32.mxu0 0.0
  %1373 = vmatmul.mubr.f32.gmra.mrb[0].mxu0 %v1300
  %v1374 = vpop.f32.mrb[0].mxu0
  %v1375 = vadd.f32 0.0, %v1374
  %v1376 = vpop.f32.mrb[0].mxu0
  %1377 = vdwg.mxu0
  %v1378 = vmul.f32 %v190, 0.5
  %v1379 = vmul.f32 %v269, 0.5
  %v1380 = vmul.f32 %v348, 0.5
  %v1381 = vmul.f32 %v427, 0.5
  %v1382 = vmul.f32 %v506, 0.5
  %v1383 = vmul.f32 %v585, 0.5
  %v1384 = vmul.f32 %v664, 0.5
  %v1385 = vmul.f32 %v743, 0.5
  %v1386 = vmul.f32 %v822, 0.5
  %v1387 = vmul.f32 %v901, 0.5
  %v1388 = vmul.f32 %v980, 0.5
  %v1389 = vmul.f32 %v1059, 0.5
  %v1390 = vmul.f32 %v1138, 0.5
  %v1391 = vmul.f32 %v1217, 0.5
  %v1392 = vmul.f32 %v1296, 0.5
  %v1393 = vmul.f32 %v1375, 0.5
  %v1394 = vmul.f32 %v190, 0.70710677
  %v1395 = vmul.f32 %v269, 0.70710677
  %v1396 = vmul.f32 %v348, 0.70710677
  %v1397 = vmul.f32 %v427, 0.70710677
  %v1398 = vmul.f32 %v506, 0.70710677
  %v1399 = vmul.f32 %v585, 0.70710677
  %v1400 = vmul.f32 %v664, 0.70710677
  %v1401 = vmul.f32 %v743, 0.70710677
  %v1402 = vmul.f32 %v822, 0.70710677
  %v1403 = vmul.f32 %v901, 0.70710677
  %v1404 = vmul.f32 %v980, 0.70710677
  %v1405 = vmul.f32 %v1059, 0.70710677
  %v1406 = vmul.f32 %v1138, 0.70710677
  %v1407 = vmul.f32 %v1217, 0.70710677
  %v1408 = vmul.f32 %v1296, 0.70710677
  %v1409 = vmul.f32 %v1375, 0.70710677
  %v1410 = verf.f32.pop %v1394
  %v1411 = verf.f32.pop %v1395
  %v1412 = verf.f32.pop %v1396
  %v1413 = verf.f32.pop %v1397
  %v1414 = verf.f32.pop %v1398
  %v1415 = verf.f32.pop %v1399
  %v1416 = verf.f32.pop %v1400
  %v1417 = verf.f32.pop %v1401
  %v1418 = verf.f32.pop %v1402
  %v1419 = verf.f32.pop %v1403
  %v1420 = verf.f32.pop %v1404
  %v1421 = verf.f32.pop %v1405
  %v1422 = verf.f32.pop %v1406
  %v1423 = verf.f32.pop %v1407
  %v1424 = verf.f32.pop %v1408
  %v1425 = verf.f32.pop %v1409
  %v1426 = vadd.f32 %v1410, 1.0
  %v1427 = vadd.f32 %v1411, 1.0
  %v1428 = vadd.f32 %v1412, 1.0
  %v1429 = vadd.f32 %v1413, 1.0
  %v1430 = vadd.f32 %v1414, 1.0
  %v1431 = vadd.f32 %v1415, 1.0
  %v1432 = vadd.f32 %v1416, 1.0
  %v1433 = vadd.f32 %v1417, 1.0
  %v1434 = vadd.f32 %v1418, 1.0
  %v1435 = vadd.f32 %v1419, 1.0
  %v1436 = vadd.f32 %v1420, 1.0
  %v1437 = vadd.f32 %v1421, 1.0
  %v1438 = vadd.f32 %v1422, 1.0
  %v1439 = vadd.f32 %v1423, 1.0
  %v1440 = vadd.f32 %v1424, 1.0
  %v1441 = vadd.f32 %v1425, 1.0
  %v1442 = vmul.f32 %v1378, %v1426
  %v1443 = vmul.f32 %v1379, %v1427
  %v1444 = vmul.f32 %v1380, %v1428
  %v1445 = vmul.f32 %v1381, %v1429
  %v1446 = vmul.f32 %v1382, %v1430
  %v1447 = vmul.f32 %v1383, %v1431
  %v1448 = vmul.f32 %v1384, %v1432
  %v1449 = vmul.f32 %v1385, %v1433
  %v1450 = vmul.f32 %v1386, %v1434
  %v1451 = vmul.f32 %v1387, %v1435
  %v1452 = vmul.f32 %v1388, %v1436
  %v1453 = vmul.f32 %v1389, %v1437
  %v1454 = vmul.f32 %v1390, %v1438
  %v1455 = vmul.f32 %v1391, %v1439
  %v1456 = vmul.f32 %v1392, %v1440
  %v1457 = vmul.f32 %v1393, %v1441
  %vm1458 = vcmask 24576
  %v1459 = vsel %vm1458, %v65, -inf
  %1460 = vmax.xlane.f32.xlu0 %v1459
  %v1461 = vpop.xlane.xlu0 %1460
  %v1462 = vsel %vm1458, %v66, -inf
  %1463 = vmax.xlane.f32.xlu0 %v1462
  %v1464 = vpop.xlane.xlu0 %1463
  %v1465 = vsel %vm1458, %v67, -inf
  %1466 = vmax.xlane.f32.xlu0 %v1465
  %v1467 = vpop.xlane.xlu0 %1466
  %v1468 = vsel %vm1458, %v68, -inf
  %1469 = vmax.xlane.f32.xlu0 %v1468
  %v1470 = vpop.xlane.xlu0 %1469
  %v1471 = vsel %vm1458, %v69, -inf
  %1472 = vmax.xlane.f32.xlu0 %v1471
  %v1473 = vpop.xlane.xlu0 %1472
  %v1474 = vsel %vm1458, %v70, -inf
  %1475 = vmax.xlane.f32.xlu0 %v1474
  %v1476 = vpop.xlane.xlu0 %1475
  %v1477 = vsel %vm1458, %v71, -inf
  %1478 = vmax.xlane.f32.xlu0 %v1477
  %v1479 = vpop.xlane.xlu0 %1478
  %v1480 = vsel %vm1458, %v72, -inf
  %1481 = vmax.xlane.f32.xlu0 %v1480
  %v1482 = vpop.xlane.xlu0 %1481
  %v1483 = vsel %vm1458, %v73, -inf
  %1484 = vmax.xlane.f32.xlu0 %v1483
  %v1485 = vpop.xlane.xlu0 %1484
  %v1486 = vsel %vm1458, %v74, -inf
  %1487 = vmax.xlane.f32.xlu0 %v1486
  %v1488 = vpop.xlane.xlu0 %1487
  %v1489 = vsel %vm1458, %v75, -inf
  %1490 = vmax.xlane.f32.xlu0 %v1489
  %v1491 = vpop.xlane.xlu0 %1490
  %v1492 = vsel %vm1458, %v76, -inf
  %1493 = vmax.xlane.f32.xlu0 %v1492
  %v1494 = vpop.xlane.xlu0 %1493
  %v1495 = vsel %vm1458, %v77, -inf
  %1496 = vmax.xlane.f32.xlu0 %v1495
  %v1497 = vpop.xlane.xlu0 %1496
  %v1498 = vsel %vm1458, %v78, -inf
  %1499 = vmax.xlane.f32.xlu0 %v1498
  %v1500 = vpop.xlane.xlu0 %1499
  %v1501 = vsel %vm1458, %v79, -inf
  %1502 = vmax.xlane.f32.xlu0 %v1501
  %v1503 = vpop.xlane.xlu0 %1502
  %v1504 = vsel %vm1458, %v80, -inf
  %1505 = vmax.xlane.f32.xlu0 %v1504
  %v1506 = vpop.xlane.xlu0 %1505
  %v1507 = vsub.f32 %v65, %v1461
  %v1508 = vsub.f32 %v66, %v1464
  %v1509 = vsub.f32 %v67, %v1467
  %v1510 = vsub.f32 %v68, %v1470
  %v1511 = vsub.f32 %v69, %v1473
  %v1512 = vsub.f32 %v70, %v1476
  %v1513 = vsub.f32 %v71, %v1479
  %v1514 = vsub.f32 %v72, %v1482
  %v1515 = vsub.f32 %v73, %v1485
  %v1516 = vsub.f32 %v74, %v1488
  %v1517 = vsub.f32 %v75, %v1491
  %v1518 = vsub.f32 %v76, %v1494
  %v1519 = vsub.f32 %v77, %v1497
  %v1520 = vsub.f32 %v78, %v1500
  %v1521 = vsub.f32 %v79, %v1503
  %v1522 = vsub.f32 %v80, %v1506
  %v1523 = vmul.f32 %v1507, 1.442695
  %v1524 = vpow.pop %v1523
  %v1525 = vmul.f32 %v1508, 1.442695
  %v1526 = vpow.pop %v1525
  %v1527 = vmul.f32 %v1509, 1.442695
  %v1528 = vpow.pop %v1527
  %v1529 = vmul.f32 %v1510, 1.442695
  %v1530 = vpow.pop %v1529
  %v1531 = vmul.f32 %v1511, 1.442695
  %v1532 = vpow.pop %v1531
  %v1533 = vmul.f32 %v1512, 1.442695
  %v1534 = vpow.pop %v1533
  %v1535 = vmul.f32 %v1513, 1.442695
  %v1536 = vpow.pop %v1535
  %v1537 = vmul.f32 %v1514, 1.442695
  %v1538 = vpow.pop %v1537
  %v1539 = vmul.f32 %v1515, 1.442695
  %v1540 = vpow.pop %v1539
  %v1541 = vmul.f32 %v1516, 1.442695
  %v1542 = vpow.pop %v1541
  %v1543 = vmul.f32 %v1517, 1.442695
  %v1544 = vpow.pop %v1543
  %v1545 = vmul.f32 %v1518, 1.442695
  %v1546 = vpow.pop %v1545
  %v1547 = vmul.f32 %v1519, 1.442695
  %v1548 = vpow.pop %v1547
  %v1549 = vmul.f32 %v1520, 1.442695
  %v1550 = vpow.pop %v1549
  %v1551 = vmul.f32 %v1521, 1.442695
  %v1552 = vpow.pop %v1551
  %v1553 = vmul.f32 %v1522, 1.442695
  %v1554 = vpow.pop %v1553
  %v1555 = vsel %vm1458, %v1524, 0.0
  %1556 = vadd.xlane.f32.xlu0 %v1555
  %v1557 = vpop.xlane.xlu0 %1556
  %v1558 = vsel %vm1458, %v1526, 0.0
  %1559 = vadd.xlane.f32.xlu0 %v1558
  %v1560 = vpop.xlane.xlu0 %1559
  %v1561 = vsel %vm1458, %v1528, 0.0
  %1562 = vadd.xlane.f32.xlu0 %v1561
  %v1563 = vpop.xlane.xlu0 %1562
  %v1564 = vsel %vm1458, %v1530, 0.0
  %1565 = vadd.xlane.f32.xlu0 %v1564
  %v1566 = vpop.xlane.xlu0 %1565
  %v1567 = vsel %vm1458, %v1532, 0.0
  %1568 = vadd.xlane.f32.xlu0 %v1567
  %v1569 = vpop.xlane.xlu0 %1568
  %v1570 = vsel %vm1458, %v1534, 0.0
  %1571 = vadd.xlane.f32.xlu0 %v1570
  %v1572 = vpop.xlane.xlu0 %1571
  %v1573 = vsel %vm1458, %v1536, 0.0
  %1574 = vadd.xlane.f32.xlu0 %v1573
  %v1575 = vpop.xlane.xlu0 %1574
  %v1576 = vsel %vm1458, %v1538, 0.0
  %1577 = vadd.xlane.f32.xlu0 %v1576
  %v1578 = vpop.xlane.xlu0 %1577
  %v1579 = vsel %vm1458, %v1540, 0.0
  %1580 = vadd.xlane.f32.xlu0 %v1579
  %v1581 = vpop.xlane.xlu0 %1580
  %v1582 = vsel %vm1458, %v1542, 0.0
  %1583 = vadd.xlane.f32.xlu0 %v1582
  %v1584 = vpop.xlane.xlu0 %1583
  %v1585 = vsel %vm1458, %v1544, 0.0
  %1586 = vadd.xlane.f32.xlu0 %v1585
  %v1587 = vpop.xlane.xlu0 %1586
  %v1588 = vsel %vm1458, %v1546, 0.0
  %1589 = vadd.xlane.f32.xlu0 %v1588
  %v1590 = vpop.xlane.xlu0 %1589
  %v1591 = vsel %vm1458, %v1548, 0.0
  %1592 = vadd.xlane.f32.xlu0 %v1591
  %v1593 = vpop.xlane.xlu0 %1592
  %v1594 = vsel %vm1458, %v1550, 0.0
  %1595 = vadd.xlane.f32.xlu0 %v1594
  %v1596 = vpop.xlane.xlu0 %1595
  %v1597 = vsel %vm1458, %v1552, 0.0
  %1598 = vadd.xlane.f32.xlu0 %v1597
  %v1599 = vpop.xlane.xlu0 %1598
  %v1600 = vsel %vm1458, %v1554, 0.0
  %1601 = vadd.xlane.f32.xlu0 %v1600
  %v1602 = vpop.xlane.xlu0 %1601
  %v1603 = vrcp.pop %v1557
  %v1604 = vrcp.pop %v1560
  %v1605 = vrcp.pop %v1563
  %v1606 = vrcp.pop %v1566
  %v1607 = vrcp.pop %v1569
  %v1608 = vrcp.pop %v1572
  %v1609 = vrcp.pop %v1575
  %v1610 = vrcp.pop %v1578
  %v1611 = vrcp.pop %v1581
  %v1612 = vrcp.pop %v1584
  %v1613 = vrcp.pop %v1587
  %v1614 = vrcp.pop %v1590
  %v1615 = vrcp.pop %v1593
  %v1616 = vrcp.pop %v1596
  %v1617 = vrcp.pop %v1599
  %v1618 = vrcp.pop %v1602
  %v1619 = vmul.f32 %v1524, %v1603
  %v1620 = vmul.f32 %v1526, %v1604
  %v1621 = vmul.f32 %v1528, %v1605
  %v1622 = vmul.f32 %v1530, %v1606
  %v1623 = vmul.f32 %v1532, %v1607
  %v1624 = vmul.f32 %v1534, %v1608
  %v1625 = vmul.f32 %v1536, %v1609
  %v1626 = vmul.f32 %v1538, %v1610
  %v1627 = vmul.f32 %v1540, %v1611
  %v1628 = vmul.f32 %v1542, %v1612
  %v1629 = vmul.f32 %v1544, %v1613
  %v1630 = vmul.f32 %v1546, %v1614
  %v1631 = vmul.f32 %v1548, %v1615
  %v1632 = vmul.f32 %v1550, %v1616
  %v1633 = vmul.f32 %v1552, %v1617
  %v1634 = vmul.f32 %v1554, %v1618
  %vm1635 = vcmask 57376
  %v1636 = vsel %vm1635, %v65, -inf
  %1637 = vmax.xlane.f32.xlu0 %v1636
  %v1638 = vpop.xlane.xlu0 %1637
  %v1639 = vsel %vm1635, %v66, -inf
  %1640 = vmax.xlane.f32.xlu0 %v1639
  %v1641 = vpop.xlane.xlu0 %1640
  %v1642 = vsel %vm1635, %v67, -inf
  %1643 = vmax.xlane.f32.xlu0 %v1642
  %v1644 = vpop.xlane.xlu0 %1643
  %v1645 = vsel %vm1635, %v68, -inf
  %1646 = vmax.xlane.f32.xlu0 %v1645
  %v1647 = vpop.xlane.xlu0 %1646
  %v1648 = vsel %vm1635, %v69, -inf
  %1649 = vmax.xlane.f32.xlu0 %v1648
  %v1650 = vpop.xlane.xlu0 %1649
  %v1651 = vsel %vm1635, %v70, -inf
  %1652 = vmax.xlane.f32.xlu0 %v1651
  %v1653 = vpop.xlane.xlu0 %1652
  %v1654 = vsel %vm1635, %v71, -inf
  %1655 = vmax.xlane.f32.xlu0 %v1654
  %v1656 = vpop.xlane.xlu0 %1655
  %v1657 = vsel %vm1635, %v72, -inf
  %1658 = vmax.xlane.f32.xlu0 %v1657
  %v1659 = vpop.xlane.xlu0 %1658
  %v1660 = vsel %vm1635, %v73, -inf
  %1661 = vmax.xlane.f32.xlu0 %v1660
  %v1662 = vpop.xlane.xlu0 %1661
  %v1663 = vsel %vm1635, %v74, -inf
  %1664 = vmax.xlane.f32.xlu0 %v1663
  %v1665 = vpop.xlane.xlu0 %1664
  %v1666 = vsel %vm1635, %v75, -inf
  %1667 = vmax.xlane.f32.xlu0 %v1666
  %v1668 = vpop.xlane.xlu0 %1667
  %v1669 = vsel %vm1635, %v76, -inf
  %1670 = vmax.xlane.f32.xlu0 %v1669
  %v1671 = vpop.xlane.xlu0 %1670
  %v1672 = vsel %vm1635, %v77, -inf
  %1673 = vmax.xlane.f32.xlu0 %v1672
  %v1674 = vpop.xlane.xlu0 %1673
  %v1675 = vsel %vm1635, %v78, -inf
  %1676 = vmax.xlane.f32.xlu0 %v1675
  %v1677 = vpop.xlane.xlu0 %1676
  %v1678 = vsel %vm1635, %v79, -inf
  %1679 = vmax.xlane.f32.xlu0 %v1678
  %v1680 = vpop.xlane.xlu0 %1679
  %v1681 = vsel %vm1635, %v80, -inf
  %1682 = vmax.xlane.f32.xlu0 %v1681
  %v1683 = vpop.xlane.xlu0 %1682
  %v1684 = vsub.f32 %v65, %v1638
  %v1685 = vsub.f32 %v66, %v1641
  %v1686 = vsub.f32 %v67, %v1644
  %v1687 = vsub.f32 %v68, %v1647
  %v1688 = vsub.f32 %v69, %v1650
  %v1689 = vsub.f32 %v70, %v1653
  %v1690 = vsub.f32 %v71, %v1656
  %v1691 = vsub.f32 %v72, %v1659
  %v1692 = vsub.f32 %v73, %v1662
  %v1693 = vsub.f32 %v74, %v1665
  %v1694 = vsub.f32 %v75, %v1668
  %v1695 = vsub.f32 %v76, %v1671
  %v1696 = vsub.f32 %v77, %v1674
  %v1697 = vsub.f32 %v78, %v1677
  %v1698 = vsub.f32 %v79, %v1680
  %v1699 = vsub.f32 %v80, %v1683
  %v1700 = vmul.f32 %v1684, 1.442695
  %v1701 = vpow.pop %v1700
  %v1702 = vmul.f32 %v1685, 1.442695
  %v1703 = vpow.pop %v1702
  %v1704 = vmul.f32 %v1686, 1.442695
  %v1705 = vpow.pop %v1704
  %v1706 = vmul.f32 %v1687, 1.442695
  %v1707 = vpow.pop %v1706
  %v1708 = vmul.f32 %v1688, 1.442695
  %v1709 = vpow.pop %v1708
  %v1710 = vmul.f32 %v1689, 1.442695
  %v1711 = vpow.pop %v1710
  %v1712 = vmul.f32 %v1690, 1.442695
  %v1713 = vpow.pop %v1712
  %v1714 = vmul.f32 %v1691, 1.442695
  %v1715 = vpow.pop %v1714
  %v1716 = vmul.f32 %v1692, 1.442695
  %v1717 = vpow.pop %v1716
  %v1718 = vmul.f32 %v1693, 1.442695
  %v1719 = vpow.pop %v1718
  %v1720 = vmul.f32 %v1694, 1.442695
  %v1721 = vpow.pop %v1720
  %v1722 = vmul.f32 %v1695, 1.442695
  %v1723 = vpow.pop %v1722
  %v1724 = vmul.f32 %v1696, 1.442695
  %v1725 = vpow.pop %v1724
  %v1726 = vmul.f32 %v1697, 1.442695
  %v1727 = vpow.pop %v1726
  %v1728 = vmul.f32 %v1698, 1.442695
  %v1729 = vpow.pop %v1728
  %v1730 = vmul.f32 %v1699, 1.442695
  %v1731 = vpow.pop %v1730
  %v1748 = vlaneseq
  %v1749 = vshrl.u32 %v1748, 7
  %v1750 = vsub.s32 0, %v1749
  %v1751 = vrot.slane %v1701, %v1750
  %v1752 = vlaneseq
  %v1753 = vshrl.u32 %v1752, 7
  %v1754 = vsub.s32 0, %v1753
  %v1755 = vrot.slane %v1703, %v1754
  %v1756 = vlaneseq
  %v1757 = vshrl.u32 %v1756, 7
  %v1758 = vsub.s32 0, %v1757
  %v1759 = vrot.slane %v1705, %v1758
  %v1760 = vlaneseq
  %v1761 = vshrl.u32 %v1760, 7
  %v1762 = vsub.s32 0, %v1761
  %v1763 = vrot.slane %v1707, %v1762
  %v1764 = vlaneseq
  %v1765 = vshrl.u32 %v1764, 7
  %v1766 = vsub.s32 0, %v1765
  %v1767 = vrot.slane %v1709, %v1766
  %v1768 = vlaneseq
  %v1769 = vshrl.u32 %v1768, 7
  %v1770 = vsub.s32 0, %v1769
  %v1771 = vrot.slane %v1711, %v1770
  %v1772 = vlaneseq
  %v1773 = vshrl.u32 %v1772, 7
  %v1774 = vsub.s32 0, %v1773
  %v1775 = vrot.slane %v1713, %v1774
  %v1776 = vlaneseq
  %v1777 = vshrl.u32 %v1776, 7
  %v1778 = vsub.s32 0, %v1777
  %v1779 = vrot.slane %v1715, %v1778
  %v1780 = vlaneseq
  %v1781 = vshrl.u32 %v1780, 7
  %v1782 = vsub.s32 0, %v1781
  %v1783 = vrot.slane %v1717, %v1782
  %v1784 = vlaneseq
  %v1785 = vshrl.u32 %v1784, 7
  %v1786 = vsub.s32 0, %v1785
  %v1787 = vrot.slane %v1719, %v1786
  %v1788 = vlaneseq
  %v1789 = vshrl.u32 %v1788, 7
  %v1790 = vsub.s32 0, %v1789
  %v1791 = vrot.slane %v1721, %v1790
  %v1792 = vlaneseq
  %v1793 = vshrl.u32 %v1792, 7
  %v1794 = vsub.s32 0, %v1793
  %v1795 = vrot.slane %v1723, %v1794
  %v1796 = vlaneseq
  %v1797 = vshrl.u32 %v1796, 7
  %v1798 = vsub.s32 0, %v1797
  %v1799 = vrot.slane %v1725, %v1798
  %v1800 = vlaneseq
  %v1801 = vshrl.u32 %v1800, 7
  %v1802 = vsub.s32 0, %v1801
  %v1803 = vrot.slane %v1727, %v1802
  %v1804 = vlaneseq
  %v1805 = vshrl.u32 %v1804, 7
  %v1806 = vsub.s32 0, %v1805
  %v1807 = vrot.slane %v1729, %v1806
  %v1808 = vlaneseq
  %v1809 = vshrl.u32 %v1808, 7
  %v1810 = vsub.s32 0, %v1809
  %v1811 = vrot.slane %v1731, %v1810
  %1812 = vrot.lane.b32.xlu0 %v1751, 124
  %v1813 = vpop.permute.xlu0 %1812
  %1814 = vrot.lane.b32.xlu0 %v1755, 124
  %v1815 = vpop.permute.xlu0 %1814
  %1816 = vrot.lane.b32.xlu0 %v1759, 124
  %v1817 = vpop.permute.xlu0 %1816
  %1818 = vrot.lane.b32.xlu0 %v1763, 124
  %v1819 = vpop.permute.xlu0 %1818
  %1820 = vrot.lane.b32.xlu0 %v1767, 124
  %v1821 = vpop.permute.xlu0 %1820
  %1822 = vrot.lane.b32.xlu0 %v1771, 124
  %v1823 = vpop.permute.xlu0 %1822
  %1824 = vrot.lane.b32.xlu0 %v1775, 124
  %v1825 = vpop.permute.xlu0 %1824
  %1826 = vrot.lane.b32.xlu0 %v1779, 124
  %v1827 = vpop.permute.xlu0 %1826
  %1828 = vrot.lane.b32.xlu0 %v1783, 124
  %v1829 = vpop.permute.xlu0 %1828
  %1830 = vrot.lane.b32.xlu0 %v1787, 124
  %v1831 = vpop.permute.xlu0 %1830
  %1832 = vrot.lane.b32.xlu0 %v1791, 124
  %v1833 = vpop.permute.xlu0 %1832
  %1834 = vrot.lane.b32.xlu0 %v1795, 124
  %v1835 = vpop.permute.xlu0 %1834
  %1836 = vrot.lane.b32.xlu0 %v1799, 124
  %v1837 = vpop.permute.xlu0 %1836
  %1838 = vrot.lane.b32.xlu0 %v1803, 124
  %v1839 = vpop.permute.xlu0 %1838
  %1840 = vrot.lane.b32.xlu0 %v1807, 124
  %v1841 = vpop.permute.xlu0 %1840
  %1842 = vrot.lane.b32.xlu0 %v1811, 124
  %v1843 = vpop.permute.xlu0 %1842
  %v1860 = vsel %vm1458, %v1813, 0.0
  %1861 = vadd.xlane.f32.xlu0 %v1860
  %v1862 = vpop.xlane.xlu0 %1861
  %v1863 = vsel %vm1458, %v1815, 0.0
  %1864 = vadd.xlane.f32.xlu0 %v1863
  %v1865 = vpop.xlane.xlu0 %1864
  %v1866 = vsel %vm1458, %v1817, 0.0
  %1867 = vadd.xlane.f32.xlu0 %v1866
  %v1868 = vpop.xlane.xlu0 %1867
  %v1869 = vsel %vm1458, %v1819, 0.0
  %1870 = vadd.xlane.f32.xlu0 %v1869
  %v1871 = vpop.xlane.xlu0 %1870
  %v1872 = vsel %vm1458, %v1821, 0.0
  %1873 = vadd.xlane.f32.xlu0 %v1872
  %v1874 = vpop.xlane.xlu0 %1873
  %v1875 = vsel %vm1458, %v1823, 0.0
  %1876 = vadd.xlane.f32.xlu0 %v1875
  %v1877 = vpop.xlane.xlu0 %1876
  %v1878 = vsel %vm1458, %v1825, 0.0
  %1879 = vadd.xlane.f32.xlu0 %v1878
  %v1880 = vpop.xlane.xlu0 %1879
  %v1881 = vsel %vm1458, %v1827, 0.0
  %1882 = vadd.xlane.f32.xlu0 %v1881
  %v1883 = vpop.xlane.xlu0 %1882
  %v1884 = vsel %vm1458, %v1829, 0.0
  %1885 = vadd.xlane.f32.xlu0 %v1884
  %v1886 = vpop.xlane.xlu0 %1885
  %v1887 = vsel %vm1458, %v1831, 0.0
  %1888 = vadd.xlane.f32.xlu0 %v1887
  %v1889 = vpop.xlane.xlu0 %1888
  %v1890 = vsel %vm1458, %v1833, 0.0
  %1891 = vadd.xlane.f32.xlu0 %v1890
  %v1892 = vpop.xlane.xlu0 %1891
  %v1893 = vsel %vm1458, %v1835, 0.0
  %1894 = vadd.xlane.f32.xlu0 %v1893
  %v1895 = vpop.xlane.xlu0 %1894
  %v1896 = vsel %vm1458, %v1837, 0.0
  %1897 = vadd.xlane.f32.xlu0 %v1896
  %v1898 = vpop.xlane.xlu0 %1897
  %v1899 = vsel %vm1458, %v1839, 0.0
  %1900 = vadd.xlane.f32.xlu0 %v1899
  %v1901 = vpop.xlane.xlu0 %1900
  %v1902 = vsel %vm1458, %v1841, 0.0
  %1903 = vadd.xlane.f32.xlu0 %v1902
  %v1904 = vpop.xlane.xlu0 %1903
  %v1905 = vsel %vm1458, %v1843, 0.0
  %1906 = vadd.xlane.f32.xlu0 %v1905
  %v1907 = vpop.xlane.xlu0 %1906
  %v1908 = vrcp.pop %v1862
  %v1909 = vrcp.pop %v1865
  %v1910 = vrcp.pop %v1868
  %v1911 = vrcp.pop %v1871
  %v1912 = vrcp.pop %v1874
  %v1913 = vrcp.pop %v1877
  %v1914 = vrcp.pop %v1880
  %v1915 = vrcp.pop %v1883
  %v1916 = vrcp.pop %v1886
  %v1917 = vrcp.pop %v1889
  %v1918 = vrcp.pop %v1892
  %v1919 = vrcp.pop %v1895
  %v1920 = vrcp.pop %v1898
  %v1921 = vrcp.pop %v1901
  %v1922 = vrcp.pop %v1904
  %v1923 = vrcp.pop %v1907
  %v1924 = vmul.f32 %v1701, %v1908
  %v1925 = vmul.f32 %v1703, %v1909
  %v1926 = vmul.f32 %v1705, %v1910
  %v1927 = vmul.f32 %v1707, %v1911
  %v1928 = vmul.f32 %v1709, %v1912
  %v1929 = vmul.f32 %v1711, %v1913
  %v1930 = vmul.f32 %v1713, %v1914
  %v1931 = vmul.f32 %v1715, %v1915
  %v1932 = vmul.f32 %v1717, %v1916
  %v1933 = vmul.f32 %v1719, %v1917
  %v1934 = vmul.f32 %v1721, %v1918
  %v1935 = vmul.f32 %v1723, %v1919
  %v1936 = vmul.f32 %v1725, %v1920
  %v1937 = vmul.f32 %v1727, %v1921
  %v1938 = vmul.f32 %v1729, %v1922
  %v1939 = vmul.f32 %v1731, %v1923
  %vm1940 = vcmask 90176
  %v1941 = vsel %vm1940, %v65, -inf
  %1942 = vmax.xlane.f32.xlu0 %v1941
  %v1943 = vpop.xlane.xlu0 %1942
  %v1944 = vsel %vm1940, %v66, -inf
  %1945 = vmax.xlane.f32.xlu0 %v1944
  %v1946 = vpop.xlane.xlu0 %1945
  %v1947 = vsel %vm1940, %v67, -inf
  %1948 = vmax.xlane.f32.xlu0 %v1947
  %v1949 = vpop.xlane.xlu0 %1948
  %v1950 = vsel %vm1940, %v68, -inf
  %1951 = vmax.xlane.f32.xlu0 %v1950
  %v1952 = vpop.xlane.xlu0 %1951
  %v1953 = vsel %vm1940, %v69, -inf
  %1954 = vmax.xlane.f32.xlu0 %v1953
  %v1955 = vpop.xlane.xlu0 %1954
  %v1956 = vsel %vm1940, %v70, -inf
  %1957 = vmax.xlane.f32.xlu0 %v1956
  %v1958 = vpop.xlane.xlu0 %1957
  %v1959 = vsel %vm1940, %v71, -inf
  %1960 = vmax.xlane.f32.xlu0 %v1959
  %v1961 = vpop.xlane.xlu0 %1960
  %v1962 = vsel %vm1940, %v72, -inf
  %1963 = vmax.xlane.f32.xlu0 %v1962
  %v1964 = vpop.xlane.xlu0 %1963
  %v1965 = vsel %vm1940, %v73, -inf
  %1966 = vmax.xlane.f32.xlu0 %v1965
  %v1967 = vpop.xlane.xlu0 %1966
  %v1968 = vsel %vm1940, %v74, -inf
  %1969 = vmax.xlane.f32.xlu0 %v1968
  %v1970 = vpop.xlane.xlu0 %1969
  %v1971 = vsel %vm1940, %v75, -inf
  %1972 = vmax.xlane.f32.xlu0 %v1971
  %v1973 = vpop.xlane.xlu0 %1972
  %v1974 = vsel %vm1940, %v76, -inf
  %1975 = vmax.xlane.f32.xlu0 %v1974
  %v1976 = vpop.xlane.xlu0 %1975
  %v1977 = vsel %vm1940, %v77, -inf
  %1978 = vmax.xlane.f32.xlu0 %v1977
  %v1979 = vpop.xlane.xlu0 %1978
  %v1980 = vsel %vm1940, %v78, -inf
  %1981 = vmax.xlane.f32.xlu0 %v1980
  %v1982 = vpop.xlane.xlu0 %1981
  %v1983 = vsel %vm1940, %v79, -inf
  %1984 = vmax.xlane.f32.xlu0 %v1983
  %v1985 = vpop.xlane.xlu0 %1984
  %v1986 = vsel %vm1940, %v80, -inf
  %1987 = vmax.xlane.f32.xlu0 %v1986
  %v1988 = vpop.xlane.xlu0 %1987
  %v1989 = vsub.f32 %v65, %v1943
  %v1990 = vsub.f32 %v66, %v1946
  %v1991 = vsub.f32 %v67, %v1949
  %v1992 = vsub.f32 %v68, %v1952
  %v1993 = vsub.f32 %v69, %v1955
  %v1994 = vsub.f32 %v70, %v1958
  %v1995 = vsub.f32 %v71, %v1961
  %v1996 = vsub.f32 %v72, %v1964
  %v1997 = vsub.f32 %v73, %v1967
  %v1998 = vsub.f32 %v74, %v1970
  %v1999 = vsub.f32 %v75, %v1973
  %v2000 = vsub.f32 %v76, %v1976
  %v2001 = vsub.f32 %v77, %v1979
  %v2002 = vsub.f32 %v78, %v1982
  %v2003 = vsub.f32 %v79, %v1985
  %v2004 = vsub.f32 %v80, %v1988
  %v2005 = vmul.f32 %v1989, 1.442695
  %v2006 = vpow.pop %v2005
  %v2007 = vmul.f32 %v1990, 1.442695
  %v2008 = vpow.pop %v2007
  %v2009 = vmul.f32 %v1991, 1.442695
  %v2010 = vpow.pop %v2009
  %v2011 = vmul.f32 %v1992, 1.442695
  %v2012 = vpow.pop %v2011
  %v2013 = vmul.f32 %v1993, 1.442695
  %v2014 = vpow.pop %v2013
  %v2015 = vmul.f32 %v1994, 1.442695
  %v2016 = vpow.pop %v2015
  %v2017 = vmul.f32 %v1995, 1.442695
  %v2018 = vpow.pop %v2017
  %v2019 = vmul.f32 %v1996, 1.442695
  %v2020 = vpow.pop %v2019
  %v2021 = vmul.f32 %v1997, 1.442695
  %v2022 = vpow.pop %v2021
  %v2023 = vmul.f32 %v1998, 1.442695
  %v2024 = vpow.pop %v2023
  %v2025 = vmul.f32 %v1999, 1.442695
  %v2026 = vpow.pop %v2025
  %v2027 = vmul.f32 %v2000, 1.442695
  %v2028 = vpow.pop %v2027
  %v2029 = vmul.f32 %v2001, 1.442695
  %v2030 = vpow.pop %v2029
  %v2031 = vmul.f32 %v2002, 1.442695
  %v2032 = vpow.pop %v2031
  %v2033 = vmul.f32 %v2003, 1.442695
  %v2034 = vpow.pop %v2033
  %v2035 = vmul.f32 %v2004, 1.442695
  %v2036 = vpow.pop %v2035
  %v2053 = vlaneseq
  %v2054 = vshrl.u32 %v2053, 7
  %v2055 = vsub.s32 0, %v2054
  %v2056 = vrot.slane %v2006, %v2055
  %v2057 = vlaneseq
  %v2058 = vshrl.u32 %v2057, 7
  %v2059 = vsub.s32 0, %v2058
  %v2060 = vrot.slane %v2008, %v2059
  %v2061 = vlaneseq
  %v2062 = vshrl.u32 %v2061, 7
  %v2063 = vsub.s32 0, %v2062
  %v2064 = vrot.slane %v2010, %v2063
  %v2065 = vlaneseq
  %v2066 = vshrl.u32 %v2065, 7
  %v2067 = vsub.s32 0, %v2066
  %v2068 = vrot.slane %v2012, %v2067
  %v2069 = vlaneseq
  %v2070 = vshrl.u32 %v2069, 7
  %v2071 = vsub.s32 0, %v2070
  %v2072 = vrot.slane %v2014, %v2071
  %v2073 = vlaneseq
  %v2074 = vshrl.u32 %v2073, 7
  %v2075 = vsub.s32 0, %v2074
  %v2076 = vrot.slane %v2016, %v2075
  %v2077 = vlaneseq
  %v2078 = vshrl.u32 %v2077, 7
  %v2079 = vsub.s32 0, %v2078
  %v2080 = vrot.slane %v2018, %v2079
  %v2081 = vlaneseq
  %v2082 = vshrl.u32 %v2081, 7
  %v2083 = vsub.s32 0, %v2082
  %v2084 = vrot.slane %v2020, %v2083
  %v2085 = vlaneseq
  %v2086 = vshrl.u32 %v2085, 7
  %v2087 = vsub.s32 0, %v2086
  %v2088 = vrot.slane %v2022, %v2087
  %v2089 = vlaneseq
  %v2090 = vshrl.u32 %v2089, 7
  %v2091 = vsub.s32 0, %v2090
  %v2092 = vrot.slane %v2024, %v2091
  %v2093 = vlaneseq
  %v2094 = vshrl.u32 %v2093, 7
  %v2095 = vsub.s32 0, %v2094
  %v2096 = vrot.slane %v2026, %v2095
  %v2097 = vlaneseq
  %v2098 = vshrl.u32 %v2097, 7
  %v2099 = vsub.s32 0, %v2098
  %v2100 = vrot.slane %v2028, %v2099
  %v2101 = vlaneseq
  %v2102 = vshrl.u32 %v2101, 7
  %v2103 = vsub.s32 0, %v2102
  %v2104 = vrot.slane %v2030, %v2103
  %v2105 = vlaneseq
  %v2106 = vshrl.u32 %v2105, 7
  %v2107 = vsub.s32 0, %v2106
  %v2108 = vrot.slane %v2032, %v2107
  %v2109 = vlaneseq
  %v2110 = vshrl.u32 %v2109, 7
  %v2111 = vsub.s32 0, %v2110
  %v2112 = vrot.slane %v2034, %v2111
  %v2113 = vlaneseq
  %v2114 = vshrl.u32 %v2113, 7
  %v2115 = vsub.s32 0, %v2114
  %v2116 = vrot.slane %v2036, %v2115
  %2117 = vrot.lane.b32.xlu0 %v2056, 120
  %v2118 = vpop.permute.xlu0 %2117
  %2119 = vrot.lane.b32.xlu0 %v2060, 120
  %v2120 = vpop.permute.xlu0 %2119
  %2121 = vrot.lane.b32.xlu0 %v2064, 120
  %v2122 = vpop.permute.xlu0 %2121
  %2123 = vrot.lane.b32.xlu0 %v2068, 120
  %v2124 = vpop.permute.xlu0 %2123
  %2125 = vrot.lane.b32.xlu0 %v2072, 120
  %v2126 = vpop.permute.xlu0 %2125
  %2127 = vrot.lane.b32.xlu0 %v2076, 120
  %v2128 = vpop.permute.xlu0 %2127
  %2129 = vrot.lane.b32.xlu0 %v2080, 120
  %v2130 = vpop.permute.xlu0 %2129
  %2131 = vrot.lane.b32.xlu0 %v2084, 120
  %v2132 = vpop.permute.xlu0 %2131
  %2133 = vrot.lane.b32.xlu0 %v2088, 120
  %v2134 = vpop.permute.xlu0 %2133
  %2135 = vrot.lane.b32.xlu0 %v2092, 120
  %v2136 = vpop.permute.xlu0 %2135
  %2137 = vrot.lane.b32.xlu0 %v2096, 120
  %v2138 = vpop.permute.xlu0 %2137
  %2139 = vrot.lane.b32.xlu0 %v2100, 120
  %v2140 = vpop.permute.xlu0 %2139
  %2141 = vrot.lane.b32.xlu0 %v2104, 120
  %v2142 = vpop.permute.xlu0 %2141
  %2143 = vrot.lane.b32.xlu0 %v2108, 120
  %v2144 = vpop.permute.xlu0 %2143
  %2145 = vrot.lane.b32.xlu0 %v2112, 120
  %v2146 = vpop.permute.xlu0 %2145
  %2147 = vrot.lane.b32.xlu0 %v2116, 120
  %v2148 = vpop.permute.xlu0 %2147
  %v2165 = vsel %vm1458, %v2118, 0.0
  %2166 = vadd.xlane.f32.xlu0 %v2165
  %v2167 = vpop.xlane.xlu0 %2166
  %v2168 = vsel %vm1458, %v2120, 0.0
  %2169 = vadd.xlane.f32.xlu0 %v2168
  %v2170 = vpop.xlane.xlu0 %2169
  %v2171 = vsel %vm1458, %v2122, 0.0
  %2172 = vadd.xlane.f32.xlu0 %v2171
  %v2173 = vpop.xlane.xlu0 %2172
  %v2174 = vsel %vm1458, %v2124, 0.0
  %2175 = vadd.xlane.f32.xlu0 %v2174
  %v2176 = vpop.xlane.xlu0 %2175
  %v2177 = vsel %vm1458, %v2126, 0.0
  %2178 = vadd.xlane.f32.xlu0 %v2177
  %v2179 = vpop.xlane.xlu0 %2178
  %v2180 = vsel %vm1458, %v2128, 0.0
  %2181 = vadd.xlane.f32.xlu0 %v2180
  %v2182 = vpop.xlane.xlu0 %2181
  %v2183 = vsel %vm1458, %v2130, 0.0
  %2184 = vadd.xlane.f32.xlu0 %v2183
  %v2185 = vpop.xlane.xlu0 %2184
  %v2186 = vsel %vm1458, %v2132, 0.0
  %2187 = vadd.xlane.f32.xlu0 %v2186
  %v2188 = vpop.xlane.xlu0 %2187
  %v2189 = vsel %vm1458, %v2134, 0.0
  %2190 = vadd.xlane.f32.xlu0 %v2189
  %v2191 = vpop.xlane.xlu0 %2190
  %v2192 = vsel %vm1458, %v2136, 0.0
  %2193 = vadd.xlane.f32.xlu0 %v2192
  %v2194 = vpop.xlane.xlu0 %2193
  %v2195 = vsel %vm1458, %v2138, 0.0
  %2196 = vadd.xlane.f32.xlu0 %v2195
  %v2197 = vpop.xlane.xlu0 %2196
  %v2198 = vsel %vm1458, %v2140, 0.0
  %2199 = vadd.xlane.f32.xlu0 %v2198
  %v2200 = vpop.xlane.xlu0 %2199
  %v2201 = vsel %vm1458, %v2142, 0.0
  %2202 = vadd.xlane.f32.xlu0 %v2201
  %v2203 = vpop.xlane.xlu0 %2202
  %v2204 = vsel %vm1458, %v2144, 0.0
  %2205 = vadd.xlane.f32.xlu0 %v2204
  %v2206 = vpop.xlane.xlu0 %2205
  %v2207 = vsel %vm1458, %v2146, 0.0
  %2208 = vadd.xlane.f32.xlu0 %v2207
  %v2209 = vpop.xlane.xlu0 %2208
  %v2210 = vsel %vm1458, %v2148, 0.0
  %2211 = vadd.xlane.f32.xlu0 %v2210
  %v2212 = vpop.xlane.xlu0 %2211
  %v2213 = vrcp.pop %v2167
  %v2214 = vrcp.pop %v2170
  %v2215 = vrcp.pop %v2173
  %v2216 = vrcp.pop %v2176
  %v2217 = vrcp.pop %v2179
  %v2218 = vrcp.pop %v2182
  %v2219 = vrcp.pop %v2185
  %v2220 = vrcp.pop %v2188
  %v2221 = vrcp.pop %v2191
  %v2222 = vrcp.pop %v2194
  %v2223 = vrcp.pop %v2197
  %v2224 = vrcp.pop %v2200
  %v2225 = vrcp.pop %v2203
  %v2226 = vrcp.pop %v2206
  %v2227 = vrcp.pop %v2209
  %v2228 = vrcp.pop %v2212
  %v2229 = vmul.f32 %v2006, %v2213
  %v2230 = vmul.f32 %v2008, %v2214
  %v2231 = vmul.f32 %v2010, %v2215
  %v2232 = vmul.f32 %v2012, %v2216
  %v2233 = vmul.f32 %v2014, %v2217
  %v2234 = vmul.f32 %v2016, %v2218
  %v2235 = vmul.f32 %v2018, %v2219
  %v2236 = vmul.f32 %v2020, %v2220
  %v2237 = vmul.f32 %v2022, %v2221
  %v2238 = vmul.f32 %v2024, %v2222
  %v2239 = vmul.f32 %v2026, %v2223
  %v2240 = vmul.f32 %v2028, %v2224
  %v2241 = vmul.f32 %v2030, %v2225
  %v2242 = vmul.f32 %v2032, %v2226
  %v2243 = vmul.f32 %v2034, %v2227
  %v2244 = vmul.f32 %v2036, %v2228
  %vm2245 = vcmask 122976
  %v2246 = vsel %vm2245, %v65, -inf
  %2247 = vmax.xlane.f32.xlu0 %v2246
  %v2248 = vpop.xlane.xlu0 %2247
  %v2249 = vsel %vm2245, %v66, -inf
  %2250 = vmax.xlane.f32.xlu0 %v2249
  %v2251 = vpop.xlane.xlu0 %2250
  %v2252 = vsel %vm2245, %v67, -inf
  %2253 = vmax.xlane.f32.xlu0 %v2252
  %v2254 = vpop.xlane.xlu0 %2253
  %v2255 = vsel %vm2245, %v68, -inf
  %2256 = vmax.xlane.f32.xlu0 %v2255
  %v2257 = vpop.xlane.xlu0 %2256
  %v2258 = vsel %vm2245, %v69, -inf
  %2259 = vmax.xlane.f32.xlu0 %v2258
  %v2260 = vpop.xlane.xlu0 %2259
  %v2261 = vsel %vm2245, %v70, -inf
  %2262 = vmax.xlane.f32.xlu0 %v2261
  %v2263 = vpop.xlane.xlu0 %2262
  %v2264 = vsel %vm2245, %v71, -inf
  %2265 = vmax.xlane.f32.xlu0 %v2264
  %v2266 = vpop.xlane.xlu0 %2265
  %v2267 = vsel %vm2245, %v72, -inf
  %2268 = vmax.xlane.f32.xlu0 %v2267
  %v2269 = vpop.xlane.xlu0 %2268
  %v2270 = vsel %vm2245, %v73, -inf
  %2271 = vmax.xlane.f32.xlu0 %v2270
  %v2272 = vpop.xlane.xlu0 %2271
  %v2273 = vsel %vm2245, %v74, -inf
  %2274 = vmax.xlane.f32.xlu0 %v2273
  %v2275 = vpop.xlane.xlu0 %2274
  %v2276 = vsel %vm2245, %v75, -inf
  %2277 = vmax.xlane.f32.xlu0 %v2276
  %v2278 = vpop.xlane.xlu0 %2277
  %v2279 = vsel %vm2245, %v76, -inf
  %2280 = vmax.xlane.f32.xlu0 %v2279
  %v2281 = vpop.xlane.xlu0 %2280
  %v2282 = vsel %vm2245, %v77, -inf
  %2283 = vmax.xlane.f32.xlu0 %v2282
  %v2284 = vpop.xlane.xlu0 %2283
  %v2285 = vsel %vm2245, %v78, -inf
  %2286 = vmax.xlane.f32.xlu0 %v2285
  %v2287 = vpop.xlane.xlu0 %2286
  %v2288 = vsel %vm2245, %v79, -inf
  %2289 = vmax.xlane.f32.xlu0 %v2288
  %v2290 = vpop.xlane.xlu0 %2289
  %v2291 = vsel %vm2245, %v80, -inf
  %2292 = vmax.xlane.f32.xlu0 %v2291
  %v2293 = vpop.xlane.xlu0 %2292
  %v2294 = vsub.f32 %v65, %v2248
  %v2295 = vsub.f32 %v66, %v2251
  %v2296 = vsub.f32 %v67, %v2254
  %v2297 = vsub.f32 %v68, %v2257
  %v2298 = vsub.f32 %v69, %v2260
  %v2299 = vsub.f32 %v70, %v2263
  %v2300 = vsub.f32 %v71, %v2266
  %v2301 = vsub.f32 %v72, %v2269
  %v2302 = vsub.f32 %v73, %v2272
  %v2303 = vsub.f32 %v74, %v2275
  %v2304 = vsub.f32 %v75, %v2278
  %v2305 = vsub.f32 %v76, %v2281
  %v2306 = vsub.f32 %v77, %v2284
  %v2307 = vsub.f32 %v78, %v2287
  %v2308 = vsub.f32 %v79, %v2290
  %v2309 = vsub.f32 %v80, %v2293
  %v2310 = vmul.f32 %v2294, 1.442695
  %v2311 = vpow.pop %v2310
  %v2312 = vmul.f32 %v2295, 1.442695
  %v2313 = vpow.pop %v2312
  %v2314 = vmul.f32 %v2296, 1.442695
  %v2315 = vpow.pop %v2314
  %v2316 = vmul.f32 %v2297, 1.442695
  %v2317 = vpow.pop %v2316
  %v2318 = vmul.f32 %v2298, 1.442695
  %v2319 = vpow.pop %v2318
  %v2320 = vmul.f32 %v2299, 1.442695
  %v2321 = vpow.pop %v2320
  %v2322 = vmul.f32 %v2300, 1.442695
  %v2323 = vpow.pop %v2322
  %v2324 = vmul.f32 %v2301, 1.442695
  %v2325 = vpow.pop %v2324
  %v2326 = vmul.f32 %v2302, 1.442695
  %v2327 = vpow.pop %v2326
  %v2328 = vmul.f32 %v2303, 1.442695
  %v2329 = vpow.pop %v2328
  %v2330 = vmul.f32 %v2304, 1.442695
  %v2331 = vpow.pop %v2330
  %v2332 = vmul.f32 %v2305, 1.442695
  %v2333 = vpow.pop %v2332
  %v2334 = vmul.f32 %v2306, 1.442695
  %v2335 = vpow.pop %v2334
  %v2336 = vmul.f32 %v2307, 1.442695
  %v2337 = vpow.pop %v2336
  %v2338 = vmul.f32 %v2308, 1.442695
  %v2339 = vpow.pop %v2338
  %v2340 = vmul.f32 %v2309, 1.442695
  %v2341 = vpow.pop %v2340
  %v2358 = vlaneseq
  %v2359 = vshrl.u32 %v2358, 7
  %v2360 = vsub.s32 0, %v2359
  %v2361 = vrot.slane %v2311, %v2360
  %v2362 = vlaneseq
  %v2363 = vshrl.u32 %v2362, 7
  %v2364 = vsub.s32 0, %v2363
  %v2365 = vrot.slane %v2313, %v2364
  %v2366 = vlaneseq
  %v2367 = vshrl.u32 %v2366, 7
  %v2368 = vsub.s32 0, %v2367
  %v2369 = vrot.slane %v2315, %v2368
  %v2370 = vlaneseq
  %v2371 = vshrl.u32 %v2370, 7
  %v2372 = vsub.s32 0, %v2371
  %v2373 = vrot.slane %v2317, %v2372
  %v2374 = vlaneseq
  %v2375 = vshrl.u32 %v2374, 7
  %v2376 = vsub.s32 0, %v2375
  %v2377 = vrot.slane %v2319, %v2376
  %v2378 = vlaneseq
  %v2379 = vshrl.u32 %v2378, 7
  %v2380 = vsub.s32 0, %v2379
  %v2381 = vrot.slane %v2321, %v2380
  %v2382 = vlaneseq
  %v2383 = vshrl.u32 %v2382, 7
  %v2384 = vsub.s32 0, %v2383
  %v2385 = vrot.slane %v2323, %v2384
  %v2386 = vlaneseq
  %v2387 = vshrl.u32 %v2386, 7
  %v2388 = vsub.s32 0, %v2387
  %v2389 = vrot.slane %v2325, %v2388
  %v2390 = vlaneseq
  %v2391 = vshrl.u32 %v2390, 7
  %v2392 = vsub.s32 0, %v2391
  %v2393 = vrot.slane %v2327, %v2392
  %v2394 = vlaneseq
  %v2395 = vshrl.u32 %v2394, 7
  %v2396 = vsub.s32 0, %v2395
  %v2397 = vrot.slane %v2329, %v2396
  %v2398 = vlaneseq
  %v2399 = vshrl.u32 %v2398, 7
  %v2400 = vsub.s32 0, %v2399
  %v2401 = vrot.slane %v2331, %v2400
  %v2402 = vlaneseq
  %v2403 = vshrl.u32 %v2402, 7
  %v2404 = vsub.s32 0, %v2403
  %v2405 = vrot.slane %v2333, %v2404
  %v2406 = vlaneseq
  %v2407 = vshrl.u32 %v2406, 7
  %v2408 = vsub.s32 0, %v2407
  %v2409 = vrot.slane %v2335, %v2408
  %v2410 = vlaneseq
  %v2411 = vshrl.u32 %v2410, 7
  %v2412 = vsub.s32 0, %v2411
  %v2413 = vrot.slane %v2337, %v2412
  %v2414 = vlaneseq
  %v2415 = vshrl.u32 %v2414, 7
  %v2416 = vsub.s32 0, %v2415
  %v2417 = vrot.slane %v2339, %v2416
  %v2418 = vlaneseq
  %v2419 = vshrl.u32 %v2418, 7
  %v2420 = vsub.s32 0, %v2419
  %v2421 = vrot.slane %v2341, %v2420
  %2422 = vrot.lane.b32.xlu0 %v2361, 116
  %v2423 = vpop.permute.xlu0 %2422
  %2424 = vrot.lane.b32.xlu0 %v2365, 116
  %v2425 = vpop.permute.xlu0 %2424
  %2426 = vrot.lane.b32.xlu0 %v2369, 116
  %v2427 = vpop.permute.xlu0 %2426
  %2428 = vrot.lane.b32.xlu0 %v2373, 116
  %v2429 = vpop.permute.xlu0 %2428
  %2430 = vrot.lane.b32.xlu0 %v2377, 116
  %v2431 = vpop.permute.xlu0 %2430
  %2432 = vrot.lane.b32.xlu0 %v2381, 116
  %v2433 = vpop.permute.xlu0 %2432
  %2434 = vrot.lane.b32.xlu0 %v2385, 116
  %v2435 = vpop.permute.xlu0 %2434
  %2436 = vrot.lane.b32.xlu0 %v2389, 116
  %v2437 = vpop.permute.xlu0 %2436
  %2438 = vrot.lane.b32.xlu0 %v2393, 116
  %v2439 = vpop.permute.xlu0 %2438
  %2440 = vrot.lane.b32.xlu0 %v2397, 116
  %v2441 = vpop.permute.xlu0 %2440
  %2442 = vrot.lane.b32.xlu0 %v2401, 116
  %v2443 = vpop.permute.xlu0 %2442
  %2444 = vrot.lane.b32.xlu0 %v2405, 116
  %v2445 = vpop.permute.xlu0 %2444
  %2446 = vrot.lane.b32.xlu0 %v2409, 116
  %v2447 = vpop.permute.xlu0 %2446
  %2448 = vrot.lane.b32.xlu0 %v2413, 116
  %v2449 = vpop.permute.xlu0 %2448
  %2450 = vrot.lane.b32.xlu0 %v2417, 116
  %v2451 = vpop.permute.xlu0 %2450
  %2452 = vrot.lane.b32.xlu0 %v2421, 116
  %v2453 = vpop.permute.xlu0 %2452
  %v2470 = vsel %vm1458, %v2423, 0.0
  %2471 = vadd.xlane.f32.xlu0 %v2470
  %v2472 = vpop.xlane.xlu0 %2471
  %v2473 = vsel %vm1458, %v2425, 0.0
  %2474 = vadd.xlane.f32.xlu0 %v2473
  %v2475 = vpop.xlane.xlu0 %2474
  %v2476 = vsel %vm1458, %v2427, 0.0
  %2477 = vadd.xlane.f32.xlu0 %v2476
  %v2478 = vpop.xlane.xlu0 %2477
  %v2479 = vsel %vm1458, %v2429, 0.0
  %2480 = vadd.xlane.f32.xlu0 %v2479
  %v2481 = vpop.xlane.xlu0 %2480
  %v2482 = vsel %vm1458, %v2431, 0.0
  %2483 = vadd.xlane.f32.xlu0 %v2482
  %v2484 = vpop.xlane.xlu0 %2483
  %v2485 = vsel %vm1458, %v2433, 0.0
  %2486 = vadd.xlane.f32.xlu0 %v2485
  %v2487 = vpop.xlane.xlu0 %2486
  %v2488 = vsel %vm1458, %v2435, 0.0
  %2489 = vadd.xlane.f32.xlu0 %v2488
  %v2490 = vpop.xlane.xlu0 %2489
  %v2491 = vsel %vm1458, %v2437, 0.0
  %2492 = vadd.xlane.f32.xlu0 %v2491
  %v2493 = vpop.xlane.xlu0 %2492
  %v2494 = vsel %vm1458, %v2439, 0.0
  %2495 = vadd.xlane.f32.xlu0 %v2494
  %v2496 = vpop.xlane.xlu0 %2495
  %v2497 = vsel %vm1458, %v2441, 0.0
  %2498 = vadd.xlane.f32.xlu0 %v2497
  %v2499 = vpop.xlane.xlu0 %2498
  %v2500 = vsel %vm1458, %v2443, 0.0
  %2501 = vadd.xlane.f32.xlu0 %v2500
  %v2502 = vpop.xlane.xlu0 %2501
  %v2503 = vsel %vm1458, %v2445, 0.0
  %2504 = vadd.xlane.f32.xlu0 %v2503
  %v2505 = vpop.xlane.xlu0 %2504
  %v2506 = vsel %vm1458, %v2447, 0.0
  %2507 = vadd.xlane.f32.xlu0 %v2506
  %v2508 = vpop.xlane.xlu0 %2507
  %v2509 = vsel %vm1458, %v2449, 0.0
  %2510 = vadd.xlane.f32.xlu0 %v2509
  %v2511 = vpop.xlane.xlu0 %2510
  %v2512 = vsel %vm1458, %v2451, 0.0
  %2513 = vadd.xlane.f32.xlu0 %v2512
  %v2514 = vpop.xlane.xlu0 %2513
  %v2515 = vsel %vm1458, %v2453, 0.0
  %2516 = vadd.xlane.f32.xlu0 %v2515
  %v2517 = vpop.xlane.xlu0 %2516
  %v2518 = vrcp.pop %v2472
  %v2519 = vrcp.pop %v2475
  %v2520 = vrcp.pop %v2478
  %v2521 = vrcp.pop %v2481
  %v2522 = vrcp.pop %v2484
  %v2523 = vrcp.pop %v2487
  %v2524 = vrcp.pop %v2490
  %v2525 = vrcp.pop %v2493
  %v2526 = vrcp.pop %v2496
  %v2527 = vrcp.pop %v2499
  %v2528 = vrcp.pop %v2502
  %v2529 = vrcp.pop %v2505
  %v2530 = vrcp.pop %v2508
  %v2531 = vrcp.pop %v2511
  %v2532 = vrcp.pop %v2514
  %v2533 = vrcp.pop %v2517
  %v2534 = vmul.f32 %v2311, %v2518
  %v2535 = vmul.f32 %v2313, %v2519
  %v2536 = vmul.f32 %v2315, %v2520
  %v2537 = vmul.f32 %v2317, %v2521
  %v2538 = vmul.f32 %v2319, %v2522
  %v2539 = vmul.f32 %v2321, %v2523
  %v2540 = vmul.f32 %v2323, %v2524
  %v2541 = vmul.f32 %v2325, %v2525
  %v2542 = vmul.f32 %v2327, %v2526
  %v2543 = vmul.f32 %v2329, %v2527
  %v2544 = vmul.f32 %v2331, %v2528
  %v2545 = vmul.f32 %v2333, %v2529
  %v2546 = vmul.f32 %v2335, %v2530
  %v2547 = vmul.f32 %v2337, %v2531
  %v2548 = vmul.f32 %v2339, %v2532
  %v2549 = vmul.f32 %v2341, %v2533
  %vm2550 = vcmask 31744
  %v2551 = vsel %vm2550, %v1619, %v1924
  %v2552 = vsel %vm2550, %v1620, %v1925
  %v2553 = vsel %vm2550, %v1621, %v1926
  %v2554 = vsel %vm2550, %v1622, %v1927
  %v2555 = vsel %vm2550, %v1623, %v1928
  %v2556 = vsel %vm2550, %v1624, %v1929
  %v2557 = vsel %vm2550, %v1625, %v1930
  %v2558 = vsel %vm2550, %v1626, %v1931
  %v2559 = vsel %vm2550, %v1627, %v1932
  %v2560 = vsel %vm2550, %v1628, %v1933
  %v2561 = vsel %vm2550, %v1629, %v1934
  %v2562 = vsel %vm2550, %v1630, %v1935
  %v2563 = vsel %vm2550, %v1631, %v1936
  %v2564 = vsel %vm2550, %v1632, %v1937
  %v2565 = vsel %vm2550, %v1633, %v1938
  %v2566 = vsel %vm2550, %v1634, %v1939
  %vm2567 = vcmask 64512
  %v2568 = vsel %vm2567, %v2551, %v2229
  %v2569 = vsel %vm2567, %v2552, %v2230
  %v2570 = vsel %vm2567, %v2553, %v2231
  %v2571 = vsel %vm2567, %v2554, %v2232
  %v2572 = vsel %vm2567, %v2555, %v2233
  %v2573 = vsel %vm2567, %v2556, %v2234
  %v2574 = vsel %vm2567, %v2557, %v2235
  %v2575 = vsel %vm2567, %v2558, %v2236
  %v2576 = vsel %vm2567, %v2559, %v2237
  %v2577 = vsel %vm2567, %v2560, %v2238
  %v2578 = vsel %vm2567, %v2561, %v2239
  %v2579 = vsel %vm2567, %v2562, %v2240
  %v2580 = vsel %vm2567, %v2563, %v2241
  %v2581 = vsel %vm2567, %v2564, %v2242
  %v2582 = vsel %vm2567, %v2565, %v2243
  %v2583 = vsel %vm2567, %v2566, %v2244
  %vm2584 = vcmask 97280
  %v2585 = vsel %vm2584, %v2568, %v2534
  %v2586 = vsel %vm2584, %v2569, %v2535
  %v2587 = vsel %vm2584, %v2570, %v2536
  %v2588 = vsel %vm2584, %v2571, %v2537
  %v2589 = vsel %vm2584, %v2572, %v2538
  %v2590 = vsel %vm2584, %v2573, %v2539
  %v2591 = vsel %vm2584, %v2574, %v2540
  %v2592 = vsel %vm2584, %v2575, %v2541
  %v2593 = vsel %vm2584, %v2576, %v2542
  %v2594 = vsel %vm2584, %v2577, %v2543
  %v2595 = vsel %vm2584, %v2578, %v2544
  %v2596 = vsel %vm2584, %v2579, %v2545
  %v2597 = vsel %vm2584, %v2580, %v2546
  %v2598 = vsel %vm2584, %v2581, %v2547
  %v2599 = vsel %vm2584, %v2582, %v2548
  %v2600 = vsel %vm2584, %v2583, %v2549
  %v2601 = vmul.f32 %v1442, %v2585
  %v2602 = vmul.f32 %v1443, %v2586
  %v2603 = vmul.f32 %v1444, %v2587
  %v2604 = vmul.f32 %v1445, %v2588
  %v2605 = vmul.f32 %v1446, %v2589
  %v2606 = vmul.f32 %v1447, %v2590
  %v2607 = vmul.f32 %v1448, %v2591
  %v2608 = vmul.f32 %v1449, %v2592
  %v2609 = vmul.f32 %v1450, %v2593
  %v2610 = vmul.f32 %v1451, %v2594
  %v2611 = vmul.f32 %v1452, %v2595
  %v2612 = vmul.f32 %v1453, %v2596
  %v2613 = vmul.f32 %v1454, %v2597
  %v2614 = vmul.f32 %v1455, %v2598
  %v2615 = vmul.f32 %v1456, %v2599
  %v2616 = vmul.f32 %v1457, %v2600
  %vm2617 = vcmask 130048
  %v2619 = vsel %vm2617, %v2601, 0
  %2621 = vmatprep.subr.mxu0 0.0
  %2622 = vmatpush1.msra.mxu0 %v81
  %2623 = vmatprep.subr.mxu0 0.0
  %2624 = vmatpush1.msra.mxu0 %v82
  %2625 = vmatprep.subr.mxu0 0.0
  %2626 = vmatpush1.msra.mxu0 0.0
  %2627 = vmatprep.subr.mxu0 0.0
  %2628 = vmatpush1.msra.mxu0 0.0
  %2629 = vmatprep.subr.mxu0 0.0
  %2630 = vmatpush1.msra.mxu0 0.0
  %2631 = vmatprep.subr.mxu0 0.0
  %2632 = vmatpush1.msra.mxu0 0.0
  %2633 = vmatprep.subr.mxu0 0.0
  %2634 = vmatpush1.msra.mxu0 0.0
  %2635 = vmatprep.subr.mxu0 0.0
  %2636 = vmatpush1.msra.mxu0 0.0
  %2637 = vmatprep.subr.mxu0 0.0
  %2638 = vmatpush1.msra.mxu0 0.0
  %2639 = vmatprep.subr.mxu0 0.0
  %2640 = vmatpush1.msra.mxu0 0.0
  %2641 = vmatprep.subr.mxu0 0.0
  %2642 = vmatpush1.msra.mxu0 0.0
  %2643 = vmatprep.subr.mxu0 0.0
  %2644 = vmatpush1.msra.mxu0 0.0
  %2645 = vmatprep.subr.mxu0 0.0
  %2646 = vmatpush1.msra.mxu0 0.0
  %2647 = vmatprep.subr.mxu0 0.0
  %2648 = vmatpush1.msra.mxu0 0.0
  %2649 = vmatprep.subr.mxu0 0.0
  %2650 = vmatpush1.msra.mxu0 0.0
  %2651 = vmatprep.subr.mxu0 0.0
  %2652 = vmatpush1.msra.mxu0 0.0
  %2653 = vmatprep.subr.mxu0 0.0
  %2654 = vmatpush1.msra.mxu0 0.0
  %2655 = vmatprep.subr.mxu0 0.0
  %2656 = vmatpush1.msra.mxu0 0.0
  %2657 = vmatprep.subr.mxu0 0.0
  %2658 = vmatpush1.msra.mxu0 0.0
  %2659 = vmatprep.subr.mxu0 0.0
  %2660 = vmatpush1.msra.mxu0 0.0
  %2661 = vmatprep.subr.mxu0 0.0
  %2662 = vmatpush1.msra.mxu0 0.0
  %2663 = vmatprep.subr.mxu0 0.0
  %2664 = vmatpush1.msra.mxu0 0.0
  %2665 = vmatprep.subr.mxu0 0.0
  %2666 = vmatpush1.msra.mxu0 0.0
  %2667 = vmatprep.subr.mxu0 0.0
  %2668 = vmatpush1.msra.mxu0 0.0
  %2669 = vmatprep.subr.mxu0 0.0
  %2670 = vmatpush1.msra.mxu0 0.0
  %2671 = vmatprep.subr.mxu0 0.0
  %2672 = vmatpush1.msra.mxu0 0.0
  %2673 = vmatprep.subr.mxu0 0.0
  %2674 = vmatpush1.msra.mxu0 0.0
  %2675 = vmatprep.subr.mxu0 0.0
  %2676 = vmatpush1.msra.mxu0 0.0
  %2677 = vmatprep.subr.mxu0 0.0
  %2678 = vmatpush1.msra.mxu0 0.0
  %2679 = vmatprep.subr.mxu0 0.0
  %2680 = vmatpush1.msra.mxu0 0.0
  %2681 = vmatprep.subr.mxu0 0.0
  %2682 = vmatpush1.msra.mxu0 0.0
  %2683 = vmatprep.subr.mxu0 0.0
  %2684 = vmatpush1.msra.mxu0 0.0
  %2685 = vmatprep.mubr.f32.mxu0 0.0
  %2686 = vmatmul.mubr.f32.gmra.mrb[0].mxu0 %v2619
  %v2687 = vpop.f32.mrb[0].mxu0
  %v2688 = vadd.f32 0.0, %v2687
  %v2689 = vpop.f32.mrb[0].mxu0
  %2690 = vdwg.mxu0
  %v2692 = vsel %vm2617, %v2602, 0
  %2694 = vmatprep.subr.mxu0 0.0
  %2695 = vmatpush1.msra.mxu0 %v83
  %2696 = vmatprep.subr.mxu0 0.0
  %2697 = vmatpush1.msra.mxu0 %v84
  %2698 = vmatprep.subr.mxu0 0.0
  %2699 = vmatpush1.msra.mxu0 0.0
  %2700 = vmatprep.subr.mxu0 0.0
  %2701 = vmatpush1.msra.mxu0 0.0
  %2702 = vmatprep.subr.mxu0 0.0
  %2703 = vmatpush1.msra.mxu0 0.0
  %2704 = vmatprep.subr.mxu0 0.0
  %2705 = vmatpush1.msra.mxu0 0.0
  %2706 = vmatprep.subr.mxu0 0.0
  %2707 = vmatpush1.msra.mxu0 0.0
  %2708 = vmatprep.subr.mxu0 0.0
  %2709 = vmatpush1.msra.mxu0 0.0
  %2710 = vmatprep.subr.mxu0 0.0
  %2711 = vmatpush1.msra.mxu0 0.0
  %2712 = vmatprep.subr.mxu0 0.0
  %2713 = vmatpush1.msra.mxu0 0.0
  %2714 = vmatprep.subr.mxu0 0.0
  %2715 = vmatpush1.msra.mxu0 0.0
  %2716 = vmatprep.subr.mxu0 0.0
  %2717 = vmatpush1.msra.mxu0 0.0
  %2718 = vmatprep.subr.mxu0 0.0
  %2719 = vmatpush1.msra.mxu0 0.0
  %2720 = vmatprep.subr.mxu0 0.0
  %2721 = vmatpush1.msra.mxu0 0.0
  %2722 = vmatprep.subr.mxu0 0.0
  %2723 = vmatpush1.msra.mxu0 0.0
  %2724 = vmatprep.subr.mxu0 0.0
  %2725 = vmatpush1.msra.mxu0 0.0
  %2726 = vmatprep.subr.mxu0 0.0
  %2727 = vmatpush1.msra.mxu0 0.0
  %2728 = vmatprep.subr.mxu0 0.0
  %2729 = vmatpush1.msra.mxu0 0.0
  %2730 = vmatprep.subr.mxu0 0.0
  %2731 = vmatpush1.msra.mxu0 0.0
  %2732 = vmatprep.subr.mxu0 0.0
  %2733 = vmatpush1.msra.mxu0 0.0
  %2734 = vmatprep.subr.mxu0 0.0
  %2735 = vmatpush1.msra.mxu0 0.0
  %2736 = vmatprep.subr.mxu0 0.0
  %2737 = vmatpush1.msra.mxu0 0.0
  %2738 = vmatprep.subr.mxu0 0.0
  %2739 = vmatpush1.msra.mxu0 0.0
  %2740 = vmatprep.subr.mxu0 0.0
  %2741 = vmatpush1.msra.mxu0 0.0
  %2742 = vmatprep.subr.mxu0 0.0
  %2743 = vmatpush1.msra.mxu0 0.0
  %2744 = vmatprep.subr.mxu0 0.0
  %2745 = vmatpush1.msra.mxu0 0.0
  %2746 = vmatprep.subr.mxu0 0.0
  %2747 = vmatpush1.msra.mxu0 0.0
  %2748 = vmatprep.subr.mxu0 0.0
  %2749 = vmatpush1.msra.mxu0 0.0
  %2750 = vmatprep.subr.mxu0 0.0
  %2751 = vmatpush1.msra.mxu0 0.0
  %2752 = vmatprep.subr.mxu0 0.0
  %2753 = vmatpush1.msra.mxu0 0.0
  %2754 = vmatprep.subr.mxu0 0.0
  %2755 = vmatpush1.msra.mxu0 0.0
  %2756 = vmatprep.subr.mxu0 0.0
  %2757 = vmatpush1.msra.mxu0 0.0
  %2758 = vmatprep.mubr.f32.mxu0 0.0
  %2759 = vmatmul.mubr.f32.gmra.mrb[0].mxu0 %v2692
  %v2760 = vpop.f32.mrb[0].mxu0
  %v2761 = vadd.f32 0.0, %v2760
  %v2762 = vpop.f32.mrb[0].mxu0
  %2763 = vdwg.mxu0
  %v2765 = vsel %vm2617, %v2603, 0
  %2767 = vmatprep.subr.mxu0 0.0
  %2768 = vmatpush1.msra.mxu0 %v85
  %2769 = vmatprep.subr.mxu0 0.0
  %2770 = vmatpush1.msra.mxu0 %v86
  %2771 = vmatprep.subr.mxu0 0.0
  %2772 = vmatpush1.msra.mxu0 0.0
  %2773 = vmatprep.subr.mxu0 0.0
  %2774 = vmatpush1.msra.mxu0 0.0
  %2775 = vmatprep.subr.mxu0 0.0
  %2776 = vmatpush1.msra.mxu0 0.0
  %2777 = vmatprep.subr.mxu0 0.0
  %2778 = vmatpush1.msra.mxu0 0.0
  %2779 = vmatprep.subr.mxu0 0.0
  %2780 = vmatpush1.msra.mxu0 0.0
  %2781 = vmatprep.subr.mxu0 0.0
  %2782 = vmatpush1.msra.mxu0 0.0
  %2783 = vmatprep.subr.mxu0 0.0
  %2784 = vmatpush1.msra.mxu0 0.0
  %2785 = vmatprep.subr.mxu0 0.0
  %2786 = vmatpush1.msra.mxu0 0.0
  %2787 = vmatprep.subr.mxu0 0.0
  %2788 = vmatpush1.msra.mxu0 0.0
  %2789 = vmatprep.subr.mxu0 0.0
  %2790 = vmatpush1.msra.mxu0 0.0
  %2791 = vmatprep.subr.mxu0 0.0
  %2792 = vmatpush1.msra.mxu0 0.0
  %2793 = vmatprep.subr.mxu0 0.0
  %2794 = vmatpush1.msra.mxu0 0.0
  %2795 = vmatprep.subr.mxu0 0.0
  %2796 = vmatpush1.msra.mxu0 0.0
  %2797 = vmatprep.subr.mxu0 0.0
  %2798 = vmatpush1.msra.mxu0 0.0
  %2799 = vmatprep.subr.mxu0 0.0
  %2800 = vmatpush1.msra.mxu0 0.0
  %2801 = vmatprep.subr.mxu0 0.0
  %2802 = vmatpush1.msra.mxu0 0.0
  %2803 = vmatprep.subr.mxu0 0.0
  %2804 = vmatpush1.msra.mxu0 0.0
  %2805 = vmatprep.subr.mxu0 0.0
  %2806 = vmatpush1.msra.mxu0 0.0
  %2807 = vmatprep.subr.mxu0 0.0
  %2808 = vmatpush1.msra.mxu0 0.0
  %2809 = vmatprep.subr.mxu0 0.0
  %2810 = vmatpush1.msra.mxu0 0.0
  %2811 = vmatprep.subr.mxu0 0.0
  %2812 = vmatpush1.msra.mxu0 0.0
  %2813 = vmatprep.subr.mxu0 0.0
  %2814 = vmatpush1.msra.mxu0 0.0
  %2815 = vmatprep.subr.mxu0 0.0
  %2816 = vmatpush1.msra.mxu0 0.0
  %2817 = vmatprep.subr.mxu0 0.0
  %2818 = vmatpush1.msra.mxu0 0.0
  %2819 = vmatprep.subr.mxu0 0.0
  %2820 = vmatpush1.msra.mxu0 0.0
  %2821 = vmatprep.subr.mxu0 0.0
  %2822 = vmatpush1.msra.mxu0 0.0
  %2823 = vmatprep.subr.mxu0 0.0
  %2824 = vmatpush1.msra.mxu0 0.0
  %2825 = vmatprep.subr.mxu0 0.0
  %2826 = vmatpush1.msra.mxu0 0.0
  %2827 = vmatprep.subr.mxu0 0.0
  %2828 = vmatpush1.msra.mxu0 0.0
  %2829 = vmatprep.subr.mxu0 0.0
  %2830 = vmatpush1.msra.mxu0 0.0
  %2831 = vmatprep.mubr.f32.mxu0 0.0
  %2832 = vmatmul.mubr.f32.gmra.mrb[0].mxu0 %v2765
  %v2833 = vpop.f32.mrb[0].mxu0
  %v2834 = vadd.f32 0.0, %v2833
  %v2835 = vpop.f32.mrb[0].mxu0
  %2836 = vdwg.mxu0
  %v2838 = vsel %vm2617, %v2604, 0
  %2840 = vmatprep.subr.mxu0 0.0
  %2841 = vmatpush1.msra.mxu0 %v87
  %2842 = vmatprep.subr.mxu0 0.0
  %2843 = vmatpush1.msra.mxu0 %v88
  %2844 = vmatprep.subr.mxu0 0.0
  %2845 = vmatpush1.msra.mxu0 0.0
  %2846 = vmatprep.subr.mxu0 0.0
  %2847 = vmatpush1.msra.mxu0 0.0
  %2848 = vmatprep.subr.mxu0 0.0
  %2849 = vmatpush1.msra.mxu0 0.0
  %2850 = vmatprep.subr.mxu0 0.0
  %2851 = vmatpush1.msra.mxu0 0.0
  %2852 = vmatprep.subr.mxu0 0.0
  %2853 = vmatpush1.msra.mxu0 0.0
  %2854 = vmatprep.subr.mxu0 0.0
  %2855 = vmatpush1.msra.mxu0 0.0
  %2856 = vmatprep.subr.mxu0 0.0
  %2857 = vmatpush1.msra.mxu0 0.0
  %2858 = vmatprep.subr.mxu0 0.0
  %2859 = vmatpush1.msra.mxu0 0.0
  %2860 = vmatprep.subr.mxu0 0.0
  %2861 = vmatpush1.msra.mxu0 0.0
  %2862 = vmatprep.subr.mxu0 0.0
  %2863 = vmatpush1.msra.mxu0 0.0
  %2864 = vmatprep.subr.mxu0 0.0
  %2865 = vmatpush1.msra.mxu0 0.0
  %2866 = vmatprep.subr.mxu0 0.0
  %2867 = vmatpush1.msra.mxu0 0.0
  %2868 = vmatprep.subr.mxu0 0.0
  %2869 = vmatpush1.msra.mxu0 0.0
  %2870 = vmatprep.subr.mxu0 0.0
  %2871 = vmatpush1.msra.mxu0 0.0
  %2872 = vmatprep.subr.mxu0 0.0
  %2873 = vmatpush1.msra.mxu0 0.0
  %2874 = vmatprep.subr.mxu0 0.0
  %2875 = vmatpush1.msra.mxu0 0.0
  %2876 = vmatprep.subr.mxu0 0.0
  %2877 = vmatpush1.msra.mxu0 0.0
  %2878 = vmatprep.subr.mxu0 0.0
  %2879 = vmatpush1.msra.mxu0 0.0
  %2880 = vmatprep.subr.mxu0 0.0
  %2881 = vmatpush1.msra.mxu0 0.0
  %2882 = vmatprep.subr.mxu0 0.0
  %2883 = vmatpush1.msra.mxu0 0.0
  %2884 = vmatprep.subr.mxu0 0.0
  %2885 = vmatpush1.msra.mxu0 0.0
  %2886 = vmatprep.subr.mxu0 0.0
  %2887 = vmatpush1.msra.mxu0 0.0
  %2888 = vmatprep.subr.mxu0 0.0
  %2889 = vmatpush1.msra.mxu0 0.0
  %2890 = vmatprep.subr.mxu0 0.0
  %2891 = vmatpush1.msra.mxu0 0.0
  %2892 = vmatprep.subr.mxu0 0.0
  %2893 = vmatpush1.msra.mxu0 0.0
  %2894 = vmatprep.subr.mxu0 0.0
  %2895 = vmatpush1.msra.mxu0 0.0
  %2896 = vmatprep.subr.mxu0 0.0
  %2897 = vmatpush1.msra.mxu0 0.0
  %2898 = vmatprep.subr.mxu0 0.0
  %2899 = vmatpush1.msra.mxu0 0.0
  %2900 = vmatprep.subr.mxu0 0.0
  %2901 = vmatpush1.msra.mxu0 0.0
  %2902 = vmatprep.subr.mxu0 0.0
  %2903 = vmatpush1.msra.mxu0 0.0
  %2904 = vmatprep.mubr.f32.mxu0 0.0
  %2905 = vmatmul.mubr.f32.gmra.mrb[0].mxu0 %v2838
  %v2906 = vpop.f32.mrb[0].mxu0
  %v2907 = vadd.f32 0.0, %v2906
  %v2908 = vpop.f32.mrb[0].mxu0
  %2909 = vdwg.mxu0
  %v2911 = vsel %vm2617, %v2605, 0
  %2913 = vmatprep.subr.mxu0 0.0
  %2914 = vmatpush1.msra.mxu0 %v89
  %2915 = vmatprep.subr.mxu0 0.0
  %2916 = vmatpush1.msra.mxu0 %v90
  %2917 = vmatprep.subr.mxu0 0.0
  %2918 = vmatpush1.msra.mxu0 0.0
  %2919 = vmatprep.subr.mxu0 0.0
  %2920 = vmatpush1.msra.mxu0 0.0
  %2921 = vmatprep.subr.mxu0 0.0
  %2922 = vmatpush1.msra.mxu0 0.0
  %2923 = vmatprep.subr.mxu0 0.0
  %2924 = vmatpush1.msra.mxu0 0.0
  %2925 = vmatprep.subr.mxu0 0.0
  %2926 = vmatpush1.msra.mxu0 0.0
  %2927 = vmatprep.subr.mxu0 0.0
  %2928 = vmatpush1.msra.mxu0 0.0
  %2929 = vmatprep.subr.mxu0 0.0
  %2930 = vmatpush1.msra.mxu0 0.0
  %2931 = vmatprep.subr.mxu0 0.0
  %2932 = vmatpush1.msra.mxu0 0.0
  %2933 = vmatprep.subr.mxu0 0.0
  %2934 = vmatpush1.msra.mxu0 0.0
  %2935 = vmatprep.subr.mxu0 0.0
  %2936 = vmatpush1.msra.mxu0 0.0
  %2937 = vmatprep.subr.mxu0 0.0
  %2938 = vmatpush1.msra.mxu0 0.0
  %2939 = vmatprep.subr.mxu0 0.0
  %2940 = vmatpush1.msra.mxu0 0.0
  %2941 = vmatprep.subr.mxu0 0.0
  %2942 = vmatpush1.msra.mxu0 0.0
  %2943 = vmatprep.subr.mxu0 0.0
  %2944 = vmatpush1.msra.mxu0 0.0
  %2945 = vmatprep.subr.mxu0 0.0
  %2946 = vmatpush1.msra.mxu0 0.0
  %2947 = vmatprep.subr.mxu0 0.0
  %2948 = vmatpush1.msra.mxu0 0.0
  %2949 = vmatprep.subr.mxu0 0.0
  %2950 = vmatpush1.msra.mxu0 0.0
  %2951 = vmatprep.subr.mxu0 0.0
  %2952 = vmatpush1.msra.mxu0 0.0
  %2953 = vmatprep.subr.mxu0 0.0
  %2954 = vmatpush1.msra.mxu0 0.0
  %2955 = vmatprep.subr.mxu0 0.0
  %2956 = vmatpush1.msra.mxu0 0.0
  %2957 = vmatprep.subr.mxu0 0.0
  %2958 = vmatpush1.msra.mxu0 0.0
  %2959 = vmatprep.subr.mxu0 0.0
  %2960 = vmatpush1.msra.mxu0 0.0
  %2961 = vmatprep.subr.mxu0 0.0
  %2962 = vmatpush1.msra.mxu0 0.0
  %2963 = vmatprep.subr.mxu0 0.0
  %2964 = vmatpush1.msra.mxu0 0.0
  %2965 = vmatprep.subr.mxu0 0.0
  %2966 = vmatpush1.msra.mxu0 0.0
  %2967 = vmatprep.subr.mxu0 0.0
  %2968 = vmatpush1.msra.mxu0 0.0
  %2969 = vmatprep.subr.mxu0 0.0
  %2970 = vmatpush1.msra.mxu0 0.0
  %2971 = vmatprep.subr.mxu0 0.0
  %2972 = vmatpush1.msra.mxu0 0.0
  %2973 = vmatprep.subr.mxu0 0.0
  %2974 = vmatpush1.msra.mxu0 0.0
  %2975 = vmatprep.subr.mxu0 0.0
  %2976 = vmatpush1.msra.mxu0 0.0
  %2977 = vmatprep.mubr.f32.mxu0 0.0
  %2978 = vmatmul.mubr.f32.gmra.mrb[0].mxu0 %v2911
  %v2979 = vpop.f32.mrb[0].mxu0
  %v2980 = vadd.f32 0.0, %v2979
  %v2981 = vpop.f32.mrb[0].mxu0
  %2982 = vdwg.mxu0
  %v2984 = vsel %vm2617, %v2606, 0
  %2986 = vmatprep.subr.mxu0 0.0
  %2987 = vmatpush1.msra.mxu0 %v91
  %2988 = vmatprep.subr.mxu0 0.0
  %2989 = vmatpush1.msra.mxu0 %v92
  %2990 = vmatprep.subr.mxu0 0.0
  %2991 = vmatpush1.msra.mxu0 0.0
  %2992 = vmatprep.subr.mxu0 0.0
  %2993 = vmatpush1.msra.mxu0 0.0
  %2994 = vmatprep.subr.mxu0 0.0
  %2995 = vmatpush1.msra.mxu0 0.0
  %2996 = vmatprep.subr.mxu0 0.0
  %2997 = vmatpush1.msra.mxu0 0.0
  %2998 = vmatprep.subr.mxu0 0.0
  %2999 = vmatpush1.msra.mxu0 0.0
  %3000 = vmatprep.subr.mxu0 0.0
  %3001 = vmatpush1.msra.mxu0 0.0
  %3002 = vmatprep.subr.mxu0 0.0
  %3003 = vmatpush1.msra.mxu0 0.0
  %3004 = vmatprep.subr.mxu0 0.0
  %3005 = vmatpush1.msra.mxu0 0.0
  %3006 = vmatprep.subr.mxu0 0.0
  %3007 = vmatpush1.msra.mxu0 0.0
  %3008 = vmatprep.subr.mxu0 0.0
  %3009 = vmatpush1.msra.mxu0 0.0
  %3010 = vmatprep.subr.mxu0 0.0
  %3011 = vmatpush1.msra.mxu0 0.0
  %3012 = vmatprep.subr.mxu0 0.0
  %3013 = vmatpush1.msra.mxu0 0.0
  %3014 = vmatprep.subr.mxu0 0.0
  %3015 = vmatpush1.msra.mxu0 0.0
  %3016 = vmatprep.subr.mxu0 0.0
  %3017 = vmatpush1.msra.mxu0 0.0
  %3018 = vmatprep.subr.mxu0 0.0
  %3019 = vmatpush1.msra.mxu0 0.0
  %3020 = vmatprep.subr.mxu0 0.0
  %3021 = vmatpush1.msra.mxu0 0.0
  %3022 = vmatprep.subr.mxu0 0.0
  %3023 = vmatpush1.msra.mxu0 0.0
  %3024 = vmatprep.subr.mxu0 0.0
  %3025 = vmatpush1.msra.mxu0 0.0
  %3026 = vmatprep.subr.mxu0 0.0
  %3027 = vmatpush1.msra.mxu0 0.0
  %3028 = vmatprep.subr.mxu0 0.0
  %3029 = vmatpush1.msra.mxu0 0.0
  %3030 = vmatprep.subr.mxu0 0.0
  %3031 = vmatpush1.msra.mxu0 0.0
  %3032 = vmatprep.subr.mxu0 0.0
  %3033 = vmatpush1.msra.mxu0 0.0
  %3034 = vmatprep.subr.mxu0 0.0
  %3035 = vmatpush1.msra.mxu0 0.0
  %3036 = vmatprep.subr.mxu0 0.0
  %3037 = vmatpush1.msra.mxu0 0.0
  %3038 = vmatprep.subr.mxu0 0.0
  %3039 = vmatpush1.msra.mxu0 0.0
  %3040 = vmatprep.subr.mxu0 0.0
  %3041 = vmatpush1.msra.mxu0 0.0
  %3042 = vmatprep.subr.mxu0 0.0
  %3043 = vmatpush1.msra.mxu0 0.0
  %3044 = vmatprep.subr.mxu0 0.0
  %3045 = vmatpush1.msra.mxu0 0.0
  %3046 = vmatprep.subr.mxu0 0.0
  %3047 = vmatpush1.msra.mxu0 0.0
  %3048 = vmatprep.subr.mxu0 0.0
  %3049 = vmatpush1.msra.mxu0 0.0
  %3050 = vmatprep.mubr.f32.mxu0 0.0
  %3051 = vmatmul.mubr.f32.gmra.mrb[0].mxu0 %v2984
  %v3052 = vpop.f32.mrb[0].mxu0
  %v3053 = vadd.f32 0.0, %v3052
  %v3054 = vpop.f32.mrb[0].mxu0
  %3055 = vdwg.mxu0
  %v3057 = vsel %vm2617, %v2607, 0
  %3059 = vmatprep.subr.mxu0 0.0
  %3060 = vmatpush1.msra.mxu0 %v93
  %3061 = vmatprep.subr.mxu0 0.0
  %3062 = vmatpush1.msra.mxu0 %v94
  %3063 = vmatprep.subr.mxu0 0.0
  %3064 = vmatpush1.msra.mxu0 0.0
  %3065 = vmatprep.subr.mxu0 0.0
  %3066 = vmatpush1.msra.mxu0 0.0
  %3067 = vmatprep.subr.mxu0 0.0
  %3068 = vmatpush1.msra.mxu0 0.0
  %3069 = vmatprep.subr.mxu0 0.0
  %3070 = vmatpush1.msra.mxu0 0.0
  %3071 = vmatprep.subr.mxu0 0.0
  %3072 = vmatpush1.msra.mxu0 0.0
  %3073 = vmatprep.subr.mxu0 0.0
  %3074 = vmatpush1.msra.mxu0 0.0
  %3075 = vmatprep.subr.mxu0 0.0
  %3076 = vmatpush1.msra.mxu0 0.0
  %3077 = vmatprep.subr.mxu0 0.0
  %3078 = vmatpush1.msra.mxu0 0.0
  %3079 = vmatprep.subr.mxu0 0.0
  %3080 = vmatpush1.msra.mxu0 0.0
  %3081 = vmatprep.subr.mxu0 0.0
  %3082 = vmatpush1.msra.mxu0 0.0
  %3083 = vmatprep.subr.mxu0 0.0
  %3084 = vmatpush1.msra.mxu0 0.0
  %3085 = vmatprep.subr.mxu0 0.0
  %3086 = vmatpush1.msra.mxu0 0.0
  %3087 = vmatprep.subr.mxu0 0.0
  %3088 = vmatpush1.msra.mxu0 0.0
  %3089 = vmatprep.subr.mxu0 0.0
  %3090 = vmatpush1.msra.mxu0 0.0
  %3091 = vmatprep.subr.mxu0 0.0
  %3092 = vmatpush1.msra.mxu0 0.0
  %3093 = vmatprep.subr.mxu0 0.0
  %3094 = vmatpush1.msra.mxu0 0.0
  %3095 = vmatprep.subr.mxu0 0.0
  %3096 = vmatpush1.msra.mxu0 0.0
  %3097 = vmatprep.subr.mxu0 0.0
  %3098 = vmatpush1.msra.mxu0 0.0
  %3099 = vmatprep.subr.mxu0 0.0
  %3100 = vmatpush1.msra.mxu0 0.0
  %3101 = vmatprep.subr.mxu0 0.0
  %3102 = vmatpush1.msra.mxu0 0.0
  %3103 = vmatprep.subr.mxu0 0.0
  %3104 = vmatpush1.msra.mxu0 0.0
  %3105 = vmatprep.subr.mxu0 0.0
  %3106 = vmatpush1.msra.mxu0 0.0
  %3107 = vmatprep.subr.mxu0 0.0
  %3108 = vmatpush1.msra.mxu0 0.0
  %3109 = vmatprep.subr.mxu0 0.0
  %3110 = vmatpush1.msra.mxu0 0.0
  %3111 = vmatprep.subr.mxu0 0.0
  %3112 = vmatpush1.msra.mxu0 0.0
  %3113 = vmatprep.subr.mxu0 0.0
  %3114 = vmatpush1.msra.mxu0 0.0
  %3115 = vmatprep.subr.mxu0 0.0
  %3116 = vmatpush1.msra.mxu0 0.0
  %3117 = vmatprep.subr.mxu0 0.0
  %3118 = vmatpush1.msra.mxu0 0.0
  %3119 = vmatprep.subr.mxu0 0.0
  %3120 = vmatpush1.msra.mxu0 0.0
  %3121 = vmatprep.subr.mxu0 0.0
  %3122 = vmatpush1.msra.mxu0 0.0
  %3123 = vmatprep.mubr.f32.mxu0 0.0
  %3124 = vmatmul.mubr.f32.gmra.mrb[0].mxu0 %v3057
  %v3125 = vpop.f32.mrb[0].mxu0
  %v3126 = vadd.f32 0.0, %v3125
  %v3127 = vpop.f32.mrb[0].mxu0
  %3128 = vdwg.mxu0
  %v3130 = vsel %vm2617, %v2608, 0
  %3132 = vmatprep.subr.mxu0 0.0
  %3133 = vmatpush1.msra.mxu0 %v95
  %3134 = vmatprep.subr.mxu0 0.0
  %3135 = vmatpush1.msra.mxu0 %v96
  %3136 = vmatprep.subr.mxu0 0.0
  %3137 = vmatpush1.msra.mxu0 0.0
  %3138 = vmatprep.subr.mxu0 0.0
  %3139 = vmatpush1.msra.mxu0 0.0
  %3140 = vmatprep.subr.mxu0 0.0
  %3141 = vmatpush1.msra.mxu0 0.0
  %3142 = vmatprep.subr.mxu0 0.0
  %3143 = vmatpush1.msra.mxu0 0.0
  %3144 = vmatprep.subr.mxu0 0.0
  %3145 = vmatpush1.msra.mxu0 0.0
  %3146 = vmatprep.subr.mxu0 0.0
  %3147 = vmatpush1.msra.mxu0 0.0
  %3148 = vmatprep.subr.mxu0 0.0
  %3149 = vmatpush1.msra.mxu0 0.0
  %3150 = vmatprep.subr.mxu0 0.0
  %3151 = vmatpush1.msra.mxu0 0.0
  %3152 = vmatprep.subr.mxu0 0.0
  %3153 = vmatpush1.msra.mxu0 0.0
  %3154 = vmatprep.subr.mxu0 0.0
  %3155 = vmatpush1.msra.mxu0 0.0
  %3156 = vmatprep.subr.mxu0 0.0
  %3157 = vmatpush1.msra.mxu0 0.0
  %3158 = vmatprep.subr.mxu0 0.0
  %3159 = vmatpush1.msra.mxu0 0.0
  %3160 = vmatprep.subr.mxu0 0.0
  %3161 = vmatpush1.msra.mxu0 0.0
  %3162 = vmatprep.subr.mxu0 0.0
  %3163 = vmatpush1.msra.mxu0 0.0
  %3164 = vmatprep.subr.mxu0 0.0
  %3165 = vmatpush1.msra.mxu0 0.0
  %3166 = vmatprep.subr.mxu0 0.0
  %3167 = vmatpush1.msra.mxu0 0.0
  %3168 = vmatprep.subr.mxu0 0.0
  %3169 = vmatpush1.msra.mxu0 0.0
  %3170 = vmatprep.subr.mxu0 0.0
  %3171 = vmatpush1.msra.mxu0 0.0
  %3172 = vmatprep.subr.mxu0 0.0
  %3173 = vmatpush1.msra.mxu0 0.0
  %3174 = vmatprep.subr.mxu0 0.0
  %3175 = vmatpush1.msra.mxu0 0.0
  %3176 = vmatprep.subr.mxu0 0.0
  %3177 = vmatpush1.msra.mxu0 0.0
  %3178 = vmatprep.subr.mxu0 0.0
  %3179 = vmatpush1.msra.mxu0 0.0
  %3180 = vmatprep.subr.mxu0 0.0
  %3181 = vmatpush1.msra.mxu0 0.0
  %3182 = vmatprep.subr.mxu0 0.0
  %3183 = vmatpush1.msra.mxu0 0.0
  %3184 = vmatprep.subr.mxu0 0.0
  %3185 = vmatpush1.msra.mxu0 0.0
  %3186 = vmatprep.subr.mxu0 0.0
  %3187 = vmatpush1.msra.mxu0 0.0
  %3188 = vmatprep.subr.mxu0 0.0
  %3189 = vmatpush1.msra.mxu0 0.0
  %3190 = vmatprep.subr.mxu0 0.0
  %3191 = vmatpush1.msra.mxu0 0.0
  %3192 = vmatprep.subr.mxu0 0.0
  %3193 = vmatpush1.msra.mxu0 0.0
  %3194 = vmatprep.subr.mxu0 0.0
  %3195 = vmatpush1.msra.mxu0 0.0
  %3196 = vmatprep.mubr.f32.mxu0 0.0
  %3197 = vmatmul.mubr.f32.gmra.mrb[0].mxu0 %v3130
  %v3198 = vpop.f32.mrb[0].mxu0
  %v3199 = vadd.f32 0.0, %v3198
  %v3200 = vpop.f32.mrb[0].mxu0
  %3201 = vdwg.mxu0
  %v3203 = vsel %vm2617, %v2609, 0
  %3205 = vmatprep.subr.mxu0 0.0
  %3206 = vmatpush1.msra.mxu0 %v97
  %3207 = vmatprep.subr.mxu0 0.0
  %3208 = vmatpush1.msra.mxu0 %v98
  %3209 = vmatprep.subr.mxu0 0.0
  %3210 = vmatpush1.msra.mxu0 0.0
  %3211 = vmatprep.subr.mxu0 0.0
  %3212 = vmatpush1.msra.mxu0 0.0
  %3213 = vmatprep.subr.mxu0 0.0
  %3214 = vmatpush1.msra.mxu0 0.0
  %3215 = vmatprep.subr.mxu0 0.0
  %3216 = vmatpush1.msra.mxu0 0.0
  %3217 = vmatprep.subr.mxu0 0.0
  %3218 = vmatpush1.msra.mxu0 0.0
  %3219 = vmatprep.subr.mxu0 0.0
  %3220 = vmatpush1.msra.mxu0 0.0
  %3221 = vmatprep.subr.mxu0 0.0
  %3222 = vmatpush1.msra.mxu0 0.0
  %3223 = vmatprep.subr.mxu0 0.0
  %3224 = vmatpush1.msra.mxu0 0.0
  %3225 = vmatprep.subr.mxu0 0.0
  %3226 = vmatpush1.msra.mxu0 0.0
  %3227 = vmatprep.subr.mxu0 0.0
  %3228 = vmatpush1.msra.mxu0 0.0
  %3229 = vmatprep.subr.mxu0 0.0
  %3230 = vmatpush1.msra.mxu0 0.0
  %3231 = vmatprep.subr.mxu0 0.0
  %3232 = vmatpush1.msra.mxu0 0.0
  %3233 = vmatprep.subr.mxu0 0.0
  %3234 = vmatpush1.msra.mxu0 0.0
  %3235 = vmatprep.subr.mxu0 0.0
  %3236 = vmatpush1.msra.mxu0 0.0
  %3237 = vmatprep.subr.mxu0 0.0
  %3238 = vmatpush1.msra.mxu0 0.0
  %3239 = vmatprep.subr.mxu0 0.0
  %3240 = vmatpush1.msra.mxu0 0.0
  %3241 = vmatprep.subr.mxu0 0.0
  %3242 = vmatpush1.msra.mxu0 0.0
  %3243 = vmatprep.subr.mxu0 0.0
  %3244 = vmatpush1.msra.mxu0 0.0
  %3245 = vmatprep.subr.mxu0 0.0
  %3246 = vmatpush1.msra.mxu0 0.0
  %3247 = vmatprep.subr.mxu0 0.0
  %3248 = vmatpush1.msra.mxu0 0.0
  %3249 = vmatprep.subr.mxu0 0.0
  %3250 = vmatpush1.msra.mxu0 0.0
  %3251 = vmatprep.subr.mxu0 0.0
  %3252 = vmatpush1.msra.mxu0 0.0
  %3253 = vmatprep.subr.mxu0 0.0
  %3254 = vmatpush1.msra.mxu0 0.0
  %3255 = vmatprep.subr.mxu0 0.0
  %3256 = vmatpush1.msra.mxu0 0.0
  %3257 = vmatprep.subr.mxu0 0.0
  %3258 = vmatpush1.msra.mxu0 0.0
  %3259 = vmatprep.subr.mxu0 0.0
  %3260 = vmatpush1.msra.mxu0 0.0
  %3261 = vmatprep.subr.mxu0 0.0
  %3262 = vmatpush1.msra.mxu0 0.0
  %3263 = vmatprep.subr.mxu0 0.0
  %3264 = vmatpush1.msra.mxu0 0.0
  %3265 = vmatprep.subr.mxu0 0.0
  %3266 = vmatpush1.msra.mxu0 0.0
  %3267 = vmatprep.subr.mxu0 0.0
  %3268 = vmatpush1.msra.mxu0 0.0
  %3269 = vmatprep.mubr.f32.mxu0 0.0
  %3270 = vmatmul.mubr.f32.gmra.mrb[0].mxu0 %v3203
  %v3271 = vpop.f32.mrb[0].mxu0
  %v3272 = vadd.f32 0.0, %v3271
  %v3273 = vpop.f32.mrb[0].mxu0
  %3274 = vdwg.mxu0
  %v3276 = vsel %vm2617, %v2610, 0
  %3278 = vmatprep.subr.mxu0 0.0
  %3279 = vmatpush1.msra.mxu0 %v99
  %3280 = vmatprep.subr.mxu0 0.0
  %3281 = vmatpush1.msra.mxu0 %v100
  %3282 = vmatprep.subr.mxu0 0.0
  %3283 = vmatpush1.msra.mxu0 0.0
  %3284 = vmatprep.subr.mxu0 0.0
  %3285 = vmatpush1.msra.mxu0 0.0
  %3286 = vmatprep.subr.mxu0 0.0
  %3287 = vmatpush1.msra.mxu0 0.0
  %3288 = vmatprep.subr.mxu0 0.0
  %3289 = vmatpush1.msra.mxu0 0.0
  %3290 = vmatprep.subr.mxu0 0.0
  %3291 = vmatpush1.msra.mxu0 0.0
  %3292 = vmatprep.subr.mxu0 0.0
  %3293 = vmatpush1.msra.mxu0 0.0
  %3294 = vmatprep.subr.mxu0 0.0
  %3295 = vmatpush1.msra.mxu0 0.0
  %3296 = vmatprep.subr.mxu0 0.0
  %3297 = vmatpush1.msra.mxu0 0.0
  %3298 = vmatprep.subr.mxu0 0.0
  %3299 = vmatpush1.msra.mxu0 0.0
  %3300 = vmatprep.subr.mxu0 0.0
  %3301 = vmatpush1.msra.mxu0 0.0
  %3302 = vmatprep.subr.mxu0 0.0
  %3303 = vmatpush1.msra.mxu0 0.0
  %3304 = vmatprep.subr.mxu0 0.0
  %3305 = vmatpush1.msra.mxu0 0.0
  %3306 = vmatprep.subr.mxu0 0.0
  %3307 = vmatpush1.msra.mxu0 0.0
  %3308 = vmatprep.subr.mxu0 0.0
  %3309 = vmatpush1.msra.mxu0 0.0
  %3310 = vmatprep.subr.mxu0 0.0
  %3311 = vmatpush1.msra.mxu0 0.0
  %3312 = vmatprep.subr.mxu0 0.0
  %3313 = vmatpush1.msra.mxu0 0.0
  %3314 = vmatprep.subr.mxu0 0.0
  %3315 = vmatpush1.msra.mxu0 0.0
  %3316 = vmatprep.subr.mxu0 0.0
  %3317 = vmatpush1.msra.mxu0 0.0
  %3318 = vmatprep.subr.mxu0 0.0
  %3319 = vmatpush1.msra.mxu0 0.0
  %3320 = vmatprep.subr.mxu0 0.0
  %3321 = vmatpush1.msra.mxu0 0.0
  %3322 = vmatprep.subr.mxu0 0.0
  %3323 = vmatpush1.msra.mxu0 0.0
  %3324 = vmatprep.subr.mxu0 0.0
  %3325 = vmatpush1.msra.mxu0 0.0
  %3326 = vmatprep.subr.mxu0 0.0
  %3327 = vmatpush1.msra.mxu0 0.0
  %3328 = vmatprep.subr.mxu0 0.0
  %3329 = vmatpush1.msra.mxu0 0.0
  %3330 = vmatprep.subr.mxu0 0.0
  %3331 = vmatpush1.msra.mxu0 0.0
  %3332 = vmatprep.subr.mxu0 0.0
  %3333 = vmatpush1.msra.mxu0 0.0
  %3334 = vmatprep.subr.mxu0 0.0
  %3335 = vmatpush1.msra.mxu0 0.0
  %3336 = vmatprep.subr.mxu0 0.0
  %3337 = vmatpush1.msra.mxu0 0.0
  %3338 = vmatprep.subr.mxu0 0.0
  %3339 = vmatpush1.msra.mxu0 0.0
  %3340 = vmatprep.subr.mxu0 0.0
  %3341 = vmatpush1.msra.mxu0 0.0
  %3342 = vmatprep.mubr.f32.mxu0 0.0
  %3343 = vmatmul.mubr.f32.gmra.mrb[0].mxu0 %v3276
  %v3344 = vpop.f32.mrb[0].mxu0
  %v3345 = vadd.f32 0.0, %v3344
  %v3346 = vpop.f32.mrb[0].mxu0
  %3347 = vdwg.mxu0
  %v3349 = vsel %vm2617, %v2611, 0
  %3351 = vmatprep.subr.mxu0 0.0
  %3352 = vmatpush1.msra.mxu0 %v101
  %3353 = vmatprep.subr.mxu0 0.0
  %3354 = vmatpush1.msra.mxu0 %v102
  %3355 = vmatprep.subr.mxu0 0.0
  %3356 = vmatpush1.msra.mxu0 0.0
  %3357 = vmatprep.subr.mxu0 0.0
  %3358 = vmatpush1.msra.mxu0 0.0
  %3359 = vmatprep.subr.mxu0 0.0
  %3360 = vmatpush1.msra.mxu0 0.0
  %3361 = vmatprep.subr.mxu0 0.0
  %3362 = vmatpush1.msra.mxu0 0.0
  %3363 = vmatprep.subr.mxu0 0.0
  %3364 = vmatpush1.msra.mxu0 0.0
  %3365 = vmatprep.subr.mxu0 0.0
  %3366 = vmatpush1.msra.mxu0 0.0
  %3367 = vmatprep.subr.mxu0 0.0
  %3368 = vmatpush1.msra.mxu0 0.0
  %3369 = vmatprep.subr.mxu0 0.0
  %3370 = vmatpush1.msra.mxu0 0.0
  %3371 = vmatprep.subr.mxu0 0.0
  %3372 = vmatpush1.msra.mxu0 0.0
  %3373 = vmatprep.subr.mxu0 0.0
  %3374 = vmatpush1.msra.mxu0 0.0
  %3375 = vmatprep.subr.mxu0 0.0
  %3376 = vmatpush1.msra.mxu0 0.0
  %3377 = vmatprep.subr.mxu0 0.0
  %3378 = vmatpush1.msra.mxu0 0.0
  %3379 = vmatprep.subr.mxu0 0.0
  %3380 = vmatpush1.msra.mxu0 0.0
  %3381 = vmatprep.subr.mxu0 0.0
  %3382 = vmatpush1.msra.mxu0 0.0
  %3383 = vmatprep.subr.mxu0 0.0
  %3384 = vmatpush1.msra.mxu0 0.0
  %3385 = vmatprep.subr.mxu0 0.0
  %3386 = vmatpush1.msra.mxu0 0.0
  %3387 = vmatprep.subr.mxu0 0.0
  %3388 = vmatpush1.msra.mxu0 0.0
  %3389 = vmatprep.subr.mxu0 0.0
  %3390 = vmatpush1.msra.mxu0 0.0
  %3391 = vmatprep.subr.mxu0 0.0
  %3392 = vmatpush1.msra.mxu0 0.0
  %3393 = vmatprep.subr.mxu0 0.0
  %3394 = vmatpush1.msra.mxu0 0.0
  %3395 = vmatprep.subr.mxu0 0.0
  %3396 = vmatpush1.msra.mxu0 0.0
  %3397 = vmatprep.subr.mxu0 0.0
  %3398 = vmatpush1.msra.mxu0 0.0
  %3399 = vmatprep.subr.mxu0 0.0
  %3400 = vmatpush1.msra.mxu0 0.0
  %3401 = vmatprep.subr.mxu0 0.0
  %3402 = vmatpush1.msra.mxu0 0.0
  %3403 = vmatprep.subr.mxu0 0.0
  %3404 = vmatpush1.msra.mxu0 0.0
  %3405 = vmatprep.subr.mxu0 0.0
  %3406 = vmatpush1.msra.mxu0 0.0
  %3407 = vmatprep.subr.mxu0 0.0
  %3408 = vmatpush1.msra.mxu0 0.0
  %3409 = vmatprep.subr.mxu0 0.0
  %3410 = vmatpush1.msra.mxu0 0.0
  %3411 = vmatprep.subr.mxu0 0.0
  %3412 = vmatpush1.msra.mxu0 0.0
  %3413 = vmatprep.subr.mxu0 0.0
  %3414 = vmatpush1.msra.mxu0 0.0
  %3415 = vmatprep.mubr.f32.mxu0 0.0
  %3416 = vmatmul.mubr.f32.gmra.mrb[0].mxu0 %v3349
  %v3417 = vpop.f32.mrb[0].mxu0
  %v3418 = vadd.f32 0.0, %v3417
  %v3419 = vpop.f32.mrb[0].mxu0
  %3420 = vdwg.mxu0
  %v3422 = vsel %vm2617, %v2612, 0
  %3424 = vmatprep.subr.mxu0 0.0
  %3425 = vmatpush1.msra.mxu0 %v103
  %3426 = vmatprep.subr.mxu0 0.0
  %3427 = vmatpush1.msra.mxu0 %v104
  %3428 = vmatprep.subr.mxu0 0.0
  %3429 = vmatpush1.msra.mxu0 0.0
  %3430 = vmatprep.subr.mxu0 0.0
  %3431 = vmatpush1.msra.mxu0 0.0
  %3432 = vmatprep.subr.mxu0 0.0
  %3433 = vmatpush1.msra.mxu0 0.0
  %3434 = vmatprep.subr.mxu0 0.0
  %3435 = vmatpush1.msra.mxu0 0.0
  %3436 = vmatprep.subr.mxu0 0.0
  %3437 = vmatpush1.msra.mxu0 0.0
  %3438 = vmatprep.subr.mxu0 0.0
  %3439 = vmatpush1.msra.mxu0 0.0
  %3440 = vmatprep.subr.mxu0 0.0
  %3441 = vmatpush1.msra.mxu0 0.0
  %3442 = vmatprep.subr.mxu0 0.0
  %3443 = vmatpush1.msra.mxu0 0.0
  %3444 = vmatprep.subr.mxu0 0.0
  %3445 = vmatpush1.msra.mxu0 0.0
  %3446 = vmatprep.subr.mxu0 0.0
  %3447 = vmatpush1.msra.mxu0 0.0
  %3448 = vmatprep.subr.mxu0 0.0
  %3449 = vmatpush1.msra.mxu0 0.0
  %3450 = vmatprep.subr.mxu0 0.0
  %3451 = vmatpush1.msra.mxu0 0.0
  %3452 = vmatprep.subr.mxu0 0.0
  %3453 = vmatpush1.msra.mxu0 0.0
  %3454 = vmatprep.subr.mxu0 0.0
  %3455 = vmatpush1.msra.mxu0 0.0
  %3456 = vmatprep.subr.mxu0 0.0
  %3457 = vmatpush1.msra.mxu0 0.0
  %3458 = vmatprep.subr.mxu0 0.0
  %3459 = vmatpush1.msra.mxu0 0.0
  %3460 = vmatprep.subr.mxu0 0.0
  %3461 = vmatpush1.msra.mxu0 0.0
  %3462 = vmatprep.subr.mxu0 0.0
  %3463 = vmatpush1.msra.mxu0 0.0
  %3464 = vmatprep.subr.mxu0 0.0
  %3465 = vmatpush1.msra.mxu0 0.0
  %3466 = vmatprep.subr.mxu0 0.0
  %3467 = vmatpush1.msra.mxu0 0.0
  %3468 = vmatprep.subr.mxu0 0.0
  %3469 = vmatpush1.msra.mxu0 0.0
  %3470 = vmatprep.subr.mxu0 0.0
  %3471 = vmatpush1.msra.mxu0 0.0
  %3472 = vmatprep.subr.mxu0 0.0
  %3473 = vmatpush1.msra.mxu0 0.0
  %3474 = vmatprep.subr.mxu0 0.0
  %3475 = vmatpush1.msra.mxu0 0.0
  %3476 = vmatprep.subr.mxu0 0.0
  %3477 = vmatpush1.msra.mxu0 0.0
  %3478 = vmatprep.subr.mxu0 0.0
  %3479 = vmatpush1.msra.mxu0 0.0
  %3480 = vmatprep.subr.mxu0 0.0
  %3481 = vmatpush1.msra.mxu0 0.0
  %3482 = vmatprep.subr.mxu0 0.0
  %3483 = vmatpush1.msra.mxu0 0.0
  %3484 = vmatprep.subr.mxu0 0.0
  %3485 = vmatpush1.msra.mxu0 0.0
  %3486 = vmatprep.subr.mxu0 0.0
  %3487 = vmatpush1.msra.mxu0 0.0
  %3488 = vmatprep.mubr.f32.mxu0 0.0
  %3489 = vmatmul.mubr.f32.gmra.mrb[0].mxu0 %v3422
  %v3490 = vpop.f32.mrb[0].mxu0
  %v3491 = vadd.f32 0.0, %v3490
  %v3492 = vpop.f32.mrb[0].mxu0
  %3493 = vdwg.mxu0
  %v3495 = vsel %vm2617, %v2613, 0
  %3497 = vmatprep.subr.mxu0 0.0
  %3498 = vmatpush1.msra.mxu0 %v105
  %3499 = vmatprep.subr.mxu0 0.0
  %3500 = vmatpush1.msra.mxu0 %v106
  %3501 = vmatprep.subr.mxu0 0.0
  %3502 = vmatpush1.msra.mxu0 0.0
  %3503 = vmatprep.subr.mxu0 0.0
  %3504 = vmatpush1.msra.mxu0 0.0
  %3505 = vmatprep.subr.mxu0 0.0
  %3506 = vmatpush1.msra.mxu0 0.0
  %3507 = vmatprep.subr.mxu0 0.0
  %3508 = vmatpush1.msra.mxu0 0.0
  %3509 = vmatprep.subr.mxu0 0.0
  %3510 = vmatpush1.msra.mxu0 0.0
  %3511 = vmatprep.subr.mxu0 0.0
  %3512 = vmatpush1.msra.mxu0 0.0
  %3513 = vmatprep.subr.mxu0 0.0
  %3514 = vmatpush1.msra.mxu0 0.0
  %3515 = vmatprep.subr.mxu0 0.0
  %3516 = vmatpush1.msra.mxu0 0.0
  %3517 = vmatprep.subr.mxu0 0.0
  %3518 = vmatpush1.msra.mxu0 0.0
  %3519 = vmatprep.subr.mxu0 0.0
  %3520 = vmatpush1.msra.mxu0 0.0
  %3521 = vmatprep.subr.mxu0 0.0
  %3522 = vmatpush1.msra.mxu0 0.0
  %3523 = vmatprep.subr.mxu0 0.0
  %3524 = vmatpush1.msra.mxu0 0.0
  %3525 = vmatprep.subr.mxu0 0.0
  %3526 = vmatpush1.msra.mxu0 0.0
  %3527 = vmatprep.subr.mxu0 0.0
  %3528 = vmatpush1.msra.mxu0 0.0
  %3529 = vmatprep.subr.mxu0 0.0
  %3530 = vmatpush1.msra.mxu0 0.0
  %3531 = vmatprep.subr.mxu0 0.0
  %3532 = vmatpush1.msra.mxu0 0.0
  %3533 = vmatprep.subr.mxu0 0.0
  %3534 = vmatpush1.msra.mxu0 0.0
  %3535 = vmatprep.subr.mxu0 0.0
  %3536 = vmatpush1.msra.mxu0 0.0
  %3537 = vmatprep.subr.mxu0 0.0
  %3538 = vmatpush1.msra.mxu0 0.0
  %3539 = vmatprep.subr.mxu0 0.0
  %3540 = vmatpush1.msra.mxu0 0.0
  %3541 = vmatprep.subr.mxu0 0.0
  %3542 = vmatpush1.msra.mxu0 0.0
  %3543 = vmatprep.subr.mxu0 0.0
  %3544 = vmatpush1.msra.mxu0 0.0
  %3545 = vmatprep.subr.mxu0 0.0
  %3546 = vmatpush1.msra.mxu0 0.0
  %3547 = vmatprep.subr.mxu0 0.0
  %3548 = vmatpush1.msra.mxu0 0.0
  %3549 = vmatprep.subr.mxu0 0.0
  %3550 = vmatpush1.msra.mxu0 0.0
  %3551 = vmatprep.subr.mxu0 0.0
  %3552 = vmatpush1.msra.mxu0 0.0
  %3553 = vmatprep.subr.mxu0 0.0
  %3554 = vmatpush1.msra.mxu0 0.0
  %3555 = vmatprep.subr.mxu0 0.0
  %3556 = vmatpush1.msra.mxu0 0.0
  %3557 = vmatprep.subr.mxu0 0.0
  %3558 = vmatpush1.msra.mxu0 0.0
  %3559 = vmatprep.subr.mxu0 0.0
  %3560 = vmatpush1.msra.mxu0 0.0
  %3561 = vmatprep.mubr.f32.mxu0 0.0
  %3562 = vmatmul.mubr.f32.gmra.mrb[0].mxu0 %v3495
  %v3563 = vpop.f32.mrb[0].mxu0
  %v3564 = vadd.f32 0.0, %v3563
  %v3565 = vpop.f32.mrb[0].mxu0
  %3566 = vdwg.mxu0
  %v3568 = vsel %vm2617, %v2614, 0
  %3570 = vmatprep.subr.mxu0 0.0
  %3571 = vmatpush1.msra.mxu0 %v107
  %3572 = vmatprep.subr.mxu0 0.0
  %3573 = vmatpush1.msra.mxu0 %v108
  %3574 = vmatprep.subr.mxu0 0.0
  %3575 = vmatpush1.msra.mxu0 0.0
  %3576 = vmatprep.subr.mxu0 0.0
  %3577 = vmatpush1.msra.mxu0 0.0
  %3578 = vmatprep.subr.mxu0 0.0
  %3579 = vmatpush1.msra.mxu0 0.0
  %3580 = vmatprep.subr.mxu0 0.0
  %3581 = vmatpush1.msra.mxu0 0.0
  %3582 = vmatprep.subr.mxu0 0.0
  %3583 = vmatpush1.msra.mxu0 0.0
  %3584 = vmatprep.subr.mxu0 0.0
  %3585 = vmatpush1.msra.mxu0 0.0
  %3586 = vmatprep.subr.mxu0 0.0
  %3587 = vmatpush1.msra.mxu0 0.0
  %3588 = vmatprep.subr.mxu0 0.0
  %3589 = vmatpush1.msra.mxu0 0.0
  %3590 = vmatprep.subr.mxu0 0.0
  %3591 = vmatpush1.msra.mxu0 0.0
  %3592 = vmatprep.subr.mxu0 0.0
  %3593 = vmatpush1.msra.mxu0 0.0
  %3594 = vmatprep.subr.mxu0 0.0
  %3595 = vmatpush1.msra.mxu0 0.0
  %3596 = vmatprep.subr.mxu0 0.0
  %3597 = vmatpush1.msra.mxu0 0.0
  %3598 = vmatprep.subr.mxu0 0.0
  %3599 = vmatpush1.msra.mxu0 0.0
  %3600 = vmatprep.subr.mxu0 0.0
  %3601 = vmatpush1.msra.mxu0 0.0
  %3602 = vmatprep.subr.mxu0 0.0
  %3603 = vmatpush1.msra.mxu0 0.0
  %3604 = vmatprep.subr.mxu0 0.0
  %3605 = vmatpush1.msra.mxu0 0.0
  %3606 = vmatprep.subr.mxu0 0.0
  %3607 = vmatpush1.msra.mxu0 0.0
  %3608 = vmatprep.subr.mxu0 0.0
  %3609 = vmatpush1.msra.mxu0 0.0
  %3610 = vmatprep.subr.mxu0 0.0
  %3611 = vmatpush1.msra.mxu0 0.0
  %3612 = vmatprep.subr.mxu0 0.0
  %3613 = vmatpush1.msra.mxu0 0.0
  %3614 = vmatprep.subr.mxu0 0.0
  %3615 = vmatpush1.msra.mxu0 0.0
  %3616 = vmatprep.subr.mxu0 0.0
  %3617 = vmatpush1.msra.mxu0 0.0
  %3618 = vmatprep.subr.mxu0 0.0
  %3619 = vmatpush1.msra.mxu0 0.0
  %3620 = vmatprep.subr.mxu0 0.0
  %3621 = vmatpush1.msra.mxu0 0.0
  %3622 = vmatprep.subr.mxu0 0.0
  %3623 = vmatpush1.msra.mxu0 0.0
  %3624 = vmatprep.subr.mxu0 0.0
  %3625 = vmatpush1.msra.mxu0 0.0
  %3626 = vmatprep.subr.mxu0 0.0
  %3627 = vmatpush1.msra.mxu0 0.0
  %3628 = vmatprep.subr.mxu0 0.0
  %3629 = vmatpush1.msra.mxu0 0.0
  %3630 = vmatprep.subr.mxu0 0.0
  %3631 = vmatpush1.msra.mxu0 0.0
  %3632 = vmatprep.subr.mxu0 0.0
  %3633 = vmatpush1.msra.mxu0 0.0
  %3634 = vmatprep.mubr.f32.mxu0 0.0
  %3635 = vmatmul.mubr.f32.gmra.mrb[0].mxu0 %v3568
  %v3636 = vpop.f32.mrb[0].mxu0
  %v3637 = vadd.f32 0.0, %v3636
  %v3638 = vpop.f32.mrb[0].mxu0
  %3639 = vdwg.mxu0
  %v3641 = vsel %vm2617, %v2615, 0
  %3643 = vmatprep.subr.mxu0 0.0
  %3644 = vmatpush1.msra.mxu0 %v109
  %3645 = vmatprep.subr.mxu0 0.0
  %3646 = vmatpush1.msra.mxu0 %v110
  %3647 = vmatprep.subr.mxu0 0.0
  %3648 = vmatpush1.msra.mxu0 0.0
  %3649 = vmatprep.subr.mxu0 0.0
  %3650 = vmatpush1.msra.mxu0 0.0
  %3651 = vmatprep.subr.mxu0 0.0
  %3652 = vmatpush1.msra.mxu0 0.0
  %3653 = vmatprep.subr.mxu0 0.0
  %3654 = vmatpush1.msra.mxu0 0.0
  %3655 = vmatprep.subr.mxu0 0.0
  %3656 = vmatpush1.msra.mxu0 0.0
  %3657 = vmatprep.subr.mxu0 0.0
  %3658 = vmatpush1.msra.mxu0 0.0
  %3659 = vmatprep.subr.mxu0 0.0
  %3660 = vmatpush1.msra.mxu0 0.0
  %3661 = vmatprep.subr.mxu0 0.0
  %3662 = vmatpush1.msra.mxu0 0.0
  %3663 = vmatprep.subr.mxu0 0.0
  %3664 = vmatpush1.msra.mxu0 0.0
  %3665 = vmatprep.subr.mxu0 0.0
  %3666 = vmatpush1.msra.mxu0 0.0
  %3667 = vmatprep.subr.mxu0 0.0
  %3668 = vmatpush1.msra.mxu0 0.0
  %3669 = vmatprep.subr.mxu0 0.0
  %3670 = vmatpush1.msra.mxu0 0.0
  %3671 = vmatprep.subr.mxu0 0.0
  %3672 = vmatpush1.msra.mxu0 0.0
  %3673 = vmatprep.subr.mxu0 0.0
  %3674 = vmatpush1.msra.mxu0 0.0
  %3675 = vmatprep.subr.mxu0 0.0
  %3676 = vmatpush1.msra.mxu0 0.0
  %3677 = vmatprep.subr.mxu0 0.0
  %3678 = vmatpush1.msra.mxu0 0.0
  %3679 = vmatprep.subr.mxu0 0.0
  %3680 = vmatpush1.msra.mxu0 0.0
  %3681 = vmatprep.subr.mxu0 0.0
  %3682 = vmatpush1.msra.mxu0 0.0
  %3683 = vmatprep.subr.mxu0 0.0
  %3684 = vmatpush1.msra.mxu0 0.0
  %3685 = vmatprep.subr.mxu0 0.0
  %3686 = vmatpush1.msra.mxu0 0.0
  %3687 = vmatprep.subr.mxu0 0.0
  %3688 = vmatpush1.msra.mxu0 0.0
  %3689 = vmatprep.subr.mxu0 0.0
  %3690 = vmatpush1.msra.mxu0 0.0
  %3691 = vmatprep.subr.mxu0 0.0
  %3692 = vmatpush1.msra.mxu0 0.0
  %3693 = vmatprep.subr.mxu0 0.0
  %3694 = vmatpush1.msra.mxu0 0.0
  %3695 = vmatprep.subr.mxu0 0.0
  %3696 = vmatpush1.msra.mxu0 0.0
  %3697 = vmatprep.subr.mxu0 0.0
  %3698 = vmatpush1.msra.mxu0 0.0
  %3699 = vmatprep.subr.mxu0 0.0
  %3700 = vmatpush1.msra.mxu0 0.0
  %3701 = vmatprep.subr.mxu0 0.0
  %3702 = vmatpush1.msra.mxu0 0.0
  %3703 = vmatprep.subr.mxu0 0.0
  %3704 = vmatpush1.msra.mxu0 0.0
  %3705 = vmatprep.subr.mxu0 0.0
  %3706 = vmatpush1.msra.mxu0 0.0
  %3707 = vmatprep.mubr.f32.mxu0 0.0
  %3708 = vmatmul.mubr.f32.gmra.mrb[0].mxu0 %v3641
  %v3709 = vpop.f32.mrb[0].mxu0
  %v3710 = vadd.f32 0.0, %v3709
  %v3711 = vpop.f32.mrb[0].mxu0
  %3712 = vdwg.mxu0
  %v3714 = vsel %vm2617, %v2616, 0
  %3716 = vmatprep.subr.mxu0 0.0
  %3717 = vmatpush1.msra.mxu0 %v111
  %3718 = vmatprep.subr.mxu0 0.0
  %3719 = vmatpush1.msra.mxu0 %v112
  %3720 = vmatprep.subr.mxu0 0.0
  %3721 = vmatpush1.msra.mxu0 0.0
  %3722 = vmatprep.subr.mxu0 0.0
  %3723 = vmatpush1.msra.mxu0 0.0
  %3724 = vmatprep.subr.mxu0 0.0
  %3725 = vmatpush1.msra.mxu0 0.0
  %3726 = vmatprep.subr.mxu0 0.0
  %3727 = vmatpush1.msra.mxu0 0.0
  %3728 = vmatprep.subr.mxu0 0.0
  %3729 = vmatpush1.msra.mxu0 0.0
  %3730 = vmatprep.subr.mxu0 0.0
  %3731 = vmatpush1.msra.mxu0 0.0
  %3732 = vmatprep.subr.mxu0 0.0
  %3733 = vmatpush1.msra.mxu0 0.0
  %3734 = vmatprep.subr.mxu0 0.0
  %3735 = vmatpush1.msra.mxu0 0.0
  %3736 = vmatprep.subr.mxu0 0.0
  %3737 = vmatpush1.msra.mxu0 0.0
  %3738 = vmatprep.subr.mxu0 0.0
  %3739 = vmatpush1.msra.mxu0 0.0
  %3740 = vmatprep.subr.mxu0 0.0
  %3741 = vmatpush1.msra.mxu0 0.0
  %3742 = vmatprep.subr.mxu0 0.0
  %3743 = vmatpush1.msra.mxu0 0.0
  %3744 = vmatprep.subr.mxu0 0.0
  %3745 = vmatpush1.msra.mxu0 0.0
  %3746 = vmatprep.subr.mxu0 0.0
  %3747 = vmatpush1.msra.mxu0 0.0
  %3748 = vmatprep.subr.mxu0 0.0
  %3749 = vmatpush1.msra.mxu0 0.0
  %3750 = vmatprep.subr.mxu0 0.0
  %3751 = vmatpush1.msra.mxu0 0.0
  %3752 = vmatprep.subr.mxu0 0.0
  %3753 = vmatpush1.msra.mxu0 0.0
  %3754 = vmatprep.subr.mxu0 0.0
  %3755 = vmatpush1.msra.mxu0 0.0
  %3756 = vmatprep.subr.mxu0 0.0
  %3757 = vmatpush1.msra.mxu0 0.0
  %3758 = vmatprep.subr.mxu0 0.0
  %3759 = vmatpush1.msra.mxu0 0.0
  %3760 = vmatprep.subr.mxu0 0.0
  %3761 = vmatpush1.msra.mxu0 0.0
  %3762 = vmatprep.subr.mxu0 0.0
  %3763 = vmatpush1.msra.mxu0 0.0
  %3764 = vmatprep.subr.mxu0 0.0
  %3765 = vmatpush1.msra.mxu0 0.0
  %3766 = vmatprep.subr.mxu0 0.0
  %3767 = vmatpush1.msra.mxu0 0.0
  %3768 = vmatprep.subr.mxu0 0.0
  %3769 = vmatpush1.msra.mxu0 0.0
  %3770 = vmatprep.subr.mxu0 0.0
  %3771 = vmatpush1.msra.mxu0 0.0
  %3772 = vmatprep.subr.mxu0 0.0
  %3773 = vmatpush1.msra.mxu0 0.0
  %3774 = vmatprep.subr.mxu0 0.0
  %3775 = vmatpush1.msra.mxu0 0.0
  %3776 = vmatprep.subr.mxu0 0.0
  %3777 = vmatpush1.msra.mxu0 0.0
  %3778 = vmatprep.subr.mxu0 0.0
  %3779 = vmatpush1.msra.mxu0 0.0
  %3780 = vmatprep.mubr.f32.mxu0 0.0
  %3781 = vmatmul.mubr.f32.gmra.mrb[0].mxu0 %v3714
  %v3782 = vpop.f32.mrb[0].mxu0
  %v3783 = vadd.f32 0.0, %v3782
  %v3784 = vpop.f32.mrb[0].mxu0
  %3785 = vdwg.mxu0
  %v3786 = vmul.f32 %v2688, 0.5
  %v3787 = vmul.f32 %v2761, 0.5
  %v3788 = vmul.f32 %v2834, 0.5
  %v3789 = vmul.f32 %v2907, 0.5
  %v3790 = vmul.f32 %v2980, 0.5
  %v3791 = vmul.f32 %v3053, 0.5
  %v3792 = vmul.f32 %v3126, 0.5
  %v3793 = vmul.f32 %v3199, 0.5
  %v3794 = vmul.f32 %v3272, 0.5
  %v3795 = vmul.f32 %v3345, 0.5
  %v3796 = vmul.f32 %v3418, 0.5
  %v3797 = vmul.f32 %v3491, 0.5
  %v3798 = vmul.f32 %v3564, 0.5
  %v3799 = vmul.f32 %v3637, 0.5
  %v3800 = vmul.f32 %v3710, 0.5
  %v3801 = vmul.f32 %v3783, 0.5
  %v3802 = vmul.f32 %v2688, 0.70710677
  %v3803 = vmul.f32 %v2761, 0.70710677
  %v3804 = vmul.f32 %v2834, 0.70710677
  %v3805 = vmul.f32 %v2907, 0.70710677
  %v3806 = vmul.f32 %v2980, 0.70710677
  %v3807 = vmul.f32 %v3053, 0.70710677
  %v3808 = vmul.f32 %v3126, 0.70710677
  %v3809 = vmul.f32 %v3199, 0.70710677
  %v3810 = vmul.f32 %v3272, 0.70710677
  %v3811 = vmul.f32 %v3345, 0.70710677
  %v3812 = vmul.f32 %v3418, 0.70710677
  %v3813 = vmul.f32 %v3491, 0.70710677
  %v3814 = vmul.f32 %v3564, 0.70710677
  %v3815 = vmul.f32 %v3637, 0.70710677
  %v3816 = vmul.f32 %v3710, 0.70710677
  %v3817 = vmul.f32 %v3783, 0.70710677
  %v3818 = verf.f32.pop %v3802
  %v3819 = verf.f32.pop %v3803
  %v3820 = verf.f32.pop %v3804
  %v3821 = verf.f32.pop %v3805
  %v3822 = verf.f32.pop %v3806
  %v3823 = verf.f32.pop %v3807
  %v3824 = verf.f32.pop %v3808
  %v3825 = verf.f32.pop %v3809
  %v3826 = verf.f32.pop %v3810
  %v3827 = verf.f32.pop %v3811
  %v3828 = verf.f32.pop %v3812
  %v3829 = verf.f32.pop %v3813
  %v3830 = verf.f32.pop %v3814
  %v3831 = verf.f32.pop %v3815
  %v3832 = verf.f32.pop %v3816
  %v3833 = verf.f32.pop %v3817
  %v3834 = vadd.f32 %v3818, 1.0
  %v3835 = vadd.f32 %v3819, 1.0
  %v3836 = vadd.f32 %v3820, 1.0
  %v3837 = vadd.f32 %v3821, 1.0
  %v3838 = vadd.f32 %v3822, 1.0
  %v3839 = vadd.f32 %v3823, 1.0
  %v3840 = vadd.f32 %v3824, 1.0
  %v3841 = vadd.f32 %v3825, 1.0
  %v3842 = vadd.f32 %v3826, 1.0
  %v3843 = vadd.f32 %v3827, 1.0
  %v3844 = vadd.f32 %v3828, 1.0
  %v3845 = vadd.f32 %v3829, 1.0
  %v3846 = vadd.f32 %v3830, 1.0
  %v3847 = vadd.f32 %v3831, 1.0
  %v3848 = vadd.f32 %v3832, 1.0
  %v3849 = vadd.f32 %v3833, 1.0
  %v3850 = vmul.f32 %v3786, %v3834
  %v3851 = vmul.f32 %v3787, %v3835
  %v3852 = vmul.f32 %v3788, %v3836
  %v3853 = vmul.f32 %v3789, %v3837
  %v3854 = vmul.f32 %v3790, %v3838
  %v3855 = vmul.f32 %v3791, %v3839
  %v3856 = vmul.f32 %v3792, %v3840
  %v3857 = vmul.f32 %v3793, %v3841
  %v3858 = vmul.f32 %v3794, %v3842
  %v3859 = vmul.f32 %v3795, %v3843
  %v3860 = vmul.f32 %v3796, %v3844
  %v3861 = vmul.f32 %v3797, %v3845
  %v3862 = vmul.f32 %v3798, %v3846
  %v3863 = vmul.f32 %v3799, %v3847
  %v3864 = vmul.f32 %v3800, %v3848
  %v3865 = vmul.f32 %v3801, %v3849
  %vm3866 = vcmask 253952
  %3867 = vst.msk [vmem:[%s4] sm:$0x1] %vm3866, %v3850
  %3868 = vst.msk [vmem:[%s4 + $0x1] sm:$0x1] %vm3866, %v3851
  %3869 = vst.msk [vmem:[%s4 + $0x2] sm:$0x1] %vm3866, %v3852
  %3870 = vst.msk [vmem:[%s4 + $0x3] sm:$0x1] %vm3866, %v3853
  %3871 = vst.msk [vmem:[%s4 + $0x4] sm:$0x1] %vm3866, %v3854
  %3872 = vst.msk [vmem:[%s4 + $0x5] sm:$0x1] %vm3866, %v3855
  %3873 = vst.msk [vmem:[%s4 + $0x6] sm:$0x1] %vm3866, %v3856
  %3874 = vst.msk [vmem:[%s4 + $0x7] sm:$0x1] %vm3866, %v3857
  %3875 = vst.msk [vmem:[%s4 + $0x8] sm:$0x1] %vm3866, %v3858
  %3876 = vst.msk [vmem:[%s4 + $0x9] sm:$0x1] %vm3866, %v3859
  %3877 = vst.msk [vmem:[%s4 + $0xa] sm:$0x1] %vm3866, %v3860
  %3878 = vst.msk [vmem:[%s4 + $0xb] sm:$0x1] %vm3866, %v3861
  %3879 = vst.msk [vmem:[%s4 + $0xc] sm:$0x1] %vm3866, %v3862
  %3880 = vst.msk [vmem:[%s4 + $0xd] sm:$0x1] %vm3866, %v3863
  %3881 = vst.msk [vmem:[%s4 + $0xe] sm:$0x1] %vm3866, %v3864
  %3882 = vst.msk [vmem:[%s4 + $0xf] sm:$0x1] %vm3866, %v3865
  // Predicated region
  $region18: #{transformer_block_forward.5} parent=0 // pred_check
    _
  $region19: #{transformer_block_forward.5} parent=0 // pred_check_branch
    %3884 = sbr.rel (0) target = $region21
  $region20: #{transformer_block_forward.5} parent=0 // pred_region
    _
  $region21: #{transformer_block_forward.5} parent=0 // pred_fallthru
    _
  // Predicated region
  $region22: #{transformer_block_forward.5} parent=0 // pred_check
    _
  $region23: #{transformer_block_forward.5} parent=0 // pred_check_branch
    %3886 = sbr.rel (0) target = $region25
  $region24: #{transformer_block_forward.5} parent=0 // pred_region
    _
  $region25: #{transformer_block_forward.5} parent=0 // pred_fallthru
    _

// kernel: transformer_block_forward.7
$region0: #{transformer_block_forward.7}
  #allocation0 [shape = 'u32[]', space=smem, size = 0x4, offset = 0x4, fixed_abs, tag = 'smem constant byte address 0x4 - core index']
  #allocation1 [shape = 'u32[144,128]{1,0:T(1,128)}', space=vmem, size = 0x12000, scoped, tag = 'internal scratch']
  %s0 = inlined_call_operand.vmem [shape: f32[16,1,32], index: 0, kind: input, shape index: {}]
  %s1 = inlined_call_operand.vmem [shape: f32[16,16,32], index: 1, kind: input, shape index: {}]
  %s2 = inlined_call_operand.vmem [shape: f32[16,1,16], index: 2, kind: input, shape index: {}]
  %s3 = inlined_call_operand.vmem [shape: f32[16,16,32], index: 3, kind: input, shape index: {}]
  %s4 = inlined_call_operand.vmem [shape: f32[16,1,32], index: 4, kind: input, shape index: {}]
  %s5 = inlined_call_operand.vmem [shape: f32[1,1,32], index: 5, kind: input, shape index: {}]
  %s6 = inlined_call_operand.vmem [shape: f32[1,1,32], index: 6, kind: input, shape index: {}]
  %s7 = inlined_call_operand.vmem [shape: f32[16,1,32], index: 7, kind: output, shape index: {}]
  %s8 = sld [smem:[#allocation0]]
  $region38: #{transformer_block_forward.7} parent=0
    _
  %s10 = ssub.s32 1, %s8
  %s11 = scalar_select 0, %s10, %s8
  // Predicated region
  $region2: #{transformer_block_forward.7} parent=0 // pred_check
    _
  $region3: #{transformer_block_forward.7} parent=0 // pred_check_branch
    %13 = sbr.rel (0) target = $region5
  $region4: #{transformer_block_forward.7} parent=0 // pred_region
    _
  $region5: #{transformer_block_forward.7} parent=0 // pred_fallthru
    _
  // Predicated region
  $region6: #{transformer_block_forward.7} parent=0 // pred_check
    _
  $region7: #{transformer_block_forward.7} parent=0 // pred_check_branch
    %15 = sbr.rel (0) target = $region9
  $region8: #{transformer_block_forward.7} parent=0 // pred_region
    _
  $region9: #{transformer_block_forward.7} parent=0 // pred_fallthru
    _
  // Predicated region
  $region10: #{transformer_block_forward.7} parent=0 // pred_check
    _
  $region11: #{transformer_block_forward.7} parent=0 // pred_check_branch
    %17 = sbr.rel (0) target = $region13
  $region12: #{transformer_block_forward.7} parent=0 // pred_region
    _
  $region13: #{transformer_block_forward.7} parent=0 // pred_fallthru
    _
  // Predicated region
  $region14: #{transformer_block_forward.7} parent=0 // pred_check
    _
  $region15: #{transformer_block_forward.7} parent=0 // pred_check_branch
    %19 = sbr.rel (0) target = $region17
  $region16: #{transformer_block_forward.7} parent=0 // pred_region
    _
  $region17: #{transformer_block_forward.7} parent=0 // pred_fallthru
    _
  // Predicated region
  $region18: #{transformer_block_forward.7} parent=0 // pred_check
    _
  $region19: #{transformer_block_forward.7} parent=0 // pred_check_branch
    %21 = sbr.rel (0) target = $region21
  $region20: #{transformer_block_forward.7} parent=0 // pred_region
    _
  $region21: #{transformer_block_forward.7} parent=0 // pred_fallthru
    _
  // Predicated region
  $region22: #{transformer_block_forward.7} parent=0 // pred_check
    _
  $region23: #{transformer_block_forward.7} parent=0 // pred_check_branch
    %23 = sbr.rel (0) target = $region25
  $region24: #{transformer_block_forward.7} parent=0 // pred_region
    _
  $region25: #{transformer_block_forward.7} parent=0 // pred_fallthru
    _
  // Predicated region
  $region26: #{transformer_block_forward.7} parent=0 // pred_check
    _
  $region27: #{transformer_block_forward.7} parent=0 // pred_check_branch
    %25 = sbr.rel (0) target = $region29
  $region28: #{transformer_block_forward.7} parent=0 // pred_region
    _
  $region29: #{transformer_block_forward.7} parent=0 // pred_fallthru
    _
  %v26 = vld [vmem:[%s0] sm:$0x1]
  %v27 = vld [vmem:[%s0 + $0x1] sm:$0x1]
  %v28 = vld [vmem:[%s0 + $0x2] sm:$0x1]
  %v29 = vld [vmem:[%s0 + $0x3] sm:$0x1]
  %v30 = vld [vmem:[%s0 + $0x4] sm:$0x1]
  %v31 = vld [vmem:[%s0 + $0x5] sm:$0x1]
  %v32 = vld [vmem:[%s0 + $0x6] sm:$0x1]
  %v33 = vld [vmem:[%s0 + $0x7] sm:$0x1]
  %v34 = vld [vmem:[%s0 + $0x8] sm:$0x1]
  %v35 = vld [vmem:[%s0 + $0x9] sm:$0x1]
  %v36 = vld [vmem:[%s0 + $0xa] sm:$0x1]
  %v37 = vld [vmem:[%s0 + $0xb] sm:$0x1]
  %v38 = vld [vmem:[%s0 + $0xc] sm:$0x1]
  %v39 = vld [vmem:[%s0 + $0xd] sm:$0x1]
  %v40 = vld [vmem:[%s0 + $0xe] sm:$0x1]
  %v41 = vld [vmem:[%s0 + $0xf] sm:$0x1]
  %v42 = vld [vmem:[%s1] sm:$0xff]
  %v43 = vld [vmem:[%s1 + $0x8] sm:$0xff]
  %v44 = vld [vmem:[%s1 + $0x10] sm:$0xff]
  %v45 = vld [vmem:[%s1 + $0x18] sm:$0xff]
  %v46 = vld [vmem:[%s1 + $0x20] sm:$0xff]
  %v47 = vld [vmem:[%s1 + $0x28] sm:$0xff]
  %v48 = vld [vmem:[%s1 + $0x30] sm:$0xff]
  %v49 = vld [vmem:[%s1 + $0x38] sm:$0xff]
  %v50 = vld [vmem:[%s1 + $0x40] sm:$0xff]
  %v51 = vld [vmem:[%s1 + $0x48] sm:$0xff]
  %v52 = vld [vmem:[%s1 + $0x50] sm:$0xff]
  %v53 = vld [vmem:[%s1 + $0x58] sm:$0xff]
  %v54 = vld [vmem:[%s1 + $0x60] sm:$0xff]
  %v55 = vld [vmem:[%s1 + $0x68] sm:$0xff]
  %v56 = vld [vmem:[%s1 + $0x70] sm:$0xff]
  %v57 = vld [vmem:[%s1 + $0x78] sm:$0xff]
  %v58 = vld [vmem:[%s1 + $0x80] sm:$0xff]
  %v59 = vld [vmem:[%s1 + $0x88] sm:$0xff]
  %v60 = vld [vmem:[%s1 + $0x90] sm:$0xff]
  %v61 = vld [vmem:[%s1 + $0x98] sm:$0xff]
  %v62 = vld [vmem:[%s1 + $0xa0] sm:$0xff]
  %v63 = vld [vmem:[%s1 + $0xa8] sm:$0xff]
  %v64 = vld [vmem:[%s1 + $0xb0] sm:$0xff]
  %v65 = vld [vmem:[%s1 + $0xb8] sm:$0xff]
  %v66 = vld [vmem:[%s1 + $0xc0] sm:$0xff]
  %v67 = vld [vmem:[%s1 + $0xc8] sm:$0xff]
  %v68 = vld [vmem:[%s1 + $0xd0] sm:$0xff]
  %v69 = vld [vmem:[%s1 + $0xd8] sm:$0xff]
  %v70 = vld [vmem:[%s1 + $0xe0] sm:$0xff]
  %v71 = vld [vmem:[%s1 + $0xe8] sm:$0xff]
  %v72 = vld [vmem:[%s1 + $0xf0] sm:$0xff]
  %v73 = vld [vmem:[%s1 + $0xf8] sm:$0xff]
  %v74 = vld [vmem:[%s2] sm:$0x1]
  %v75 = vld [vmem:[%s2 + $0x1] sm:$0x1]
  %v76 = vld [vmem:[%s2 + $0x2] sm:$0x1]
  %v77 = vld [vmem:[%s2 + $0x3] sm:$0x1]
  %v78 = vld [vmem:[%s2 + $0x4] sm:$0x1]
  %v79 = vld [vmem:[%s2 + $0x5] sm:$0x1]
  %v80 = vld [vmem:[%s2 + $0x6] sm:$0x1]
  %v81 = vld [vmem:[%s2 + $0x7] sm:$0x1]
  %v82 = vld [vmem:[%s2 + $0x8] sm:$0x1]
  %v83 = vld [vmem:[%s2 + $0x9] sm:$0x1]
  %v84 = vld [vmem:[%s2 + $0xa] sm:$0x1]
  %v85 = vld [vmem:[%s2 + $0xb] sm:$0x1]
  %v86 = vld [vmem:[%s2 + $0xc] sm:$0x1]
  %v87 = vld [vmem:[%s2 + $0xd] sm:$0x1]
  %v88 = vld [vmem:[%s2 + $0xe] sm:$0x1]
  %v89 = vld [vmem:[%s2 + $0xf] sm:$0x1]
  %v90 = vld [vmem:[%s3] sm:$0xff]
  %v91 = vld [vmem:[%s3 + $0x8] sm:$0xff]
  %v92 = vld [vmem:[%s3 + $0x10] sm:$0xff]
  %v93 = vld [vmem:[%s3 + $0x18] sm:$0xff]
  %v94 = vld [vmem:[%s3 + $0x20] sm:$0xff]
  %v95 = vld [vmem:[%s3 + $0x28] sm:$0xff]
  %v96 = vld [vmem:[%s3 + $0x30] sm:$0xff]
  %v97 = vld [vmem:[%s3 + $0x38] sm:$0xff]
  %v98 = vld [vmem:[%s3 + $0x40] sm:$0xff]
  %v99 = vld [vmem:[%s3 + $0x48] sm:$0xff]
  %v100 = vld [vmem:[%s3 + $0x50] sm:$0xff]
  %v101 = vld [vmem:[%s3 + $0x58] sm:$0xff]
  %v102 = vld [vmem:[%s3 + $0x60] sm:$0xff]
  %v103 = vld [vmem:[%s3 + $0x68] sm:$0xff]
  %v104 = vld [vmem:[%s3 + $0x70] sm:$0xff]
  %v105 = vld [vmem:[%s3 + $0x78] sm:$0xff]
  %v106 = vld [vmem:[%s3 + $0x80] sm:$0xff]
  %v107 = vld [vmem:[%s3 + $0x88] sm:$0xff]
  %v108 = vld [vmem:[%s3 + $0x90] sm:$0xff]
  %v109 = vld [vmem:[%s3 + $0x98] sm:$0xff]
  %v110 = vld [vmem:[%s3 + $0xa0] sm:$0xff]
  %v111 = vld [vmem:[%s3 + $0xa8] sm:$0xff]
  %v112 = vld [vmem:[%s3 + $0xb0] sm:$0xff]
  %v113 = vld [vmem:[%s3 + $0xb8] sm:$0xff]
  %v114 = vld [vmem:[%s3 + $0xc0] sm:$0xff]
  %v115 = vld [vmem:[%s3 + $0xc8] sm:$0xff]
  %v116 = vld [vmem:[%s3 + $0xd0] sm:$0xff]
  %v117 = vld [vmem:[%s3 + $0xd8] sm:$0xff]
  %v118 = vld [vmem:[%s3 + $0xe0] sm:$0xff]
  %v119 = vld [vmem:[%s3 + $0xe8] sm:$0xff]
  %v120 = vld [vmem:[%s3 + $0xf0] sm:$0xff]
  %v121 = vld [vmem:[%s3 + $0xf8] sm:$0xff]
  %vm122 = vcmask 261120
  %v124 = vsel %vm122, %v26, 0
  %v127 = vsel %vm122, %v42, 0
  %v130 = vsel %vm122, %v43, 0
  %132 = vmatprep.subr.mxu0 0.0
  %133 = vmatpush1.xpose.msra.mxu0 %v127
  %134 = vmatprep.subr.mxu0 0.0
  %135 = vmatpush1.xpose.msra.mxu0 %v130
  %136 = vmatprep.subr.mxu0 0.0
  %137 = vmatpush1.xpose.msra.mxu0 0.0
  %138 = vmatprep.subr.mxu0 0.0
  %139 = vmatpush1.xpose.msra.mxu0 0.0
  %140 = vmatprep.subr.mxu0 0.0
  %141 = vmatpush1.xpose.msra.mxu0 0.0
  %142 = vmatprep.subr.mxu0 0.0
  %143 = vmatpush1.xpose.msra.mxu0 0.0
  %144 = vmatprep.subr.mxu0 0.0
  %145 = vmatpush1.xpose.msra.mxu0 0.0
  %146 = vmatprep.subr.mxu0 0.0
  %147 = vmatpush1.xpose.msra.mxu0 0.0
  %148 = vmatprep.subr.mxu0 0.0
  %149 = vmatpush1.xpose.msra.mxu0 0.0
  %150 = vmatprep.subr.mxu0 0.0
  %151 = vmatpush1.xpose.msra.mxu0 0.0
  %152 = vmatprep.subr.mxu0 0.0
  %153 = vmatpush1.xpose.msra.mxu0 0.0
  %154 = vmatprep.subr.mxu0 0.0
  %155 = vmatpush1.xpose.msra.mxu0 0.0
  %156 = vmatprep.subr.mxu0 0.0
  %157 = vmatpush1.xpose.msra.mxu0 0.0
  %158 = vmatprep.subr.mxu0 0.0
  %159 = vmatpush1.xpose.msra.mxu0 0.0
  %160 = vmatprep.subr.mxu0 0.0
  %161 = vmatpush1.xpose.msra.mxu0 0.0
  %162 = vmatprep.subr.mxu0 0.0
  %163 = vmatpush1.xpose.msra.mxu0 0.0
  %164 = vmatprep.subr.mxu0 0.0
  %165 = vmatpush1.xpose.msra.mxu0 0.0
  %166 = vmatprep.subr.mxu0 0.0
  %167 = vmatpush1.xpose.msra.mxu0 0.0
  %168 = vmatprep.subr.mxu0 0.0
  %169 = vmatpush1.xpose.msra.mxu0 0.0
  %170 = vmatprep.subr.mxu0 0.0
  %171 = vmatpush1.xpose.msra.mxu0 0.0
  %172 = vmatprep.subr.mxu0 0.0
  %173 = vmatpush1.xpose.msra.mxu0 0.0
  %174 = vmatprep.subr.mxu0 0.0
  %175 = vmatpush1.xpose.msra.mxu0 0.0
  %176 = vmatprep.subr.mxu0 0.0
  %177 = vmatpush1.xpose.msra.mxu0 0.0
  %178 = vmatprep.subr.mxu0 0.0
  %179 = vmatpush1.xpose.msra.mxu0 0.0
  %180 = vmatprep.subr.mxu0 0.0
  %181 = vmatpush1.xpose.msra.mxu0 0.0
  %182 = vmatprep.subr.mxu0 0.0
  %183 = vmatpush1.xpose.msra.mxu0 0.0
  %184 = vmatprep.subr.mxu0 0.0
  %185 = vmatpush1.xpose.msra.mxu0 0.0
  %186 = vmatprep.subr.mxu0 0.0
  %187 = vmatpush1.xpose.msra.mxu0 0.0
  %188 = vmatprep.subr.mxu0 0.0
  %189 = vmatpush1.xpose.msra.mxu0 0.0
  %190 = vmatprep.subr.mxu0 0.0
  %191 = vmatpush1.xpose.msra.mxu0 0.0
  %192 = vmatprep.subr.mxu0 0.0
  %193 = vmatpush1.xpose.msra.mxu0 0.0
  %194 = vmatprep.subr.mxu0 0.0
  %195 = vmatpush1.xpose.msra.mxu0 0.0
  %196 = vmatprep.mubr.f32.mxu0 0.0
  %197 = vmatmul.mubr.f32.gmra.mrb[0].mxu0 %v124
  %v198 = vpop.f32.mrb[0].mxu0
  %v199 = vadd.f32 0.0, %v198
  %v200 = vpop.f32.mrb[0].mxu0
  %201 = vdwg.mxu0
  %v203 = vsel %vm122, %v27, 0
  %v206 = vsel %vm122, %v44, 0
  %v209 = vsel %vm122, %v45, 0
  %211 = vmatprep.subr.mxu0 0.0
  %212 = vmatpush1.xpose.msra.mxu0 %v206
  %213 = vmatprep.subr.mxu0 0.0
  %214 = vmatpush1.xpose.msra.mxu0 %v209
  %215 = vmatprep.subr.mxu0 0.0
  %216 = vmatpush1.xpose.msra.mxu0 0.0
  %217 = vmatprep.subr.mxu0 0.0
  %218 = vmatpush1.xpose.msra.mxu0 0.0
  %219 = vmatprep.subr.mxu0 0.0
  %220 = vmatpush1.xpose.msra.mxu0 0.0
  %221 = vmatprep.subr.mxu0 0.0
  %222 = vmatpush1.xpose.msra.mxu0 0.0
  %223 = vmatprep.subr.mxu0 0.0
  %224 = vmatpush1.xpose.msra.mxu0 0.0
  %225 = vmatprep.subr.mxu0 0.0
  %226 = vmatpush1.xpose.msra.mxu0 0.0
  %227 = vmatprep.subr.mxu0 0.0
  %228 = vmatpush1.xpose.msra.mxu0 0.0
  %229 = vmatprep.subr.mxu0 0.0
  %230 = vmatpush1.xpose.msra.mxu0 0.0
  %231 = vmatprep.subr.mxu0 0.0
  %232 = vmatpush1.xpose.msra.mxu0 0.0
  %233 = vmatprep.subr.mxu0 0.0
  %234 = vmatpush1.xpose.msra.mxu0 0.0
  %235 = vmatprep.subr.mxu0 0.0
  %236 = vmatpush1.xpose.msra.mxu0 0.0
  %237 = vmatprep.subr.mxu0 0.0
  %238 = vmatpush1.xpose.msra.mxu0 0.0
  %239 = vmatprep.subr.mxu0 0.0
  %240 = vmatpush1.xpose.msra.mxu0 0.0
  %241 = vmatprep.subr.mxu0 0.0
  %242 = vmatpush1.xpose.msra.mxu0 0.0
  %243 = vmatprep.subr.mxu0 0.0
  %244 = vmatpush1.xpose.msra.mxu0 0.0
  %245 = vmatprep.subr.mxu0 0.0
  %246 = vmatpush1.xpose.msra.mxu0 0.0
  %247 = vmatprep.subr.mxu0 0.0
  %248 = vmatpush1.xpose.msra.mxu0 0.0
  %249 = vmatprep.subr.mxu0 0.0
  %250 = vmatpush1.xpose.msra.mxu0 0.0
  %251 = vmatprep.subr.mxu0 0.0
  %252 = vmatpush1.xpose.msra.mxu0 0.0
  %253 = vmatprep.subr.mxu0 0.0
  %254 = vmatpush1.xpose.msra.mxu0 0.0
  %255 = vmatprep.subr.mxu0 0.0
  %256 = vmatpush1.xpose.msra.mxu0 0.0
  %257 = vmatprep.subr.mxu0 0.0
  %258 = vmatpush1.xpose.msra.mxu0 0.0
  %259 = vmatprep.subr.mxu0 0.0
  %260 = vmatpush1.xpose.msra.mxu0 0.0
  %261 = vmatprep.subr.mxu0 0.0
  %262 = vmatpush1.xpose.msra.mxu0 0.0
  %263 = vmatprep.subr.mxu0 0.0
  %264 = vmatpush1.xpose.msra.mxu0 0.0
  %265 = vmatprep.subr.mxu0 0.0
  %266 = vmatpush1.xpose.msra.mxu0 0.0
  %267 = vmatprep.subr.mxu0 0.0
  %268 = vmatpush1.xpose.msra.mxu0 0.0
  %269 = vmatprep.subr.mxu0 0.0
  %270 = vmatpush1.xpose.msra.mxu0 0.0
  %271 = vmatprep.subr.mxu0 0.0
  %272 = vmatpush1.xpose.msra.mxu0 0.0
  %273 = vmatprep.subr.mxu0 0.0
  %274 = vmatpush1.xpose.msra.mxu0 0.0
  %275 = vmatprep.mubr.f32.mxu0 0.0
  %276 = vmatmul.mubr.f32.gmra.mrb[0].mxu0 %v203
  %v277 = vpop.f32.mrb[0].mxu0
  %v278 = vadd.f32 0.0, %v277
  %v279 = vpop.f32.mrb[0].mxu0
  %280 = vdwg.mxu0
  %v282 = vsel %vm122, %v28, 0
  %v285 = vsel %vm122, %v46, 0
  %v288 = vsel %vm122, %v47, 0
  %290 = vmatprep.subr.mxu0 0.0
  %291 = vmatpush1.xpose.msra.mxu0 %v285
  %292 = vmatprep.subr.mxu0 0.0
  %293 = vmatpush1.xpose.msra.mxu0 %v288
  %294 = vmatprep.subr.mxu0 0.0
  %295 = vmatpush1.xpose.msra.mxu0 0.0
  %296 = vmatprep.subr.mxu0 0.0
  %297 = vmatpush1.xpose.msra.mxu0 0.0
  %298 = vmatprep.subr.mxu0 0.0
  %299 = vmatpush1.xpose.msra.mxu0 0.0
  %300 = vmatprep.subr.mxu0 0.0
  %301 = vmatpush1.xpose.msra.mxu0 0.0
  %302 = vmatprep.subr.mxu0 0.0
  %303 = vmatpush1.xpose.msra.mxu0 0.0
  %304 = vmatprep.subr.mxu0 0.0
  %305 = vmatpush1.xpose.msra.mxu0 0.0
  %306 = vmatprep.subr.mxu0 0.0
  %307 = vmatpush1.xpose.msra.mxu0 0.0
  %308 = vmatprep.subr.mxu0 0.0
  %309 = vmatpush1.xpose.msra.mxu0 0.0
  %310 = vmatprep.subr.mxu0 0.0
  %311 = vmatpush1.xpose.msra.mxu0 0.0
  %312 = vmatprep.subr.mxu0 0.0
  %313 = vmatpush1.xpose.msra.mxu0 0.0
  %314 = vmatprep.subr.mxu0 0.0
  %315 = vmatpush1.xpose.msra.mxu0 0.0
  %316 = vmatprep.subr.mxu0 0.0
  %317 = vmatpush1.xpose.msra.mxu0 0.0
  %318 = vmatprep.subr.mxu0 0.0
  %319 = vmatpush1.xpose.msra.mxu0 0.0
  %320 = vmatprep.subr.mxu0 0.0
  %321 = vmatpush1.xpose.msra.mxu0 0.0
  %322 = vmatprep.subr.mxu0 0.0
  %323 = vmatpush1.xpose.msra.mxu0 0.0
  %324 = vmatprep.subr.mxu0 0.0
  %325 = vmatpush1.xpose.msra.mxu0 0.0
  %326 = vmatprep.subr.mxu0 0.0
  %327 = vmatpush1.xpose.msra.mxu0 0.0
  %328 = vmatprep.subr.mxu0 0.0
  %329 = vmatpush1.xpose.msra.mxu0 0.0
  %330 = vmatprep.subr.mxu0 0.0
  %331 = vmatpush1.xpose.msra.mxu0 0.0
  %332 = vmatprep.subr.mxu0 0.0
  %333 = vmatpush1.xpose.msra.mxu0 0.0
  %334 = vmatprep.subr.mxu0 0.0
  %335 = vmatpush1.xpose.msra.mxu0 0.0
  %336 = vmatprep.subr.mxu0 0.0
  %337 = vmatpush1.xpose.msra.mxu0 0.0
  %338 = vmatprep.subr.mxu0 0.0
  %339 = vmatpush1.xpose.msra.mxu0 0.0
  %340 = vmatprep.subr.mxu0 0.0
  %341 = vmatpush1.xpose.msra.mxu0 0.0
  %342 = vmatprep.subr.mxu0 0.0
  %343 = vmatpush1.xpose.msra.mxu0 0.0
  %344 = vmatprep.subr.mxu0 0.0
  %345 = vmatpush1.xpose.msra.mxu0 0.0
  %346 = vmatprep.subr.mxu0 0.0
  %347 = vmatpush1.xpose.msra.mxu0 0.0
  %348 = vmatprep.subr.mxu0 0.0
  %349 = vmatpush1.xpose.msra.mxu0 0.0
  %350 = vmatprep.subr.mxu0 0.0
  %351 = vmatpush1.xpose.msra.mxu0 0.0
  %352 = vmatprep.subr.mxu0 0.0
  %353 = vmatpush1.xpose.msra.mxu0 0.0
  %354 = vmatprep.mubr.f32.mxu0 0.0
  %355 = vmatmul.mubr.f32.gmra.mrb[0].mxu0 %v282
  %v356 = vpop.f32.mrb[0].mxu0
  %v357 = vadd.f32 0.0, %v356
  %v358 = vpop.f32.mrb[0].mxu0
  %359 = vdwg.mxu0
  %v361 = vsel %vm122, %v29, 0
  %v364 = vsel %vm122, %v48, 0
  %v367 = vsel %vm122, %v49, 0
  %369 = vmatprep.subr.mxu0 0.0
  %370 = vmatpush1.xpose.msra.mxu0 %v364
  %371 = vmatprep.subr.mxu0 0.0
  %372 = vmatpush1.xpose.msra.mxu0 %v367
  %373 = vmatprep.subr.mxu0 0.0
  %374 = vmatpush1.xpose.msra.mxu0 0.0
  %375 = vmatprep.subr.mxu0 0.0
  %376 = vmatpush1.xpose.msra.mxu0 0.0
  %377 = vmatprep.subr.mxu0 0.0
  %378 = vmatpush1.xpose.msra.mxu0 0.0
  %379 = vmatprep.subr.mxu0 0.0
  %380 = vmatpush1.xpose.msra.mxu0 0.0
  %381 = vmatprep.subr.mxu0 0.0
  %382 = vmatpush1.xpose.msra.mxu0 0.0
  %383 = vmatprep.subr.mxu0 0.0
  %384 = vmatpush1.xpose.msra.mxu0 0.0
  %385 = vmatprep.subr.mxu0 0.0
  %386 = vmatpush1.xpose.msra.mxu0 0.0
  %387 = vmatprep.subr.mxu0 0.0
  %388 = vmatpush1.xpose.msra.mxu0 0.0
  %389 = vmatprep.subr.mxu0 0.0
  %390 = vmatpush1.xpose.msra.mxu0 0.0
  %391 = vmatprep.subr.mxu0 0.0
  %392 = vmatpush1.xpose.msra.mxu0 0.0
  %393 = vmatprep.subr.mxu0 0.0
  %394 = vmatpush1.xpose.msra.mxu0 0.0
  %395 = vmatprep.subr.mxu0 0.0
  %396 = vmatpush1.xpose.msra.mxu0 0.0
  %397 = vmatprep.subr.mxu0 0.0
  %398 = vmatpush1.xpose.msra.mxu0 0.0
  %399 = vmatprep.subr.mxu0 0.0
  %400 = vmatpush1.xpose.msra.mxu0 0.0
  %401 = vmatprep.subr.mxu0 0.0
  %402 = vmatpush1.xpose.msra.mxu0 0.0
  %403 = vmatprep.subr.mxu0 0.0
  %404 = vmatpush1.xpose.msra.mxu0 0.0
  %405 = vmatprep.subr.mxu0 0.0
  %406 = vmatpush1.xpose.msra.mxu0 0.0
  %407 = vmatprep.subr.mxu0 0.0
  %408 = vmatpush1.xpose.msra.mxu0 0.0
  %409 = vmatprep.subr.mxu0 0.0
  %410 = vmatpush1.xpose.msra.mxu0 0.0
  %411 = vmatprep.subr.mxu0 0.0
  %412 = vmatpush1.xpose.msra.mxu0 0.0
  %413 = vmatprep.subr.mxu0 0.0
  %414 = vmatpush1.xpose.msra.mxu0 0.0
  %415 = vmatprep.subr.mxu0 0.0
  %416 = vmatpush1.xpose.msra.mxu0 0.0
  %417 = vmatprep.subr.mxu0 0.0
  %418 = vmatpush1.xpose.msra.mxu0 0.0
  %419 = vmatprep.subr.mxu0 0.0
  %420 = vmatpush1.xpose.msra.mxu0 0.0
  %421 = vmatprep.subr.mxu0 0.0
  %422 = vmatpush1.xpose.msra.mxu0 0.0
  %423 = vmatprep.subr.mxu0 0.0
  %424 = vmatpush1.xpose.msra.mxu0 0.0
  %425 = vmatprep.subr.mxu0 0.0
  %426 = vmatpush1.xpose.msra.mxu0 0.0
  %427 = vmatprep.subr.mxu0 0.0
  %428 = vmatpush1.xpose.msra.mxu0 0.0
  %429 = vmatprep.subr.mxu0 0.0
  %430 = vmatpush1.xpose.msra.mxu0 0.0
  %431 = vmatprep.subr.mxu0 0.0
  %432 = vmatpush1.xpose.msra.mxu0 0.0
  %433 = vmatprep.mubr.f32.mxu0 0.0
  %434 = vmatmul.mubr.f32.gmra.mrb[0].mxu0 %v361
  %v435 = vpop.f32.mrb[0].mxu0
  %v436 = vadd.f32 0.0, %v435
  %v437 = vpop.f32.mrb[0].mxu0
  %438 = vdwg.mxu0
  %v440 = vsel %vm122, %v30, 0
  %v443 = vsel %vm122, %v50, 0
  %v446 = vsel %vm122, %v51, 0
  %448 = vmatprep.subr.mxu0 0.0
  %449 = vmatpush1.xpose.msra.mxu0 %v443
  %450 = vmatprep.subr.mxu0 0.0
  %451 = vmatpush1.xpose.msra.mxu0 %v446
  %452 = vmatprep.subr.mxu0 0.0
  %453 = vmatpush1.xpose.msra.mxu0 0.0
  %454 = vmatprep.subr.mxu0 0.0
  %455 = vmatpush1.xpose.msra.mxu0 0.0
  %456 = vmatprep.subr.mxu0 0.0
  %457 = vmatpush1.xpose.msra.mxu0 0.0
  %458 = vmatprep.subr.mxu0 0.0
  %459 = vmatpush1.xpose.msra.mxu0 0.0
  %460 = vmatprep.subr.mxu0 0.0
  %461 = vmatpush1.xpose.msra.mxu0 0.0
  %462 = vmatprep.subr.mxu0 0.0
  %463 = vmatpush1.xpose.msra.mxu0 0.0
  %464 = vmatprep.subr.mxu0 0.0
  %465 = vmatpush1.xpose.msra.mxu0 0.0
  %466 = vmatprep.subr.mxu0 0.0
  %467 = vmatpush1.xpose.msra.mxu0 0.0
  %468 = vmatprep.subr.mxu0 0.0
  %469 = vmatpush1.xpose.msra.mxu0 0.0
  %470 = vmatprep.subr.mxu0 0.0
  %471 = vmatpush1.xpose.msra.mxu0 0.0
  %472 = vmatprep.subr.mxu0 0.0
  %473 = vmatpush1.xpose.msra.mxu0 0.0
  %474 = vmatprep.subr.mxu0 0.0
  %475 = vmatpush1.xpose.msra.mxu0 0.0
  %476 = vmatprep.subr.mxu0 0.0
  %477 = vmatpush1.xpose.msra.mxu0 0.0
  %478 = vmatprep.subr.mxu0 0.0
  %479 = vmatpush1.xpose.msra.mxu0 0.0
  %480 = vmatprep.subr.mxu0 0.0
  %481 = vmatpush1.xpose.msra.mxu0 0.0
  %482 = vmatprep.subr.mxu0 0.0
  %483 = vmatpush1.xpose.msra.mxu0 0.0
  %484 = vmatprep.subr.mxu0 0.0
  %485 = vmatpush1.xpose.msra.mxu0 0.0
  %486 = vmatprep.subr.mxu0 0.0
  %487 = vmatpush1.xpose.msra.mxu0 0.0
  %488 = vmatprep.subr.mxu0 0.0
  %489 = vmatpush1.xpose.msra.mxu0 0.0
  %490 = vmatprep.subr.mxu0 0.0
  %491 = vmatpush1.xpose.msra.mxu0 0.0
  %492 = vmatprep.subr.mxu0 0.0
  %493 = vmatpush1.xpose.msra.mxu0 0.0
  %494 = vmatprep.subr.mxu0 0.0
  %495 = vmatpush1.xpose.msra.mxu0 0.0
  %496 = vmatprep.subr.mxu0 0.0
  %497 = vmatpush1.xpose.msra.mxu0 0.0
  %498 = vmatprep.subr.mxu0 0.0
  %499 = vmatpush1.xpose.msra.mxu0 0.0
  %500 = vmatprep.subr.mxu0 0.0
  %501 = vmatpush1.xpose.msra.mxu0 0.0
  %502 = vmatprep.subr.mxu0 0.0
  %503 = vmatpush1.xpose.msra.mxu0 0.0
  %504 = vmatprep.subr.mxu0 0.0
  %505 = vmatpush1.xpose.msra.mxu0 0.0
  %506 = vmatprep.subr.mxu0 0.0
  %507 = vmatpush1.xpose.msra.mxu0 0.0
  %508 = vmatprep.subr.mxu0 0.0
  %509 = vmatpush1.xpose.msra.mxu0 0.0
  %510 = vmatprep.subr.mxu0 0.0
  %511 = vmatpush1.xpose.msra.mxu0 0.0
  %512 = vmatprep.mubr.f32.mxu0 0.0
  %513 = vmatmul.mubr.f32.gmra.mrb[0].mxu0 %v440
  %v514 = vpop.f32.mrb[0].mxu0
  %v515 = vadd.f32 0.0, %v514
  %v516 = vpop.f32.mrb[0].mxu0
  %517 = vdwg.mxu0
  %v519 = vsel %vm122, %v31, 0
  %v522 = vsel %vm122, %v52, 0
  %v525 = vsel %vm122, %v53, 0
  %527 = vmatprep.subr.mxu0 0.0
  %528 = vmatpush1.xpose.msra.mxu0 %v522
  %529 = vmatprep.subr.mxu0 0.0
  %530 = vmatpush1.xpose.msra.mxu0 %v525
  %531 = vmatprep.subr.mxu0 0.0
  %532 = vmatpush1.xpose.msra.mxu0 0.0
  %533 = vmatprep.subr.mxu0 0.0
  %534 = vmatpush1.xpose.msra.mxu0 0.0
  %535 = vmatprep.subr.mxu0 0.0
  %536 = vmatpush1.xpose.msra.mxu0 0.0
  %537 = vmatprep.subr.mxu0 0.0
  %538 = vmatpush1.xpose.msra.mxu0 0.0
  %539 = vmatprep.subr.mxu0 0.0
  %540 = vmatpush1.xpose.msra.mxu0 0.0
  %541 = vmatprep.subr.mxu0 0.0
  %542 = vmatpush1.xpose.msra.mxu0 0.0
  %543 = vmatprep.subr.mxu0 0.0
  %544 = vmatpush1.xpose.msra.mxu0 0.0
  %545 = vmatprep.subr.mxu0 0.0
  %546 = vmatpush1.xpose.msra.mxu0 0.0
  %547 = vmatprep.subr.mxu0 0.0
  %548 = vmatpush1.xpose.msra.mxu0 0.0
  %549 = vmatprep.subr.mxu0 0.0
  %550 = vmatpush1.xpose.msra.mxu0 0.0
  %551 = vmatprep.subr.mxu0 0.0
  %552 = vmatpush1.xpose.msra.mxu0 0.0
  %553 = vmatprep.subr.mxu0 0.0
  %554 = vmatpush1.xpose.msra.mxu0 0.0
  %555 = vmatprep.subr.mxu0 0.0
  %556 = vmatpush1.xpose.msra.mxu0 0.0
  %557 = vmatprep.subr.mxu0 0.0
  %558 = vmatpush1.xpose.msra.mxu0 0.0
  %559 = vmatprep.subr.mxu0 0.0
  %560 = vmatpush1.xpose.msra.mxu0 0.0
  %561 = vmatprep.subr.mxu0 0.0
  %562 = vmatpush1.xpose.msra.mxu0 0.0
  %563 = vmatprep.subr.mxu0 0.0
  %564 = vmatpush1.xpose.msra.mxu0 0.0
  %565 = vmatprep.subr.mxu0 0.0
  %566 = vmatpush1.xpose.msra.mxu0 0.0
  %567 = vmatprep.subr.mxu0 0.0
  %568 = vmatpush1.xpose.msra.mxu0 0.0
  %569 = vmatprep.subr.mxu0 0.0
  %570 = vmatpush1.xpose.msra.mxu0 0.0
  %571 = vmatprep.subr.mxu0 0.0
  %572 = vmatpush1.xpose.msra.mxu0 0.0
  %573 = vmatprep.subr.mxu0 0.0
  %574 = vmatpush1.xpose.msra.mxu0 0.0
  %575 = vmatprep.subr.mxu0 0.0
  %576 = vmatpush1.xpose.msra.mxu0 0.0
  %577 = vmatprep.subr.mxu0 0.0
  %578 = vmatpush1.xpose.msra.mxu0 0.0
  %579 = vmatprep.subr.mxu0 0.0
  %580 = vmatpush1.xpose.msra.mxu0 0.0
  %581 = vmatprep.subr.mxu0 0.0
  %582 = vmatpush1.xpose.msra.mxu0 0.0
  %583 = vmatprep.subr.mxu0 0.0
  %584 = vmatpush1.xpose.msra.mxu0 0.0
  %585 = vmatprep.subr.mxu0 0.0
  %586 = vmatpush1.xpose.msra.mxu0 0.0
  %587 = vmatprep.subr.mxu0 0.0
  %588 = vmatpush1.xpose.msra.mxu0 0.0
  %589 = vmatprep.subr.mxu0 0.0
  %590 = vmatpush1.xpose.msra.mxu0 0.0
  %591 = vmatprep.mubr.f32.mxu0 0.0
  %592 = vmatmul.mubr.f32.gmra.mrb[0].mxu0 %v519
  %v593 = vpop.f32.mrb[0].mxu0
  %v594 = vadd.f32 0.0, %v593
  %v595 = vpop.f32.mrb[0].mxu0
  %596 = vdwg.mxu0
  %v598 = vsel %vm122, %v32, 0
  %v601 = vsel %vm122, %v54, 0
  %v604 = vsel %vm122, %v55, 0
  %606 = vmatprep.subr.mxu0 0.0
  %607 = vmatpush1.xpose.msra.mxu0 %v601
  %608 = vmatprep.subr.mxu0 0.0
  %609 = vmatpush1.xpose.msra.mxu0 %v604
  %610 = vmatprep.subr.mxu0 0.0
  %611 = vmatpush1.xpose.msra.mxu0 0.0
  %612 = vmatprep.subr.mxu0 0.0
  %613 = vmatpush1.xpose.msra.mxu0 0.0
  %614 = vmatprep.subr.mxu0 0.0
  %615 = vmatpush1.xpose.msra.mxu0 0.0
  %616 = vmatprep.subr.mxu0 0.0
  %617 = vmatpush1.xpose.msra.mxu0 0.0
  %618 = vmatprep.subr.mxu0 0.0
  %619 = vmatpush1.xpose.msra.mxu0 0.0
  %620 = vmatprep.subr.mxu0 0.0
  %621 = vmatpush1.xpose.msra.mxu0 0.0
  %622 = vmatprep.subr.mxu0 0.0
  %623 = vmatpush1.xpose.msra.mxu0 0.0
  %624 = vmatprep.subr.mxu0 0.0
  %625 = vmatpush1.xpose.msra.mxu0 0.0
  %626 = vmatprep.subr.mxu0 0.0
  %627 = vmatpush1.xpose.msra.mxu0 0.0
  %628 = vmatprep.subr.mxu0 0.0
  %629 = vmatpush1.xpose.msra.mxu0 0.0
  %630 = vmatprep.subr.mxu0 0.0
  %631 = vmatpush1.xpose.msra.mxu0 0.0
  %632 = vmatprep.subr.mxu0 0.0
  %633 = vmatpush1.xpose.msra.mxu0 0.0
  %634 = vmatprep.subr.mxu0 0.0
  %635 = vmatpush1.xpose.msra.mxu0 0.0
  %636 = vmatprep.subr.mxu0 0.0
  %637 = vmatpush1.xpose.msra.mxu0 0.0
  %638 = vmatprep.subr.mxu0 0.0
  %639 = vmatpush1.xpose.msra.mxu0 0.0
  %640 = vmatprep.subr.mxu0 0.0
  %641 = vmatpush1.xpose.msra.mxu0 0.0
  %642 = vmatprep.subr.mxu0 0.0
  %643 = vmatpush1.xpose.msra.mxu0 0.0
  %644 = vmatprep.subr.mxu0 0.0
  %645 = vmatpush1.xpose.msra.mxu0 0.0
  %646 = vmatprep.subr.mxu0 0.0
  %647 = vmatpush1.xpose.msra.mxu0 0.0
  %648 = vmatprep.subr.mxu0 0.0
  %649 = vmatpush1.xpose.msra.mxu0 0.0
  %650 = vmatprep.subr.mxu0 0.0
  %651 = vmatpush1.xpose.msra.mxu0 0.0
  %652 = vmatprep.subr.mxu0 0.0
  %653 = vmatpush1.xpose.msra.mxu0 0.0
  %654 = vmatprep.subr.mxu0 0.0
  %655 = vmatpush1.xpose.msra.mxu0 0.0
  %656 = vmatprep.subr.mxu0 0.0
  %657 = vmatpush1.xpose.msra.mxu0 0.0
  %658 = vmatprep.subr.mxu0 0.0
  %659 = vmatpush1.xpose.msra.mxu0 0.0
  %660 = vmatprep.subr.mxu0 0.0
  %661 = vmatpush1.xpose.msra.mxu0 0.0
  %662 = vmatprep.subr.mxu0 0.0
  %663 = vmatpush1.xpose.msra.mxu0 0.0
  %664 = vmatprep.subr.mxu0 0.0
  %665 = vmatpush1.xpose.msra.mxu0 0.0
  %666 = vmatprep.subr.mxu0 0.0
  %667 = vmatpush1.xpose.msra.mxu0 0.0
  %668 = vmatprep.subr.mxu0 0.0
  %669 = vmatpush1.xpose.msra.mxu0 0.0
  %670 = vmatprep.mubr.f32.mxu0 0.0
  %671 = vmatmul.mubr.f32.gmra.mrb[0].mxu0 %v598
  %v672 = vpop.f32.mrb[0].mxu0
  %v673 = vadd.f32 0.0, %v672
  %v674 = vpop.f32.mrb[0].mxu0
  %675 = vdwg.mxu0
  %v677 = vsel %vm122, %v33, 0
  %v680 = vsel %vm122, %v56, 0
  %v683 = vsel %vm122, %v57, 0
  %685 = vmatprep.subr.mxu0 0.0
  %686 = vmatpush1.xpose.msra.mxu0 %v680
  %687 = vmatprep.subr.mxu0 0.0
  %688 = vmatpush1.xpose.msra.mxu0 %v683
  %689 = vmatprep.subr.mxu0 0.0
  %690 = vmatpush1.xpose.msra.mxu0 0.0
  %691 = vmatprep.subr.mxu0 0.0
  %692 = vmatpush1.xpose.msra.mxu0 0.0
  %693 = vmatprep.subr.mxu0 0.0
  %694 = vmatpush1.xpose.msra.mxu0 0.0
  %695 = vmatprep.subr.mxu0 0.0
  %696 = vmatpush1.xpose.msra.mxu0 0.0
  %697 = vmatprep.subr.mxu0 0.0
  %698 = vmatpush1.xpose.msra.mxu0 0.0
  %699 = vmatprep.subr.mxu0 0.0
  %700 = vmatpush1.xpose.msra.mxu0 0.0
  %701 = vmatprep.subr.mxu0 0.0
  %702 = vmatpush1.xpose.msra.mxu0 0.0
  %703 = vmatprep.subr.mxu0 0.0
  %704 = vmatpush1.xpose.msra.mxu0 0.0
  %705 = vmatprep.subr.mxu0 0.0
  %706 = vmatpush1.xpose.msra.mxu0 0.0
  %707 = vmatprep.subr.mxu0 0.0
  %708 = vmatpush1.xpose.msra.mxu0 0.0
  %709 = vmatprep.subr.mxu0 0.0
  %710 = vmatpush1.xpose.msra.mxu0 0.0
  %711 = vmatprep.subr.mxu0 0.0
  %712 = vmatpush1.xpose.msra.mxu0 0.0
  %713 = vmatprep.subr.mxu0 0.0
  %714 = vmatpush1.xpose.msra.mxu0 0.0
  %715 = vmatprep.subr.mxu0 0.0
  %716 = vmatpush1.xpose.msra.mxu0 0.0
  %717 = vmatprep.subr.mxu0 0.0
  %718 = vmatpush1.xpose.msra.mxu0 0.0
  %719 = vmatprep.subr.mxu0 0.0
  %720 = vmatpush1.xpose.msra.mxu0 0.0
  %721 = vmatprep.subr.mxu0 0.0
  %722 = vmatpush1.xpose.msra.mxu0 0.0
  %723 = vmatprep.subr.mxu0 0.0
  %724 = vmatpush1.xpose.msra.mxu0 0.0
  %725 = vmatprep.subr.mxu0 0.0
  %726 = vmatpush1.xpose.msra.mxu0 0.0
  %727 = vmatprep.subr.mxu0 0.0
  %728 = vmatpush1.xpose.msra.mxu0 0.0
  %729 = vmatprep.subr.mxu0 0.0
  %730 = vmatpush1.xpose.msra.mxu0 0.0
  %731 = vmatprep.subr.mxu0 0.0
  %732 = vmatpush1.xpose.msra.mxu0 0.0
  %733 = vmatprep.subr.mxu0 0.0
  %734 = vmatpush1.xpose.msra.mxu0 0.0
  %735 = vmatprep.subr.mxu0 0.0
  %736 = vmatpush1.xpose.msra.mxu0 0.0
  %737 = vmatprep.subr.mxu0 0.0
  %738 = vmatpush1.xpose.msra.mxu0 0.0
  %739 = vmatprep.subr.mxu0 0.0
  %740 = vmatpush1.xpose.msra.mxu0 0.0
  %741 = vmatprep.subr.mxu0 0.0
  %742 = vmatpush1.xpose.msra.mxu0 0.0
  %743 = vmatprep.subr.mxu0 0.0
  %744 = vmatpush1.xpose.msra.mxu0 0.0
  %745 = vmatprep.subr.mxu0 0.0
  %746 = vmatpush1.xpose.msra.mxu0 0.0
  %747 = vmatprep.subr.mxu0 0.0
  %748 = vmatpush1.xpose.msra.mxu0 0.0
  %749 = vmatprep.mubr.f32.mxu0 0.0
  %750 = vmatmul.mubr.f32.gmra.mrb[0].mxu0 %v677
  %v751 = vpop.f32.mrb[0].mxu0
  %v752 = vadd.f32 0.0, %v751
  %v753 = vpop.f32.mrb[0].mxu0
  %754 = vdwg.mxu0
  %v756 = vsel %vm122, %v34, 0
  %v759 = vsel %vm122, %v58, 0
  %v762 = vsel %vm122, %v59, 0
  %764 = vmatprep.subr.mxu0 0.0
  %765 = vmatpush1.xpose.msra.mxu0 %v759
  %766 = vmatprep.subr.mxu0 0.0
  %767 = vmatpush1.xpose.msra.mxu0 %v762
  %768 = vmatprep.subr.mxu0 0.0
  %769 = vmatpush1.xpose.msra.mxu0 0.0
  %770 = vmatprep.subr.mxu0 0.0
  %771 = vmatpush1.xpose.msra.mxu0 0.0
  %772 = vmatprep.subr.mxu0 0.0
  %773 = vmatpush1.xpose.msra.mxu0 0.0
  %774 = vmatprep.subr.mxu0 0.0
  %775 = vmatpush1.xpose.msra.mxu0 0.0
  %776 = vmatprep.subr.mxu0 0.0
  %777 = vmatpush1.xpose.msra.mxu0 0.0
  %778 = vmatprep.subr.mxu0 0.0
  %779 = vmatpush1.xpose.msra.mxu0 0.0
  %780 = vmatprep.subr.mxu0 0.0
  %781 = vmatpush1.xpose.msra.mxu0 0.0
  %782 = vmatprep.subr.mxu0 0.0
  %783 = vmatpush1.xpose.msra.mxu0 0.0
  %784 = vmatprep.subr.mxu0 0.0
  %785 = vmatpush1.xpose.msra.mxu0 0.0
  %786 = vmatprep.subr.mxu0 0.0
  %787 = vmatpush1.xpose.msra.mxu0 0.0
  %788 = vmatprep.subr.mxu0 0.0
  %789 = vmatpush1.xpose.msra.mxu0 0.0
  %790 = vmatprep.subr.mxu0 0.0
  %791 = vmatpush1.xpose.msra.mxu0 0.0
  %792 = vmatprep.subr.mxu0 0.0
  %793 = vmatpush1.xpose.msra.mxu0 0.0
  %794 = vmatprep.subr.mxu0 0.0
  %795 = vmatpush1.xpose.msra.mxu0 0.0
  %796 = vmatprep.subr.mxu0 0.0
  %797 = vmatpush1.xpose.msra.mxu0 0.0
  %798 = vmatprep.subr.mxu0 0.0
  %799 = vmatpush1.xpose.msra.mxu0 0.0
  %800 = vmatprep.subr.mxu0 0.0
  %801 = vmatpush1.xpose.msra.mxu0 0.0
  %802 = vmatprep.subr.mxu0 0.0
  %803 = vmatpush1.xpose.msra.mxu0 0.0
  %804 = vmatprep.subr.mxu0 0.0
  %805 = vmatpush1.xpose.msra.mxu0 0.0
  %806 = vmatprep.subr.mxu0 0.0
  %807 = vmatpush1.xpose.msra.mxu0 0.0
  %808 = vmatprep.subr.mxu0 0.0
  %809 = vmatpush1.xpose.msra.mxu0 0.0
  %810 = vmatprep.subr.mxu0 0.0
  %811 = vmatpush1.xpose.msra.mxu0 0.0
  %812 = vmatprep.subr.mxu0 0.0
  %813 = vmatpush1.xpose.msra.mxu0 0.0
  %814 = vmatprep.subr.mxu0 0.0
  %815 = vmatpush1.xpose.msra.mxu0 0.0
  %816 = vmatprep.subr.mxu0 0.0
  %817 = vmatpush1.xpose.msra.mxu0 0.0
  %818 = vmatprep.subr.mxu0 0.0
  %819 = vmatpush1.xpose.msra.mxu0 0.0
  %820 = vmatprep.subr.mxu0 0.0
  %821 = vmatpush1.xpose.msra.mxu0 0.0
  %822 = vmatprep.subr.mxu0 0.0
  %823 = vmatpush1.xpose.msra.mxu0 0.0
  %824 = vmatprep.subr.mxu0 0.0
  %825 = vmatpush1.xpose.msra.mxu0 0.0
  %826 = vmatprep.subr.mxu0 0.0
  %827 = vmatpush1.xpose.msra.mxu0 0.0
  %828 = vmatprep.mubr.f32.mxu0 0.0
  %829 = vmatmul.mubr.f32.gmra.mrb[0].mxu0 %v756
  %v830 = vpop.f32.mrb[0].mxu0
  %v831 = vadd.f32 0.0, %v830
  %v832 = vpop.f32.mrb[0].mxu0
  %833 = vdwg.mxu0
  %v835 = vsel %vm122, %v35, 0
  %v838 = vsel %vm122, %v60, 0
  %v841 = vsel %vm122, %v61, 0
  %843 = vmatprep.subr.mxu0 0.0
  %844 = vmatpush1.xpose.msra.mxu0 %v838
  %845 = vmatprep.subr.mxu0 0.0
  %846 = vmatpush1.xpose.msra.mxu0 %v841
  %847 = vmatprep.subr.mxu0 0.0
  %848 = vmatpush1.xpose.msra.mxu0 0.0
  %849 = vmatprep.subr.mxu0 0.0
  %850 = vmatpush1.xpose.msra.mxu0 0.0
  %851 = vmatprep.subr.mxu0 0.0
  %852 = vmatpush1.xpose.msra.mxu0 0.0
  %853 = vmatprep.subr.mxu0 0.0
  %854 = vmatpush1.xpose.msra.mxu0 0.0
  %855 = vmatprep.subr.mxu0 0.0
  %856 = vmatpush1.xpose.msra.mxu0 0.0
  %857 = vmatprep.subr.mxu0 0.0
  %858 = vmatpush1.xpose.msra.mxu0 0.0
  %859 = vmatprep.subr.mxu0 0.0
  %860 = vmatpush1.xpose.msra.mxu0 0.0
  %861 = vmatprep.subr.mxu0 0.0
  %862 = vmatpush1.xpose.msra.mxu0 0.0
  %863 = vmatprep.subr.mxu0 0.0
  %864 = vmatpush1.xpose.msra.mxu0 0.0
  %865 = vmatprep.subr.mxu0 0.0
  %866 = vmatpush1.xpose.msra.mxu0 0.0
  %867 = vmatprep.subr.mxu0 0.0
  %868 = vmatpush1.xpose.msra.mxu0 0.0
  %869 = vmatprep.subr.mxu0 0.0
  %870 = vmatpush1.xpose.msra.mxu0 0.0
  %871 = vmatprep.subr.mxu0 0.0
  %872 = vmatpush1.xpose.msra.mxu0 0.0
  %873 = vmatprep.subr.mxu0 0.0
  %874 = vmatpush1.xpose.msra.mxu0 0.0
  %875 = vmatprep.subr.mxu0 0.0
  %876 = vmatpush1.xpose.msra.mxu0 0.0
  %877 = vmatprep.subr.mxu0 0.0
  %878 = vmatpush1.xpose.msra.mxu0 0.0
  %879 = vmatprep.subr.mxu0 0.0
  %880 = vmatpush1.xpose.msra.mxu0 0.0
  %881 = vmatprep.subr.mxu0 0.0
  %882 = vmatpush1.xpose.msra.mxu0 0.0
  %883 = vmatprep.subr.mxu0 0.0
  %884 = vmatpush1.xpose.msra.mxu0 0.0
  %885 = vmatprep.subr.mxu0 0.0
  %886 = vmatpush1.xpose.msra.mxu0 0.0
  %887 = vmatprep.subr.mxu0 0.0
  %888 = vmatpush1.xpose.msra.mxu0 0.0
  %889 = vmatprep.subr.mxu0 0.0
  %890 = vmatpush1.xpose.msra.mxu0 0.0
  %891 = vmatprep.subr.mxu0 0.0
  %892 = vmatpush1.xpose.msra.mxu0 0.0
  %893 = vmatprep.subr.mxu0 0.0
  %894 = vmatpush1.xpose.msra.mxu0 0.0
  %895 = vmatprep.subr.mxu0 0.0
  %896 = vmatpush1.xpose.msra.mxu0 0.0
  %897 = vmatprep.subr.mxu0 0.0
  %898 = vmatpush1.xpose.msra.mxu0 0.0
  %899 = vmatprep.subr.mxu0 0.0
  %900 = vmatpush1.xpose.msra.mxu0 0.0
  %901 = vmatprep.subr.mxu0 0.0
  %902 = vmatpush1.xpose.msra.mxu0 0.0
  %903 = vmatprep.subr.mxu0 0.0
  %904 = vmatpush1.xpose.msra.mxu0 0.0
  %905 = vmatprep.subr.mxu0 0.0
  %906 = vmatpush1.xpose.msra.mxu0 0.0
  %907 = vmatprep.mubr.f32.mxu0 0.0
  %908 = vmatmul.mubr.f32.gmra.mrb[0].mxu0 %v835
  %v909 = vpop.f32.mrb[0].mxu0
  %v910 = vadd.f32 0.0, %v909
  %v911 = vpop.f32.mrb[0].mxu0
  %912 = vdwg.mxu0
  %v914 = vsel %vm122, %v36, 0
  %v917 = vsel %vm122, %v62, 0
  %v920 = vsel %vm122, %v63, 0
  %922 = vmatprep.subr.mxu0 0.0
  %923 = vmatpush1.xpose.msra.mxu0 %v917
  %924 = vmatprep.subr.mxu0 0.0
  %925 = vmatpush1.xpose.msra.mxu0 %v920
  %926 = vmatprep.subr.mxu0 0.0
  %927 = vmatpush1.xpose.msra.mxu0 0.0
  %928 = vmatprep.subr.mxu0 0.0
  %929 = vmatpush1.xpose.msra.mxu0 0.0
  %930 = vmatprep.subr.mxu0 0.0
  %931 = vmatpush1.xpose.msra.mxu0 0.0
  %932 = vmatprep.subr.mxu0 0.0
  %933 = vmatpush1.xpose.msra.mxu0 0.0
  %934 = vmatprep.subr.mxu0 0.0
  %935 = vmatpush1.xpose.msra.mxu0 0.0
  %936 = vmatprep.subr.mxu0 0.0
  %937 = vmatpush1.xpose.msra.mxu0 0.0
  %938 = vmatprep.subr.mxu0 0.0
  %939 = vmatpush1.xpose.msra.mxu0 0.0
  %940 = vmatprep.subr.mxu0 0.0
  %941 = vmatpush1.xpose.msra.mxu0 0.0
  %942 = vmatprep.subr.mxu0 0.0
  %943 = vmatpush1.xpose.msra.mxu0 0.0
  %944 = vmatprep.subr.mxu0 0.0
  %945 = vmatpush1.xpose.msra.mxu0 0.0
  %946 = vmatprep.subr.mxu0 0.0
  %947 = vmatpush1.xpose.msra.mxu0 0.0
  %948 = vmatprep.subr.mxu0 0.0
  %949 = vmatpush1.xpose.msra.mxu0 0.0
  %950 = vmatprep.subr.mxu0 0.0
  %951 = vmatpush1.xpose.msra.mxu0 0.0
  %952 = vmatprep.subr.mxu0 0.0
  %953 = vmatpush1.xpose.msra.mxu0 0.0
  %954 = vmatprep.subr.mxu0 0.0
  %955 = vmatpush1.xpose.msra.mxu0 0.0
  %956 = vmatprep.subr.mxu0 0.0
  %957 = vmatpush1.xpose.msra.mxu0 0.0
  %958 = vmatprep.subr.mxu0 0.0
  %959 = vmatpush1.xpose.msra.mxu0 0.0
  %960 = vmatprep.subr.mxu0 0.0
  %961 = vmatpush1.xpose.msra.mxu0 0.0
  %962 = vmatprep.subr.mxu0 0.0
  %963 = vmatpush1.xpose.msra.mxu0 0.0
  %964 = vmatprep.subr.mxu0 0.0
  %965 = vmatpush1.xpose.msra.mxu0 0.0
  %966 = vmatprep.subr.mxu0 0.0
  %967 = vmatpush1.xpose.msra.mxu0 0.0
  %968 = vmatprep.subr.mxu0 0.0
  %969 = vmatpush1.xpose.msra.mxu0 0.0
  %970 = vmatprep.subr.mxu0 0.0
  %971 = vmatpush1.xpose.msra.mxu0 0.0
  %972 = vmatprep.subr.mxu0 0.0
  %973 = vmatpush1.xpose.msra.mxu0 0.0
  %974 = vmatprep.subr.mxu0 0.0
  %975 = vmatpush1.xpose.msra.mxu0 0.0
  %976 = vmatprep.subr.mxu0 0.0
  %977 = vmatpush1.xpose.msra.mxu0 0.0
  %978 = vmatprep.subr.mxu0 0.0
  %979 = vmatpush1.xpose.msra.mxu0 0.0
  %980 = vmatprep.subr.mxu0 0.0
  %981 = vmatpush1.xpose.msra.mxu0 0.0
  %982 = vmatprep.subr.mxu0 0.0
  %983 = vmatpush1.xpose.msra.mxu0 0.0
  %984 = vmatprep.subr.mxu0 0.0
  %985 = vmatpush1.xpose.msra.mxu0 0.0
  %986 = vmatprep.mubr.f32.mxu0 0.0
  %987 = vmatmul.mubr.f32.gmra.mrb[0].mxu0 %v914
  %v988 = vpop.f32.mrb[0].mxu0
  %v989 = vadd.f32 0.0, %v988
  %v990 = vpop.f32.mrb[0].mxu0
  %991 = vdwg.mxu0
  %v993 = vsel %vm122, %v37, 0
  %v996 = vsel %vm122, %v64, 0
  %v999 = vsel %vm122, %v65, 0
  %1001 = vmatprep.subr.mxu0 0.0
  %1002 = vmatpush1.xpose.msra.mxu0 %v996
  %1003 = vmatprep.subr.mxu0 0.0
  %1004 = vmatpush1.xpose.msra.mxu0 %v999
  %1005 = vmatprep.subr.mxu0 0.0
  %1006 = vmatpush1.xpose.msra.mxu0 0.0
  %1007 = vmatprep.subr.mxu0 0.0
  %1008 = vmatpush1.xpose.msra.mxu0 0.0
  %1009 = vmatprep.subr.mxu0 0.0
  %1010 = vmatpush1.xpose.msra.mxu0 0.0
  %1011 = vmatprep.subr.mxu0 0.0
  %1012 = vmatpush1.xpose.msra.mxu0 0.0
  %1013 = vmatprep.subr.mxu0 0.0
  %1014 = vmatpush1.xpose.msra.mxu0 0.0
  %1015 = vmatprep.subr.mxu0 0.0
  %1016 = vmatpush1.xpose.msra.mxu0 0.0
  %1017 = vmatprep.subr.mxu0 0.0
  %1018 = vmatpush1.xpose.msra.mxu0 0.0
  %1019 = vmatprep.subr.mxu0 0.0
  %1020 = vmatpush1.xpose.msra.mxu0 0.0
  %1021 = vmatprep.subr.mxu0 0.0
  %1022 = vmatpush1.xpose.msra.mxu0 0.0
  %1023 = vmatprep.subr.mxu0 0.0
  %1024 = vmatpush1.xpose.msra.mxu0 0.0
  %1025 = vmatprep.subr.mxu0 0.0
  %1026 = vmatpush1.xpose.msra.mxu0 0.0
  %1027 = vmatprep.subr.mxu0 0.0
  %1028 = vmatpush1.xpose.msra.mxu0 0.0
  %1029 = vmatprep.subr.mxu0 0.0
  %1030 = vmatpush1.xpose.msra.mxu0 0.0
  %1031 = vmatprep.subr.mxu0 0.0
  %1032 = vmatpush1.xpose.msra.mxu0 0.0
  %1033 = vmatprep.subr.mxu0 0.0
  %1034 = vmatpush1.xpose.msra.mxu0 0.0
  %1035 = vmatprep.subr.mxu0 0.0
  %1036 = vmatpush1.xpose.msra.mxu0 0.0
  %1037 = vmatprep.subr.mxu0 0.0
  %1038 = vmatpush1.xpose.msra.mxu0 0.0
  %1039 = vmatprep.subr.mxu0 0.0
  %1040 = vmatpush1.xpose.msra.mxu0 0.0
  %1041 = vmatprep.subr.mxu0 0.0
  %1042 = vmatpush1.xpose.msra.mxu0 0.0
  %1043 = vmatprep.subr.mxu0 0.0
  %1044 = vmatpush1.xpose.msra.mxu0 0.0
  %1045 = vmatprep.subr.mxu0 0.0
  %1046 = vmatpush1.xpose.msra.mxu0 0.0
  %1047 = vmatprep.subr.mxu0 0.0
  %1048 = vmatpush1.xpose.msra.mxu0 0.0
  %1049 = vmatprep.subr.mxu0 0.0
  %1050 = vmatpush1.xpose.msra.mxu0 0.0
  %1051 = vmatprep.subr.mxu0 0.0
  %1052 = vmatpush1.xpose.msra.mxu0 0.0
  %1053 = vmatprep.subr.mxu0 0.0
  %1054 = vmatpush1.xpose.msra.mxu0 0.0
  %1055 = vmatprep.subr.mxu0 0.0
  %1056 = vmatpush1.xpose.msra.mxu0 0.0
  %1057 = vmatprep.subr.mxu0 0.0
  %1058 = vmatpush1.xpose.msra.mxu0 0.0
  %1059 = vmatprep.subr.mxu0 0.0
  %1060 = vmatpush1.xpose.msra.mxu0 0.0
  %1061 = vmatprep.subr.mxu0 0.0
  %1062 = vmatpush1.xpose.msra.mxu0 0.0
  %1063 = vmatprep.subr.mxu0 0.0
  %1064 = vmatpush1.xpose.msra.mxu0 0.0
  %1065 = vmatprep.mubr.f32.mxu0 0.0
  %1066 = vmatmul.mubr.f32.gmra.mrb[0].mxu0 %v993
  %v1067 = vpop.f32.mrb[0].mxu0
  %v1068 = vadd.f32 0.0, %v1067
  %v1069 = vpop.f32.mrb[0].mxu0
  %1070 = vdwg.mxu0
  %v1072 = vsel %vm122, %v38, 0
  %v1075 = vsel %vm122, %v66, 0
  %v1078 = vsel %vm122, %v67, 0
  %1080 = vmatprep.subr.mxu0 0.0
  %1081 = vmatpush1.xpose.msra.mxu0 %v1075
  %1082 = vmatprep.subr.mxu0 0.0
  %1083 = vmatpush1.xpose.msra.mxu0 %v1078
  %1084 = vmatprep.subr.mxu0 0.0
  %1085 = vmatpush1.xpose.msra.mxu0 0.0
  %1086 = vmatprep.subr.mxu0 0.0
  %1087 = vmatpush1.xpose.msra.mxu0 0.0
  %1088 = vmatprep.subr.mxu0 0.0
  %1089 = vmatpush1.xpose.msra.mxu0 0.0
  %1090 = vmatprep.subr.mxu0 0.0
  %1091 = vmatpush1.xpose.msra.mxu0 0.0
  %1092 = vmatprep.subr.mxu0 0.0
  %1093 = vmatpush1.xpose.msra.mxu0 0.0
  %1094 = vmatprep.subr.mxu0 0.0
  %1095 = vmatpush1.xpose.msra.mxu0 0.0
  %1096 = vmatprep.subr.mxu0 0.0
  %1097 = vmatpush1.xpose.msra.mxu0 0.0
  %1098 = vmatprep.subr.mxu0 0.0
  %1099 = vmatpush1.xpose.msra.mxu0 0.0
  %1100 = vmatprep.subr.mxu0 0.0
  %1101 = vmatpush1.xpose.msra.mxu0 0.0
  %1102 = vmatprep.subr.mxu0 0.0
  %1103 = vmatpush1.xpose.msra.mxu0 0.0
  %1104 = vmatprep.subr.mxu0 0.0
  %1105 = vmatpush1.xpose.msra.mxu0 0.0
  %1106 = vmatprep.subr.mxu0 0.0
  %1107 = vmatpush1.xpose.msra.mxu0 0.0
  %1108 = vmatprep.subr.mxu0 0.0
  %1109 = vmatpush1.xpose.msra.mxu0 0.0
  %1110 = vmatprep.subr.mxu0 0.0
  %1111 = vmatpush1.xpose.msra.mxu0 0.0
  %1112 = vmatprep.subr.mxu0 0.0
  %1113 = vmatpush1.xpose.msra.mxu0 0.0
  %1114 = vmatprep.subr.mxu0 0.0
  %1115 = vmatpush1.xpose.msra.mxu0 0.0
  %1116 = vmatprep.subr.mxu0 0.0
  %1117 = vmatpush1.xpose.msra.mxu0 0.0
  %1118 = vmatprep.subr.mxu0 0.0
  %1119 = vmatpush1.xpose.msra.mxu0 0.0
  %1120 = vmatprep.subr.mxu0 0.0
  %1121 = vmatpush1.xpose.msra.mxu0 0.0
  %1122 = vmatprep.subr.mxu0 0.0
  %1123 = vmatpush1.xpose.msra.mxu0 0.0
  %1124 = vmatprep.subr.mxu0 0.0
  %1125 = vmatpush1.xpose.msra.mxu0 0.0
  %1126 = vmatprep.subr.mxu0 0.0
  %1127 = vmatpush1.xpose.msra.mxu0 0.0
  %1128 = vmatprep.subr.mxu0 0.0
  %1129 = vmatpush1.xpose.msra.mxu0 0.0
  %1130 = vmatprep.subr.mxu0 0.0
  %1131 = vmatpush1.xpose.msra.mxu0 0.0
  %1132 = vmatprep.subr.mxu0 0.0
  %1133 = vmatpush1.xpose.msra.mxu0 0.0
  %1134 = vmatprep.subr.mxu0 0.0
  %1135 = vmatpush1.xpose.msra.mxu0 0.0
  %1136 = vmatprep.subr.mxu0 0.0
  %1137 = vmatpush1.xpose.msra.mxu0 0.0
  %1138 = vmatprep.subr.mxu0 0.0
  %1139 = vmatpush1.xpose.msra.mxu0 0.0
  %1140 = vmatprep.subr.mxu0 0.0
  %1141 = vmatpush1.xpose.msra.mxu0 0.0
  %1142 = vmatprep.subr.mxu0 0.0
  %1143 = vmatpush1.xpose.msra.mxu0 0.0
  %1144 = vmatprep.mubr.f32.mxu0 0.0
  %1145 = vmatmul.mubr.f32.gmra.mrb[0].mxu0 %v1072
  %v1146 = vpop.f32.mrb[0].mxu0
  %v1147 = vadd.f32 0.0, %v1146
  %v1148 = vpop.f32.mrb[0].mxu0
  %1149 = vdwg.mxu0
  %v1151 = vsel %vm122, %v39, 0
  %v1154 = vsel %vm122, %v68, 0
  %v1157 = vsel %vm122, %v69, 0
  %1159 = vmatprep.subr.mxu0 0.0
  %1160 = vmatpush1.xpose.msra.mxu0 %v1154
  %1161 = vmatprep.subr.mxu0 0.0
  %1162 = vmatpush1.xpose.msra.mxu0 %v1157
  %1163 = vmatprep.subr.mxu0 0.0
  %1164 = vmatpush1.xpose.msra.mxu0 0.0
  %1165 = vmatprep.subr.mxu0 0.0
  %1166 = vmatpush1.xpose.msra.mxu0 0.0
  %1167 = vmatprep.subr.mxu0 0.0
  %1168 = vmatpush1.xpose.msra.mxu0 0.0
  %1169 = vmatprep.subr.mxu0 0.0
  %1170 = vmatpush1.xpose.msra.mxu0 0.0
  %1171 = vmatprep.subr.mxu0 0.0
  %1172 = vmatpush1.xpose.msra.mxu0 0.0
  %1173 = vmatprep.subr.mxu0 0.0
  %1174 = vmatpush1.xpose.msra.mxu0 0.0
  %1175 = vmatprep.subr.mxu0 0.0
  %1176 = vmatpush1.xpose.msra.mxu0 0.0
  %1177 = vmatprep.subr.mxu0 0.0
  %1178 = vmatpush1.xpose.msra.mxu0 0.0
  %1179 = vmatprep.subr.mxu0 0.0
  %1180 = vmatpush1.xpose.msra.mxu0 0.0
  %1181 = vmatprep.subr.mxu0 0.0
  %1182 = vmatpush1.xpose.msra.mxu0 0.0
  %1183 = vmatprep.subr.mxu0 0.0
  %1184 = vmatpush1.xpose.msra.mxu0 0.0
  %1185 = vmatprep.subr.mxu0 0.0
  %1186 = vmatpush1.xpose.msra.mxu0 0.0
  %1187 = vmatprep.subr.mxu0 0.0
  %1188 = vmatpush1.xpose.msra.mxu0 0.0
  %1189 = vmatprep.subr.mxu0 0.0
  %1190 = vmatpush1.xpose.msra.mxu0 0.0
  %1191 = vmatprep.subr.mxu0 0.0
  %1192 = vmatpush1.xpose.msra.mxu0 0.0
  %1193 = vmatprep.subr.mxu0 0.0
  %1194 = vmatpush1.xpose.msra.mxu0 0.0
  %1195 = vmatprep.subr.mxu0 0.0
  %1196 = vmatpush1.xpose.msra.mxu0 0.0
  %1197 = vmatprep.subr.mxu0 0.0
  %1198 = vmatpush1.xpose.msra.mxu0 0.0
  %1199 = vmatprep.subr.mxu0 0.0
  %1200 = vmatpush1.xpose.msra.mxu0 0.0
  %1201 = vmatprep.subr.mxu0 0.0
  %1202 = vmatpush1.xpose.msra.mxu0 0.0
  %1203 = vmatprep.subr.mxu0 0.0
  %1204 = vmatpush1.xpose.msra.mxu0 0.0
  %1205 = vmatprep.subr.mxu0 0.0
  %1206 = vmatpush1.xpose.msra.mxu0 0.0
  %1207 = vmatprep.subr.mxu0 0.0
  %1208 = vmatpush1.xpose.msra.mxu0 0.0
  %1209 = vmatprep.subr.mxu0 0.0
  %1210 = vmatpush1.xpose.msra.mxu0 0.0
  %1211 = vmatprep.subr.mxu0 0.0
  %1212 = vmatpush1.xpose.msra.mxu0 0.0
  %1213 = vmatprep.subr.mxu0 0.0
  %1214 = vmatpush1.xpose.msra.mxu0 0.0
  %1215 = vmatprep.subr.mxu0 0.0
  %1216 = vmatpush1.xpose.msra.mxu0 0.0
  %1217 = vmatprep.subr.mxu0 0.0
  %1218 = vmatpush1.xpose.msra.mxu0 0.0
  %1219 = vmatprep.subr.mxu0 0.0
  %1220 = vmatpush1.xpose.msra.mxu0 0.0
  %1221 = vmatprep.subr.mxu0 0.0
  %1222 = vmatpush1.xpose.msra.mxu0 0.0
  %1223 = vmatprep.mubr.f32.mxu0 0.0
  %1224 = vmatmul.mubr.f32.gmra.mrb[0].mxu0 %v1151
  %v1225 = vpop.f32.mrb[0].mxu0
  %v1226 = vadd.f32 0.0, %v1225
  %v1227 = vpop.f32.mrb[0].mxu0
  %1228 = vdwg.mxu0
  %v1230 = vsel %vm122, %v40, 0
  %v1233 = vsel %vm122, %v70, 0
  %v1236 = vsel %vm122, %v71, 0
  %1238 = vmatprep.subr.mxu0 0.0
  %1239 = vmatpush1.xpose.msra.mxu0 %v1233
  %1240 = vmatprep.subr.mxu0 0.0
  %1241 = vmatpush1.xpose.msra.mxu0 %v1236
  %1242 = vmatprep.subr.mxu0 0.0
  %1243 = vmatpush1.xpose.msra.mxu0 0.0
  %1244 = vmatprep.subr.mxu0 0.0
  %1245 = vmatpush1.xpose.msra.mxu0 0.0
  %1246 = vmatprep.subr.mxu0 0.0
  %1247 = vmatpush1.xpose.msra.mxu0 0.0
  %1248 = vmatprep.subr.mxu0 0.0
  %1249 = vmatpush1.xpose.msra.mxu0 0.0
  %1250 = vmatprep.subr.mxu0 0.0
  %1251 = vmatpush1.xpose.msra.mxu0 0.0
  %1252 = vmatprep.subr.mxu0 0.0
  %1253 = vmatpush1.xpose.msra.mxu0 0.0
  %1254 = vmatprep.subr.mxu0 0.0
  %1255 = vmatpush1.xpose.msra.mxu0 0.0
  %1256 = vmatprep.subr.mxu0 0.0
  %1257 = vmatpush1.xpose.msra.mxu0 0.0
  %1258 = vmatprep.subr.mxu0 0.0
  %1259 = vmatpush1.xpose.msra.mxu0 0.0
  %1260 = vmatprep.subr.mxu0 0.0
  %1261 = vmatpush1.xpose.msra.mxu0 0.0
  %1262 = vmatprep.subr.mxu0 0.0
  %1263 = vmatpush1.xpose.msra.mxu0 0.0
  %1264 = vmatprep.subr.mxu0 0.0
  %1265 = vmatpush1.xpose.msra.mxu0 0.0
  %1266 = vmatprep.subr.mxu0 0.0
  %1267 = vmatpush1.xpose.msra.mxu0 0.0
  %1268 = vmatprep.subr.mxu0 0.0
  %1269 = vmatpush1.xpose.msra.mxu0 0.0
  %1270 = vmatprep.subr.mxu0 0.0
  %1271 = vmatpush1.xpose.msra.mxu0 0.0
  %1272 = vmatprep.subr.mxu0 0.0
  %1273 = vmatpush1.xpose.msra.mxu0 0.0
  %1274 = vmatprep.subr.mxu0 0.0
  %1275 = vmatpush1.xpose.msra.mxu0 0.0
  %1276 = vmatprep.subr.mxu0 0.0
  %1277 = vmatpush1.xpose.msra.mxu0 0.0
  %1278 = vmatprep.subr.mxu0 0.0
  %1279 = vmatpush1.xpose.msra.mxu0 0.0
  %1280 = vmatprep.subr.mxu0 0.0
  %1281 = vmatpush1.xpose.msra.mxu0 0.0
  %1282 = vmatprep.subr.mxu0 0.0
  %1283 = vmatpush1.xpose.msra.mxu0 0.0
  %1284 = vmatprep.subr.mxu0 0.0
  %1285 = vmatpush1.xpose.msra.mxu0 0.0
  %1286 = vmatprep.subr.mxu0 0.0
  %1287 = vmatpush1.xpose.msra.mxu0 0.0
  %1288 = vmatprep.subr.mxu0 0.0
  %1289 = vmatpush1.xpose.msra.mxu0 0.0
  %1290 = vmatprep.subr.mxu0 0.0
  %1291 = vmatpush1.xpose.msra.mxu0 0.0
  %1292 = vmatprep.subr.mxu0 0.0
  %1293 = vmatpush1.xpose.msra.mxu0 0.0
  %1294 = vmatprep.subr.mxu0 0.0
  %1295 = vmatpush1.xpose.msra.mxu0 0.0
  %1296 = vmatprep.subr.mxu0 0.0
  %1297 = vmatpush1.xpose.msra.mxu0 0.0
  %1298 = vmatprep.subr.mxu0 0.0
  %1299 = vmatpush1.xpose.msra.mxu0 0.0
  %1300 = vmatprep.subr.mxu0 0.0
  %1301 = vmatpush1.xpose.msra.mxu0 0.0
  %1302 = vmatprep.mubr.f32.mxu0 0.0
  %1303 = vmatmul.mubr.f32.gmra.mrb[0].mxu0 %v1230
  %v1304 = vpop.f32.mrb[0].mxu0
  %v1305 = vadd.f32 0.0, %v1304
  %v1306 = vpop.f32.mrb[0].mxu0
  %1307 = vdwg.mxu0
  %v1309 = vsel %vm122, %v41, 0
  %v1312 = vsel %vm122, %v72, 0
  %v1315 = vsel %vm122, %v73, 0
  %1317 = vmatprep.subr.mxu0 0.0
  %1318 = vmatpush1.xpose.msra.mxu0 %v1312
  %1319 = vmatprep.subr.mxu0 0.0
  %1320 = vmatpush1.xpose.msra.mxu0 %v1315
  %1321 = vmatprep.subr.mxu0 0.0
  %1322 = vmatpush1.xpose.msra.mxu0 0.0
  %1323 = vmatprep.subr.mxu0 0.0
  %1324 = vmatpush1.xpose.msra.mxu0 0.0
  %1325 = vmatprep.subr.mxu0 0.0
  %1326 = vmatpush1.xpose.msra.mxu0 0.0
  %1327 = vmatprep.subr.mxu0 0.0
  %1328 = vmatpush1.xpose.msra.mxu0 0.0
  %1329 = vmatprep.subr.mxu0 0.0
  %1330 = vmatpush1.xpose.msra.mxu0 0.0
  %1331 = vmatprep.subr.mxu0 0.0
  %1332 = vmatpush1.xpose.msra.mxu0 0.0
  %1333 = vmatprep.subr.mxu0 0.0
  %1334 = vmatpush1.xpose.msra.mxu0 0.0
  %1335 = vmatprep.subr.mxu0 0.0
  %1336 = vmatpush1.xpose.msra.mxu0 0.0
  %1337 = vmatprep.subr.mxu0 0.0
  %1338 = vmatpush1.xpose.msra.mxu0 0.0
  %1339 = vmatprep.subr.mxu0 0.0
  %1340 = vmatpush1.xpose.msra.mxu0 0.0
  %1341 = vmatprep.subr.mxu0 0.0
  %1342 = vmatpush1.xpose.msra.mxu0 0.0
  %1343 = vmatprep.subr.mxu0 0.0
  %1344 = vmatpush1.xpose.msra.mxu0 0.0
  %1345 = vmatprep.subr.mxu0 0.0
  %1346 = vmatpush1.xpose.msra.mxu0 0.0
  %1347 = vmatprep.subr.mxu0 0.0
  %1348 = vmatpush1.xpose.msra.mxu0 0.0
  %1349 = vmatprep.subr.mxu0 0.0
  %1350 = vmatpush1.xpose.msra.mxu0 0.0
  %1351 = vmatprep.subr.mxu0 0.0
  %1352 = vmatpush1.xpose.msra.mxu0 0.0
  %1353 = vmatprep.subr.mxu0 0.0
  %1354 = vmatpush1.xpose.msra.mxu0 0.0
  %1355 = vmatprep.subr.mxu0 0.0
  %1356 = vmatpush1.xpose.msra.mxu0 0.0
  %1357 = vmatprep.subr.mxu0 0.0
  %1358 = vmatpush1.xpose.msra.mxu0 0.0
  %1359 = vmatprep.subr.mxu0 0.0
  %1360 = vmatpush1.xpose.msra.mxu0 0.0
  %1361 = vmatprep.subr.mxu0 0.0
  %1362 = vmatpush1.xpose.msra.mxu0 0.0
  %1363 = vmatprep.subr.mxu0 0.0
  %1364 = vmatpush1.xpose.msra.mxu0 0.0
  %1365 = vmatprep.subr.mxu0 0.0
  %1366 = vmatpush1.xpose.msra.mxu0 0.0
  %1367 = vmatprep.subr.mxu0 0.0
  %1368 = vmatpush1.xpose.msra.mxu0 0.0
  %1369 = vmatprep.subr.mxu0 0.0
  %1370 = vmatpush1.xpose.msra.mxu0 0.0
  %1371 = vmatprep.subr.mxu0 0.0
  %1372 = vmatpush1.xpose.msra.mxu0 0.0
  %1373 = vmatprep.subr.mxu0 0.0
  %1374 = vmatpush1.xpose.msra.mxu0 0.0
  %1375 = vmatprep.subr.mxu0 0.0
  %1376 = vmatpush1.xpose.msra.mxu0 0.0
  %1377 = vmatprep.subr.mxu0 0.0
  %1378 = vmatpush1.xpose.msra.mxu0 0.0
  %1379 = vmatprep.subr.mxu0 0.0
  %1380 = vmatpush1.xpose.msra.mxu0 0.0
  %1381 = vmatprep.mubr.f32.mxu0 0.0
  %1382 = vmatmul.mubr.f32.gmra.mrb[0].mxu0 %v1309
  %v1383 = vpop.f32.mrb[0].mxu0
  %v1384 = vadd.f32 0.0, %v1383
  %v1385 = vpop.f32.mrb[0].mxu0
  %1386 = vdwg.mxu0
  %v1387 = vmul.f32 %v199, 0.5
  %v1388 = vmul.f32 %v278, 0.5
  %v1389 = vmul.f32 %v357, 0.5
  %v1390 = vmul.f32 %v436, 0.5
  %v1391 = vmul.f32 %v515, 0.5
  %v1392 = vmul.f32 %v594, 0.5
  %v1393 = vmul.f32 %v673, 0.5
  %v1394 = vmul.f32 %v752, 0.5
  %v1395 = vmul.f32 %v831, 0.5
  %v1396 = vmul.f32 %v910, 0.5
  %v1397 = vmul.f32 %v989, 0.5
  %v1398 = vmul.f32 %v1068, 0.5
  %v1399 = vmul.f32 %v1147, 0.5
  %v1400 = vmul.f32 %v1226, 0.5
  %v1401 = vmul.f32 %v1305, 0.5
  %v1402 = vmul.f32 %v1384, 0.5
  %v1403 = vmul.f32 %v199, 0.70710677
  %v1404 = vmul.f32 %v278, 0.70710677
  %v1405 = vmul.f32 %v357, 0.70710677
  %v1406 = vmul.f32 %v436, 0.70710677
  %v1407 = vmul.f32 %v515, 0.70710677
  %v1408 = vmul.f32 %v594, 0.70710677
  %v1409 = vmul.f32 %v673, 0.70710677
  %v1410 = vmul.f32 %v752, 0.70710677
  %v1411 = vmul.f32 %v831, 0.70710677
  %v1412 = vmul.f32 %v910, 0.70710677
  %v1413 = vmul.f32 %v989, 0.70710677
  %v1414 = vmul.f32 %v1068, 0.70710677
  %v1415 = vmul.f32 %v1147, 0.70710677
  %v1416 = vmul.f32 %v1226, 0.70710677
  %v1417 = vmul.f32 %v1305, 0.70710677
  %v1418 = vmul.f32 %v1384, 0.70710677
  %v1419 = verf.f32.pop %v1403
  %v1420 = verf.f32.pop %v1404
  %v1421 = verf.f32.pop %v1405
  %v1422 = verf.f32.pop %v1406
  %v1423 = verf.f32.pop %v1407
  %v1424 = verf.f32.pop %v1408
  %v1425 = verf.f32.pop %v1409
  %v1426 = verf.f32.pop %v1410
  %v1427 = verf.f32.pop %v1411
  %v1428 = verf.f32.pop %v1412
  %v1429 = verf.f32.pop %v1413
  %v1430 = verf.f32.pop %v1414
  %v1431 = verf.f32.pop %v1415
  %v1432 = verf.f32.pop %v1416
  %v1433 = verf.f32.pop %v1417
  %v1434 = verf.f32.pop %v1418
  %v1435 = vadd.f32 %v1419, 1.0
  %v1436 = vadd.f32 %v1420, 1.0
  %v1437 = vadd.f32 %v1421, 1.0
  %v1438 = vadd.f32 %v1422, 1.0
  %v1439 = vadd.f32 %v1423, 1.0
  %v1440 = vadd.f32 %v1424, 1.0
  %v1441 = vadd.f32 %v1425, 1.0
  %v1442 = vadd.f32 %v1426, 1.0
  %v1443 = vadd.f32 %v1427, 1.0
  %v1444 = vadd.f32 %v1428, 1.0
  %v1445 = vadd.f32 %v1429, 1.0
  %v1446 = vadd.f32 %v1430, 1.0
  %v1447 = vadd.f32 %v1431, 1.0
  %v1448 = vadd.f32 %v1432, 1.0
  %v1449 = vadd.f32 %v1433, 1.0
  %v1450 = vadd.f32 %v1434, 1.0
  %v1451 = vmul.f32 %v1387, %v1435
  %v1452 = vmul.f32 %v1388, %v1436
  %v1453 = vmul.f32 %v1389, %v1437
  %v1454 = vmul.f32 %v1390, %v1438
  %v1455 = vmul.f32 %v1391, %v1439
  %v1456 = vmul.f32 %v1392, %v1440
  %v1457 = vmul.f32 %v1393, %v1441
  %v1458 = vmul.f32 %v1394, %v1442
  %v1459 = vmul.f32 %v1395, %v1443
  %v1460 = vmul.f32 %v1396, %v1444
  %v1461 = vmul.f32 %v1397, %v1445
  %v1462 = vmul.f32 %v1398, %v1446
  %v1463 = vmul.f32 %v1399, %v1447
  %v1464 = vmul.f32 %v1400, %v1448
  %v1465 = vmul.f32 %v1401, %v1449
  %v1466 = vmul.f32 %v1402, %v1450
  %vm1467 = vcmask 24576
  %v1468 = vsel %vm1467, %v74, -inf
  %1469 = vmax.xlane.f32.xlu0 %v1468
  %v1470 = vpop.xlane.xlu0 %1469
  %v1471 = vsel %vm1467, %v75, -inf
  %1472 = vmax.xlane.f32.xlu0 %v1471
  %v1473 = vpop.xlane.xlu0 %1472
  %v1474 = vsel %vm1467, %v76, -inf
  %1475 = vmax.xlane.f32.xlu0 %v1474
  %v1476 = vpop.xlane.xlu0 %1475
  %v1477 = vsel %vm1467, %v77, -inf
  %1478 = vmax.xlane.f32.xlu0 %v1477
  %v1479 = vpop.xlane.xlu0 %1478
  %v1480 = vsel %vm1467, %v78, -inf
  %1481 = vmax.xlane.f32.xlu0 %v1480
  %v1482 = vpop.xlane.xlu0 %1481
  %v1483 = vsel %vm1467, %v79, -inf
  %1484 = vmax.xlane.f32.xlu0 %v1483
  %v1485 = vpop.xlane.xlu0 %1484
  %v1486 = vsel %vm1467, %v80, -inf
  %1487 = vmax.xlane.f32.xlu0 %v1486
  %v1488 = vpop.xlane.xlu0 %1487
  %v1489 = vsel %vm1467, %v81, -inf
  %1490 = vmax.xlane.f32.xlu0 %v1489
  %v1491 = vpop.xlane.xlu0 %1490
  %v1492 = vsel %vm1467, %v82, -inf
  %1493 = vmax.xlane.f32.xlu0 %v1492
  %v1494 = vpop.xlane.xlu0 %1493
  %v1495 = vsel %vm1467, %v83, -inf
  %1496 = vmax.xlane.f32.xlu0 %v1495
  %v1497 = vpop.xlane.xlu0 %1496
  %v1498 = vsel %vm1467, %v84, -inf
  %1499 = vmax.xlane.f32.xlu0 %v1498
  %v1500 = vpop.xlane.xlu0 %1499
  %v1501 = vsel %vm1467, %v85, -inf
  %1502 = vmax.xlane.f32.xlu0 %v1501
  %v1503 = vpop.xlane.xlu0 %1502
  %v1504 = vsel %vm1467, %v86, -inf
  %1505 = vmax.xlane.f32.xlu0 %v1504
  %v1506 = vpop.xlane.xlu0 %1505
  %v1507 = vsel %vm1467, %v87, -inf
  %1508 = vmax.xlane.f32.xlu0 %v1507
  %v1509 = vpop.xlane.xlu0 %1508
  %v1510 = vsel %vm1467, %v88, -inf
  %1511 = vmax.xlane.f32.xlu0 %v1510
  %v1512 = vpop.xlane.xlu0 %1511
  %v1513 = vsel %vm1467, %v89, -inf
  %1514 = vmax.xlane.f32.xlu0 %v1513
  %v1515 = vpop.xlane.xlu0 %1514
  %v1516 = vsub.f32 %v74, %v1470
  %v1517 = vsub.f32 %v75, %v1473
  %v1518 = vsub.f32 %v76, %v1476
  %v1519 = vsub.f32 %v77, %v1479
  %v1520 = vsub.f32 %v78, %v1482
  %v1521 = vsub.f32 %v79, %v1485
  %v1522 = vsub.f32 %v80, %v1488
  %v1523 = vsub.f32 %v81, %v1491
  %v1524 = vsub.f32 %v82, %v1494
  %v1525 = vsub.f32 %v83, %v1497
  %v1526 = vsub.f32 %v84, %v1500
  %v1527 = vsub.f32 %v85, %v1503
  %v1528 = vsub.f32 %v86, %v1506
  %v1529 = vsub.f32 %v87, %v1509
  %v1530 = vsub.f32 %v88, %v1512
  %v1531 = vsub.f32 %v89, %v1515
  %v1532 = vmul.f32 %v1516, 1.442695
  %v1533 = vpow.pop %v1532
  %v1534 = vmul.f32 %v1517, 1.442695
  %v1535 = vpow.pop %v1534
  %v1536 = vmul.f32 %v1518, 1.442695
  %v1537 = vpow.pop %v1536
  %v1538 = vmul.f32 %v1519, 1.442695
  %v1539 = vpow.pop %v1538
  %v1540 = vmul.f32 %v1520, 1.442695
  %v1541 = vpow.pop %v1540
  %v1542 = vmul.f32 %v1521, 1.442695
  %v1543 = vpow.pop %v1542
  %v1544 = vmul.f32 %v1522, 1.442695
  %v1545 = vpow.pop %v1544
  %v1546 = vmul.f32 %v1523, 1.442695
  %v1547 = vpow.pop %v1546
  %v1548 = vmul.f32 %v1524, 1.442695
  %v1549 = vpow.pop %v1548
  %v1550 = vmul.f32 %v1525, 1.442695
  %v1551 = vpow.pop %v1550
  %v1552 = vmul.f32 %v1526, 1.442695
  %v1553 = vpow.pop %v1552
  %v1554 = vmul.f32 %v1527, 1.442695
  %v1555 = vpow.pop %v1554
  %v1556 = vmul.f32 %v1528, 1.442695
  %v1557 = vpow.pop %v1556
  %v1558 = vmul.f32 %v1529, 1.442695
  %v1559 = vpow.pop %v1558
  %v1560 = vmul.f32 %v1530, 1.442695
  %v1561 = vpow.pop %v1560
  %v1562 = vmul.f32 %v1531, 1.442695
  %v1563 = vpow.pop %v1562
  %v1564 = vsel %vm1467, %v1533, 0.0
  %1565 = vadd.xlane.f32.xlu0 %v1564
  %v1566 = vpop.xlane.xlu0 %1565
  %v1567 = vsel %vm1467, %v1535, 0.0
  %1568 = vadd.xlane.f32.xlu0 %v1567
  %v1569 = vpop.xlane.xlu0 %1568
  %v1570 = vsel %vm1467, %v1537, 0.0
  %1571 = vadd.xlane.f32.xlu0 %v1570
  %v1572 = vpop.xlane.xlu0 %1571
  %v1573 = vsel %vm1467, %v1539, 0.0
  %1574 = vadd.xlane.f32.xlu0 %v1573
  %v1575 = vpop.xlane.xlu0 %1574
  %v1576 = vsel %vm1467, %v1541, 0.0
  %1577 = vadd.xlane.f32.xlu0 %v1576
  %v1578 = vpop.xlane.xlu0 %1577
  %v1579 = vsel %vm1467, %v1543, 0.0
  %1580 = vadd.xlane.f32.xlu0 %v1579
  %v1581 = vpop.xlane.xlu0 %1580
  %v1582 = vsel %vm1467, %v1545, 0.0
  %1583 = vadd.xlane.f32.xlu0 %v1582
  %v1584 = vpop.xlane.xlu0 %1583
  %v1585 = vsel %vm1467, %v1547, 0.0
  %1586 = vadd.xlane.f32.xlu0 %v1585
  %v1587 = vpop.xlane.xlu0 %1586
  %v1588 = vsel %vm1467, %v1549, 0.0
  %1589 = vadd.xlane.f32.xlu0 %v1588
  %v1590 = vpop.xlane.xlu0 %1589
  %v1591 = vsel %vm1467, %v1551, 0.0
  %1592 = vadd.xlane.f32.xlu0 %v1591
  %v1593 = vpop.xlane.xlu0 %1592
  %v1594 = vsel %vm1467, %v1553, 0.0
  %1595 = vadd.xlane.f32.xlu0 %v1594
  %v1596 = vpop.xlane.xlu0 %1595
  %v1597 = vsel %vm1467, %v1555, 0.0
  %1598 = vadd.xlane.f32.xlu0 %v1597
  %v1599 = vpop.xlane.xlu0 %1598
  %v1600 = vsel %vm1467, %v1557, 0.0
  %1601 = vadd.xlane.f32.xlu0 %v1600
  %v1602 = vpop.xlane.xlu0 %1601
  %v1603 = vsel %vm1467, %v1559, 0.0
  %1604 = vadd.xlane.f32.xlu0 %v1603
  %v1605 = vpop.xlane.xlu0 %1604
  %v1606 = vsel %vm1467, %v1561, 0.0
  %1607 = vadd.xlane.f32.xlu0 %v1606
  %v1608 = vpop.xlane.xlu0 %1607
  %v1609 = vsel %vm1467, %v1563, 0.0
  %1610 = vadd.xlane.f32.xlu0 %v1609
  %v1611 = vpop.xlane.xlu0 %1610
  %v1612 = vrcp.pop %v1566
  %v1613 = vrcp.pop %v1569
  %v1614 = vrcp.pop %v1572
  %v1615 = vrcp.pop %v1575
  %v1616 = vrcp.pop %v1578
  %v1617 = vrcp.pop %v1581
  %v1618 = vrcp.pop %v1584
  %v1619 = vrcp.pop %v1587
  %v1620 = vrcp.pop %v1590
  %v1621 = vrcp.pop %v1593
  %v1622 = vrcp.pop %v1596
  %v1623 = vrcp.pop %v1599
  %v1624 = vrcp.pop %v1602
  %v1625 = vrcp.pop %v1605
  %v1626 = vrcp.pop %v1608
  %v1627 = vrcp.pop %v1611
  %v1628 = vmul.f32 %v1533, %v1612
  %v1629 = vmul.f32 %v1535, %v1613
  %v1630 = vmul.f32 %v1537, %v1614
  %v1631 = vmul.f32 %v1539, %v1615
  %v1632 = vmul.f32 %v1541, %v1616
  %v1633 = vmul.f32 %v1543, %v1617
  %v1634 = vmul.f32 %v1545, %v1618
  %v1635 = vmul.f32 %v1547, %v1619
  %v1636 = vmul.f32 %v1549, %v1620
  %v1637 = vmul.f32 %v1551, %v1621
  %v1638 = vmul.f32 %v1553, %v1622
  %v1639 = vmul.f32 %v1555, %v1623
  %v1640 = vmul.f32 %v1557, %v1624
  %v1641 = vmul.f32 %v1559, %v1625
  %v1642 = vmul.f32 %v1561, %v1626
  %v1643 = vmul.f32 %v1563, %v1627
  %vm1644 = vcmask 57376
  %v1645 = vsel %vm1644, %v74, -inf
  %1646 = vmax.xlane.f32.xlu0 %v1645
  %v1647 = vpop.xlane.xlu0 %1646
  %v1648 = vsel %vm1644, %v75, -inf
  %1649 = vmax.xlane.f32.xlu0 %v1648
  %v1650 = vpop.xlane.xlu0 %1649
  %v1651 = vsel %vm1644, %v76, -inf
  %1652 = vmax.xlane.f32.xlu0 %v1651
  %v1653 = vpop.xlane.xlu0 %1652
  %v1654 = vsel %vm1644, %v77, -inf
  %1655 = vmax.xlane.f32.xlu0 %v1654
  %v1656 = vpop.xlane.xlu0 %1655
  %v1657 = vsel %vm1644, %v78, -inf
  %1658 = vmax.xlane.f32.xlu0 %v1657
  %v1659 = vpop.xlane.xlu0 %1658
  %v1660 = vsel %vm1644, %v79, -inf
  %1661 = vmax.xlane.f32.xlu0 %v1660
  %v1662 = vpop.xlane.xlu0 %1661
  %v1663 = vsel %vm1644, %v80, -inf
  %1664 = vmax.xlane.f32.xlu0 %v1663
  %v1665 = vpop.xlane.xlu0 %1664
  %v1666 = vsel %vm1644, %v81, -inf
  %1667 = vmax.xlane.f32.xlu0 %v1666
  %v1668 = vpop.xlane.xlu0 %1667
  %v1669 = vsel %vm1644, %v82, -inf
  %1670 = vmax.xlane.f32.xlu0 %v1669
  %v1671 = vpop.xlane.xlu0 %1670
  %v1672 = vsel %vm1644, %v83, -inf
  %1673 = vmax.xlane.f32.xlu0 %v1672
  %v1674 = vpop.xlane.xlu0 %1673
  %v1675 = vsel %vm1644, %v84, -inf
  %1676 = vmax.xlane.f32.xlu0 %v1675
  %v1677 = vpop.xlane.xlu0 %1676
  %v1678 = vsel %vm1644, %v85, -inf
  %1679 = vmax.xlane.f32.xlu0 %v1678
  %v1680 = vpop.xlane.xlu0 %1679
  %v1681 = vsel %vm1644, %v86, -inf
  %1682 = vmax.xlane.f32.xlu0 %v1681
  %v1683 = vpop.xlane.xlu0 %1682
  %v1684 = vsel %vm1644, %v87, -inf
  %1685 = vmax.xlane.f32.xlu0 %v1684
  %v1686 = vpop.xlane.xlu0 %1685
  %v1687 = vsel %vm1644, %v88, -inf
  %1688 = vmax.xlane.f32.xlu0 %v1687
  %v1689 = vpop.xlane.xlu0 %1688
  %v1690 = vsel %vm1644, %v89, -inf
  %1691 = vmax.xlane.f32.xlu0 %v1690
  %v1692 = vpop.xlane.xlu0 %1691
  %v1693 = vsub.f32 %v74, %v1647
  %v1694 = vsub.f32 %v75, %v1650
  %v1695 = vsub.f32 %v76, %v1653
  %v1696 = vsub.f32 %v77, %v1656
  %v1697 = vsub.f32 %v78, %v1659
  %v1698 = vsub.f32 %v79, %v1662
  %v1699 = vsub.f32 %v80, %v1665
  %v1700 = vsub.f32 %v81, %v1668
  %v1701 = vsub.f32 %v82, %v1671
  %v1702 = vsub.f32 %v83, %v1674
  %v1703 = vsub.f32 %v84, %v1677
  %v1704 = vsub.f32 %v85, %v1680
  %v1705 = vsub.f32 %v86, %v1683
  %v1706 = vsub.f32 %v87, %v1686
  %v1707 = vsub.f32 %v88, %v1689
  %v1708 = vsub.f32 %v89, %v1692
  %v1709 = vmul.f32 %v1693, 1.442695
  %v1710 = vpow.pop %v1709
  %v1711 = vmul.f32 %v1694, 1.442695
  %v1712 = vpow.pop %v1711
  %v1713 = vmul.f32 %v1695, 1.442695
  %v1714 = vpow.pop %v1713
  %v1715 = vmul.f32 %v1696, 1.442695
  %v1716 = vpow.pop %v1715
  %v1717 = vmul.f32 %v1697, 1.442695
  %v1718 = vpow.pop %v1717
  %v1719 = vmul.f32 %v1698, 1.442695
  %v1720 = vpow.pop %v1719
  %v1721 = vmul.f32 %v1699, 1.442695
  %v1722 = vpow.pop %v1721
  %v1723 = vmul.f32 %v1700, 1.442695
  %v1724 = vpow.pop %v1723
  %v1725 = vmul.f32 %v1701, 1.442695
  %v1726 = vpow.pop %v1725
  %v1727 = vmul.f32 %v1702, 1.442695
  %v1728 = vpow.pop %v1727
  %v1729 = vmul.f32 %v1703, 1.442695
  %v1730 = vpow.pop %v1729
  %v1731 = vmul.f32 %v1704, 1.442695
  %v1732 = vpow.pop %v1731
  %v1733 = vmul.f32 %v1705, 1.442695
  %v1734 = vpow.pop %v1733
  %v1735 = vmul.f32 %v1706, 1.442695
  %v1736 = vpow.pop %v1735
  %v1737 = vmul.f32 %v1707, 1.442695
  %v1738 = vpow.pop %v1737
  %v1739 = vmul.f32 %v1708, 1.442695
  %v1740 = vpow.pop %v1739
  %v1757 = vlaneseq
  %v1758 = vshrl.u32 %v1757, 7
  %v1759 = vsub.s32 0, %v1758
  %v1760 = vrot.slane %v1710, %v1759
  %v1761 = vlaneseq
  %v1762 = vshrl.u32 %v1761, 7
  %v1763 = vsub.s32 0, %v1762
  %v1764 = vrot.slane %v1712, %v1763
  %v1765 = vlaneseq
  %v1766 = vshrl.u32 %v1765, 7
  %v1767 = vsub.s32 0, %v1766
  %v1768 = vrot.slane %v1714, %v1767
  %v1769 = vlaneseq
  %v1770 = vshrl.u32 %v1769, 7
  %v1771 = vsub.s32 0, %v1770
  %v1772 = vrot.slane %v1716, %v1771
  %v1773 = vlaneseq
  %v1774 = vshrl.u32 %v1773, 7
  %v1775 = vsub.s32 0, %v1774
  %v1776 = vrot.slane %v1718, %v1775
  %v1777 = vlaneseq
  %v1778 = vshrl.u32 %v1777, 7
  %v1779 = vsub.s32 0, %v1778
  %v1780 = vrot.slane %v1720, %v1779
  %v1781 = vlaneseq
  %v1782 = vshrl.u32 %v1781, 7
  %v1783 = vsub.s32 0, %v1782
  %v1784 = vrot.slane %v1722, %v1783
  %v1785 = vlaneseq
  %v1786 = vshrl.u32 %v1785, 7
  %v1787 = vsub.s32 0, %v1786
  %v1788 = vrot.slane %v1724, %v1787
  %v1789 = vlaneseq
  %v1790 = vshrl.u32 %v1789, 7
  %v1791 = vsub.s32 0, %v1790
  %v1792 = vrot.slane %v1726, %v1791
  %v1793 = vlaneseq
  %v1794 = vshrl.u32 %v1793, 7
  %v1795 = vsub.s32 0, %v1794
  %v1796 = vrot.slane %v1728, %v1795
  %v1797 = vlaneseq
  %v1798 = vshrl.u32 %v1797, 7
  %v1799 = vsub.s32 0, %v1798
  %v1800 = vrot.slane %v1730, %v1799
  %v1801 = vlaneseq
  %v1802 = vshrl.u32 %v1801, 7
  %v1803 = vsub.s32 0, %v1802
  %v1804 = vrot.slane %v1732, %v1803
  %v1805 = vlaneseq
  %v1806 = vshrl.u32 %v1805, 7
  %v1807 = vsub.s32 0, %v1806
  %v1808 = vrot.slane %v1734, %v1807
  %v1809 = vlaneseq
  %v1810 = vshrl.u32 %v1809, 7
  %v1811 = vsub.s32 0, %v1810
  %v1812 = vrot.slane %v1736, %v1811
  %v1813 = vlaneseq
  %v1814 = vshrl.u32 %v1813, 7
  %v1815 = vsub.s32 0, %v1814
  %v1816 = vrot.slane %v1738, %v1815
  %v1817 = vlaneseq
  %v1818 = vshrl.u32 %v1817, 7
  %v1819 = vsub.s32 0, %v1818
  %v1820 = vrot.slane %v1740, %v1819
  %1821 = vrot.lane.b32.xlu0 %v1760, 124
  %v1822 = vpop.permute.xlu0 %1821
  %1823 = vrot.lane.b32.xlu0 %v1764, 124
  %v1824 = vpop.permute.xlu0 %1823
  %1825 = vrot.lane.b32.xlu0 %v1768, 124
  %v1826 = vpop.permute.xlu0 %1825
  %1827 = vrot.lane.b32.xlu0 %v1772, 124
  %v1828 = vpop.permute.xlu0 %1827
  %1829 = vrot.lane.b32.xlu0 %v1776, 124
  %v1830 = vpop.permute.xlu0 %1829
  %1831 = vrot.lane.b32.xlu0 %v1780, 124
  %v1832 = vpop.permute.xlu0 %1831
  %1833 = vrot.lane.b32.xlu0 %v1784, 124
  %v1834 = vpop.permute.xlu0 %1833
  %1835 = vrot.lane.b32.xlu0 %v1788, 124
  %v1836 = vpop.permute.xlu0 %1835
  %1837 = vrot.lane.b32.xlu0 %v1792, 124
  %v1838 = vpop.permute.xlu0 %1837
  %1839 = vrot.lane.b32.xlu0 %v1796, 124
  %v1840 = vpop.permute.xlu0 %1839
  %1841 = vrot.lane.b32.xlu0 %v1800, 124
  %v1842 = vpop.permute.xlu0 %1841
  %1843 = vrot.lane.b32.xlu0 %v1804, 124
  %v1844 = vpop.permute.xlu0 %1843
  %1845 = vrot.lane.b32.xlu0 %v1808, 124
  %v1846 = vpop.permute.xlu0 %1845
  %1847 = vrot.lane.b32.xlu0 %v1812, 124
  %v1848 = vpop.permute.xlu0 %1847
  %1849 = vrot.lane.b32.xlu0 %v1816, 124
  %v1850 = vpop.permute.xlu0 %1849
  %1851 = vrot.lane.b32.xlu0 %v1820, 124
  %v1852 = vpop.permute.xlu0 %1851
  %v1869 = vsel %vm1467, %v1822, 0.0
  %1870 = vadd.xlane.f32.xlu0 %v1869
  %v1871 = vpop.xlane.xlu0 %1870
  %v1872 = vsel %vm1467, %v1824, 0.0
  %1873 = vadd.xlane.f32.xlu0 %v1872
  %v1874 = vpop.xlane.xlu0 %1873
  %v1875 = vsel %vm1467, %v1826, 0.0
  %1876 = vadd.xlane.f32.xlu0 %v1875
  %v1877 = vpop.xlane.xlu0 %1876
  %v1878 = vsel %vm1467, %v1828, 0.0
  %1879 = vadd.xlane.f32.xlu0 %v1878
  %v1880 = vpop.xlane.xlu0 %1879
  %v1881 = vsel %vm1467, %v1830, 0.0
  %1882 = vadd.xlane.f32.xlu0 %v1881
  %v1883 = vpop.xlane.xlu0 %1882
  %v1884 = vsel %vm1467, %v1832, 0.0
  %1885 = vadd.xlane.f32.xlu0 %v1884
  %v1886 = vpop.xlane.xlu0 %1885
  %v1887 = vsel %vm1467, %v1834, 0.0
  %1888 = vadd.xlane.f32.xlu0 %v1887
  %v1889 = vpop.xlane.xlu0 %1888
  %v1890 = vsel %vm1467, %v1836, 0.0
  %1891 = vadd.xlane.f32.xlu0 %v1890
  %v1892 = vpop.xlane.xlu0 %1891
  %v1893 = vsel %vm1467, %v1838, 0.0
  %1894 = vadd.xlane.f32.xlu0 %v1893
  %v1895 = vpop.xlane.xlu0 %1894
  %v1896 = vsel %vm1467, %v1840, 0.0
  %1897 = vadd.xlane.f32.xlu0 %v1896
  %v1898 = vpop.xlane.xlu0 %1897
  %v1899 = vsel %vm1467, %v1842, 0.0
  %1900 = vadd.xlane.f32.xlu0 %v1899
  %v1901 = vpop.xlane.xlu0 %1900
  %v1902 = vsel %vm1467, %v1844, 0.0
  %1903 = vadd.xlane.f32.xlu0 %v1902
  %v1904 = vpop.xlane.xlu0 %1903
  %v1905 = vsel %vm1467, %v1846, 0.0
  %1906 = vadd.xlane.f32.xlu0 %v1905
  %v1907 = vpop.xlane.xlu0 %1906
  %v1908 = vsel %vm1467, %v1848, 0.0
  %1909 = vadd.xlane.f32.xlu0 %v1908
  %v1910 = vpop.xlane.xlu0 %1909
  %v1911 = vsel %vm1467, %v1850, 0.0
  %1912 = vadd.xlane.f32.xlu0 %v1911
  %v1913 = vpop.xlane.xlu0 %1912
  %v1914 = vsel %vm1467, %v1852, 0.0
  %1915 = vadd.xlane.f32.xlu0 %v1914
  %v1916 = vpop.xlane.xlu0 %1915
  %v1917 = vrcp.pop %v1871
  %v1918 = vrcp.pop %v1874
  %v1919 = vrcp.pop %v1877
  %v1920 = vrcp.pop %v1880
  %v1921 = vrcp.pop %v1883
  %v1922 = vrcp.pop %v1886
  %v1923 = vrcp.pop %v1889
  %v1924 = vrcp.pop %v1892
  %v1925 = vrcp.pop %v1895
  %v1926 = vrcp.pop %v1898
  %v1927 = vrcp.pop %v1901
  %v1928 = vrcp.pop %v1904
  %v1929 = vrcp.pop %v1907
  %v1930 = vrcp.pop %v1910
  %v1931 = vrcp.pop %v1913
  %v1932 = vrcp.pop %v1916
  %v1933 = vmul.f32 %v1710, %v1917
  %v1934 = vmul.f32 %v1712, %v1918
  %v1935 = vmul.f32 %v1714, %v1919
  %v1936 = vmul.f32 %v1716, %v1920
  %v1937 = vmul.f32 %v1718, %v1921
  %v1938 = vmul.f32 %v1720, %v1922
  %v1939 = vmul.f32 %v1722, %v1923
  %v1940 = vmul.f32 %v1724, %v1924
  %v1941 = vmul.f32 %v1726, %v1925
  %v1942 = vmul.f32 %v1728, %v1926
  %v1943 = vmul.f32 %v1730, %v1927
  %v1944 = vmul.f32 %v1732, %v1928
  %v1945 = vmul.f32 %v1734, %v1929
  %v1946 = vmul.f32 %v1736, %v1930
  %v1947 = vmul.f32 %v1738, %v1931
  %v1948 = vmul.f32 %v1740, %v1932
  %vm1949 = vcmask 90176
  %v1950 = vsel %vm1949, %v74, -inf
  %1951 = vmax.xlane.f32.xlu0 %v1950
  %v1952 = vpop.xlane.xlu0 %1951
  %v1953 = vsel %vm1949, %v75, -inf
  %1954 = vmax.xlane.f32.xlu0 %v1953
  %v1955 = vpop.xlane.xlu0 %1954
  %v1956 = vsel %vm1949, %v76, -inf
  %1957 = vmax.xlane.f32.xlu0 %v1956
  %v1958 = vpop.xlane.xlu0 %1957
  %v1959 = vsel %vm1949, %v77, -inf
  %1960 = vmax.xlane.f32.xlu0 %v1959
  %v1961 = vpop.xlane.xlu0 %1960
  %v1962 = vsel %vm1949, %v78, -inf
  %1963 = vmax.xlane.f32.xlu0 %v1962
  %v1964 = vpop.xlane.xlu0 %1963
  %v1965 = vsel %vm1949, %v79, -inf
  %1966 = vmax.xlane.f32.xlu0 %v1965
  %v1967 = vpop.xlane.xlu0 %1966
  %v1968 = vsel %vm1949, %v80, -inf
  %1969 = vmax.xlane.f32.xlu0 %v1968
  %v1970 = vpop.xlane.xlu0 %1969
  %v1971 = vsel %vm1949, %v81, -inf
  %1972 = vmax.xlane.f32.xlu0 %v1971
  %v1973 = vpop.xlane.xlu0 %1972
  %v1974 = vsel %vm1949, %v82, -inf
  %1975 = vmax.xlane.f32.xlu0 %v1974
  %v1976 = vpop.xlane.xlu0 %1975
  %v1977 = vsel %vm1949, %v83, -inf
  %1978 = vmax.xlane.f32.xlu0 %v1977
  %v1979 = vpop.xlane.xlu0 %1978
  %v1980 = vsel %vm1949, %v84, -inf
  %1981 = vmax.xlane.f32.xlu0 %v1980
  %v1982 = vpop.xlane.xlu0 %1981
  %v1983 = vsel %vm1949, %v85, -inf
  %1984 = vmax.xlane.f32.xlu0 %v1983
  %v1985 = vpop.xlane.xlu0 %1984
  %v1986 = vsel %vm1949, %v86, -inf
  %1987 = vmax.xlane.f32.xlu0 %v1986
  %v1988 = vpop.xlane.xlu0 %1987
  %v1989 = vsel %vm1949, %v87, -inf
  %1990 = vmax.xlane.f32.xlu0 %v1989
  %v1991 = vpop.xlane.xlu0 %1990
  %v1992 = vsel %vm1949, %v88, -inf
  %1993 = vmax.xlane.f32.xlu0 %v1992
  %v1994 = vpop.xlane.xlu0 %1993
  %v1995 = vsel %vm1949, %v89, -inf
  %1996 = vmax.xlane.f32.xlu0 %v1995
  %v1997 = vpop.xlane.xlu0 %1996
  %v1998 = vsub.f32 %v74, %v1952
  %v1999 = vsub.f32 %v75, %v1955
  %v2000 = vsub.f32 %v76, %v1958
  %v2001 = vsub.f32 %v77, %v1961
  %v2002 = vsub.f32 %v78, %v1964
  %v2003 = vsub.f32 %v79, %v1967
  %v2004 = vsub.f32 %v80, %v1970
  %v2005 = vsub.f32 %v81, %v1973
  %v2006 = vsub.f32 %v82, %v1976
  %v2007 = vsub.f32 %v83, %v1979
  %v2008 = vsub.f32 %v84, %v1982
  %v2009 = vsub.f32 %v85, %v1985
  %v2010 = vsub.f32 %v86, %v1988
  %v2011 = vsub.f32 %v87, %v1991
  %v2012 = vsub.f32 %v88, %v1994
  %v2013 = vsub.f32 %v89, %v1997
  %v2014 = vmul.f32 %v1998, 1.442695
  %v2015 = vpow.pop %v2014
  %v2016 = vmul.f32 %v1999, 1.442695
  %v2017 = vpow.pop %v2016
  %v2018 = vmul.f32 %v2000, 1.442695
  %v2019 = vpow.pop %v2018
  %v2020 = vmul.f32 %v2001, 1.442695
  %v2021 = vpow.pop %v2020
  %v2022 = vmul.f32 %v2002, 1.442695
  %v2023 = vpow.pop %v2022
  %v2024 = vmul.f32 %v2003, 1.442695
  %v2025 = vpow.pop %v2024
  %v2026 = vmul.f32 %v2004, 1.442695
  %v2027 = vpow.pop %v2026
  %v2028 = vmul.f32 %v2005, 1.442695
  %v2029 = vpow.pop %v2028
  %v2030 = vmul.f32 %v2006, 1.442695
  %v2031 = vpow.pop %v2030
  %v2032 = vmul.f32 %v2007, 1.442695
  %v2033 = vpow.pop %v2032
  %v2034 = vmul.f32 %v2008, 1.442695
  %v2035 = vpow.pop %v2034
  %v2036 = vmul.f32 %v2009, 1.442695
  %v2037 = vpow.pop %v2036
  %v2038 = vmul.f32 %v2010, 1.442695
  %v2039 = vpow.pop %v2038
  %v2040 = vmul.f32 %v2011, 1.442695
  %v2041 = vpow.pop %v2040
  %v2042 = vmul.f32 %v2012, 1.442695
  %v2043 = vpow.pop %v2042
  %v2044 = vmul.f32 %v2013, 1.442695
  %v2045 = vpow.pop %v2044
  %v2062 = vlaneseq
  %v2063 = vshrl.u32 %v2062, 7
  %v2064 = vsub.s32 0, %v2063
  %v2065 = vrot.slane %v2015, %v2064
  %v2066 = vlaneseq
  %v2067 = vshrl.u32 %v2066, 7
  %v2068 = vsub.s32 0, %v2067
  %v2069 = vrot.slane %v2017, %v2068
  %v2070 = vlaneseq
  %v2071 = vshrl.u32 %v2070, 7
  %v2072 = vsub.s32 0, %v2071
  %v2073 = vrot.slane %v2019, %v2072
  %v2074 = vlaneseq
  %v2075 = vshrl.u32 %v2074, 7
  %v2076 = vsub.s32 0, %v2075
  %v2077 = vrot.slane %v2021, %v2076
  %v2078 = vlaneseq
  %v2079 = vshrl.u32 %v2078, 7
  %v2080 = vsub.s32 0, %v2079
  %v2081 = vrot.slane %v2023, %v2080
  %v2082 = vlaneseq
  %v2083 = vshrl.u32 %v2082, 7
  %v2084 = vsub.s32 0, %v2083
  %v2085 = vrot.slane %v2025, %v2084
  %v2086 = vlaneseq
  %v2087 = vshrl.u32 %v2086, 7
  %v2088 = vsub.s32 0, %v2087
  %v2089 = vrot.slane %v2027, %v2088
  %v2090 = vlaneseq
  %v2091 = vshrl.u32 %v2090, 7
  %v2092 = vsub.s32 0, %v2091
  %v2093 = vrot.slane %v2029, %v2092
  %v2094 = vlaneseq
  %v2095 = vshrl.u32 %v2094, 7
  %v2096 = vsub.s32 0, %v2095
  %v2097 = vrot.slane %v2031, %v2096
  %v2098 = vlaneseq
  %v2099 = vshrl.u32 %v2098, 7
  %v2100 = vsub.s32 0, %v2099
  %v2101 = vrot.slane %v2033, %v2100
  %v2102 = vlaneseq
  %v2103 = vshrl.u32 %v2102, 7
  %v2104 = vsub.s32 0, %v2103
  %v2105 = vrot.slane %v2035, %v2104
  %v2106 = vlaneseq
  %v2107 = vshrl.u32 %v2106, 7
  %v2108 = vsub.s32 0, %v2107
  %v2109 = vrot.slane %v2037, %v2108
  %v2110 = vlaneseq
  %v2111 = vshrl.u32 %v2110, 7
  %v2112 = vsub.s32 0, %v2111
  %v2113 = vrot.slane %v2039, %v2112
  %v2114 = vlaneseq
  %v2115 = vshrl.u32 %v2114, 7
  %v2116 = vsub.s32 0, %v2115
  %v2117 = vrot.slane %v2041, %v2116
  %v2118 = vlaneseq
  %v2119 = vshrl.u32 %v2118, 7
  %v2120 = vsub.s32 0, %v2119
  %v2121 = vrot.slane %v2043, %v2120
  %v2122 = vlaneseq
  %v2123 = vshrl.u32 %v2122, 7
  %v2124 = vsub.s32 0, %v2123
  %v2125 = vrot.slane %v2045, %v2124
  %2126 = vrot.lane.b32.xlu0 %v2065, 120
  %v2127 = vpop.permute.xlu0 %2126
  %2128 = vrot.lane.b32.xlu0 %v2069, 120
  %v2129 = vpop.permute.xlu0 %2128
  %2130 = vrot.lane.b32.xlu0 %v2073, 120
  %v2131 = vpop.permute.xlu0 %2130
  %2132 = vrot.lane.b32.xlu0 %v2077, 120
  %v2133 = vpop.permute.xlu0 %2132
  %2134 = vrot.lane.b32.xlu0 %v2081, 120
  %v2135 = vpop.permute.xlu0 %2134
  %2136 = vrot.lane.b32.xlu0 %v2085, 120
  %v2137 = vpop.permute.xlu0 %2136
  %2138 = vrot.lane.b32.xlu0 %v2089, 120
  %v2139 = vpop.permute.xlu0 %2138
  %2140 = vrot.lane.b32.xlu0 %v2093, 120
  %v2141 = vpop.permute.xlu0 %2140
  %2142 = vrot.lane.b32.xlu0 %v2097, 120
  %v2143 = vpop.permute.xlu0 %2142
  %2144 = vrot.lane.b32.xlu0 %v2101, 120
  %v2145 = vpop.permute.xlu0 %2144
  %2146 = vrot.lane.b32.xlu0 %v2105, 120
  %v2147 = vpop.permute.xlu0 %2146
  %2148 = vrot.lane.b32.xlu0 %v2109, 120
  %v2149 = vpop.permute.xlu0 %2148
  %2150 = vrot.lane.b32.xlu0 %v2113, 120
  %v2151 = vpop.permute.xlu0 %2150
  %2152 = vrot.lane.b32.xlu0 %v2117, 120
  %v2153 = vpop.permute.xlu0 %2152
  %2154 = vrot.lane.b32.xlu0 %v2121, 120
  %v2155 = vpop.permute.xlu0 %2154
  %2156 = vrot.lane.b32.xlu0 %v2125, 120
  %v2157 = vpop.permute.xlu0 %2156
  %v2174 = vsel %vm1467, %v2127, 0.0
  %2175 = vadd.xlane.f32.xlu0 %v2174
  %v2176 = vpop.xlane.xlu0 %2175
  %v2177 = vsel %vm1467, %v2129, 0.0
  %2178 = vadd.xlane.f32.xlu0 %v2177
  %v2179 = vpop.xlane.xlu0 %2178
  %v2180 = vsel %vm1467, %v2131, 0.0
  %2181 = vadd.xlane.f32.xlu0 %v2180
  %v2182 = vpop.xlane.xlu0 %2181
  %v2183 = vsel %vm1467, %v2133, 0.0
  %2184 = vadd.xlane.f32.xlu0 %v2183
  %v2185 = vpop.xlane.xlu0 %2184
  %v2186 = vsel %vm1467, %v2135, 0.0
  %2187 = vadd.xlane.f32.xlu0 %v2186
  %v2188 = vpop.xlane.xlu0 %2187
  %v2189 = vsel %vm1467, %v2137, 0.0
  %2190 = vadd.xlane.f32.xlu0 %v2189
  %v2191 = vpop.xlane.xlu0 %2190
  %v2192 = vsel %vm1467, %v2139, 0.0
  %2193 = vadd.xlane.f32.xlu0 %v2192
  %v2194 = vpop.xlane.xlu0 %2193
  %v2195 = vsel %vm1467, %v2141, 0.0
  %2196 = vadd.xlane.f32.xlu0 %v2195
  %v2197 = vpop.xlane.xlu0 %2196
  %v2198 = vsel %vm1467, %v2143, 0.0
  %2199 = vadd.xlane.f32.xlu0 %v2198
  %v2200 = vpop.xlane.xlu0 %2199
  %v2201 = vsel %vm1467, %v2145, 0.0
  %2202 = vadd.xlane.f32.xlu0 %v2201
  %v2203 = vpop.xlane.xlu0 %2202
  %v2204 = vsel %vm1467, %v2147, 0.0
  %2205 = vadd.xlane.f32.xlu0 %v2204
  %v2206 = vpop.xlane.xlu0 %2205
  %v2207 = vsel %vm1467, %v2149, 0.0
  %2208 = vadd.xlane.f32.xlu0 %v2207
  %v2209 = vpop.xlane.xlu0 %2208
  %v2210 = vsel %vm1467, %v2151, 0.0
  %2211 = vadd.xlane.f32.xlu0 %v2210
  %v2212 = vpop.xlane.xlu0 %2211
  %v2213 = vsel %vm1467, %v2153, 0.0
  %2214 = vadd.xlane.f32.xlu0 %v2213
  %v2215 = vpop.xlane.xlu0 %2214
  %v2216 = vsel %vm1467, %v2155, 0.0
  %2217 = vadd.xlane.f32.xlu0 %v2216
  %v2218 = vpop.xlane.xlu0 %2217
  %v2219 = vsel %vm1467, %v2157, 0.0
  %2220 = vadd.xlane.f32.xlu0 %v2219
  %v2221 = vpop.xlane.xlu0 %2220
  %v2222 = vrcp.pop %v2176
  %v2223 = vrcp.pop %v2179
  %v2224 = vrcp.pop %v2182
  %v2225 = vrcp.pop %v2185
  %v2226 = vrcp.pop %v2188
  %v2227 = vrcp.pop %v2191
  %v2228 = vrcp.pop %v2194
  %v2229 = vrcp.pop %v2197
  %v2230 = vrcp.pop %v2200
  %v2231 = vrcp.pop %v2203
  %v2232 = vrcp.pop %v2206
  %v2233 = vrcp.pop %v2209
  %v2234 = vrcp.pop %v2212
  %v2235 = vrcp.pop %v2215
  %v2236 = vrcp.pop %v2218
  %v2237 = vrcp.pop %v2221
  %v2238 = vmul.f32 %v2015, %v2222
  %v2239 = vmul.f32 %v2017, %v2223
  %v2240 = vmul.f32 %v2019, %v2224
  %v2241 = vmul.f32 %v2021, %v2225
  %v2242 = vmul.f32 %v2023, %v2226
  %v2243 = vmul.f32 %v2025, %v2227
  %v2244 = vmul.f32 %v2027, %v2228
  %v2245 = vmul.f32 %v2029, %v2229
  %v2246 = vmul.f32 %v2031, %v2230
  %v2247 = vmul.f32 %v2033, %v2231
  %v2248 = vmul.f32 %v2035, %v2232
  %v2249 = vmul.f32 %v2037, %v2233
  %v2250 = vmul.f32 %v2039, %v2234
  %v2251 = vmul.f32 %v2041, %v2235
  %v2252 = vmul.f32 %v2043, %v2236
  %v2253 = vmul.f32 %v2045, %v2237
  %vm2254 = vcmask 122976
  %v2255 = vsel %vm2254, %v74, -inf
  %2256 = vmax.xlane.f32.xlu0 %v2255
  %v2257 = vpop.xlane.xlu0 %2256
  %v2258 = vsel %vm2254, %v75, -inf
  %2259 = vmax.xlane.f32.xlu0 %v2258
  %v2260 = vpop.xlane.xlu0 %2259
  %v2261 = vsel %vm2254, %v76, -inf
  %2262 = vmax.xlane.f32.xlu0 %v2261
  %v2263 = vpop.xlane.xlu0 %2262
  %v2264 = vsel %vm2254, %v77, -inf
  %2265 = vmax.xlane.f32.xlu0 %v2264
  %v2266 = vpop.xlane.xlu0 %2265
  %v2267 = vsel %vm2254, %v78, -inf
  %2268 = vmax.xlane.f32.xlu0 %v2267
  %v2269 = vpop.xlane.xlu0 %2268
  %v2270 = vsel %vm2254, %v79, -inf
  %2271 = vmax.xlane.f32.xlu0 %v2270
  %v2272 = vpop.xlane.xlu0 %2271
  %v2273 = vsel %vm2254, %v80, -inf
  %2274 = vmax.xlane.f32.xlu0 %v2273
  %v2275 = vpop.xlane.xlu0 %2274
  %v2276 = vsel %vm2254, %v81, -inf
  %2277 = vmax.xlane.f32.xlu0 %v2276
  %v2278 = vpop.xlane.xlu0 %2277
  %v2279 = vsel %vm2254, %v82, -inf
  %2280 = vmax.xlane.f32.xlu0 %v2279
  %v2281 = vpop.xlane.xlu0 %2280
  %v2282 = vsel %vm2254, %v83, -inf
  %2283 = vmax.xlane.f32.xlu0 %v2282
  %v2284 = vpop.xlane.xlu0 %2283
  %v2285 = vsel %vm2254, %v84, -inf
  %2286 = vmax.xlane.f32.xlu0 %v2285
  %v2287 = vpop.xlane.xlu0 %2286
  %v2288 = vsel %vm2254, %v85, -inf
  %2289 = vmax.xlane.f32.xlu0 %v2288
  %v2290 = vpop.xlane.xlu0 %2289
  %v2291 = vsel %vm2254, %v86, -inf
  %2292 = vmax.xlane.f32.xlu0 %v2291
  %v2293 = vpop.xlane.xlu0 %2292
  %v2294 = vsel %vm2254, %v87, -inf
  %2295 = vmax.xlane.f32.xlu0 %v2294
  %v2296 = vpop.xlane.xlu0 %2295
  %v2297 = vsel %vm2254, %v88, -inf
  %2298 = vmax.xlane.f32.xlu0 %v2297
  %v2299 = vpop.xlane.xlu0 %2298
  %v2300 = vsel %vm2254, %v89, -inf
  %2301 = vmax.xlane.f32.xlu0 %v2300
  %v2302 = vpop.xlane.xlu0 %2301
  %v2303 = vsub.f32 %v74, %v2257
  %v2304 = vsub.f32 %v75, %v2260
  %v2305 = vsub.f32 %v76, %v2263
  %v2306 = vsub.f32 %v77, %v2266
  %v2307 = vsub.f32 %v78, %v2269
  %v2308 = vsub.f32 %v79, %v2272
  %v2309 = vsub.f32 %v80, %v2275
  %v2310 = vsub.f32 %v81, %v2278
  %v2311 = vsub.f32 %v82, %v2281
  %v2312 = vsub.f32 %v83, %v2284
  %v2313 = vsub.f32 %v84, %v2287
  %v2314 = vsub.f32 %v85, %v2290
  %v2315 = vsub.f32 %v86, %v2293
  %v2316 = vsub.f32 %v87, %v2296
  %v2317 = vsub.f32 %v88, %v2299
  %v2318 = vsub.f32 %v89, %v2302
  %v2319 = vmul.f32 %v2303, 1.442695
  %v2320 = vpow.pop %v2319
  %v2321 = vmul.f32 %v2304, 1.442695
  %v2322 = vpow.pop %v2321
  %v2323 = vmul.f32 %v2305, 1.442695
  %v2324 = vpow.pop %v2323
  %v2325 = vmul.f32 %v2306, 1.442695
  %v2326 = vpow.pop %v2325
  %v2327 = vmul.f32 %v2307, 1.442695
  %v2328 = vpow.pop %v2327
  %v2329 = vmul.f32 %v2308, 1.442695
  %v2330 = vpow.pop %v2329
  %v2331 = vmul.f32 %v2309, 1.442695
  %v2332 = vpow.pop %v2331
  %v2333 = vmul.f32 %v2310, 1.442695
  %v2334 = vpow.pop %v2333
  %v2335 = vmul.f32 %v2311, 1.442695
  %v2336 = vpow.pop %v2335
  %v2337 = vmul.f32 %v2312, 1.442695
  %v2338 = vpow.pop %v2337
  %v2339 = vmul.f32 %v2313, 1.442695
  %v2340 = vpow.pop %v2339
  %v2341 = vmul.f32 %v2314, 1.442695
  %v2342 = vpow.pop %v2341
  %v2343 = vmul.f32 %v2315, 1.442695
  %v2344 = vpow.pop %v2343
  %v2345 = vmul.f32 %v2316, 1.442695
  %v2346 = vpow.pop %v2345
  %v2347 = vmul.f32 %v2317, 1.442695
  %v2348 = vpow.pop %v2347
  %v2349 = vmul.f32 %v2318, 1.442695
  %v2350 = vpow.pop %v2349
  %v2367 = vlaneseq
  %v2368 = vshrl.u32 %v2367, 7
  %v2369 = vsub.s32 0, %v2368
  %v2370 = vrot.slane %v2320, %v2369
  %v2371 = vlaneseq
  %v2372 = vshrl.u32 %v2371, 7
  %v2373 = vsub.s32 0, %v2372
  %v2374 = vrot.slane %v2322, %v2373
  %v2375 = vlaneseq
  %v2376 = vshrl.u32 %v2375, 7
  %v2377 = vsub.s32 0, %v2376
  %v2378 = vrot.slane %v2324, %v2377
  %v2379 = vlaneseq
  %v2380 = vshrl.u32 %v2379, 7
  %v2381 = vsub.s32 0, %v2380
  %v2382 = vrot.slane %v2326, %v2381
  %v2383 = vlaneseq
  %v2384 = vshrl.u32 %v2383, 7
  %v2385 = vsub.s32 0, %v2384
  %v2386 = vrot.slane %v2328, %v2385
  %v2387 = vlaneseq
  %v2388 = vshrl.u32 %v2387, 7
  %v2389 = vsub.s32 0, %v2388
  %v2390 = vrot.slane %v2330, %v2389
  %v2391 = vlaneseq
  %v2392 = vshrl.u32 %v2391, 7
  %v2393 = vsub.s32 0, %v2392
  %v2394 = vrot.slane %v2332, %v2393
  %v2395 = vlaneseq
  %v2396 = vshrl.u32 %v2395, 7
  %v2397 = vsub.s32 0, %v2396
  %v2398 = vrot.slane %v2334, %v2397
  %v2399 = vlaneseq
  %v2400 = vshrl.u32 %v2399, 7
  %v2401 = vsub.s32 0, %v2400
  %v2402 = vrot.slane %v2336, %v2401
  %v2403 = vlaneseq
  %v2404 = vshrl.u32 %v2403, 7
  %v2405 = vsub.s32 0, %v2404
  %v2406 = vrot.slane %v2338, %v2405
  %v2407 = vlaneseq
  %v2408 = vshrl.u32 %v2407, 7
  %v2409 = vsub.s32 0, %v2408
  %v2410 = vrot.slane %v2340, %v2409
  %v2411 = vlaneseq
  %v2412 = vshrl.u32 %v2411, 7
  %v2413 = vsub.s32 0, %v2412
  %v2414 = vrot.slane %v2342, %v2413
  %v2415 = vlaneseq
  %v2416 = vshrl.u32 %v2415, 7
  %v2417 = vsub.s32 0, %v2416
  %v2418 = vrot.slane %v2344, %v2417
  %v2419 = vlaneseq
  %v2420 = vshrl.u32 %v2419, 7
  %v2421 = vsub.s32 0, %v2420
  %v2422 = vrot.slane %v2346, %v2421
  %v2423 = vlaneseq
  %v2424 = vshrl.u32 %v2423, 7
  %v2425 = vsub.s32 0, %v2424
  %v2426 = vrot.slane %v2348, %v2425
  %v2427 = vlaneseq
  %v2428 = vshrl.u32 %v2427, 7
  %v2429 = vsub.s32 0, %v2428
  %v2430 = vrot.slane %v2350, %v2429
  %2431 = vrot.lane.b32.xlu0 %v2370, 116
  %v2432 = vpop.permute.xlu0 %2431
  %2433 = vrot.lane.b32.xlu0 %v2374, 116
  %v2434 = vpop.permute.xlu0 %2433
  %2435 = vrot.lane.b32.xlu0 %v2378, 116
  %v2436 = vpop.permute.xlu0 %2435
  %2437 = vrot.lane.b32.xlu0 %v2382, 116
  %v2438 = vpop.permute.xlu0 %2437
  %2439 = vrot.lane.b32.xlu0 %v2386, 116
  %v2440 = vpop.permute.xlu0 %2439
  %2441 = vrot.lane.b32.xlu0 %v2390, 116
  %v2442 = vpop.permute.xlu0 %2441
  %2443 = vrot.lane.b32.xlu0 %v2394, 116
  %v2444 = vpop.permute.xlu0 %2443
  %2445 = vrot.lane.b32.xlu0 %v2398, 116
  %v2446 = vpop.permute.xlu0 %2445
  %2447 = vrot.lane.b32.xlu0 %v2402, 116
  %v2448 = vpop.permute.xlu0 %2447
  %2449 = vrot.lane.b32.xlu0 %v2406, 116
  %v2450 = vpop.permute.xlu0 %2449
  %2451 = vrot.lane.b32.xlu0 %v2410, 116
  %v2452 = vpop.permute.xlu0 %2451
  %2453 = vrot.lane.b32.xlu0 %v2414, 116
  %v2454 = vpop.permute.xlu0 %2453
  %2455 = vrot.lane.b32.xlu0 %v2418, 116
  %v2456 = vpop.permute.xlu0 %2455
  %2457 = vrot.lane.b32.xlu0 %v2422, 116
  %v2458 = vpop.permute.xlu0 %2457
  %2459 = vrot.lane.b32.xlu0 %v2426, 116
  %v2460 = vpop.permute.xlu0 %2459
  %2461 = vrot.lane.b32.xlu0 %v2430, 116
  %v2462 = vpop.permute.xlu0 %2461
  %v2479 = vsel %vm1467, %v2432, 0.0
  %2480 = vadd.xlane.f32.xlu0 %v2479
  %v2481 = vpop.xlane.xlu0 %2480
  %v2482 = vsel %vm1467, %v2434, 0.0
  %2483 = vadd.xlane.f32.xlu0 %v2482
  %v2484 = vpop.xlane.xlu0 %2483
  %v2485 = vsel %vm1467, %v2436, 0.0
  %2486 = vadd.xlane.f32.xlu0 %v2485
  %v2487 = vpop.xlane.xlu0 %2486
  %v2488 = vsel %vm1467, %v2438, 0.0
  %2489 = vadd.xlane.f32.xlu0 %v2488
  %v2490 = vpop.xlane.xlu0 %2489
  %v2491 = vsel %vm1467, %v2440, 0.0
  %2492 = vadd.xlane.f32.xlu0 %v2491
  %v2493 = vpop.xlane.xlu0 %2492
  %v2494 = vsel %vm1467, %v2442, 0.0
  %2495 = vadd.xlane.f32.xlu0 %v2494
  %v2496 = vpop.xlane.xlu0 %2495
  %v2497 = vsel %vm1467, %v2444, 0.0
  %2498 = vadd.xlane.f32.xlu0 %v2497
  %v2499 = vpop.xlane.xlu0 %2498
  %v2500 = vsel %vm1467, %v2446, 0.0
  %2501 = vadd.xlane.f32.xlu0 %v2500
  %v2502 = vpop.xlane.xlu0 %2501
  %v2503 = vsel %vm1467, %v2448, 0.0
  %2504 = vadd.xlane.f32.xlu0 %v2503
  %v2505 = vpop.xlane.xlu0 %2504
  %v2506 = vsel %vm1467, %v2450, 0.0
  %2507 = vadd.xlane.f32.xlu0 %v2506
  %v2508 = vpop.xlane.xlu0 %2507
  %v2509 = vsel %vm1467, %v2452, 0.0
  %2510 = vadd.xlane.f32.xlu0 %v2509
  %v2511 = vpop.xlane.xlu0 %2510
  %v2512 = vsel %vm1467, %v2454, 0.0
  %2513 = vadd.xlane.f32.xlu0 %v2512
  %v2514 = vpop.xlane.xlu0 %2513
  %v2515 = vsel %vm1467, %v2456, 0.0
  %2516 = vadd.xlane.f32.xlu0 %v2515
  %v2517 = vpop.xlane.xlu0 %2516
  %v2518 = vsel %vm1467, %v2458, 0.0
  %2519 = vadd.xlane.f32.xlu0 %v2518
  %v2520 = vpop.xlane.xlu0 %2519
  %v2521 = vsel %vm1467, %v2460, 0.0
  %2522 = vadd.xlane.f32.xlu0 %v2521
  %v2523 = vpop.xlane.xlu0 %2522
  %v2524 = vsel %vm1467, %v2462, 0.0
  %2525 = vadd.xlane.f32.xlu0 %v2524
  %v2526 = vpop.xlane.xlu0 %2525
  %v2527 = vrcp.pop %v2481
  %v2528 = vrcp.pop %v2484
  %v2529 = vrcp.pop %v2487
  %v2530 = vrcp.pop %v2490
  %v2531 = vrcp.pop %v2493
  %v2532 = vrcp.pop %v2496
  %v2533 = vrcp.pop %v2499
  %v2534 = vrcp.pop %v2502
  %v2535 = vrcp.pop %v2505
  %v2536 = vrcp.pop %v2508
  %v2537 = vrcp.pop %v2511
  %v2538 = vrcp.pop %v2514
  %v2539 = vrcp.pop %v2517
  %v2540 = vrcp.pop %v2520
  %v2541 = vrcp.pop %v2523
  %v2542 = vrcp.pop %v2526
  %v2543 = vmul.f32 %v2320, %v2527
  %v2544 = vmul.f32 %v2322, %v2528
  %v2545 = vmul.f32 %v2324, %v2529
  %v2546 = vmul.f32 %v2326, %v2530
  %v2547 = vmul.f32 %v2328, %v2531
  %v2548 = vmul.f32 %v2330, %v2532
  %v2549 = vmul.f32 %v2332, %v2533
  %v2550 = vmul.f32 %v2334, %v2534
  %v2551 = vmul.f32 %v2336, %v2535
  %v2552 = vmul.f32 %v2338, %v2536
  %v2553 = vmul.f32 %v2340, %v2537
  %v2554 = vmul.f32 %v2342, %v2538
  %v2555 = vmul.f32 %v2344, %v2539
  %v2556 = vmul.f32 %v2346, %v2540
  %v2557 = vmul.f32 %v2348, %v2541
  %v2558 = vmul.f32 %v2350, %v2542
  %vm2559 = vcmask 31744
  %v2560 = vsel %vm2559, %v1628, %v1933
  %v2561 = vsel %vm2559, %v1629, %v1934
  %v2562 = vsel %vm2559, %v1630, %v1935
  %v2563 = vsel %vm2559, %v1631, %v1936
  %v2564 = vsel %vm2559, %v1632, %v1937
  %v2565 = vsel %vm2559, %v1633, %v1938
  %v2566 = vsel %vm2559, %v1634, %v1939
  %v2567 = vsel %vm2559, %v1635, %v1940
  %v2568 = vsel %vm2559, %v1636, %v1941
  %v2569 = vsel %vm2559, %v1637, %v1942
  %v2570 = vsel %vm2559, %v1638, %v1943
  %v2571 = vsel %vm2559, %v1639, %v1944
  %v2572 = vsel %vm2559, %v1640, %v1945
  %v2573 = vsel %vm2559, %v1641, %v1946
  %v2574 = vsel %vm2559, %v1642, %v1947
  %v2575 = vsel %vm2559, %v1643, %v1948
  %vm2576 = vcmask 64512
  %v2577 = vsel %vm2576, %v2560, %v2238
  %v2578 = vsel %vm2576, %v2561, %v2239
  %v2579 = vsel %vm2576, %v2562, %v2240
  %v2580 = vsel %vm2576, %v2563, %v2241
  %v2581 = vsel %vm2576, %v2564, %v2242
  %v2582 = vsel %vm2576, %v2565, %v2243
  %v2583 = vsel %vm2576, %v2566, %v2244
  %v2584 = vsel %vm2576, %v2567, %v2245
  %v2585 = vsel %vm2576, %v2568, %v2246
  %v2586 = vsel %vm2576, %v2569, %v2247
  %v2587 = vsel %vm2576, %v2570, %v2248
  %v2588 = vsel %vm2576, %v2571, %v2249
  %v2589 = vsel %vm2576, %v2572, %v2250
  %v2590 = vsel %vm2576, %v2573, %v2251
  %v2591 = vsel %vm2576, %v2574, %v2252
  %v2592 = vsel %vm2576, %v2575, %v2253
  %vm2593 = vcmask 97280
  %v2594 = vsel %vm2593, %v2577, %v2543
  %v2595 = vsel %vm2593, %v2578, %v2544
  %v2596 = vsel %vm2593, %v2579, %v2545
  %v2597 = vsel %vm2593, %v2580, %v2546
  %v2598 = vsel %vm2593, %v2581, %v2547
  %v2599 = vsel %vm2593, %v2582, %v2548
  %v2600 = vsel %vm2593, %v2583, %v2549
  %v2601 = vsel %vm2593, %v2584, %v2550
  %v2602 = vsel %vm2593, %v2585, %v2551
  %v2603 = vsel %vm2593, %v2586, %v2552
  %v2604 = vsel %vm2593, %v2587, %v2553
  %v2605 = vsel %vm2593, %v2588, %v2554
  %v2606 = vsel %vm2593, %v2589, %v2555
  %v2607 = vsel %vm2593, %v2590, %v2556
  %v2608 = vsel %vm2593, %v2591, %v2557
  %v2609 = vsel %vm2593, %v2592, %v2558
  %v2610 = vmul.f32 %v1451, %v2594
  %v2611 = vmul.f32 %v1452, %v2595
  %v2612 = vmul.f32 %v1453, %v2596
  %v2613 = vmul.f32 %v1454, %v2597
  %v2614 = vmul.f32 %v1455, %v2598
  %v2615 = vmul.f32 %v1456, %v2599
  %v2616 = vmul.f32 %v1457, %v2600
  %v2617 = vmul.f32 %v1458, %v2601
  %v2618 = vmul.f32 %v1459, %v2602
  %v2619 = vmul.f32 %v1460, %v2603
  %v2620 = vmul.f32 %v1461, %v2604
  %v2621 = vmul.f32 %v1462, %v2605
  %v2622 = vmul.f32 %v1463, %v2606
  %v2623 = vmul.f32 %v1464, %v2607
  %v2624 = vmul.f32 %v1465, %v2608
  %v2625 = vmul.f32 %v1466, %v2609
  %v2626 = vld [vmem:[%s4] sm:$0x1]
  %v2627 = vld [vmem:[%s4 + $0x1] sm:$0x1]
  %v2628 = vld [vmem:[%s4 + $0x2] sm:$0x1]
  %v2629 = vld [vmem:[%s4 + $0x3] sm:$0x1]
  %v2630 = vld [vmem:[%s4 + $0x4] sm:$0x1]
  %v2631 = vld [vmem:[%s4 + $0x5] sm:$0x1]
  %v2632 = vld [vmem:[%s4 + $0x6] sm:$0x1]
  %v2633 = vld [vmem:[%s4 + $0x7] sm:$0x1]
  %v2634 = vld [vmem:[%s4 + $0x8] sm:$0x1]
  %v2635 = vld [vmem:[%s4 + $0x9] sm:$0x1]
  %v2636 = vld [vmem:[%s4 + $0xa] sm:$0x1]
  %v2637 = vld [vmem:[%s4 + $0xb] sm:$0x1]
  %v2638 = vld [vmem:[%s4 + $0xc] sm:$0x1]
  %v2639 = vld [vmem:[%s4 + $0xd] sm:$0x1]
  %v2640 = vld [vmem:[%s4 + $0xe] sm:$0x1]
  %v2641 = vld [vmem:[%s4 + $0xf] sm:$0x1]
  %vm2642 = vcmask 130048
  %v2644 = vsel %vm2642, %v2610, 0
  %2646 = vmatprep.subr.mxu0 0.0
  %2647 = vmatpush1.msra.mxu0 %v90
  %2648 = vmatprep.subr.mxu0 0.0
  %2649 = vmatpush1.msra.mxu0 %v91
  %2650 = vmatprep.subr.mxu0 0.0
  %2651 = vmatpush1.msra.mxu0 0.0
  %2652 = vmatprep.subr.mxu0 0.0
  %2653 = vmatpush1.msra.mxu0 0.0
  %2654 = vmatprep.subr.mxu0 0.0
  %2655 = vmatpush1.msra.mxu0 0.0
  %2656 = vmatprep.subr.mxu0 0.0
  %2657 = vmatpush1.msra.mxu0 0.0
  %2658 = vmatprep.subr.mxu0 0.0
  %2659 = vmatpush1.msra.mxu0 0.0
  %2660 = vmatprep.subr.mxu0 0.0
  %2661 = vmatpush1.msra.mxu0 0.0
  %2662 = vmatprep.subr.mxu0 0.0
  %2663 = vmatpush1.msra.mxu0 0.0
  %2664 = vmatprep.subr.mxu0 0.0
  %2665 = vmatpush1.msra.mxu0 0.0
  %2666 = vmatprep.subr.mxu0 0.0
  %2667 = vmatpush1.msra.mxu0 0.0
  %2668 = vmatprep.subr.mxu0 0.0
  %2669 = vmatpush1.msra.mxu0 0.0
  %2670 = vmatprep.subr.mxu0 0.0
  %2671 = vmatpush1.msra.mxu0 0.0
  %2672 = vmatprep.subr.mxu0 0.0
  %2673 = vmatpush1.msra.mxu0 0.0
  %2674 = vmatprep.subr.mxu0 0.0
  %2675 = vmatpush1.msra.mxu0 0.0
  %2676 = vmatprep.subr.mxu0 0.0
  %2677 = vmatpush1.msra.mxu0 0.0
  %2678 = vmatprep.subr.mxu0 0.0
  %2679 = vmatpush1.msra.mxu0 0.0
  %2680 = vmatprep.subr.mxu0 0.0
  %2681 = vmatpush1.msra.mxu0 0.0
  %2682 = vmatprep.subr.mxu0 0.0
  %2683 = vmatpush1.msra.mxu0 0.0
  %2684 = vmatprep.subr.mxu0 0.0
  %2685 = vmatpush1.msra.mxu0 0.0
  %2686 = vmatprep.subr.mxu0 0.0
  %2687 = vmatpush1.msra.mxu0 0.0
  %2688 = vmatprep.subr.mxu0 0.0
  %2689 = vmatpush1.msra.mxu0 0.0
  %2690 = vmatprep.subr.mxu0 0.0
  %2691 = vmatpush1.msra.mxu0 0.0
  %2692 = vmatprep.subr.mxu0 0.0
  %2693 = vmatpush1.msra.mxu0 0.0
  %2694 = vmatprep.subr.mxu0 0.0
  %2695 = vmatpush1.msra.mxu0 0.0
  %2696 = vmatprep.subr.mxu0 0.0
  %2697 = vmatpush1.msra.mxu0 0.0
  %2698 = vmatprep.subr.mxu0 0.0
  %2699 = vmatpush1.msra.mxu0 0.0
  %2700 = vmatprep.subr.mxu0 0.0
  %2701 = vmatpush1.msra.mxu0 0.0
  %2702 = vmatprep.subr.mxu0 0.0
  %2703 = vmatpush1.msra.mxu0 0.0
  %2704 = vmatprep.subr.mxu0 0.0
  %2705 = vmatpush1.msra.mxu0 0.0
  %2706 = vmatprep.subr.mxu0 0.0
  %2707 = vmatpush1.msra.mxu0 0.0
  %2708 = vmatprep.subr.mxu0 0.0
  %2709 = vmatpush1.msra.mxu0 0.0
  %2710 = vmatprep.mubr.f32.mxu0 0.0
  %2711 = vmatmul.mubr.f32.gmra.mrb[0].mxu0 %v2644
  %v2712 = vpop.f32.mrb[0].mxu0
  %v2713 = vadd.f32 %v2626, %v2712
  %v2714 = vpop.f32.mrb[0].mxu0
  %2715 = vdwg.mxu0
  %v2717 = vsel %vm2642, %v2611, 0
  %2719 = vmatprep.subr.mxu0 0.0
  %2720 = vmatpush1.msra.mxu0 %v92
  %2721 = vmatprep.subr.mxu0 0.0
  %2722 = vmatpush1.msra.mxu0 %v93
  %2723 = vmatprep.subr.mxu0 0.0
  %2724 = vmatpush1.msra.mxu0 0.0
  %2725 = vmatprep.subr.mxu0 0.0
  %2726 = vmatpush1.msra.mxu0 0.0
  %2727 = vmatprep.subr.mxu0 0.0
  %2728 = vmatpush1.msra.mxu0 0.0
  %2729 = vmatprep.subr.mxu0 0.0
  %2730 = vmatpush1.msra.mxu0 0.0
  %2731 = vmatprep.subr.mxu0 0.0
  %2732 = vmatpush1.msra.mxu0 0.0
  %2733 = vmatprep.subr.mxu0 0.0
  %2734 = vmatpush1.msra.mxu0 0.0
  %2735 = vmatprep.subr.mxu0 0.0
  %2736 = vmatpush1.msra.mxu0 0.0
  %2737 = vmatprep.subr.mxu0 0.0
  %2738 = vmatpush1.msra.mxu0 0.0
  %2739 = vmatprep.subr.mxu0 0.0
  %2740 = vmatpush1.msra.mxu0 0.0
  %2741 = vmatprep.subr.mxu0 0.0
  %2742 = vmatpush1.msra.mxu0 0.0
  %2743 = vmatprep.subr.mxu0 0.0
  %2744 = vmatpush1.msra.mxu0 0.0
  %2745 = vmatprep.subr.mxu0 0.0
  %2746 = vmatpush1.msra.mxu0 0.0
  %2747 = vmatprep.subr.mxu0 0.0
  %2748 = vmatpush1.msra.mxu0 0.0
  %2749 = vmatprep.subr.mxu0 0.0
  %2750 = vmatpush1.msra.mxu0 0.0
  %2751 = vmatprep.subr.mxu0 0.0
  %2752 = vmatpush1.msra.mxu0 0.0
  %2753 = vmatprep.subr.mxu0 0.0
  %2754 = vmatpush1.msra.mxu0 0.0
  %2755 = vmatprep.subr.mxu0 0.0
  %2756 = vmatpush1.msra.mxu0 0.0
  %2757 = vmatprep.subr.mxu0 0.0
  %2758 = vmatpush1.msra.mxu0 0.0
  %2759 = vmatprep.subr.mxu0 0.0
  %2760 = vmatpush1.msra.mxu0 0.0
  %2761 = vmatprep.subr.mxu0 0.0
  %2762 = vmatpush1.msra.mxu0 0.0
  %2763 = vmatprep.subr.mxu0 0.0
  %2764 = vmatpush1.msra.mxu0 0.0
  %2765 = vmatprep.subr.mxu0 0.0
  %2766 = vmatpush1.msra.mxu0 0.0
  %2767 = vmatprep.subr.mxu0 0.0
  %2768 = vmatpush1.msra.mxu0 0.0
  %2769 = vmatprep.subr.mxu0 0.0
  %2770 = vmatpush1.msra.mxu0 0.0
  %2771 = vmatprep.subr.mxu0 0.0
  %2772 = vmatpush1.msra.mxu0 0.0
  %2773 = vmatprep.subr.mxu0 0.0
  %2774 = vmatpush1.msra.mxu0 0.0
  %2775 = vmatprep.subr.mxu0 0.0
  %2776 = vmatpush1.msra.mxu0 0.0
  %2777 = vmatprep.subr.mxu0 0.0
  %2778 = vmatpush1.msra.mxu0 0.0
  %2779 = vmatprep.subr.mxu0 0.0
  %2780 = vmatpush1.msra.mxu0 0.0
  %2781 = vmatprep.subr.mxu0 0.0
  %2782 = vmatpush1.msra.mxu0 0.0
  %2783 = vmatprep.mubr.f32.mxu0 0.0
  %2784 = vmatmul.mubr.f32.gmra.mrb[0].mxu0 %v2717
  %v2785 = vpop.f32.mrb[0].mxu0
  %v2786 = vadd.f32 %v2627, %v2785
  %v2787 = vpop.f32.mrb[0].mxu0
  %2788 = vdwg.mxu0
  %v2790 = vsel %vm2642, %v2612, 0
  %2792 = vmatprep.subr.mxu0 0.0
  %2793 = vmatpush1.msra.mxu0 %v94
  %2794 = vmatprep.subr.mxu0 0.0
  %2795 = vmatpush1.msra.mxu0 %v95
  %2796 = vmatprep.subr.mxu0 0.0
  %2797 = vmatpush1.msra.mxu0 0.0
  %2798 = vmatprep.subr.mxu0 0.0
  %2799 = vmatpush1.msra.mxu0 0.0
  %2800 = vmatprep.subr.mxu0 0.0
  %2801 = vmatpush1.msra.mxu0 0.0
  %2802 = vmatprep.subr.mxu0 0.0
  %2803 = vmatpush1.msra.mxu0 0.0
  %2804 = vmatprep.subr.mxu0 0.0
  %2805 = vmatpush1.msra.mxu0 0.0
  %2806 = vmatprep.subr.mxu0 0.0
  %2807 = vmatpush1.msra.mxu0 0.0
  %2808 = vmatprep.subr.mxu0 0.0
  %2809 = vmatpush1.msra.mxu0 0.0
  %2810 = vmatprep.subr.mxu0 0.0
  %2811 = vmatpush1.msra.mxu0 0.0
  %2812 = vmatprep.subr.mxu0 0.0
  %2813 = vmatpush1.msra.mxu0 0.0
  %2814 = vmatprep.subr.mxu0 0.0
  %2815 = vmatpush1.msra.mxu0 0.0
  %2816 = vmatprep.subr.mxu0 0.0
  %2817 = vmatpush1.msra.mxu0 0.0
  %2818 = vmatprep.subr.mxu0 0.0
  %2819 = vmatpush1.msra.mxu0 0.0
  %2820 = vmatprep.subr.mxu0 0.0
  %2821 = vmatpush1.msra.mxu0 0.0
  %2822 = vmatprep.subr.mxu0 0.0
  %2823 = vmatpush1.msra.mxu0 0.0
  %2824 = vmatprep.subr.mxu0 0.0
  %2825 = vmatpush1.msra.mxu0 0.0
  %2826 = vmatprep.subr.mxu0 0.0
  %2827 = vmatpush1.msra.mxu0 0.0
  %2828 = vmatprep.subr.mxu0 0.0
  %2829 = vmatpush1.msra.mxu0 0.0
  %2830 = vmatprep.subr.mxu0 0.0
  %2831 = vmatpush1.msra.mxu0 0.0
  %2832 = vmatprep.subr.mxu0 0.0
  %2833 = vmatpush1.msra.mxu0 0.0
  %2834 = vmatprep.subr.mxu0 0.0
  %2835 = vmatpush1.msra.mxu0 0.0
  %2836 = vmatprep.subr.mxu0 0.0
  %2837 = vmatpush1.msra.mxu0 0.0
  %2838 = vmatprep.subr.mxu0 0.0
  %2839 = vmatpush1.msra.mxu0 0.0
  %2840 = vmatprep.subr.mxu0 0.0
  %2841 = vmatpush1.msra.mxu0 0.0
  %2842 = vmatprep.subr.mxu0 0.0
  %2843 = vmatpush1.msra.mxu0 0.0
  %2844 = vmatprep.subr.mxu0 0.0
  %2845 = vmatpush1.msra.mxu0 0.0
  %2846 = vmatprep.subr.mxu0 0.0
  %2847 = vmatpush1.msra.mxu0 0.0
  %2848 = vmatprep.subr.mxu0 0.0
  %2849 = vmatpush1.msra.mxu0 0.0
  %2850 = vmatprep.subr.mxu0 0.0
  %2851 = vmatpush1.msra.mxu0 0.0
  %2852 = vmatprep.subr.mxu0 0.0
  %2853 = vmatpush1.msra.mxu0 0.0
  %2854 = vmatprep.subr.mxu0 0.0
  %2855 = vmatpush1.msra.mxu0 0.0
  %2856 = vmatprep.mubr.f32.mxu0 0.0
  %2857 = vmatmul.mubr.f32.gmra.mrb[0].mxu0 %v2790
  %v2858 = vpop.f32.mrb[0].mxu0
  %v2859 = vadd.f32 %v2628, %v2858
  %v2860 = vpop.f32.mrb[0].mxu0
  %2861 = vdwg.mxu0
  %v2863 = vsel %vm2642, %v2613, 0
  %2865 = vmatprep.subr.mxu0 0.0
  %2866 = vmatpush1.msra.mxu0 %v96
  %2867 = vmatprep.subr.mxu0 0.0
  %2868 = vmatpush1.msra.mxu0 %v97
  %2869 = vmatprep.subr.mxu0 0.0
  %2870 = vmatpush1.msra.mxu0 0.0
  %2871 = vmatprep.subr.mxu0 0.0
  %2872 = vmatpush1.msra.mxu0 0.0
  %2873 = vmatprep.subr.mxu0 0.0
  %2874 = vmatpush1.msra.mxu0 0.0
  %2875 = vmatprep.subr.mxu0 0.0
  %2876 = vmatpush1.msra.mxu0 0.0
  %2877 = vmatprep.subr.mxu0 0.0
  %2878 = vmatpush1.msra.mxu0 0.0
  %2879 = vmatprep.subr.mxu0 0.0
  %2880 = vmatpush1.msra.mxu0 0.0
  %2881 = vmatprep.subr.mxu0 0.0
  %2882 = vmatpush1.msra.mxu0 0.0
  %2883 = vmatprep.subr.mxu0 0.0
  %2884 = vmatpush1.msra.mxu0 0.0
  %2885 = vmatprep.subr.mxu0 0.0
  %2886 = vmatpush1.msra.mxu0 0.0
  %2887 = vmatprep.subr.mxu0 0.0
  %2888 = vmatpush1.msra.mxu0 0.0
  %2889 = vmatprep.subr.mxu0 0.0
  %2890 = vmatpush1.msra.mxu0 0.0
  %2891 = vmatprep.subr.mxu0 0.0
  %2892 = vmatpush1.msra.mxu0 0.0
  %2893 = vmatprep.subr.mxu0 0.0
  %2894 = vmatpush1.msra.mxu0 0.0
  %2895 = vmatprep.subr.mxu0 0.0
  %2896 = vmatpush1.msra.mxu0 0.0
  %2897 = vmatprep.subr.mxu0 0.0
  %2898 = vmatpush1.msra.mxu0 0.0
  %2899 = vmatprep.subr.mxu0 0.0
  %2900 = vmatpush1.msra.mxu0 0.0
  %2901 = vmatprep.subr.mxu0 0.0
  %2902 = vmatpush1.msra.mxu0 0.0
  %2903 = vmatprep.subr.mxu0 0.0
  %2904 = vmatpush1.msra.mxu0 0.0
  %2905 = vmatprep.subr.mxu0 0.0
  %2906 = vmatpush1.msra.mxu0 0.0
  %2907 = vmatprep.subr.mxu0 0.0
  %2908 = vmatpush1.msra.mxu0 0.0
  %2909 = vmatprep.subr.mxu0 0.0
  %2910 = vmatpush1.msra.mxu0 0.0
  %2911 = vmatprep.subr.mxu0 0.0
  %2912 = vmatpush1.msra.mxu0 0.0
  %2913 = vmatprep.subr.mxu0 0.0
  %2914 = vmatpush1.msra.mxu0 0.0
  %2915 = vmatprep.subr.mxu0 0.0
  %2916 = vmatpush1.msra.mxu0 0.0
  %2917 = vmatprep.subr.mxu0 0.0
  %2918 = vmatpush1.msra.mxu0 0.0
  %2919 = vmatprep.subr.mxu0 0.0
  %2920 = vmatpush1.msra.mxu0 0.0
  %2921 = vmatprep.subr.mxu0 0.0
  %2922 = vmatpush1.msra.mxu0 0.0
  %2923 = vmatprep.subr.mxu0 0.0
  %2924 = vmatpush1.msra.mxu0 0.0
  %2925 = vmatprep.subr.mxu0 0.0
  %2926 = vmatpush1.msra.mxu0 0.0
  %2927 = vmatprep.subr.mxu0 0.0
  %2928 = vmatpush1.msra.mxu0 0.0
  %2929 = vmatprep.mubr.f32.mxu0 0.0
  %2930 = vmatmul.mubr.f32.gmra.mrb[0].mxu0 %v2863
  %v2931 = vpop.f32.mrb[0].mxu0
  %v2932 = vadd.f32 %v2629, %v2931
  %v2933 = vpop.f32.mrb[0].mxu0
  %2934 = vdwg.mxu0
  %v2936 = vsel %vm2642, %v2614, 0
  %2938 = vmatprep.subr.mxu0 0.0
  %2939 = vmatpush1.msra.mxu0 %v98
  %2940 = vmatprep.subr.mxu0 0.0
  %2941 = vmatpush1.msra.mxu0 %v99
  %2942 = vmatprep.subr.mxu0 0.0
  %2943 = vmatpush1.msra.mxu0 0.0
  %2944 = vmatprep.subr.mxu0 0.0
  %2945 = vmatpush1.msra.mxu0 0.0
  %2946 = vmatprep.subr.mxu0 0.0
  %2947 = vmatpush1.msra.mxu0 0.0
  %2948 = vmatprep.subr.mxu0 0.0
  %2949 = vmatpush1.msra.mxu0 0.0
  %2950 = vmatprep.subr.mxu0 0.0
  %2951 = vmatpush1.msra.mxu0 0.0
  %2952 = vmatprep.subr.mxu0 0.0
  %2953 = vmatpush1.msra.mxu0 0.0
  %2954 = vmatprep.subr.mxu0 0.0
  %2955 = vmatpush1.msra.mxu0 0.0
  %2956 = vmatprep.subr.mxu0 0.0
  %2957 = vmatpush1.msra.mxu0 0.0
  %2958 = vmatprep.subr.mxu0 0.0
  %2959 = vmatpush1.msra.mxu0 0.0
  %2960 = vmatprep.subr.mxu0 0.0
  %2961 = vmatpush1.msra.mxu0 0.0
  %2962 = vmatprep.subr.mxu0 0.0
  %2963 = vmatpush1.msra.mxu0 0.0
  %2964 = vmatprep.subr.mxu0 0.0
  %2965 = vmatpush1.msra.mxu0 0.0
  %2966 = vmatprep.subr.mxu0 0.0
  %2967 = vmatpush1.msra.mxu0 0.0
  %2968 = vmatprep.subr.mxu0 0.0
  %2969 = vmatpush1.msra.mxu0 0.0
  %2970 = vmatprep.subr.mxu0 0.0
  %2971 = vmatpush1.msra.mxu0 0.0
  %2972 = vmatprep.subr.mxu0 0.0
  %2973 = vmatpush1.msra.mxu0 0.0
  %2974 = vmatprep.subr.mxu0 0.0
  %2975 = vmatpush1.msra.mxu0 0.0
  %2976 = vmatprep.subr.mxu0 0.0
  %2977 = vmatpush1.msra.mxu0 0.0
  %2978 = vmatprep.subr.mxu0 0.0
  %2979 = vmatpush1.msra.mxu0 0.0
  %2980 = vmatprep.subr.mxu0 0.0
  %2981 = vmatpush1.msra.mxu0 0.0
  %2982 = vmatprep.subr.mxu0 0.0
  %2983 = vmatpush1.msra.mxu0 0.0
  %2984 = vmatprep.subr.mxu0 0.0
  %2985 = vmatpush1.msra.mxu0 0.0
  %2986 = vmatprep.subr.mxu0 0.0
  %2987 = vmatpush1.msra.mxu0 0.0
  %2988 = vmatprep.subr.mxu0 0.0
  %2989 = vmatpush1.msra.mxu0 0.0
  %2990 = vmatprep.subr.mxu0 0.0
  %2991 = vmatpush1.msra.mxu0 0.0
  %2992 = vmatprep.subr.mxu0 0.0
  %2993 = vmatpush1.msra.mxu0 0.0
  %2994 = vmatprep.subr.mxu0 0.0
  %2995 = vmatpush1.msra.mxu0 0.0
  %2996 = vmatprep.subr.mxu0 0.0
  %2997 = vmatpush1.msra.mxu0 0.0
  %2998 = vmatprep.subr.mxu0 0.0
  %2999 = vmatpush1.msra.mxu0 0.0
  %3000 = vmatprep.subr.mxu0 0.0
  %3001 = vmatpush1.msra.mxu0 0.0
  %3002 = vmatprep.mubr.f32.mxu0 0.0
  %3003 = vmatmul.mubr.f32.gmra.mrb[0].mxu0 %v2936
  %v3004 = vpop.f32.mrb[0].mxu0
  %v3005 = vadd.f32 %v2630, %v3004
  %v3006 = vpop.f32.mrb[0].mxu0
  %3007 = vdwg.mxu0
  %v3009 = vsel %vm2642, %v2615, 0
  %3011 = vmatprep.subr.mxu0 0.0
  %3012 = vmatpush1.msra.mxu0 %v100
  %3013 = vmatprep.subr.mxu0 0.0
  %3014 = vmatpush1.msra.mxu0 %v101
  %3015 = vmatprep.subr.mxu0 0.0
  %3016 = vmatpush1.msra.mxu0 0.0
  %3017 = vmatprep.subr.mxu0 0.0
  %3018 = vmatpush1.msra.mxu0 0.0
  %3019 = vmatprep.subr.mxu0 0.0
  %3020 = vmatpush1.msra.mxu0 0.0
  %3021 = vmatprep.subr.mxu0 0.0
  %3022 = vmatpush1.msra.mxu0 0.0
  %3023 = vmatprep.subr.mxu0 0.0
  %3024 = vmatpush1.msra.mxu0 0.0
  %3025 = vmatprep.subr.mxu0 0.0
  %3026 = vmatpush1.msra.mxu0 0.0
  %3027 = vmatprep.subr.mxu0 0.0
  %3028 = vmatpush1.msra.mxu0 0.0
  %3029 = vmatprep.subr.mxu0 0.0
  %3030 = vmatpush1.msra.mxu0 0.0
  %3031 = vmatprep.subr.mxu0 0.0
  %3032 = vmatpush1.msra.mxu0 0.0
  %3033 = vmatprep.subr.mxu0 0.0
  %3034 = vmatpush1.msra.mxu0 0.0
  %3035 = vmatprep.subr.mxu0 0.0
  %3036 = vmatpush1.msra.mxu0 0.0
  %3037 = vmatprep.subr.mxu0 0.0
  %3038 = vmatpush1.msra.mxu0 0.0
  %3039 = vmatprep.subr.mxu0 0.0
  %3040 = vmatpush1.msra.mxu0 0.0
  %3041 = vmatprep.subr.mxu0 0.0
  %3042 = vmatpush1.msra.mxu0 0.0
  %3043 = vmatprep.subr.mxu0 0.0
  %3044 = vmatpush1.msra.mxu0 0.0
  %3045 = vmatprep.subr.mxu0 0.0
  %3046 = vmatpush1.msra.mxu0 0.0
  %3047 = vmatprep.subr.mxu0 0.0
  %3048 = vmatpush1.msra.mxu0 0.0
  %3049 = vmatprep.subr.mxu0 0.0
  %3050 = vmatpush1.msra.mxu0 0.0
  %3051 = vmatprep.subr.mxu0 0.0
  %3052 = vmatpush1.msra.mxu0 0.0
  %3053 = vmatprep.subr.mxu0 0.0
  %3054 = vmatpush1.msra.mxu0 0.0
  %3055 = vmatprep.subr.mxu0 0.0
  %3056 = vmatpush1.msra.mxu0 0.0
  %3057 = vmatprep.subr.mxu0 0.0
  %3058 = vmatpush1.msra.mxu0 0.0
  %3059 = vmatprep.subr.mxu0 0.0
  %3060 = vmatpush1.msra.mxu0 0.0
  %3061 = vmatprep.subr.mxu0 0.0
  %3062 = vmatpush1.msra.mxu0 0.0
  %3063 = vmatprep.subr.mxu0 0.0
  %3064 = vmatpush1.msra.mxu0 0.0
  %3065 = vmatprep.subr.mxu0 0.0
  %3066 = vmatpush1.msra.mxu0 0.0
  %3067 = vmatprep.subr.mxu0 0.0
  %3068 = vmatpush1.msra.mxu0 0.0
  %3069 = vmatprep.subr.mxu0 0.0
  %3070 = vmatpush1.msra.mxu0 0.0
  %3071 = vmatprep.subr.mxu0 0.0
  %3072 = vmatpush1.msra.mxu0 0.0
  %3073 = vmatprep.subr.mxu0 0.0
  %3074 = vmatpush1.msra.mxu0 0.0
  %3075 = vmatprep.mubr.f32.mxu0 0.0
  %3076 = vmatmul.mubr.f32.gmra.mrb[0].mxu0 %v3009
  %v3077 = vpop.f32.mrb[0].mxu0
  %v3078 = vadd.f32 %v2631, %v3077
  %v3079 = vpop.f32.mrb[0].mxu0
  %3080 = vdwg.mxu0
  %v3082 = vsel %vm2642, %v2616, 0
  %3084 = vmatprep.subr.mxu0 0.0
  %3085 = vmatpush1.msra.mxu0 %v102
  %3086 = vmatprep.subr.mxu0 0.0
  %3087 = vmatpush1.msra.mxu0 %v103
  %3088 = vmatprep.subr.mxu0 0.0
  %3089 = vmatpush1.msra.mxu0 0.0
  %3090 = vmatprep.subr.mxu0 0.0
  %3091 = vmatpush1.msra.mxu0 0.0
  %3092 = vmatprep.subr.mxu0 0.0
  %3093 = vmatpush1.msra.mxu0 0.0
  %3094 = vmatprep.subr.mxu0 0.0
  %3095 = vmatpush1.msra.mxu0 0.0
  %3096 = vmatprep.subr.mxu0 0.0
  %3097 = vmatpush1.msra.mxu0 0.0
  %3098 = vmatprep.subr.mxu0 0.0
  %3099 = vmatpush1.msra.mxu0 0.0
  %3100 = vmatprep.subr.mxu0 0.0
  %3101 = vmatpush1.msra.mxu0 0.0
  %3102 = vmatprep.subr.mxu0 0.0
  %3103 = vmatpush1.msra.mxu0 0.0
  %3104 = vmatprep.subr.mxu0 0.0
  %3105 = vmatpush1.msra.mxu0 0.0
  %3106 = vmatprep.subr.mxu0 0.0
  %3107 = vmatpush1.msra.mxu0 0.0
  %3108 = vmatprep.subr.mxu0 0.0
  %3109 = vmatpush1.msra.mxu0 0.0
  %3110 = vmatprep.subr.mxu0 0.0
  %3111 = vmatpush1.msra.mxu0 0.0
  %3112 = vmatprep.subr.mxu0 0.0
  %3113 = vmatpush1.msra.mxu0 0.0
  %3114 = vmatprep.subr.mxu0 0.0
  %3115 = vmatpush1.msra.mxu0 0.0
  %3116 = vmatprep.subr.mxu0 0.0
  %3117 = vmatpush1.msra.mxu0 0.0
  %3118 = vmatprep.subr.mxu0 0.0
  %3119 = vmatpush1.msra.mxu0 0.0
  %3120 = vmatprep.subr.mxu0 0.0
  %3121 = vmatpush1.msra.mxu0 0.0
  %3122 = vmatprep.subr.mxu0 0.0
  %3123 = vmatpush1.msra.mxu0 0.0
  %3124 = vmatprep.subr.mxu0 0.0
  %3125 = vmatpush1.msra.mxu0 0.0
  %3126 = vmatprep.subr.mxu0 0.0
  %3127 = vmatpush1.msra.mxu0 0.0
  %3128 = vmatprep.subr.mxu0 0.0
  %3129 = vmatpush1.msra.mxu0 0.0
  %3130 = vmatprep.subr.mxu0 0.0
  %3131 = vmatpush1.msra.mxu0 0.0
  %3132 = vmatprep.subr.mxu0 0.0
  %3133 = vmatpush1.msra.mxu0 0.0
  %3134 = vmatprep.subr.mxu0 0.0
  %3135 = vmatpush1.msra.mxu0 0.0
  %3136 = vmatprep.subr.mxu0 0.0
  %3137 = vmatpush1.msra.mxu0 0.0
  %3138 = vmatprep.subr.mxu0 0.0
  %3139 = vmatpush1.msra.mxu0 0.0
  %3140 = vmatprep.subr.mxu0 0.0
  %3141 = vmatpush1.msra.mxu0 0.0
  %3142 = vmatprep.subr.mxu0 0.0
  %3143 = vmatpush1.msra.mxu0 0.0
  %3144 = vmatprep.subr.mxu0 0.0
  %3145 = vmatpush1.msra.mxu0 0.0
  %3146 = vmatprep.subr.mxu0 0.0
  %3147 = vmatpush1.msra.mxu0 0.0
  %3148 = vmatprep.mubr.f32.mxu0 0.0
  %3149 = vmatmul.mubr.f32.gmra.mrb[0].mxu0 %v3082
  %v3150 = vpop.f32.mrb[0].mxu0
  %v3151 = vadd.f32 %v2632, %v3150
  %v3152 = vpop.f32.mrb[0].mxu0
  %3153 = vdwg.mxu0
  %v3155 = vsel %vm2642, %v2617, 0
  %3157 = vmatprep.subr.mxu0 0.0
  %3158 = vmatpush1.msra.mxu0 %v104
  %3159 = vmatprep.subr.mxu0 0.0
  %3160 = vmatpush1.msra.mxu0 %v105
  %3161 = vmatprep.subr.mxu0 0.0
  %3162 = vmatpush1.msra.mxu0 0.0
  %3163 = vmatprep.subr.mxu0 0.0
  %3164 = vmatpush1.msra.mxu0 0.0
  %3165 = vmatprep.subr.mxu0 0.0
  %3166 = vmatpush1.msra.mxu0 0.0
  %3167 = vmatprep.subr.mxu0 0.0
  %3168 = vmatpush1.msra.mxu0 0.0
  %3169 = vmatprep.subr.mxu0 0.0
  %3170 = vmatpush1.msra.mxu0 0.0
  %3171 = vmatprep.subr.mxu0 0.0
  %3172 = vmatpush1.msra.mxu0 0.0
  %3173 = vmatprep.subr.mxu0 0.0
  %3174 = vmatpush1.msra.mxu0 0.0
  %3175 = vmatprep.subr.mxu0 0.0
  %3176 = vmatpush1.msra.mxu0 0.0
  %3177 = vmatprep.subr.mxu0 0.0
  %3178 = vmatpush1.msra.mxu0 0.0
  %3179 = vmatprep.subr.mxu0 0.0
  %3180 = vmatpush1.msra.mxu0 0.0
  %3181 = vmatprep.subr.mxu0 0.0
  %3182 = vmatpush1.msra.mxu0 0.0
  %3183 = vmatprep.subr.mxu0 0.0
  %3184 = vmatpush1.msra.mxu0 0.0
  %3185 = vmatprep.subr.mxu0 0.0
  %3186 = vmatpush1.msra.mxu0 0.0
  %3187 = vmatprep.subr.mxu0 0.0
  %3188 = vmatpush1.msra.mxu0 0.0
  %3189 = vmatprep.subr.mxu0 0.0
  %3190 = vmatpush1.msra.mxu0 0.0
  %3191 = vmatprep.subr.mxu0 0.0
  %3192 = vmatpush1.msra.mxu0 0.0
  %3193 = vmatprep.subr.mxu0 0.0
  %3194 = vmatpush1.msra.mxu0 0.0
  %3195 = vmatprep.subr.mxu0 0.0
  %3196 = vmatpush1.msra.mxu0 0.0
  %3197 = vmatprep.subr.mxu0 0.0
  %3198 = vmatpush1.msra.mxu0 0.0
  %3199 = vmatprep.subr.mxu0 0.0
  %3200 = vmatpush1.msra.mxu0 0.0
  %3201 = vmatprep.subr.mxu0 0.0
  %3202 = vmatpush1.msra.mxu0 0.0
  %3203 = vmatprep.subr.mxu0 0.0
  %3204 = vmatpush1.msra.mxu0 0.0
  %3205 = vmatprep.subr.mxu0 0.0
  %3206 = vmatpush1.msra.mxu0 0.0
  %3207 = vmatprep.subr.mxu0 0.0
  %3208 = vmatpush1.msra.mxu0 0.0
  %3209 = vmatprep.subr.mxu0 0.0
  %3210 = vmatpush1.msra.mxu0 0.0
  %3211 = vmatprep.subr.mxu0 0.0
  %3212 = vmatpush1.msra.mxu0 0.0
  %3213 = vmatprep.subr.mxu0 0.0
  %3214 = vmatpush1.msra.mxu0 0.0
  %3215 = vmatprep.subr.mxu0 0.0
  %3216 = vmatpush1.msra.mxu0 0.0
  %3217 = vmatprep.subr.mxu0 0.0
  %3218 = vmatpush1.msra.mxu0 0.0
  %3219 = vmatprep.subr.mxu0 0.0
  %3220 = vmatpush1.msra.mxu0 0.0
  %3221 = vmatprep.mubr.f32.mxu0 0.0
  %3222 = vmatmul.mubr.f32.gmra.mrb[0].mxu0 %v3155
  %v3223 = vpop.f32.mrb[0].mxu0
  %v3224 = vadd.f32 %v2633, %v3223
  %v3225 = vpop.f32.mrb[0].mxu0
  %3226 = vdwg.mxu0
  %v3228 = vsel %vm2642, %v2618, 0
  %3230 = vmatprep.subr.mxu0 0.0
  %3231 = vmatpush1.msra.mxu0 %v106
  %3232 = vmatprep.subr.mxu0 0.0
  %3233 = vmatpush1.msra.mxu0 %v107
  %3234 = vmatprep.subr.mxu0 0.0
  %3235 = vmatpush1.msra.mxu0 0.0
  %3236 = vmatprep.subr.mxu0 0.0
  %3237 = vmatpush1.msra.mxu0 0.0
  %3238 = vmatprep.subr.mxu0 0.0
  %3239 = vmatpush1.msra.mxu0 0.0
  %3240 = vmatprep.subr.mxu0 0.0
  %3241 = vmatpush1.msra.mxu0 0.0
  %3242 = vmatprep.subr.mxu0 0.0
  %3243 = vmatpush1.msra.mxu0 0.0
  %3244 = vmatprep.subr.mxu0 0.0
  %3245 = vmatpush1.msra.mxu0 0.0
  %3246 = vmatprep.subr.mxu0 0.0
  %3247 = vmatpush1.msra.mxu0 0.0
  %3248 = vmatprep.subr.mxu0 0.0
  %3249 = vmatpush1.msra.mxu0 0.0
  %3250 = vmatprep.subr.mxu0 0.0
  %3251 = vmatpush1.msra.mxu0 0.0
  %3252 = vmatprep.subr.mxu0 0.0
  %3253 = vmatpush1.msra.mxu0 0.0
  %3254 = vmatprep.subr.mxu0 0.0
  %3255 = vmatpush1.msra.mxu0 0.0
  %3256 = vmatprep.subr.mxu0 0.0
  %3257 = vmatpush1.msra.mxu0 0.0
  %3258 = vmatprep.subr.mxu0 0.0
  %3259 = vmatpush1.msra.mxu0 0.0
  %3260 = vmatprep.subr.mxu0 0.0
  %3261 = vmatpush1.msra.mxu0 0.0
  %3262 = vmatprep.subr.mxu0 0.0
  %3263 = vmatpush1.msra.mxu0 0.0
  %3264 = vmatprep.subr.mxu0 0.0
  %3265 = vmatpush1.msra.mxu0 0.0
  %3266 = vmatprep.subr.mxu0 0.0
  %3267 = vmatpush1.msra.mxu0 0.0
  %3268 = vmatprep.subr.mxu0 0.0
  %3269 = vmatpush1.msra.mxu0 0.0
  %3270 = vmatprep.subr.mxu0 0.0
  %3271 = vmatpush1.msra.mxu0 0.0
  %3272 = vmatprep.subr.mxu0 0.0
  %3273 = vmatpush1.msra.mxu0 0.0
  %3274 = vmatprep.subr.mxu0 0.0
  %3275 = vmatpush1.msra.mxu0 0.0
  %3276 = vmatprep.subr.mxu0 0.0
  %3277 = vmatpush1.msra.mxu0 0.0
  %3278 = vmatprep.subr.mxu0 0.0
  %3279 = vmatpush1.msra.mxu0 0.0
  %3280 = vmatprep.subr.mxu0 0.0
  %3281 = vmatpush1.msra.mxu0 0.0
  %3282 = vmatprep.subr.mxu0 0.0
  %3283 = vmatpush1.msra.mxu0 0.0
  %3284 = vmatprep.subr.mxu0 0.0
  %3285 = vmatpush1.msra.mxu0 0.0
  %3286 = vmatprep.subr.mxu0 0.0
  %3287 = vmatpush1.msra.mxu0 0.0
  %3288 = vmatprep.subr.mxu0 0.0
  %3289 = vmatpush1.msra.mxu0 0.0
  %3290 = vmatprep.subr.mxu0 0.0
  %3291 = vmatpush1.msra.mxu0 0.0
  %3292 = vmatprep.subr.mxu0 0.0
  %3293 = vmatpush1.msra.mxu0 0.0
  %3294 = vmatprep.mubr.f32.mxu0 0.0
  %3295 = vmatmul.mubr.f32.gmra.mrb[0].mxu0 %v3228
  %v3296 = vpop.f32.mrb[0].mxu0
  %v3297 = vadd.f32 %v2634, %v3296
  %v3298 = vpop.f32.mrb[0].mxu0
  %3299 = vdwg.mxu0
  %v3301 = vsel %vm2642, %v2619, 0
  %3303 = vmatprep.subr.mxu0 0.0
  %3304 = vmatpush1.msra.mxu0 %v108
  %3305 = vmatprep.subr.mxu0 0.0
  %3306 = vmatpush1.msra.mxu0 %v109
  %3307 = vmatprep.subr.mxu0 0.0
  %3308 = vmatpush1.msra.mxu0 0.0
  %3309 = vmatprep.subr.mxu0 0.0
  %3310 = vmatpush1.msra.mxu0 0.0
  %3311 = vmatprep.subr.mxu0 0.0
  %3312 = vmatpush1.msra.mxu0 0.0
  %3313 = vmatprep.subr.mxu0 0.0
  %3314 = vmatpush1.msra.mxu0 0.0
  %3315 = vmatprep.subr.mxu0 0.0
  %3316 = vmatpush1.msra.mxu0 0.0
  %3317 = vmatprep.subr.mxu0 0.0
  %3318 = vmatpush1.msra.mxu0 0.0
  %3319 = vmatprep.subr.mxu0 0.0
  %3320 = vmatpush1.msra.mxu0 0.0
  %3321 = vmatprep.subr.mxu0 0.0
  %3322 = vmatpush1.msra.mxu0 0.0
  %3323 = vmatprep.subr.mxu0 0.0
  %3324 = vmatpush1.msra.mxu0 0.0
  %3325 = vmatprep.subr.mxu0 0.0
  %3326 = vmatpush1.msra.mxu0 0.0
  %3327 = vmatprep.subr.mxu0 0.0
  %3328 = vmatpush1.msra.mxu0 0.0
  %3329 = vmatprep.subr.mxu0 0.0
  %3330 = vmatpush1.msra.mxu0 0.0
  %3331 = vmatprep.subr.mxu0 0.0
  %3332 = vmatpush1.msra.mxu0 0.0
  %3333 = vmatprep.subr.mxu0 0.0
  %3334 = vmatpush1.msra.mxu0 0.0
  %3335 = vmatprep.subr.mxu0 0.0
  %3336 = vmatpush1.msra.mxu0 0.0
  %3337 = vmatprep.subr.mxu0 0.0
  %3338 = vmatpush1.msra.mxu0 0.0
  %3339 = vmatprep.subr.mxu0 0.0
  %3340 = vmatpush1.msra.mxu0 0.0
  %3341 = vmatprep.subr.mxu0 0.0
  %3342 = vmatpush1.msra.mxu0 0.0
  %3343 = vmatprep.subr.mxu0 0.0
  %3344 = vmatpush1.msra.mxu0 0.0
  %3345 = vmatprep.subr.mxu0 0.0
  %3346 = vmatpush1.msra.mxu0 0.0
  %3347 = vmatprep.subr.mxu0 0.0
  %3348 = vmatpush1.msra.mxu0 0.0
  %3349 = vmatprep.subr.mxu0 0.0
  %3350 = vmatpush1.msra.mxu0 0.0
  %3351 = vmatprep.subr.mxu0 0.0
  %3352 = vmatpush1.msra.mxu0 0.0
  %3353 = vmatprep.subr.mxu0 0.0
  %3354 = vmatpush1.msra.mxu0 0.0
  %3355 = vmatprep.subr.mxu0 0.0
  %3356 = vmatpush1.msra.mxu0 0.0
  %3357 = vmatprep.subr.mxu0 0.0
  %3358 = vmatpush1.msra.mxu0 0.0
  %3359 = vmatprep.subr.mxu0 0.0
  %3360 = vmatpush1.msra.mxu0 0.0
  %3361 = vmatprep.subr.mxu0 0.0
  %3362 = vmatpush1.msra.mxu0 0.0
  %3363 = vmatprep.subr.mxu0 0.0
  %3364 = vmatpush1.msra.mxu0 0.0
  %3365 = vmatprep.subr.mxu0 0.0
  %3366 = vmatpush1.msra.mxu0 0.0
  %3367 = vmatprep.mubr.f32.mxu0 0.0
  %3368 = vmatmul.mubr.f32.gmra.mrb[0].mxu0 %v3301
  %v3369 = vpop.f32.mrb[0].mxu0
  %v3370 = vadd.f32 %v2635, %v3369
  %v3371 = vpop.f32.mrb[0].mxu0
  %3372 = vdwg.mxu0
  %v3374 = vsel %vm2642, %v2620, 0
  %3376 = vmatprep.subr.mxu0 0.0
  %3377 = vmatpush1.msra.mxu0 %v110
  %3378 = vmatprep.subr.mxu0 0.0
  %3379 = vmatpush1.msra.mxu0 %v111
  %3380 = vmatprep.subr.mxu0 0.0
  %3381 = vmatpush1.msra.mxu0 0.0
  %3382 = vmatprep.subr.mxu0 0.0
  %3383 = vmatpush1.msra.mxu0 0.0
  %3384 = vmatprep.subr.mxu0 0.0
  %3385 = vmatpush1.msra.mxu0 0.0
  %3386 = vmatprep.subr.mxu0 0.0
  %3387 = vmatpush1.msra.mxu0 0.0
  %3388 = vmatprep.subr.mxu0 0.0
  %3389 = vmatpush1.msra.mxu0 0.0
  %3390 = vmatprep.subr.mxu0 0.0
  %3391 = vmatpush1.msra.mxu0 0.0
  %3392 = vmatprep.subr.mxu0 0.0
  %3393 = vmatpush1.msra.mxu0 0.0
  %3394 = vmatprep.subr.mxu0 0.0
  %3395 = vmatpush1.msra.mxu0 0.0
  %3396 = vmatprep.subr.mxu0 0.0
  %3397 = vmatpush1.msra.mxu0 0.0
  %3398 = vmatprep.subr.mxu0 0.0
  %3399 = vmatpush1.msra.mxu0 0.0
  %3400 = vmatprep.subr.mxu0 0.0
  %3401 = vmatpush1.msra.mxu0 0.0
  %3402 = vmatprep.subr.mxu0 0.0
  %3403 = vmatpush1.msra.mxu0 0.0
  %3404 = vmatprep.subr.mxu0 0.0
  %3405 = vmatpush1.msra.mxu0 0.0
  %3406 = vmatprep.subr.mxu0 0.0
  %3407 = vmatpush1.msra.mxu0 0.0
  %3408 = vmatprep.subr.mxu0 0.0
  %3409 = vmatpush1.msra.mxu0 0.0
  %3410 = vmatprep.subr.mxu0 0.0
  %3411 = vmatpush1.msra.mxu0 0.0
  %3412 = vmatprep.subr.mxu0 0.0
  %3413 = vmatpush1.msra.mxu0 0.0
  %3414 = vmatprep.subr.mxu0 0.0
  %3415 = vmatpush1.msra.mxu0 0.0
  %3416 = vmatprep.subr.mxu0 0.0
  %3417 = vmatpush1.msra.mxu0 0.0
  %3418 = vmatprep.subr.mxu0 0.0
  %3419 = vmatpush1.msra.mxu0 0.0
  %3420 = vmatprep.subr.mxu0 0.0
  %3421 = vmatpush1.msra.mxu0 0.0
  %3422 = vmatprep.subr.mxu0 0.0
  %3423 = vmatpush1.msra.mxu0 0.0
  %3424 = vmatprep.subr.mxu0 0.0
  %3425 = vmatpush1.msra.mxu0 0.0
  %3426 = vmatprep.subr.mxu0 0.0
  %3427 = vmatpush1.msra.mxu0 0.0
  %3428 = vmatprep.subr.mxu0 0.0
  %3429 = vmatpush1.msra.mxu0 0.0
  %3430 = vmatprep.subr.mxu0 0.0
  %3431 = vmatpush1.msra.mxu0 0.0
  %3432 = vmatprep.subr.mxu0 0.0
  %3433 = vmatpush1.msra.mxu0 0.0
  %3434 = vmatprep.subr.mxu0 0.0
  %3435 = vmatpush1.msra.mxu0 0.0
  %3436 = vmatprep.subr.mxu0 0.0
  %3437 = vmatpush1.msra.mxu0 0.0
  %3438 = vmatprep.subr.mxu0 0.0
  %3439 = vmatpush1.msra.mxu0 0.0
  %3440 = vmatprep.mubr.f32.mxu0 0.0
  %3441 = vmatmul.mubr.f32.gmra.mrb[0].mxu0 %v3374
  %v3442 = vpop.f32.mrb[0].mxu0
  %v3443 = vadd.f32 %v2636, %v3442
  %v3444 = vpop.f32.mrb[0].mxu0
  %3445 = vdwg.mxu0
  %v3447 = vsel %vm2642, %v2621, 0
  %3449 = vmatprep.subr.mxu0 0.0
  %3450 = vmatpush1.msra.mxu0 %v112
  %3451 = vmatprep.subr.mxu0 0.0
  %3452 = vmatpush1.msra.mxu0 %v113
  %3453 = vmatprep.subr.mxu0 0.0
  %3454 = vmatpush1.msra.mxu0 0.0
  %3455 = vmatprep.subr.mxu0 0.0
  %3456 = vmatpush1.msra.mxu0 0.0
  %3457 = vmatprep.subr.mxu0 0.0
  %3458 = vmatpush1.msra.mxu0 0.0
  %3459 = vmatprep.subr.mxu0 0.0
  %3460 = vmatpush1.msra.mxu0 0.0
  %3461 = vmatprep.subr.mxu0 0.0
  %3462 = vmatpush1.msra.mxu0 0.0
  %3463 = vmatprep.subr.mxu0 0.0
  %3464 = vmatpush1.msra.mxu0 0.0
  %3465 = vmatprep.subr.mxu0 0.0
  %3466 = vmatpush1.msra.mxu0 0.0
  %3467 = vmatprep.subr.mxu0 0.0
  %3468 = vmatpush1.msra.mxu0 0.0
  %3469 = vmatprep.subr.mxu0 0.0
  %3470 = vmatpush1.msra.mxu0 0.0
  %3471 = vmatprep.subr.mxu0 0.0
  %3472 = vmatpush1.msra.mxu0 0.0
  %3473 = vmatprep.subr.mxu0 0.0
  %3474 = vmatpush1.msra.mxu0 0.0
  %3475 = vmatprep.subr.mxu0 0.0
  %3476 = vmatpush1.msra.mxu0 0.0
  %3477 = vmatprep.subr.mxu0 0.0
  %3478 = vmatpush1.msra.mxu0 0.0
  %3479 = vmatprep.subr.mxu0 0.0
  %3480 = vmatpush1.msra.mxu0 0.0
  %3481 = vmatprep.subr.mxu0 0.0
  %3482 = vmatpush1.msra.mxu0 0.0
  %3483 = vmatprep.subr.mxu0 0.0
  %3484 = vmatpush1.msra.mxu0 0.0
  %3485 = vmatprep.subr.mxu0 0.0
  %3486 = vmatpush1.msra.mxu0 0.0
  %3487 = vmatprep.subr.mxu0 0.0
  %3488 = vmatpush1.msra.mxu0 0.0
  %3489 = vmatprep.subr.mxu0 0.0
  %3490 = vmatpush1.msra.mxu0 0.0
  %3491 = vmatprep.subr.mxu0 0.0
  %3492 = vmatpush1.msra.mxu0 0.0
  %3493 = vmatprep.subr.mxu0 0.0
  %3494 = vmatpush1.msra.mxu0 0.0
  %3495 = vmatprep.subr.mxu0 0.0
  %3496 = vmatpush1.msra.mxu0 0.0
  %3497 = vmatprep.subr.mxu0 0.0
  %3498 = vmatpush1.msra.mxu0 0.0
  %3499 = vmatprep.subr.mxu0 0.0
  %3500 = vmatpush1.msra.mxu0 0.0
  %3501 = vmatprep.subr.mxu0 0.0
  %3502 = vmatpush1.msra.mxu0 0.0
  %3503 = vmatprep.subr.mxu0 0.0
  %3504 = vmatpush1.msra.mxu0 0.0
  %3505 = vmatprep.subr.mxu0 0.0
  %3506 = vmatpush1.msra.mxu0 0.0
  %3507 = vmatprep.subr.mxu0 0.0
  %3508 = vmatpush1.msra.mxu0 0.0
  %3509 = vmatprep.subr.mxu0 0.0
  %3510 = vmatpush1.msra.mxu0 0.0
  %3511 = vmatprep.subr.mxu0 0.0
  %3512 = vmatpush1.msra.mxu0 0.0
  %3513 = vmatprep.mubr.f32.mxu0 0.0
  %3514 = vmatmul.mubr.f32.gmra.mrb[0].mxu0 %v3447
  %v3515 = vpop.f32.mrb[0].mxu0
  %v3516 = vadd.f32 %v2637, %v3515
  %v3517 = vpop.f32.mrb[0].mxu0
  %3518 = vdwg.mxu0
  %v3520 = vsel %vm2642, %v2622, 0
  %3522 = vmatprep.subr.mxu0 0.0
  %3523 = vmatpush1.msra.mxu0 %v114
  %3524 = vmatprep.subr.mxu0 0.0
  %3525 = vmatpush1.msra.mxu0 %v115
  %3526 = vmatprep.subr.mxu0 0.0
  %3527 = vmatpush1.msra.mxu0 0.0
  %3528 = vmatprep.subr.mxu0 0.0
  %3529 = vmatpush1.msra.mxu0 0.0
  %3530 = vmatprep.subr.mxu0 0.0
  %3531 = vmatpush1.msra.mxu0 0.0
  %3532 = vmatprep.subr.mxu0 0.0
  %3533 = vmatpush1.msra.mxu0 0.0
  %3534 = vmatprep.subr.mxu0 0.0
  %3535 = vmatpush1.msra.mxu0 0.0
  %3536 = vmatprep.subr.mxu0 0.0
  %3537 = vmatpush1.msra.mxu0 0.0
  %3538 = vmatprep.subr.mxu0 0.0
  %3539 = vmatpush1.msra.mxu0 0.0
  %3540 = vmatprep.subr.mxu0 0.0
  %3541 = vmatpush1.msra.mxu0 0.0
  %3542 = vmatprep.subr.mxu0 0.0
  %3543 = vmatpush1.msra.mxu0 0.0
  %3544 = vmatprep.subr.mxu0 0.0
  %3545 = vmatpush1.msra.mxu0 0.0
  %3546 = vmatprep.subr.mxu0 0.0
  %3547 = vmatpush1.msra.mxu0 0.0
  %3548 = vmatprep.subr.mxu0 0.0
  %3549 = vmatpush1.msra.mxu0 0.0
  %3550 = vmatprep.subr.mxu0 0.0
  %3551 = vmatpush1.msra.mxu0 0.0
  %3552 = vmatprep.subr.mxu0 0.0
  %3553 = vmatpush1.msra.mxu0 0.0
  %3554 = vmatprep.subr.mxu0 0.0
  %3555 = vmatpush1.msra.mxu0 0.0
  %3556 = vmatprep.subr.mxu0 0.0
  %3557 = vmatpush1.msra.mxu0 0.0
  %3558 = vmatprep.subr.mxu0 0.0
  %3559 = vmatpush1.msra.mxu0 0.0
  %3560 = vmatprep.subr.mxu0 0.0
  %3561 = vmatpush1.msra.mxu0 0.0
  %3562 = vmatprep.subr.mxu0 0.0
  %3563 = vmatpush1.msra.mxu0 0.0
  %3564 = vmatprep.subr.mxu0 0.0
  %3565 = vmatpush1.msra.mxu0 0.0
  %3566 = vmatprep.subr.mxu0 0.0
  %3567 = vmatpush1.msra.mxu0 0.0
  %3568 = vmatprep.subr.mxu0 0.0
  %3569 = vmatpush1.msra.mxu0 0.0
  %3570 = vmatprep.subr.mxu0 0.0
  %3571 = vmatpush1.msra.mxu0 0.0
  %3572 = vmatprep.subr.mxu0 0.0
  %3573 = vmatpush1.msra.mxu0 0.0
  %3574 = vmatprep.subr.mxu0 0.0
  %3575 = vmatpush1.msra.mxu0 0.0
  %3576 = vmatprep.subr.mxu0 0.0
  %3577 = vmatpush1.msra.mxu0 0.0
  %3578 = vmatprep.subr.mxu0 0.0
  %3579 = vmatpush1.msra.mxu0 0.0
  %3580 = vmatprep.subr.mxu0 0.0
  %3581 = vmatpush1.msra.mxu0 0.0
  %3582 = vmatprep.subr.mxu0 0.0
  %3583 = vmatpush1.msra.mxu0 0.0
  %3584 = vmatprep.subr.mxu0 0.0
  %3585 = vmatpush1.msra.mxu0 0.0
  %3586 = vmatprep.mubr.f32.mxu0 0.0
  %3587 = vmatmul.mubr.f32.gmra.mrb[0].mxu0 %v3520
  %v3588 = vpop.f32.mrb[0].mxu0
  %v3589 = vadd.f32 %v2638, %v3588
  %v3590 = vpop.f32.mrb[0].mxu0
  %3591 = vdwg.mxu0
  %v3593 = vsel %vm2642, %v2623, 0
  %3595 = vmatprep.subr.mxu0 0.0
  %3596 = vmatpush1.msra.mxu0 %v116
  %3597 = vmatprep.subr.mxu0 0.0
  %3598 = vmatpush1.msra.mxu0 %v117
  %3599 = vmatprep.subr.mxu0 0.0
  %3600 = vmatpush1.msra.mxu0 0.0
  %3601 = vmatprep.subr.mxu0 0.0
  %3602 = vmatpush1.msra.mxu0 0.0
  %3603 = vmatprep.subr.mxu0 0.0
  %3604 = vmatpush1.msra.mxu0 0.0
  %3605 = vmatprep.subr.mxu0 0.0
  %3606 = vmatpush1.msra.mxu0 0.0
  %3607 = vmatprep.subr.mxu0 0.0
  %3608 = vmatpush1.msra.mxu0 0.0
  %3609 = vmatprep.subr.mxu0 0.0
  %3610 = vmatpush1.msra.mxu0 0.0
  %3611 = vmatprep.subr.mxu0 0.0
  %3612 = vmatpush1.msra.mxu0 0.0
  %3613 = vmatprep.subr.mxu0 0.0
  %3614 = vmatpush1.msra.mxu0 0.0
  %3615 = vmatprep.subr.mxu0 0.0
  %3616 = vmatpush1.msra.mxu0 0.0
  %3617 = vmatprep.subr.mxu0 0.0
  %3618 = vmatpush1.msra.mxu0 0.0
  %3619 = vmatprep.subr.mxu0 0.0
  %3620 = vmatpush1.msra.mxu0 0.0
  %3621 = vmatprep.subr.mxu0 0.0
  %3622 = vmatpush1.msra.mxu0 0.0
  %3623 = vmatprep.subr.mxu0 0.0
  %3624 = vmatpush1.msra.mxu0 0.0
  %3625 = vmatprep.subr.mxu0 0.0
  %3626 = vmatpush1.msra.mxu0 0.0
  %3627 = vmatprep.subr.mxu0 0.0
  %3628 = vmatpush1.msra.mxu0 0.0
  %3629 = vmatprep.subr.mxu0 0.0
  %3630 = vmatpush1.msra.mxu0 0.0
  %3631 = vmatprep.subr.mxu0 0.0
  %3632 = vmatpush1.msra.mxu0 0.0
  %3633 = vmatprep.subr.mxu0 0.0
  %3634 = vmatpush1.msra.mxu0 0.0
  %3635 = vmatprep.subr.mxu0 0.0
  %3636 = vmatpush1.msra.mxu0 0.0
  %3637 = vmatprep.subr.mxu0 0.0
  %3638 = vmatpush1.msra.mxu0 0.0
  %3639 = vmatprep.subr.mxu0 0.0
  %3640 = vmatpush1.msra.mxu0 0.0
  %3641 = vmatprep.subr.mxu0 0.0
  %3642 = vmatpush1.msra.mxu0 0.0
  %3643 = vmatprep.subr.mxu0 0.0
  %3644 = vmatpush1.msra.mxu0 0.0
  %3645 = vmatprep.subr.mxu0 0.0
  %3646 = vmatpush1.msra.mxu0 0.0
  %3647 = vmatprep.subr.mxu0 0.0
  %3648 = vmatpush1.msra.mxu0 0.0
  %3649 = vmatprep.subr.mxu0 0.0
  %3650 = vmatpush1.msra.mxu0 0.0
  %3651 = vmatprep.subr.mxu0 0.0
  %3652 = vmatpush1.msra.mxu0 0.0
  %3653 = vmatprep.subr.mxu0 0.0
  %3654 = vmatpush1.msra.mxu0 0.0
  %3655 = vmatprep.subr.mxu0 0.0
  %3656 = vmatpush1.msra.mxu0 0.0
  %3657 = vmatprep.subr.mxu0 0.0
  %3658 = vmatpush1.msra.mxu0 0.0
  %3659 = vmatprep.mubr.f32.mxu0 0.0
  %3660 = vmatmul.mubr.f32.gmra.mrb[0].mxu0 %v3593
  %v3661 = vpop.f32.mrb[0].mxu0
  %v3662 = vadd.f32 %v2639, %v3661
  %v3663 = vpop.f32.mrb[0].mxu0
  %3664 = vdwg.mxu0
  %v3666 = vsel %vm2642, %v2624, 0
  %3668 = vmatprep.subr.mxu0 0.0
  %3669 = vmatpush1.msra.mxu0 %v118
  %3670 = vmatprep.subr.mxu0 0.0
  %3671 = vmatpush1.msra.mxu0 %v119
  %3672 = vmatprep.subr.mxu0 0.0
  %3673 = vmatpush1.msra.mxu0 0.0
  %3674 = vmatprep.subr.mxu0 0.0
  %3675 = vmatpush1.msra.mxu0 0.0
  %3676 = vmatprep.subr.mxu0 0.0
  %3677 = vmatpush1.msra.mxu0 0.0
  %3678 = vmatprep.subr.mxu0 0.0
  %3679 = vmatpush1.msra.mxu0 0.0
  %3680 = vmatprep.subr.mxu0 0.0
  %3681 = vmatpush1.msra.mxu0 0.0
  %3682 = vmatprep.subr.mxu0 0.0
  %3683 = vmatpush1.msra.mxu0 0.0
  %3684 = vmatprep.subr.mxu0 0.0
  %3685 = vmatpush1.msra.mxu0 0.0
  %3686 = vmatprep.subr.mxu0 0.0
  %3687 = vmatpush1.msra.mxu0 0.0
  %3688 = vmatprep.subr.mxu0 0.0
  %3689 = vmatpush1.msra.mxu0 0.0
  %3690 = vmatprep.subr.mxu0 0.0
  %3691 = vmatpush1.msra.mxu0 0.0
  %3692 = vmatprep.subr.mxu0 0.0
  %3693 = vmatpush1.msra.mxu0 0.0
  %3694 = vmatprep.subr.mxu0 0.0
  %3695 = vmatpush1.msra.mxu0 0.0
  %3696 = vmatprep.subr.mxu0 0.0
  %3697 = vmatpush1.msra.mxu0 0.0
  %3698 = vmatprep.subr.mxu0 0.0
  %3699 = vmatpush1.msra.mxu0 0.0
  %3700 = vmatprep.subr.mxu0 0.0
  %3701 = vmatpush1.msra.mxu0 0.0
  %3702 = vmatprep.subr.mxu0 0.0
  %3703 = vmatpush1.msra.mxu0 0.0
  %3704 = vmatprep.subr.mxu0 0.0
  %3705 = vmatpush1.msra.mxu0 0.0
  %3706 = vmatprep.subr.mxu0 0.0
  %3707 = vmatpush1.msra.mxu0 0.0
  %3708 = vmatprep.subr.mxu0 0.0
  %3709 = vmatpush1.msra.mxu0 0.0
  %3710 = vmatprep.subr.mxu0 0.0
  %3711 = vmatpush1.msra.mxu0 0.0
  %3712 = vmatprep.subr.mxu0 0.0
  %3713 = vmatpush1.msra.mxu0 0.0
  %3714 = vmatprep.subr.mxu0 0.0
  %3715 = vmatpush1.msra.mxu0 0.0
  %3716 = vmatprep.subr.mxu0 0.0
  %3717 = vmatpush1.msra.mxu0 0.0
  %3718 = vmatprep.subr.mxu0 0.0
  %3719 = vmatpush1.msra.mxu0 0.0
  %3720 = vmatprep.subr.mxu0 0.0
  %3721 = vmatpush1.msra.mxu0 0.0
  %3722 = vmatprep.subr.mxu0 0.0
  %3723 = vmatpush1.msra.mxu0 0.0
  %3724 = vmatprep.subr.mxu0 0.0
  %3725 = vmatpush1.msra.mxu0 0.0
  %3726 = vmatprep.subr.mxu0 0.0
  %3727 = vmatpush1.msra.mxu0 0.0
  %3728 = vmatprep.subr.mxu0 0.0
  %3729 = vmatpush1.msra.mxu0 0.0
  %3730 = vmatprep.subr.mxu0 0.0
  %3731 = vmatpush1.msra.mxu0 0.0
  %3732 = vmatprep.mubr.f32.mxu0 0.0
  %3733 = vmatmul.mubr.f32.gmra.mrb[0].mxu0 %v3666
  %v3734 = vpop.f32.mrb[0].mxu0
  %v3735 = vadd.f32 %v2640, %v3734
  %v3736 = vpop.f32.mrb[0].mxu0
  %3737 = vdwg.mxu0
  %v3739 = vsel %vm2642, %v2625, 0
  %3741 = vmatprep.subr.mxu0 0.0
  %3742 = vmatpush1.msra.mxu0 %v120
  %3743 = vmatprep.subr.mxu0 0.0
  %3744 = vmatpush1.msra.mxu0 %v121
  %3745 = vmatprep.subr.mxu0 0.0
  %3746 = vmatpush1.msra.mxu0 0.0
  %3747 = vmatprep.subr.mxu0 0.0
  %3748 = vmatpush1.msra.mxu0 0.0
  %3749 = vmatprep.subr.mxu0 0.0
  %3750 = vmatpush1.msra.mxu0 0.0
  %3751 = vmatprep.subr.mxu0 0.0
  %3752 = vmatpush1.msra.mxu0 0.0
  %3753 = vmatprep.subr.mxu0 0.0
  %3754 = vmatpush1.msra.mxu0 0.0
  %3755 = vmatprep.subr.mxu0 0.0
  %3756 = vmatpush1.msra.mxu0 0.0
  %3757 = vmatprep.subr.mxu0 0.0
  %3758 = vmatpush1.msra.mxu0 0.0
  %3759 = vmatprep.subr.mxu0 0.0
  %3760 = vmatpush1.msra.mxu0 0.0
  %3761 = vmatprep.subr.mxu0 0.0
  %3762 = vmatpush1.msra.mxu0 0.0
  %3763 = vmatprep.subr.mxu0 0.0
  %3764 = vmatpush1.msra.mxu0 0.0
  %3765 = vmatprep.subr.mxu0 0.0
  %3766 = vmatpush1.msra.mxu0 0.0
  %3767 = vmatprep.subr.mxu0 0.0
  %3768 = vmatpush1.msra.mxu0 0.0
  %3769 = vmatprep.subr.mxu0 0.0
  %3770 = vmatpush1.msra.mxu0 0.0
  %3771 = vmatprep.subr.mxu0 0.0
  %3772 = vmatpush1.msra.mxu0 0.0
  %3773 = vmatprep.subr.mxu0 0.0
  %3774 = vmatpush1.msra.mxu0 0.0
  %3775 = vmatprep.subr.mxu0 0.0
  %3776 = vmatpush1.msra.mxu0 0.0
  %3777 = vmatprep.subr.mxu0 0.0
  %3778 = vmatpush1.msra.mxu0 0.0
  %3779 = vmatprep.subr.mxu0 0.0
  %3780 = vmatpush1.msra.mxu0 0.0
  %3781 = vmatprep.subr.mxu0 0.0
  %3782 = vmatpush1.msra.mxu0 0.0
  %3783 = vmatprep.subr.mxu0 0.0
  %3784 = vmatpush1.msra.mxu0 0.0
  %3785 = vmatprep.subr.mxu0 0.0
  %3786 = vmatpush1.msra.mxu0 0.0
  %3787 = vmatprep.subr.mxu0 0.0
  %3788 = vmatpush1.msra.mxu0 0.0
  %3789 = vmatprep.subr.mxu0 0.0
  %3790 = vmatpush1.msra.mxu0 0.0
  %3791 = vmatprep.subr.mxu0 0.0
  %3792 = vmatpush1.msra.mxu0 0.0
  %3793 = vmatprep.subr.mxu0 0.0
  %3794 = vmatpush1.msra.mxu0 0.0
  %3795 = vmatprep.subr.mxu0 0.0
  %3796 = vmatpush1.msra.mxu0 0.0
  %3797 = vmatprep.subr.mxu0 0.0
  %3798 = vmatpush1.msra.mxu0 0.0
  %3799 = vmatprep.subr.mxu0 0.0
  %3800 = vmatpush1.msra.mxu0 0.0
  %3801 = vmatprep.subr.mxu0 0.0
  %3802 = vmatpush1.msra.mxu0 0.0
  %3803 = vmatprep.subr.mxu0 0.0
  %3804 = vmatpush1.msra.mxu0 0.0
  %3805 = vmatprep.mubr.f32.mxu0 0.0
  %3806 = vmatmul.mubr.f32.gmra.mrb[0].mxu0 %v3739
  %v3807 = vpop.f32.mrb[0].mxu0
  %v3808 = vadd.f32 %v2641, %v3807
  %v3809 = vpop.f32.mrb[0].mxu0
  %3810 = vdwg.mxu0
  %v3811 = vld [vmem:[%s5] sm:$0x1]
  %v3812 = vld [vmem:[%s6] sm:$0x1]
  %vm3813 = vcmask 253952
  %v3814 = vsel %vm3813, %v2713, 0.0
  %3815 = vadd.xlane.f32.xlu0 %v3814
  %v3816 = vpop.xlane.xlu0 %3815
  %v3817 = vsel %vm3813, %v2786, 0.0
  %3818 = vadd.xlane.f32.xlu0 %v3817
  %v3819 = vpop.xlane.xlu0 %3818
  %v3820 = vsel %vm3813, %v2859, 0.0
  %3821 = vadd.xlane.f32.xlu0 %v3820
  %v3822 = vpop.xlane.xlu0 %3821
  %v3823 = vsel %vm3813, %v2932, 0.0
  %3824 = vadd.xlane.f32.xlu0 %v3823
  %v3825 = vpop.xlane.xlu0 %3824
  %v3826 = vsel %vm3813, %v3005, 0.0
  %3827 = vadd.xlane.f32.xlu0 %v3826
  %v3828 = vpop.xlane.xlu0 %3827
  %v3829 = vsel %vm3813, %v3078, 0.0
  %3830 = vadd.xlane.f32.xlu0 %v3829
  %v3831 = vpop.xlane.xlu0 %3830
  %v3832 = vsel %vm3813, %v3151, 0.0
  %3833 = vadd.xlane.f32.xlu0 %v3832
  %v3834 = vpop.xlane.xlu0 %3833
  %v3835 = vsel %vm3813, %v3224, 0.0
  %3836 = vadd.xlane.f32.xlu0 %v3835
  %v3837 = vpop.xlane.xlu0 %3836
  %v3838 = vsel %vm3813, %v3297, 0.0
  %3839 = vadd.xlane.f32.xlu0 %v3838
  %v3840 = vpop.xlane.xlu0 %3839
  %v3841 = vsel %vm3813, %v3370, 0.0
  %3842 = vadd.xlane.f32.xlu0 %v3841
  %v3843 = vpop.xlane.xlu0 %3842
  %v3844 = vsel %vm3813, %v3443, 0.0
  %3845 = vadd.xlane.f32.xlu0 %v3844
  %v3846 = vpop.xlane.xlu0 %3845
  %v3847 = vsel %vm3813, %v3516, 0.0
  %3848 = vadd.xlane.f32.xlu0 %v3847
  %v3849 = vpop.xlane.xlu0 %3848
  %v3850 = vsel %vm3813, %v3589, 0.0
  %3851 = vadd.xlane.f32.xlu0 %v3850
  %v3852 = vpop.xlane.xlu0 %3851
  %v3853 = vsel %vm3813, %v3662, 0.0
  %3854 = vadd.xlane.f32.xlu0 %v3853
  %v3855 = vpop.xlane.xlu0 %3854
  %v3856 = vsel %vm3813, %v3735, 0.0
  %3857 = vadd.xlane.f32.xlu0 %v3856
  %v3858 = vpop.xlane.xlu0 %3857
  %v3859 = vsel %vm3813, %v3808, 0.0
  %3860 = vadd.xlane.f32.xlu0 %v3859
  %v3861 = vpop.xlane.xlu0 %3860
  %v3862 = vrcp.pop 32.0
  %v3863 = vmul.f32 %v3816, %v3862
  %v3864 = vmul.f32 %v3819, %v3862
  %v3865 = vmul.f32 %v3822, %v3862
  %v3866 = vmul.f32 %v3825, %v3862
  %v3867 = vmul.f32 %v3828, %v3862
  %v3868 = vmul.f32 %v3831, %v3862
  %v3869 = vmul.f32 %v3834, %v3862
  %v3870 = vmul.f32 %v3837, %v3862
  %v3871 = vmul.f32 %v3840, %v3862
  %v3872 = vmul.f32 %v3843, %v3862
  %v3873 = vmul.f32 %v3846, %v3862
  %v3874 = vmul.f32 %v3849, %v3862
  %v3875 = vmul.f32 %v3852, %v3862
  %v3876 = vmul.f32 %v3855, %v3862
  %v3877 = vmul.f32 %v3858, %v3862
  %v3878 = vmul.f32 %v3861, %v3862
  %v3879 = vsub.f32 %v2713, %v3863
  %v3880 = vsub.f32 %v2786, %v3864
  %v3881 = vsub.f32 %v2859, %v3865
  %v3882 = vsub.f32 %v2932, %v3866
  %v3883 = vsub.f32 %v3005, %v3867
  %v3884 = vsub.f32 %v3078, %v3868
  %v3885 = vsub.f32 %v3151, %v3869
  %v3886 = vsub.f32 %v3224, %v3870
  %v3887 = vsub.f32 %v3297, %v3871
  %v3888 = vsub.f32 %v3370, %v3872
  %v3889 = vsub.f32 %v3443, %v3873
  %v3890 = vsub.f32 %v3516, %v3874
  %v3891 = vsub.f32 %v3589, %v3875
  %v3892 = vsub.f32 %v3662, %v3876
  %v3893 = vsub.f32 %v3735, %v3877
  %v3894 = vsub.f32 %v3808, %v3878
  %v3895 = vmul.f32 %v3879, %v3879
  %v3896 = vmul.f32 %v3880, %v3880
  %v3897 = vmul.f32 %v3881, %v3881
  %v3898 = vmul.f32 %v3882, %v3882
  %v3899 = vmul.f32 %v3883, %v3883
  %v3900 = vmul.f32 %v3884, %v3884
  %v3901 = vmul.f32 %v3885, %v3885
  %v3902 = vmul.f32 %v3886, %v3886
  %v3903 = vmul.f32 %v3887, %v3887
  %v3904 = vmul.f32 %v3888, %v3888
  %v3905 = vmul.f32 %v3889, %v3889
  %v3906 = vmul.f32 %v3890, %v3890
  %v3907 = vmul.f32 %v3891, %v3891
  %v3908 = vmul.f32 %v3892, %v3892
  %v3909 = vmul.f32 %v3893, %v3893
  %v3910 = vmul.f32 %v3894, %v3894
  %v3911 = vsel %vm3813, %v3895, 0.0
  %3912 = vadd.xlane.f32.xlu0 %v3911
  %v3913 = vpop.xlane.xlu0 %3912
  %v3914 = vsel %vm3813, %v3896, 0.0
  %3915 = vadd.xlane.f32.xlu0 %v3914
  %v3916 = vpop.xlane.xlu0 %3915
  %v3917 = vsel %vm3813, %v3897, 0.0
  %3918 = vadd.xlane.f32.xlu0 %v3917
  %v3919 = vpop.xlane.xlu0 %3918
  %v3920 = vsel %vm3813, %v3898, 0.0
  %3921 = vadd.xlane.f32.xlu0 %v3920
  %v3922 = vpop.xlane.xlu0 %3921
  %v3923 = vsel %vm3813, %v3899, 0.0
  %3924 = vadd.xlane.f32.xlu0 %v3923
  %v3925 = vpop.xlane.xlu0 %3924
  %v3926 = vsel %vm3813, %v3900, 0.0
  %3927 = vadd.xlane.f32.xlu0 %v3926
  %v3928 = vpop.xlane.xlu0 %3927
  %v3929 = vsel %vm3813, %v3901, 0.0
  %3930 = vadd.xlane.f32.xlu0 %v3929
  %v3931 = vpop.xlane.xlu0 %3930
  %v3932 = vsel %vm3813, %v3902, 0.0
  %3933 = vadd.xlane.f32.xlu0 %v3932
  %v3934 = vpop.xlane.xlu0 %3933
  %v3935 = vsel %vm3813, %v3903, 0.0
  %3936 = vadd.xlane.f32.xlu0 %v3935
  %v3937 = vpop.xlane.xlu0 %3936
  %v3938 = vsel %vm3813, %v3904, 0.0
  %3939 = vadd.xlane.f32.xlu0 %v3938
  %v3940 = vpop.xlane.xlu0 %3939
  %v3941 = vsel %vm3813, %v3905, 0.0
  %3942 = vadd.xlane.f32.xlu0 %v3941
  %v3943 = vpop.xlane.xlu0 %3942
  %v3944 = vsel %vm3813, %v3906, 0.0
  %3945 = vadd.xlane.f32.xlu0 %v3944
  %v3946 = vpop.xlane.xlu0 %3945
  %v3947 = vsel %vm3813, %v3907, 0.0
  %3948 = vadd.xlane.f32.xlu0 %v3947
  %v3949 = vpop.xlane.xlu0 %3948
  %v3950 = vsel %vm3813, %v3908, 0.0
  %3951 = vadd.xlane.f32.xlu0 %v3950
  %v3952 = vpop.xlane.xlu0 %3951
  %v3953 = vsel %vm3813, %v3909, 0.0
  %3954 = vadd.xlane.f32.xlu0 %v3953
  %v3955 = vpop.xlane.xlu0 %3954
  %v3956 = vsel %vm3813, %v3910, 0.0
  %3957 = vadd.xlane.f32.xlu0 %v3956
  %v3958 = vpop.xlane.xlu0 %3957
  %v3959 = vmul.f32 %v3913, %v3862
  %v3960 = vmul.f32 %v3916, %v3862
  %v3961 = vmul.f32 %v3919, %v3862
  %v3962 = vmul.f32 %v3922, %v3862
  %v3963 = vmul.f32 %v3925, %v3862
  %v3964 = vmul.f32 %v3928, %v3862
  %v3965 = vmul.f32 %v3931, %v3862
  %v3966 = vmul.f32 %v3934, %v3862
  %v3967 = vmul.f32 %v3937, %v3862
  %v3968 = vmul.f32 %v3940, %v3862
  %v3969 = vmul.f32 %v3943, %v3862
  %v3970 = vmul.f32 %v3946, %v3862
  %v3971 = vmul.f32 %v3949, %v3862
  %v3972 = vmul.f32 %v3952, %v3862
  %v3973 = vmul.f32 %v3955, %v3862
  %v3974 = vmul.f32 %v3958, %v3862
  %v3975 = vadd.f32 %v3959, 1e-05
  %v3976 = vadd.f32 %v3960, 1e-05
  %v3977 = vadd.f32 %v3961, 1e-05
  %v3978 = vadd.f32 %v3962, 1e-05
  %v3979 = vadd.f32 %v3963, 1e-05
  %v3980 = vadd.f32 %v3964, 1e-05
  %v3981 = vadd.f32 %v3965, 1e-05
  %v3982 = vadd.f32 %v3966, 1e-05
  %v3983 = vadd.f32 %v3967, 1e-05
  %v3984 = vadd.f32 %v3968, 1e-05
  %v3985 = vadd.f32 %v3969, 1e-05
  %v3986 = vadd.f32 %v3970, 1e-05
  %v3987 = vadd.f32 %v3971, 1e-05
  %v3988 = vadd.f32 %v3972, 1e-05
  %v3989 = vadd.f32 %v3973, 1e-05
  %v3990 = vadd.f32 %v3974, 1e-05
  %v3991 = vrsqrt.pop %v3975
  %v3992 = vrsqrt.pop %v3976
  %v3993 = vrsqrt.pop %v3977
  %v3994 = vrsqrt.pop %v3978
  %v3995 = vrsqrt.pop %v3979
  %v3996 = vrsqrt.pop %v3980
  %v3997 = vrsqrt.pop %v3981
  %v3998 = vrsqrt.pop %v3982
  %v3999 = vrsqrt.pop %v3983
  %v4000 = vrsqrt.pop %v3984
  %v4001 = vrsqrt.pop %v3985
  %v4002 = vrsqrt.pop %v3986
  %v4003 = vrsqrt.pop %v3987
  %v4004 = vrsqrt.pop %v3988
  %v4005 = vrsqrt.pop %v3989
  %v4006 = vrsqrt.pop %v3990
  %v4007 = vmul.f32 %v3879, %v3991
  %v4008 = vmul.f32 %v3880, %v3992
  %v4009 = vmul.f32 %v3881, %v3993
  %v4010 = vmul.f32 %v3882, %v3994
  %v4011 = vmul.f32 %v3883, %v3995
  %v4012 = vmul.f32 %v3884, %v3996
  %v4013 = vmul.f32 %v3885, %v3997
  %v4014 = vmul.f32 %v3886, %v3998
  %v4015 = vmul.f32 %v3887, %v3999
  %v4016 = vmul.f32 %v3888, %v4000
  %v4017 = vmul.f32 %v3889, %v4001
  %v4018 = vmul.f32 %v3890, %v4002
  %v4019 = vmul.f32 %v3891, %v4003
  %v4020 = vmul.f32 %v3892, %v4004
  %v4021 = vmul.f32 %v3893, %v4005
  %v4022 = vmul.f32 %v3894, %v4006
  %v4023 = vmul.f32 %v4007, %v3811
  %v4024 = vmul.f32 %v4008, %v3811
  %v4025 = vmul.f32 %v4009, %v3811
  %v4026 = vmul.f32 %v4010, %v3811
  %v4027 = vmul.f32 %v4011, %v3811
  %v4028 = vmul.f32 %v4012, %v3811
  %v4029 = vmul.f32 %v4013, %v3811
  %v4030 = vmul.f32 %v4014, %v3811
  %v4031 = vmul.f32 %v4015, %v3811
  %v4032 = vmul.f32 %v4016, %v3811
  %v4033 = vmul.f32 %v4017, %v3811
  %v4034 = vmul.f32 %v4018, %v3811
  %v4035 = vmul.f32 %v4019, %v3811
  %v4036 = vmul.f32 %v4020, %v3811
  %v4037 = vmul.f32 %v4021, %v3811
  %v4038 = vmul.f32 %v4022, %v3811
  %v4039 = vadd.f32 %v4023, %v3812
  %v4040 = vadd.f32 %v4024, %v3812
  %v4041 = vadd.f32 %v4025, %v3812
  %v4042 = vadd.f32 %v4026, %v3812
  %v4043 = vadd.f32 %v4027, %v3812
  %v4044 = vadd.f32 %v4028, %v3812
  %v4045 = vadd.f32 %v4029, %v3812
  %v4046 = vadd.f32 %v4030, %v3812
  %v4047 = vadd.f32 %v4031, %v3812
  %v4048 = vadd.f32 %v4032, %v3812
  %v4049 = vadd.f32 %v4033, %v3812
  %v4050 = vadd.f32 %v4034, %v3812
  %v4051 = vadd.f32 %v4035, %v3812
  %v4052 = vadd.f32 %v4036, %v3812
  %v4053 = vadd.f32 %v4037, %v3812
  %v4054 = vadd.f32 %v4038, %v3812
  %4055 = vst.msk [vmem:[%s7] sm:$0x1] %vm3813, %v4039
  %4056 = vst.msk [vmem:[%s7 + $0x1] sm:$0x1] %vm3813, %v4040
  %4057 = vst.msk [vmem:[%s7 + $0x2] sm:$0x1] %vm3813, %v4041
  %4058 = vst.msk [vmem:[%s7 + $0x3] sm:$0x1] %vm3813, %v4042
  %4059 = vst.msk [vmem:[%s7 + $0x4] sm:$0x1] %vm3813, %v4043
  %4060 = vst.msk [vmem:[%s7 + $0x5] sm:$0x1] %vm3813, %v4044
  %4061 = vst.msk [vmem:[%s7 + $0x6] sm:$0x1] %vm3813, %v4045
  %4062 = vst.msk [vmem:[%s7 + $0x7] sm:$0x1] %vm3813, %v4046
  %4063 = vst.msk [vmem:[%s7 + $0x8] sm:$0x1] %vm3813, %v4047
  %4064 = vst.msk [vmem:[%s7 + $0x9] sm:$0x1] %vm3813, %v4048
  %4065 = vst.msk [vmem:[%s7 + $0xa] sm:$0x1] %vm3813, %v4049
  %4066 = vst.msk [vmem:[%s7 + $0xb] sm:$0x1] %vm3813, %v4050
  %4067 = vst.msk [vmem:[%s7 + $0xc] sm:$0x1] %vm3813, %v4051
  %4068 = vst.msk [vmem:[%s7 + $0xd] sm:$0x1] %vm3813, %v4052
  %4069 = vst.msk [vmem:[%s7 + $0xe] sm:$0x1] %vm3813, %v4053
  %4070 = vst.msk [vmem:[%s7 + $0xf] sm:$0x1] %vm3813, %v4054
  // Predicated region
  $region30: #{transformer_block_forward.7} parent=0 // pred_check
    _
  $region31: #{transformer_block_forward.7} parent=0 // pred_check_branch
    %4072 = sbr.rel (0) target = $region33
  $region32: #{transformer_block_forward.7} parent=0 // pred_region
    _
  $region33: #{transformer_block_forward.7} parent=0 // pred_fallthru
    _
  // Predicated region
  $region34: #{transformer_block_forward.7} parent=0 // pred_check
    _
  $region35: #{transformer_block_forward.7} parent=0 // pred_check_branch
    %4074 = sbr.rel (0) target = $region37
  $region36: #{transformer_block_forward.7} parent=0 // pred_region
    _
  $region37: #{transformer_block_forward.7} parent=0 // pred_fallthru
    _

</llo_original>
